<compile_context>
chip_gen: v7x
topology: tpu7x:2x2x1
jax: 0.10.0
libtpu: 0.0.40
codegen_flags: <defaults>
</compile_context>

<pallas_src>
import functools

import jax
import jax.numpy as jnp
from jax import lax
from jax.experimental import pallas as pl
from jax.experimental.pallas import tpu as pltpu

LATENT_DIM = 32
VMEM_LIMIT_BYTES = 32 * 1024 * 1024    # explicit: v5e scoped-VMEM default is only 16 MiB
_TILE_BUDGET_BYTES = 16 * 1024 * 1024  # working-set budget used for M-tile selection


def _round_up(n, m=128):
    return ((n + m - 1) // m) * m


# ----------------------------------------------------------------------------
# Pallas kernel: batched fused  out[p] = act(A[p] @ W[p] + b)
# ----------------------------------------------------------------------------
def _gemm_bias_act_kernel(a_ref, w_ref, b_ref, o_ref, *, activation):
    acc = jnp.dot(a_ref[...], w_ref[...], preferred_element_type=jnp.float32)
    acc = acc + b_ref[...]
    if activation == "relu":
        acc = jnp.maximum(acc, 0.0)
    elif activation == "tanh":
        acc = jnp.tanh(acc)
    o_ref[...] = acc.astype(o_ref.dtype)


def _choose_tm(P, M, K, Np, budget=_TILE_BUDGET_BYTES):
    """Largest M-tile whose double-buffered A/out tiles (+ weight tile) fit the
    VMEM budget.  When the phase axis is trivial (P == 1) and M is large, split
    in two so a second parallel grid step exists for the v7x megacore."""
    per_row = 8 * (K + Np)              # f32: double-buffered A row + out row
    fixed = 8 * K * Np + 4 * Np         # double-buffered W tile + bias
    cap = max((budget - fixed) // per_row, 8)
    tm = M if (P > 1 or M < 256) else -(-M // 2)
    tm = min(tm, cap)
    if tm >= M:
        return M
    q = 128 if tm >= 128 else 8
    return max((tm // q) * q, 8)


def batched_gemm_bias_act(a, w, b, activation="none"):
    """a: [P, M, K], w: [P, K, Np], b: [1, Np]  ->  [P, M, Np]  (all f32).

    Np should be a multiple of 128 (lane-dense stores); callers pad + slice."""
    P, M, K = a.shape
    P2, K2, Np = w.shape
    assert (P, K) == (P2, K2) and b.shape == (1, Np)
    tm = _choose_tm(P, M, K, Np)
    grid = (P, pl.cdiv(M, tm))
    return pl.pallas_call(
        functools.partial(_gemm_bias_act_kernel, activation=activation),
        out_shape=jax.ShapeDtypeStruct((P, M, Np), jnp.float32),
        grid=grid,
        in_specs=[
            pl.BlockSpec((None, tm, K), lambda p, i: (p, i, 0)),
            pl.BlockSpec((None, K, Np), lambda p, i: (p, 0, 0)),
            pl.BlockSpec((1, Np), lambda p, i: (0, 0)),
        ],
        out_specs=pl.BlockSpec((None, tm, Np), lambda p, i: (p, i, 0)),
        compiler_params=pltpu.CompilerParams(
            dimension_semantics=("parallel", "parallel"),
            vmem_limit_bytes=VMEM_LIMIT_BYTES,
        ),
    )(a, w, b)


# ----------------------------------------------------------------------------
# Pallas kernel: fused enc_fc -> dec_fc chain (two GEMVs, one launch)
# ----------------------------------------------------------------------------
def _fc_chain_kernel(x_ref, w1_ref, b1_ref, w2_ref, b2_ref, z_ref, d_ref):
    z = jnp.dot(x_ref[...], w1_ref[...], preferred_element_type=jnp.float32) + b1_ref[...]
    z_ref[...] = z
    d_ref[...] = (jnp.dot(z, w2_ref[...], preferred_element_type=jnp.float32)
                  + b2_ref[...])


def fc_chain(x, w1, b1, w2, b2):
    """z = x @ w1 + b1 ; d = z @ w2 + b2  — both weights resident in VMEM,
    second DMA overlaps the first matmul, z never round-trips through HBM twice."""
    M, K1 = x.shape
    _, N1 = w1.shape
    _, N2 = w2.shape
    return pl.pallas_call(
        _fc_chain_kernel,
        out_shape=(jax.ShapeDtypeStruct((M, N1), jnp.float32),
                   jax.ShapeDtypeStruct((M, N2), jnp.float32)),
        grid=(1,),
        in_specs=[
            pl.BlockSpec((M, K1), lambda i: (0, 0)),
            pl.BlockSpec((K1, N1), lambda i: (0, 0)),
            pl.BlockSpec((1, N1), lambda i: (0, 0)),
            pl.BlockSpec((N1, N2), lambda i: (0, 0)),
            pl.BlockSpec((1, N2), lambda i: (0, 0)),
        ],
        out_specs=(pl.BlockSpec((M, N1), lambda i: (0, 0)),
                   pl.BlockSpec((M, N2), lambda i: (0, 0))),
        compiler_params=pltpu.CompilerParams(
            dimension_semantics=("arbitrary",),
            vmem_limit_bytes=VMEM_LIMIT_BYTES,
        ),
    )(x, w1, b1, w2, b2)


# ----------------------------------------------------------------------------
# Glue: im2col / sub-pixel phase extraction (plain JAX, static slices only)
# ----------------------------------------------------------------------------
def _im2col(x, kh, kw, stride, pad):
    """x: [N, H, W, C] -> ([1, N*Ho*Wo, kh*kw*C], (N, Ho, Wo))."""
    N, H, W, C = x.shape
    xp = jnp.pad(x, ((0, 0), (pad, pad), (pad, pad), (0, 0)))
    Ho = (H + 2 * pad - kh) // stride + 1
    Wo = (W + 2 * pad - kw) // stride + 1
    cols = []
    for i in range(kh):
        for j in range(kw):
            cols.append(xp[:, i:i + stride * Ho:stride, j:j + stride * Wo:stride, :])
    patches = jnp.stack(cols, axis=3)                  # [N, Ho, Wo, kh*kw, C]
    return patches.reshape(1, N * Ho * Wo, kh * kw * C), (N, Ho, Wo)


def _phase_cols(x):
    """Sub-pixel im2col for a stride-2 / k=4 / pad=1 ConvTranspose2d.
    x: [N, H, W, C] -> [4, N*H*W, 4*C]; phase p = 2*r + s feeds output (2m+r, 2n+s)."""
    N, H, W, C = x.shape
    xp = jnp.pad(x, ((0, 0), (1, 1), (1, 1), (0, 0)))
    phases = []
    for r in range(2):
        for s in range(2):
            taps = []
            for dy in range(2):
                for dx in range(2):
                    taps.append(xp[:, r + dy:r + dy + H, s + dx:s + dx + W, :])
            p = jnp.stack(taps, axis=3)                # [N, H, W, 4, C]
            phases.append(p.reshape(N * H * W, 4 * C))
    return jnp.stack(phases, axis=0), (N, H, W)


def conv2d(x, layer, stride, pad, activation):
    """x NHWC; `layer` carries a GEMM-ready [1, K, Npad] weight and [1, Npad] bias."""
    cols, (N, Ho, Wo) = _im2col(x, layer["kh"], layer["kw"], stride, pad)
    y = batched_gemm_bias_act(cols, layer["w"], layer["b"], activation)
    return y[0, :, :layer["cout"]].reshape(N, Ho, Wo, layer["cout"])


def conv_transpose2d(x, layer, activation):
    """Stride-2 / k=4 / pad=1 ConvTranspose2d via sub-pixel phases: 4 small GEMMs
    in one pallas_call, then interleave — no dilated zeros are ever multiplied."""
    cols, (N, H, W) = _phase_cols(x)                           # [4, M, 4*Cin]
    y = batched_gemm_bias_act(cols, layer["w"], layer["b"], activation)
    cout = layer["cout"]
    y = y[:, :, :cout].reshape(2, 2, N, H, W, cout)            # [r, s, n, h, w, c]
    y = jnp.transpose(y, (2, 3, 0, 4, 1, 5))                   # [n, h, r, w, s, c]
    return y.reshape(N, 2 * H, 2 * W, cout)


# ----------------------------------------------------------------------------
# Parameters: PyTorch-native init, one-time pack into GEMM-ready layouts
# ----------------------------------------------------------------------------
def init_params(key, latent_dim=LATENT_DIM):
    shapes = {
        "enc_conv1_w": (64, 3, 4, 4),    "enc_conv1_b": (64,),
        "enc_conv2_w": (128, 64, 4, 4),  "enc_conv2_b": (128,),
        "enc_conv3_w": (256, 128, 4, 4), "enc_conv3_b": (256,),
        "enc_fc_w": (latent_dim, 256 * 4 * 4), "enc_fc_b": (latent_dim,),
        "dec_fc_w": (256 * 4 * 4, latent_dim), "dec_fc_b": (256 * 4 * 4,),
        "dec_deconv1_w": (256, 128, 4, 4), "dec_deconv1_b": (128,),
        "dec_deconv2_w": (128, 64, 4, 4),  "dec_deconv2_b": (64,),
        "dec_deconv3_w": (64, 3, 4, 4),    "dec_deconv3_b": (3,),
    }
    keys = jax.random.split(key, len(shapes))
    return {name: 0.05 * jax.random.normal(k, shp, jnp.float32)
            for (name, shp), k in zip(shapes.items(), keys)}


def _pad_cols(x, n):
    return jnp.pad(x, [(0, 0)] * (x.ndim - 1) + [(0, n - x.shape[-1])])


def _pack_conv(w_pt, b):
    """PyTorch Conv2d weight [O, C, kh, kw] -> GEMM-ready [1, kh*kw*C, Npad]."""
    O, C, kh, kw = w_pt.shape
    npad = _round_up(O)
    w_mat = jnp.transpose(w_pt, (2, 3, 1, 0)).reshape(kh * kw * C, O)
    return {"w": _pad_cols(w_mat, npad)[None],
            "b": _pad_cols(b.reshape(1, O), npad),
            "cout": O, "kh": kh, "kw": kw}


def _pack_deconv(w_pt, b):
    """PyTorch ConvTranspose2d weight [Cin, Cout, 4, 4] -> per-phase GEMM weights
    [4, 4*Cin, Npad]; phase p = 2*r + s uses taps ky = 3-r-2*dy, kx = 3-s-2*dx."""
    Cin, Cout, kh, kw = w_pt.shape
    assert (kh, kw) == (4, 4)
    npad = _round_up(Cout)
    phases = []
    for r in range(2):
        for s in range(2):
            taps = []
            for dy in range(2):
                for dx in range(2):
                    taps.append(w_pt[:, :, 3 - r - 2 * dy, 3 - s - 2 * dx])  # [Cin, Cout]
            phases.append(jnp.stack(taps, axis=0).reshape(4 * Cin, Cout))
    w_phase = jnp.stack(phases, axis=0)                        # [4, 4*Cin, Cout]
    return {"w": _pad_cols(w_phase, npad),
            "b": _pad_cols(b.reshape(1, Cout), npad),
            "cout": Cout}


def pack_params(raw, latent_dim=LATENT_DIM):
    """One-time weight transform (transposes / flips / phase split / 128-padding)."""
    packed = {
        "enc_conv1": _pack_conv(raw["enc_conv1_w"], raw["enc_conv1_b"]),
        "enc_conv2": _pack_conv(raw["enc_conv2_w"], raw["enc_conv2_b"]),
        "enc_conv3": _pack_conv(raw["enc_conv3_w"], raw["enc_conv3_b"]),
        "dec_deconv1": _pack_deconv(raw["dec_deconv1_w"], raw["dec_deconv1_b"]),
        "dec_deconv2": _pack_deconv(raw["dec_deconv2_w"], raw["dec_deconv2_b"]),
        "dec_deconv3": _pack_deconv(raw["dec_deconv3_w"], raw["dec_deconv3_b"]),
    }
    lpad = _round_up(latent_dim)                               # 32 -> 128 lane-dense z
    packed["fc"] = {
        "w1": _pad_cols(raw["enc_fc_w"].T, lpad),              # [4096, 128]
        "b1": _pad_cols(raw["enc_fc_b"].reshape(1, -1), lpad), # [1, 128]
        "w2": jnp.pad(raw["dec_fc_w"].T,
                      ((0, lpad - latent_dim), (0, 0))),       # [128, 4096] (zero rows)
        "b2": raw["dec_fc_b"].reshape(1, -1),                  # [1, 4096]
    }
    return packed


# ----------------------------------------------------------------------------
# Forward pass (matches WAE_MMD.forward)
# ----------------------------------------------------------------------------
def wae_mmd_forward(packed, x_nchw, latent_dim=LATENT_DIM):
    """Returns (z, recon), matching the PyTorch module."""
    x = jnp.transpose(x_nchw, (0, 2, 3, 1))                              # NCHW -> NHWC
    # ---- encoder ----
    h = conv2d(x, packed["enc_conv1"], 2, 1, "relu")                     # 32 -> 16
    h = conv2d(h, packed["enc_conv2"], 2, 1, "relu")                     # 16 -> 8
    h = conv2d(h, packed["enc_conv3"], 2, 1, "relu")                     # 8  -> 4
    N = h.shape[0]
    h_flat = jnp.transpose(h, (0, 3, 1, 2)).reshape(N, 256 * 4 * 4)      # PyTorch NCHW flatten
    # ---- latent FCs, fused into one kernel ----
    fc = packed["fc"]
    z_pad, d = fc_chain(h_flat, fc["w1"], fc["b1"], fc["w2"], fc["b2"])
    z = z_pad[:, :latent_dim]
    # ---- decoder ----
    d = jnp.transpose(d.reshape(N, 256, 4, 4), (0, 2, 3, 1))             # .view(-1,256,4,4) -> NHWC
    d = conv_transpose2d(d, packed["dec_deconv1"], "relu")               # 4  -> 8
    d = conv_transpose2d(d, packed["dec_deconv2"], "relu")               # 8  -> 16
    d = conv_transpose2d(d, packed["dec_deconv3"], "tanh")               # 16 -> 32
    recon = jnp.transpose(d, (0, 3, 1, 2))                               # NHWC -> NCHW
    return z, recon
    # TODO(synk): mmd_loss(z, prior_z) is not part of forward(); not implemented here.


# ----------------------------------------------------------------------------
# Pure-XLA reference (correctness check only)
# ----------------------------------------------------------------------------
def _reference_forward(raw, x):
    def conv(h, w, b, s, p):
        y = lax.conv_general_dilated(h, w, (s, s), ((p, p), (p, p)),
                                     dimension_numbers=("NCHW", "OIHW", "NCHW"))
        return y + b.reshape(1, -1, 1, 1)

    def deconv(h, w, b, s, p):
        k = w.shape[2]
        w_eq = jnp.transpose(w[:, :, ::-1, ::-1], (1, 0, 2, 3))
        y = lax.conv_general_dilated(h, w_eq, (1, 1),
                                     ((k - 1 - p, k - 1 - p),) * 2,
                                     lhs_dilation=(s, s),
                                     dimension_numbers=("NCHW", "OIHW", "NCHW"))
        return y + b.reshape(1, -1, 1, 1)

    h = jax.nn.relu(conv(x, raw["enc_conv1_w"], raw["enc_conv1_b"], 2, 1))
    h = jax.nn.relu(conv(h, raw["enc_conv2_w"], raw["enc_conv2_b"], 2, 1))
    h = jax.nn.relu(conv(h, raw["enc_conv3_w"], raw["enc_conv3_b"], 2, 1))
    hf = h.reshape(h.shape[0], -1)
    z = hf @ raw["enc_fc_w"].T + raw["enc_fc_b"]
    d = (z @ raw["dec_fc_w"].T + raw["dec_fc_b"]).reshape(-1, 256, 4, 4)
    d = jax.nn.relu(deconv(d, raw["dec_deconv1_w"], raw["dec_deconv1_b"], 2, 1))
    d = jax.nn.relu(deconv(d, raw["dec_deconv2_w"], raw["dec_deconv2_b"], 2, 1))
    recon = jnp.tanh(deconv(d, raw["dec_deconv3_w"], raw["dec_deconv3_b"], 2, 1))
    return z, recon


if __name__ == "__main__":
    key = jax.random.PRNGKey(0)
    pkey, xkey = jax.random.split(key)
    raw = init_params(pkey)
    packed = pack_params(raw)          # one-time weight transform, off the hot path
    # Architecture requires 32x32 inputs (three stride-2 convs -> 4x4 before Flatten).
    x = jax.random.normal(xkey, (2, 3, 32, 32), jnp.float32)

    forward = jax.jit(lambda inp: wae_mmd_forward(packed, inp))
    z, recon = forward(x)
    jax.block_until_ready((z, recon))

    assert z.shape == (2, LATENT_DIM) and z.dtype == jnp.float32
    assert recon.shape == (2, 3, 32, 32) and recon.dtype == jnp.float32

    # Compare against a pure-XLA reference (loose tolerance: both paths use the
    # MXU's default-precision f32 matmuls, so small rounding differences remain).
    z_ref, recon_ref = jax.jit(functools.partial(_reference_forward, raw))(x)
    z_err = float(jnp.max(jnp.abs(z - z_ref)))
    r_err = float(jnp.max(jnp.abs(recon - recon_ref)))
    z_tol = 5e-2 * float(jnp.max(jnp.abs(z_ref))) + 1e-3
    assert z_err <= z_tol, ("latent mismatch", z_err, z_tol)
    assert r_err <= 5e-2, ("recon mismatch", r_err)

    print("KERNEL_OK")
</pallas_src>

<mosaic_0001>
module attributes {stable_mosaic.version = 11 : i64} {
  func.func @_gemm_bias_act_kernel(%arg0: i32, %arg1: i32, %arg2: memref<1x256x48xf32, #tpu.memory_space<vmem>>, %arg3: memref<1x48x128xf32, #tpu.memory_space<vmem>>, %arg4: memref<1x128xf32, #tpu.memory_space<vmem>>, %arg5: memref<1x256x128xf32, #tpu.memory_space<vmem>>) attributes {dimension_semantics = [#tpu.dimension_semantics<parallel>, #tpu.dimension_semantics<parallel>], iteration_bounds = array<i64: 1, 2>, scalar_prefetch = 0 : i64, scratch_operands = 0 : i64, tpu.core_type = #tpu.core_type<tc>, window_params = [{transform_indices = @transform_0, window_bounds = array<i64: 1, 256, 48>}, {transform_indices = @transform_1, window_bounds = array<i64: 1, 48, 128>}, {pipeline_mode = #tpu.pipeline_mode<synchronous>, transform_indices = @transform_2, window_bounds = array<i64: 1, 128>}, {transform_indices = @transform_3, window_bounds = array<i64: 1, 256, 128>}]} {
    %c0 = arith.constant 0 : index
    %c0_0 = arith.constant 0 : index
    %c0_1 = arith.constant 0 : index
    %0 = vector.load %arg2[%c0, %c0_0, %c0_1] : memref<1x256x48xf32, #tpu.memory_space<vmem>>, vector<1x256x48xf32>
    %1 = vector.shape_cast %0 : vector<1x256x48xf32> to vector<256x48xf32>
    %c0_2 = arith.constant 0 : index
    %c0_3 = arith.constant 0 : index
    %c0_4 = arith.constant 0 : index
    %2 = vector.load %arg3[%c0_2, %c0_3, %c0_4] : memref<1x48x128xf32, #tpu.memory_space<vmem>>, vector<1x48x128xf32>
    %3 = vector.shape_cast %2 : vector<1x48x128xf32> to vector<48x128xf32>
    %cst = arith.constant dense<0.000000e+00> : vector<256x128xf32>
    %4 = tpu.matmul %1, %3, %cst {dimension_numbers = #tpu.dot_dimension_numbers<[1], [0], [0], [1], [0, 0, 1, 1], [], []>} : vector<256x48xf32>, vector<48x128xf32>, vector<256x128xf32> -> vector<256x128xf32>
    %c0_5 = arith.constant 0 : index
    %c0_6 = arith.constant 0 : index
    %5 = vector.load %arg4[%c0_5, %c0_6] : memref<1x128xf32, #tpu.memory_space<vmem>>, vector<1x128xf32>
    %6 = vector.broadcast %5 : vector<1x128xf32> to vector<256x128xf32>
    %7 = arith.addf %4, %6 : vector<256x128xf32>
    %cst_7 = arith.constant 0.000000e+00 : f32
    %8 = vector.broadcast %cst_7 : f32 to vector<256x128xf32>
    %9 = arith.maximumf %7, %8 : vector<256x128xf32>
    %c0_8 = arith.constant 0 : index
    %c0_9 = arith.constant 0 : index
    %c0_10 = arith.constant 0 : index
    %10 = vector.load %arg5[%c0_8, %c0_9, %c0_10] : memref<1x256x128xf32, #tpu.memory_space<vmem>>, vector<1x256x128xf32>
    %11 = vector.shape_cast %10 : vector<1x256x128xf32> to vector<256x128xf32>
    %12 = vector.shape_cast %9 : vector<256x128xf32> to vector<1x256x128xf32>
    tpu.vector_store %arg5[%c0_8, %c0_9, %c0_10], %12 {strides = array<i32>} : memref<1x256x128xf32, #tpu.memory_space<vmem>>, vector<1x256x128xf32>,
    return
  }
  func.func @transform_0(%arg0: i32, %arg1: i32) -> (i32, i32, i32) {
    %c0_i32 = arith.constant 0 : i32
    %c0_i32_0 = arith.constant 0 : i32
    return %arg0, %arg1, %c0_i32 : i32, i32, i32
  }
  func.func @transform_1(%arg0: i32, %arg1: i32) -> (i32, i32, i32) {
    %c0_i32 = arith.constant 0 : i32
    %c0_i32_0 = arith.constant 0 : i32
    %c0_i32_1 = arith.constant 0 : i32
    return %arg0, %c0_i32, %c0_i32_0 : i32, i32, i32
  }
  func.func @transform_2(%arg0: i32, %arg1: i32) -> (i32, i32) {
    %c0_i32 = arith.constant 0 : i32
    %c0_i32_0 = arith.constant 0 : i32
    %c0_i32_1 = arith.constant 0 : i32
    return %c0_i32, %c0_i32_0 : i32, i32
  }
  func.func @transform_3(%arg0: i32, %arg1: i32) -> (i32, i32, i32) {
    %c0_i32 = arith.constant 0 : i32
    %c0_i32_0 = arith.constant 0 : i32
    return %arg0, %arg1, %c0_i32 : i32, i32, i32
  }
}

module attributes {stable_mosaic.version = 11 : i64} {
  func.func @_gemm_bias_act_kernel(%arg0: i32, %arg1: i32, %arg2: memref<1x128x1024xf32, #tpu.memory_space<vmem>>, %arg3: memref<1x1024x128xf32, #tpu.memory_space<vmem>>, %arg4: memref<1x128xf32, #tpu.memory_space<vmem>>, %arg5: memref<1x128x128xf32, #tpu.memory_space<vmem>>) attributes {dimension_semantics = [#tpu.dimension_semantics<parallel>, #tpu.dimension_semantics<parallel>], iteration_bounds = array<i64: 1, 1>, scalar_prefetch = 0 : i64, scratch_operands = 0 : i64, tpu.core_type = #tpu.core_type<tc>, window_params = [{transform_indices = @transform_0, window_bounds = array<i64: 1, 128, 1024>}, {transform_indices = @transform_1, window_bounds = array<i64: 1, 1024, 128>}, {pipeline_mode = #tpu.pipeline_mode<synchronous>, transform_indices = @transform_2, window_bounds = array<i64: 1, 128>}, {transform_indices = @transform_3, window_bounds = array<i64: 1, 128, 128>}]} {
    %c0 = arith.constant 0 : index
    %c0_0 = arith.constant 0 : index
    %c0_1 = arith.constant 0 : index
    %0 = vector.load %arg2[%c0, %c0_0, %c0_1] : memref<1x128x1024xf32, #tpu.memory_space<vmem>>, vector<1x128x1024xf32>
    %1 = vector.shape_cast %0 : vector<1x128x1024xf32> to vector<128x1024xf32>
    %c0_2 = arith.constant 0 : index
    %c0_3 = arith.constant 0 : index
    %c0_4 = arith.constant 0 : index
    %2 = vector.load %arg3[%c0_2, %c0_3, %c0_4] : memref<1x1024x128xf32, #tpu.memory_space<vmem>>, vector<1x1024x128xf32>
    %3 = vector.shape_cast %2 : vector<1x1024x128xf32> to vector<1024x128xf32>
    %cst = arith.constant dense<0.000000e+00> : vector<128x128xf32>
    %4 = tpu.matmul %1, %3, %cst {dimension_numbers = #tpu.dot_dimension_numbers<[1], [0], [0], [1], [0, 0, 1, 1], [], []>} : vector<128x1024xf32>, vector<1024x128xf32>, vector<128x128xf32> -> vector<128x128xf32>
    %c0_5 = arith.constant 0 : index
    %c0_6 = arith.constant 0 : index
    %5 = vector.load %arg4[%c0_5, %c0_6] : memref<1x128xf32, #tpu.memory_space<vmem>>, vector<1x128xf32>
    %6 = vector.broadcast %5 : vector<1x128xf32> to vector<128x128xf32>
    %7 = arith.addf %4, %6 : vector<128x128xf32>
    %cst_7 = arith.constant 0.000000e+00 : f32
    %8 = vector.broadcast %cst_7 : f32 to vector<128x128xf32>
    %9 = arith.maximumf %7, %8 : vector<128x128xf32>
    %c0_8 = arith.constant 0 : index
    %c0_9 = arith.constant 0 : index
    %c0_10 = arith.constant 0 : index
    %10 = vector.load %arg5[%c0_8, %c0_9, %c0_10] : memref<1x128x128xf32, #tpu.memory_space<vmem>>, vector<1x128x128xf32>
    %11 = vector.shape_cast %10 : vector<1x128x128xf32> to vector<128x128xf32>
    %12 = vector.shape_cast %9 : vector<128x128xf32> to vector<1x128x128xf32>
    tpu.vector_store %arg5[%c0_8, %c0_9, %c0_10], %12 {strides = array<i32>} : memref<1x128x128xf32, #tpu.memory_space<vmem>>, vector<1x128x128xf32>,
    return
  }
  func.func @transform_0(%arg0: i32, %arg1: i32) -> (i32, i32, i32) {
    %c0_i32 = arith.constant 0 : i32
    %c0_i32_0 = arith.constant 0 : i32
    return %arg0, %arg1, %c0_i32 : i32, i32, i32
  }
  func.func @transform_1(%arg0: i32, %arg1: i32) -> (i32, i32, i32) {
    %c0_i32 = arith.constant 0 : i32
    %c0_i32_0 = arith.constant 0 : i32
    %c0_i32_1 = arith.constant 0 : i32
    return %arg0, %c0_i32, %c0_i32_0 : i32, i32, i32
  }
  func.func @transform_2(%arg0: i32, %arg1: i32) -> (i32, i32) {
    %c0_i32 = arith.constant 0 : i32
    %c0_i32_0 = arith.constant 0 : i32
    %c0_i32_1 = arith.constant 0 : i32
    return %c0_i32, %c0_i32_0 : i32, i32
  }
  func.func @transform_3(%arg0: i32, %arg1: i32) -> (i32, i32, i32) {
    %c0_i32 = arith.constant 0 : i32
    %c0_i32_0 = arith.constant 0 : i32
    return %arg0, %arg1, %c0_i32 : i32, i32, i32
  }
}

module attributes {stable_mosaic.version = 11 : i64} {
  func.func @_gemm_bias_act_kernel(%arg0: i32, %arg1: i32, %arg2: memref<1x32x2048xf32, #tpu.memory_space<vmem>>, %arg3: memref<1x2048x256xf32, #tpu.memory_space<vmem>>, %arg4: memref<1x256xf32, #tpu.memory_space<vmem>>, %arg5: memref<1x32x256xf32, #tpu.memory_space<vmem>>) attributes {dimension_semantics = [#tpu.dimension_semantics<parallel>, #tpu.dimension_semantics<parallel>], iteration_bounds = array<i64: 1, 1>, scalar_prefetch = 0 : i64, scratch_operands = 0 : i64, tpu.core_type = #tpu.core_type<tc>, window_params = [{transform_indices = @transform_0, window_bounds = array<i64: 1, 32, 2048>}, {transform_indices = @transform_1, window_bounds = array<i64: 1, 2048, 256>}, {pipeline_mode = #tpu.pipeline_mode<synchronous>, transform_indices = @transform_2, window_bounds = array<i64: 1, 256>}, {transform_indices = @transform_3, window_bounds = array<i64: 1, 32, 256>}]} {
    %c0 = arith.constant 0 : index
    %c0_0 = arith.constant 0 : index
    %c0_1 = arith.constant 0 : index
    %0 = vector.load %arg2[%c0, %c0_0, %c0_1] : memref<1x32x2048xf32, #tpu.memory_space<vmem>>, vector<1x32x2048xf32>
    %1 = vector.shape_cast %0 : vector<1x32x2048xf32> to vector<32x2048xf32>
    %c0_2 = arith.constant 0 : index
    %c0_3 = arith.constant 0 : index
    %c0_4 = arith.constant 0 : index
    %2 = vector.load %arg3[%c0_2, %c0_3, %c0_4] : memref<1x2048x256xf32, #tpu.memory_space<vmem>>, vector<1x2048x256xf32>
    %3 = vector.shape_cast %2 : vector<1x2048x256xf32> to vector<2048x256xf32>
    %cst = arith.constant dense<0.000000e+00> : vector<32x256xf32>
    %4 = tpu.matmul %1, %3, %cst {dimension_numbers = #tpu.dot_dimension_numbers<[1], [0], [0], [1], [0, 0, 1, 1], [], []>} : vector<32x2048xf32>, vector<2048x256xf32>, vector<32x256xf32> -> vector<32x256xf32>
    %c0_5 = arith.constant 0 : index
    %c0_6 = arith.constant 0 : index
    %5 = vector.load %arg4[%c0_5, %c0_6] : memref<1x256xf32, #tpu.memory_space<vmem>>, vector<1x256xf32>
    %6 = vector.broadcast %5 : vector<1x256xf32> to vector<32x256xf32>
    %7 = arith.addf %4, %6 : vector<32x256xf32>
    %cst_7 = arith.constant 0.000000e+00 : f32
    %8 = vector.broadcast %cst_7 : f32 to vector<32x256xf32>
    %9 = arith.maximumf %7, %8 : vector<32x256xf32>
    %c0_8 = arith.constant 0 : index
    %c0_9 = arith.constant 0 : index
    %c0_10 = arith.constant 0 : index
    %10 = vector.load %arg5[%c0_8, %c0_9, %c0_10] : memref<1x32x256xf32, #tpu.memory_space<vmem>>, vector<1x32x256xf32>
    %11 = vector.shape_cast %10 : vector<1x32x256xf32> to vector<32x256xf32>
    %12 = vector.shape_cast %9 : vector<32x256xf32> to vector<1x32x256xf32>
    tpu.vector_store %arg5[%c0_8, %c0_9, %c0_10], %12 {strides = array<i32>} : memref<1x32x256xf32, #tpu.memory_space<vmem>>, vector<1x32x256xf32>,
    return
  }
  func.func @transform_0(%arg0: i32, %arg1: i32) -> (i32, i32, i32) {
    %c0_i32 = arith.constant 0 : i32
    %c0_i32_0 = arith.constant 0 : i32
    return %arg0, %arg1, %c0_i32 : i32, i32, i32
  }
  func.func @transform_1(%arg0: i32, %arg1: i32) -> (i32, i32, i32) {
    %c0_i32 = arith.constant 0 : i32
    %c0_i32_0 = arith.constant 0 : i32
    %c0_i32_1 = arith.constant 0 : i32
    return %arg0, %c0_i32, %c0_i32_0 : i32, i32, i32
  }
  func.func @transform_2(%arg0: i32, %arg1: i32) -> (i32, i32) {
    %c0_i32 = arith.constant 0 : i32
    %c0_i32_0 = arith.constant 0 : i32
    %c0_i32_1 = arith.constant 0 : i32
    return %c0_i32, %c0_i32_0 : i32, i32
  }
  func.func @transform_3(%arg0: i32, %arg1: i32) -> (i32, i32, i32) {
    %c0_i32 = arith.constant 0 : i32
    %c0_i32_0 = arith.constant 0 : i32
    return %arg0, %arg1, %c0_i32 : i32, i32, i32
  }
}

module attributes {stable_mosaic.version = 11 : i64} {
  func.func @_fc_chain_kernel(%arg0: i32, %arg1: memref<2x4096xf32, #tpu.memory_space<vmem>>, %arg2: memref<4096x128xf32, #tpu.memory_space<vmem>>, %arg3: memref<1x128xf32, #tpu.memory_space<vmem>>, %arg4: memref<128x4096xf32, #tpu.memory_space<vmem>>, %arg5: memref<1x4096xf32, #tpu.memory_space<vmem>>, %arg6: memref<2x128xf32, #tpu.memory_space<vmem>>, %arg7: memref<2x4096xf32, #tpu.memory_space<vmem>>) attributes {dimension_semantics = [#tpu.dimension_semantics<arbitrary>], iteration_bounds = array<i64: 1>, scalar_prefetch = 0 : i64, scratch_operands = 0 : i64, tpu.core_type = #tpu.core_type<tc>, window_params = [{pipeline_mode = #tpu.pipeline_mode<synchronous>, transform_indices = @transform_0, window_bounds = array<i64: 2, 4096>}, {pipeline_mode = #tpu.pipeline_mode<synchronous>, transform_indices = @transform_1, window_bounds = array<i64: 4096, 128>}, {pipeline_mode = #tpu.pipeline_mode<synchronous>, transform_indices = @transform_2, window_bounds = array<i64: 1, 128>}, {pipeline_mode = #tpu.pipeline_mode<synchronous>, transform_indices = @transform_3, window_bounds = array<i64: 128, 4096>}, {pipeline_mode = #tpu.pipeline_mode<synchronous>, transform_indices = @transform_4, window_bounds = array<i64: 1, 4096>}, {pipeline_mode = #tpu.pipeline_mode<synchronous>, transform_indices = @transform_5, window_bounds = array<i64: 2, 128>}, {pipeline_mode = #tpu.pipeline_mode<synchronous>, transform_indices = @transform_6, window_bounds = array<i64: 2, 4096>}]} {
    %c0 = arith.constant 0 : index
    %c0_0 = arith.constant 0 : index
    %0 = vector.load %arg1[%c0, %c0_0] : memref<2x4096xf32, #tpu.memory_space<vmem>>, vector<2x4096xf32>
    %c0_1 = arith.constant 0 : index
    %c0_2 = arith.constant 0 : index
    %1 = vector.load %arg2[%c0_1, %c0_2] : memref<4096x128xf32, #tpu.memory_space<vmem>>, vector<4096x128xf32>
    %cst = arith.constant dense<0.000000e+00> : vector<2x128xf32>
    %2 = tpu.matmul %0, %1, %cst {dimension_numbers = #tpu.dot_dimension_numbers<[1], [0], [0], [1], [0, 0, 1, 1], [], []>} : vector<2x4096xf32>, vector<4096x128xf32>, vector<2x128xf32> -> vector<2x128xf32>
    %c0_3 = arith.constant 0 : index
    %c0_4 = arith.constant 0 : index
    %3 = vector.load %arg3[%c0_3, %c0_4] : memref<1x128xf32, #tpu.memory_space<vmem>>, vector<1x128xf32>
    %4 = vector.broadcast %3 : vector<1x128xf32> to vector<2x128xf32>
    %5 = arith.addf %2, %4 : vector<2x128xf32>
    %c0_5 = arith.constant 0 : index
    %c0_6 = arith.constant 0 : index
    %6 = vector.load %arg6[%c0_5, %c0_6] : memref<2x128xf32, #tpu.memory_space<vmem>>, vector<2x128xf32>
    tpu.vector_store %arg6[%c0_5, %c0_6], %5 {strides = array<i32>} : memref<2x128xf32, #tpu.memory_space<vmem>>, vector<2x128xf32>,
    %c0_7 = arith.constant 0 : index
    %c0_8 = arith.constant 0 : index
    %7 = vector.load %arg4[%c0_7, %c0_8] : memref<128x4096xf32, #tpu.memory_space<vmem>>, vector<128x4096xf32>
    %cst_9 = arith.constant dense<0.000000e+00> : vector<2x4096xf32>
    %8 = tpu.matmul %5, %7, %cst_9 {dimension_numbers = #tpu.dot_dimension_numbers<[1], [0], [0], [1], [0, 0, 1, 1], [], []>} : vector<2x128xf32>, vector<128x4096xf32>, vector<2x4096xf32> -> vector<2x4096xf32>
    %c0_10 = arith.constant 0 : index
    %c0_11 = arith.constant 0 : index
    %9 = vector.load %arg5[%c0_10, %c0_11] : memref<1x4096xf32, #tpu.memory_space<vmem>>, vector<1x4096xf32>
    %10 = vector.broadcast %9 : vector<1x4096xf32> to vector<2x4096xf32>
    %11 = arith.addf %8, %10 : vector<2x4096xf32>
    %c0_12 = arith.constant 0 : index
    %c0_13 = arith.constant 0 : index
    %12 = vector.load %arg7[%c0_12, %c0_13] : memref<2x4096xf32, #tpu.memory_space<vmem>>, vector<2x4096xf32>
    tpu.vector_store %arg7[%c0_12, %c0_13], %11 {strides = array<i32>} : memref<2x4096xf32, #tpu.memory_space<vmem>>, vector<2x4096xf32>,
    return
  }
  func.func @transform_0(%arg0: i32) -> (i32, i32) {
    %c0_i32 = arith.constant 0 : i32
    %c0_i32_0 = arith.constant 0 : i32
    %c0_i32_1 = arith.constant 0 : i32
    return %c0_i32, %c0_i32_0 : i32, i32
  }
  func.func @transform_1(%arg0: i32) -> (i32, i32) {
    %c0_i32 = arith.constant 0 : i32
    %c0_i32_0 = arith.constant 0 : i32
    %c0_i32_1 = arith.constant 0 : i32
    return %c0_i32, %c0_i32_0 : i32, i32
  }
  func.func @transform_2(%arg0: i32) -> (i32, i32) {
    %c0_i32 = arith.constant 0 : i32
    %c0_i32_0 = arith.constant 0 : i32
    %c0_i32_1 = arith.constant 0 : i32
    return %c0_i32, %c0_i32_0 : i32, i32
  }
  func.func @transform_3(%arg0: i32) -> (i32, i32) {
    %c0_i32 = arith.constant 0 : i32
    %c0_i32_0 = arith.constant 0 : i32
    %c0_i32_1 = arith.constant 0 : i32
    return %c0_i32, %c0_i32_0 : i32, i32
  }
  func.func @transform_4(%arg0: i32) -> (i32, i32) {
    %c0_i32 = arith.constant 0 : i32
    %c0_i32_0 = arith.constant 0 : i32
    %c0_i32_1 = arith.constant 0 : i32
    return %c0_i32, %c0_i32_0 : i32, i32
  }
  func.func @transform_5(%arg0: i32) -> (i32, i32) {
    %c0_i32 = arith.constant 0 : i32
    %c0_i32_0 = arith.constant 0 : i32
    %c0_i32_1 = arith.constant 0 : i32
    return %c0_i32, %c0_i32_0 : i32, i32
  }
  func.func @transform_6(%arg0: i32) -> (i32, i32) {
    %c0_i32 = arith.constant 0 : i32
    %c0_i32_0 = arith.constant 0 : i32
    %c0_i32_1 = arith.constant 0 : i32
    return %c0_i32, %c0_i32_0 : i32, i32
  }
}

module attributes {stable_mosaic.version = 11 : i64} {
  func.func @_gemm_bias_act_kernel(%arg0: i32, %arg1: i32, %arg2: memref<1x32x1024xf32, #tpu.memory_space<vmem>>, %arg3: memref<1x1024x128xf32, #tpu.memory_space<vmem>>, %arg4: memref<1x128xf32, #tpu.memory_space<vmem>>, %arg5: memref<1x32x128xf32, #tpu.memory_space<vmem>>) attributes {dimension_semantics = [#tpu.dimension_semantics<parallel>, #tpu.dimension_semantics<parallel>], iteration_bounds = array<i64: 4, 1>, scalar_prefetch = 0 : i64, scratch_operands = 0 : i64, tpu.core_type = #tpu.core_type<tc>, window_params = [{transform_indices = @transform_0, window_bounds = array<i64: 1, 32, 1024>}, {transform_indices = @transform_1, window_bounds = array<i64: 1, 1024, 128>}, {pipeline_mode = #tpu.pipeline_mode<synchronous>, transform_indices = @transform_2, window_bounds = array<i64: 1, 128>}, {transform_indices = @transform_3, window_bounds = array<i64: 1, 32, 128>}]} {
    %c0 = arith.constant 0 : index
    %c0_0 = arith.constant 0 : index
    %c0_1 = arith.constant 0 : index
    %0 = vector.load %arg2[%c0, %c0_0, %c0_1] : memref<1x32x1024xf32, #tpu.memory_space<vmem>>, vector<1x32x1024xf32>
    %1 = vector.shape_cast %0 : vector<1x32x1024xf32> to vector<32x1024xf32>
    %c0_2 = arith.constant 0 : index
    %c0_3 = arith.constant 0 : index
    %c0_4 = arith.constant 0 : index
    %2 = vector.load %arg3[%c0_2, %c0_3, %c0_4] : memref<1x1024x128xf32, #tpu.memory_space<vmem>>, vector<1x1024x128xf32>
    %3 = vector.shape_cast %2 : vector<1x1024x128xf32> to vector<1024x128xf32>
    %cst = arith.constant dense<0.000000e+00> : vector<32x128xf32>
    %4 = tpu.matmul %1, %3, %cst {dimension_numbers = #tpu.dot_dimension_numbers<[1], [0], [0], [1], [0, 0, 1, 1], [], []>} : vector<32x1024xf32>, vector<1024x128xf32>, vector<32x128xf32> -> vector<32x128xf32>
    %c0_5 = arith.constant 0 : index
    %c0_6 = arith.constant 0 : index
    %5 = vector.load %arg4[%c0_5, %c0_6] : memref<1x128xf32, #tpu.memory_space<vmem>>, vector<1x128xf32>
    %6 = vector.broadcast %5 : vector<1x128xf32> to vector<32x128xf32>
    %7 = arith.addf %4, %6 : vector<32x128xf32>
    %cst_7 = arith.constant 0.000000e+00 : f32
    %8 = vector.broadcast %cst_7 : f32 to vector<32x128xf32>
    %9 = arith.maximumf %7, %8 : vector<32x128xf32>
    %c0_8 = arith.constant 0 : index
    %c0_9 = arith.constant 0 : index
    %c0_10 = arith.constant 0 : index
    %10 = vector.load %arg5[%c0_8, %c0_9, %c0_10] : memref<1x32x128xf32, #tpu.memory_space<vmem>>, vector<1x32x128xf32>
    %11 = vector.shape_cast %10 : vector<1x32x128xf32> to vector<32x128xf32>
    %12 = vector.shape_cast %9 : vector<32x128xf32> to vector<1x32x128xf32>
    tpu.vector_store %arg5[%c0_8, %c0_9, %c0_10], %12 {strides = array<i32>} : memref<1x32x128xf32, #tpu.memory_space<vmem>>, vector<1x32x128xf32>,
    return
  }
  func.func @transform_0(%arg0: i32, %arg1: i32) -> (i32, i32, i32) {
    %c0_i32 = arith.constant 0 : i32
    %c0_i32_0 = arith.constant 0 : i32
    return %arg0, %arg1, %c0_i32 : i32, i32, i32
  }
  func.func @transform_1(%arg0: i32, %arg1: i32) -> (i32, i32, i32) {
    %c0_i32 = arith.constant 0 : i32
    %c0_i32_0 = arith.constant 0 : i32
    %c0_i32_1 = arith.constant 0 : i32
    return %arg0, %c0_i32, %c0_i32_0 : i32, i32, i32
  }
  func.func @transform_2(%arg0: i32, %arg1: i32) -> (i32, i32) {
    %c0_i32 = arith.constant 0 : i32
    %c0_i32_0 = arith.constant 0 : i32
    %c0_i32_1 = arith.constant 0 : i32
    return %c0_i32, %c0_i32_0 : i32, i32
  }
  func.func @transform_3(%arg0: i32, %arg1: i32) -> (i32, i32, i32) {
    %c0_i32 = arith.constant 0 : i32
    %c0_i32_0 = arith.constant 0 : i32
    return %arg0, %arg1, %c0_i32 : i32, i32, i32
  }
}

module attributes {stable_mosaic.version = 11 : i64} {
  func.func @_gemm_bias_act_kernel(%arg0: i32, %arg1: i32, %arg2: memref<1x128x512xf32, #tpu.memory_space<vmem>>, %arg3: memref<1x512x128xf32, #tpu.memory_space<vmem>>, %arg4: memref<1x128xf32, #tpu.memory_space<vmem>>, %arg5: memref<1x128x128xf32, #tpu.memory_space<vmem>>) attributes {dimension_semantics = [#tpu.dimension_semantics<parallel>, #tpu.dimension_semantics<parallel>], iteration_bounds = array<i64: 4, 1>, scalar_prefetch = 0 : i64, scratch_operands = 0 : i64, tpu.core_type = #tpu.core_type<tc>, window_params = [{transform_indices = @transform_0, window_bounds = array<i64: 1, 128, 512>}, {transform_indices = @transform_1, window_bounds = array<i64: 1, 512, 128>}, {pipeline_mode = #tpu.pipeline_mode<synchronous>, transform_indices = @transform_2, window_bounds = array<i64: 1, 128>}, {transform_indices = @transform_3, window_bounds = array<i64: 1, 128, 128>}]} {
    %c0 = arith.constant 0 : index
    %c0_0 = arith.constant 0 : index
    %c0_1 = arith.constant 0 : index
    %0 = vector.load %arg2[%c0, %c0_0, %c0_1] : memref<1x128x512xf32, #tpu.memory_space<vmem>>, vector<1x128x512xf32>
    %1 = vector.shape_cast %0 : vector<1x128x512xf32> to vector<128x512xf32>
    %c0_2 = arith.constant 0 : index
    %c0_3 = arith.constant 0 : index
    %c0_4 = arith.constant 0 : index
    %2 = vector.load %arg3[%c0_2, %c0_3, %c0_4] : memref<1x512x128xf32, #tpu.memory_space<vmem>>, vector<1x512x128xf32>
    %3 = vector.shape_cast %2 : vector<1x512x128xf32> to vector<512x128xf32>
    %cst = arith.constant dense<0.000000e+00> : vector<128x128xf32>
    %4 = tpu.matmul %1, %3, %cst {dimension_numbers = #tpu.dot_dimension_numbers<[1], [0], [0], [1], [0, 0, 1, 1], [], []>} : vector<128x512xf32>, vector<512x128xf32>, vector<128x128xf32> -> vector<128x128xf32>
    %c0_5 = arith.constant 0 : index
    %c0_6 = arith.constant 0 : index
    %5 = vector.load %arg4[%c0_5, %c0_6] : memref<1x128xf32, #tpu.memory_space<vmem>>, vector<1x128xf32>
    %6 = vector.broadcast %5 : vector<1x128xf32> to vector<128x128xf32>
    %7 = arith.addf %4, %6 : vector<128x128xf32>
    %cst_7 = arith.constant 0.000000e+00 : f32
    %8 = vector.broadcast %cst_7 : f32 to vector<128x128xf32>
    %9 = arith.maximumf %7, %8 : vector<128x128xf32>
    %c0_8 = arith.constant 0 : index
    %c0_9 = arith.constant 0 : index
    %c0_10 = arith.constant 0 : index
    %10 = vector.load %arg5[%c0_8, %c0_9, %c0_10] : memref<1x128x128xf32, #tpu.memory_space<vmem>>, vector<1x128x128xf32>
    %11 = vector.shape_cast %10 : vector<1x128x128xf32> to vector<128x128xf32>
    %12 = vector.shape_cast %9 : vector<128x128xf32> to vector<1x128x128xf32>
    tpu.vector_store %arg5[%c0_8, %c0_9, %c0_10], %12 {strides = array<i32>} : memref<1x128x128xf32, #tpu.memory_space<vmem>>, vector<1x128x128xf32>,
    return
  }
  func.func @transform_0(%arg0: i32, %arg1: i32) -> (i32, i32, i32) {
    %c0_i32 = arith.constant 0 : i32
    %c0_i32_0 = arith.constant 0 : i32
    return %arg0, %arg1, %c0_i32 : i32, i32, i32
  }
  func.func @transform_1(%arg0: i32, %arg1: i32) -> (i32, i32, i32) {
    %c0_i32 = arith.constant 0 : i32
    %c0_i32_0 = arith.constant 0 : i32
    %c0_i32_1 = arith.constant 0 : i32
    return %arg0, %c0_i32, %c0_i32_0 : i32, i32, i32
  }
  func.func @transform_2(%arg0: i32, %arg1: i32) -> (i32, i32) {
    %c0_i32 = arith.constant 0 : i32
    %c0_i32_0 = arith.constant 0 : i32
    %c0_i32_1 = arith.constant 0 : i32
    return %c0_i32, %c0_i32_0 : i32, i32
  }
  func.func @transform_3(%arg0: i32, %arg1: i32) -> (i32, i32, i32) {
    %c0_i32 = arith.constant 0 : i32
    %c0_i32_0 = arith.constant 0 : i32
    return %arg0, %arg1, %c0_i32 : i32, i32, i32
  }
}

module attributes {stable_mosaic.version = 11 : i64} {
  func.func @_gemm_bias_act_kernel(%arg0: i32, %arg1: i32, %arg2: memref<1x512x256xf32, #tpu.memory_space<vmem>>, %arg3: memref<1x256x128xf32, #tpu.memory_space<vmem>>, %arg4: memref<1x128xf32, #tpu.memory_space<vmem>>, %arg5: memref<1x512x128xf32, #tpu.memory_space<vmem>>) attributes {dimension_semantics = [#tpu.dimension_semantics<parallel>, #tpu.dimension_semantics<parallel>], iteration_bounds = array<i64: 4, 1>, scalar_prefetch = 0 : i64, scratch_operands = 0 : i64, tpu.core_type = #tpu.core_type<tc>, window_params = [{transform_indices = @transform_0, window_bounds = array<i64: 1, 512, 256>}, {transform_indices = @transform_1, window_bounds = array<i64: 1, 256, 128>}, {pipeline_mode = #tpu.pipeline_mode<synchronous>, transform_indices = @transform_2, window_bounds = array<i64: 1, 128>}, {transform_indices = @transform_3, window_bounds = array<i64: 1, 512, 128>}]} {
    %c0 = arith.constant 0 : index
    %c0_0 = arith.constant 0 : index
    %c0_1 = arith.constant 0 : index
    %0 = vector.load %arg2[%c0, %c0_0, %c0_1] : memref<1x512x256xf32, #tpu.memory_space<vmem>>, vector<1x512x256xf32>
    %1 = vector.shape_cast %0 : vector<1x512x256xf32> to vector<512x256xf32>
    %c0_2 = arith.constant 0 : index
    %c0_3 = arith.constant 0 : index
    %c0_4 = arith.constant 0 : index
    %2 = vector.load %arg3[%c0_2, %c0_3, %c0_4] : memref<1x256x128xf32, #tpu.memory_space<vmem>>, vector<1x256x128xf32>
    %3 = vector.shape_cast %2 : vector<1x256x128xf32> to vector<256x128xf32>
    %cst = arith.constant dense<0.000000e+00> : vector<512x128xf32>
    %4 = tpu.matmul %1, %3, %cst {dimension_numbers = #tpu.dot_dimension_numbers<[1], [0], [0], [1], [0, 0, 1, 1], [], []>} : vector<512x256xf32>, vector<256x128xf32>, vector<512x128xf32> -> vector<512x128xf32>
    %c0_5 = arith.constant 0 : index
    %c0_6 = arith.constant 0 : index
    %5 = vector.load %arg4[%c0_5, %c0_6] : memref<1x128xf32, #tpu.memory_space<vmem>>, vector<1x128xf32>
    %6 = vector.broadcast %5 : vector<1x128xf32> to vector<512x128xf32>
    %7 = arith.addf %4, %6 : vector<512x128xf32>
    %8 = math.tanh %7 : vector<512x128xf32>
    %c0_7 = arith.constant 0 : index
    %c0_8 = arith.constant 0 : index
    %c0_9 = arith.constant 0 : index
    %9 = vector.load %arg5[%c0_7, %c0_8, %c0_9] : memref<1x512x128xf32, #tpu.memory_space<vmem>>, vector<1x512x128xf32>
    %10 = vector.shape_cast %9 : vector<1x512x128xf32> to vector<512x128xf32>
    %11 = vector.shape_cast %8 : vector<512x128xf32> to vector<1x512x128xf32>
    tpu.vector_store %arg5[%c0_7, %c0_8, %c0_9], %11 {strides = array<i32>} : memref<1x512x128xf32, #tpu.memory_space<vmem>>, vector<1x512x128xf32>,
    return
  }
  func.func @transform_0(%arg0: i32, %arg1: i32) -> (i32, i32, i32) {
    %c0_i32 = arith.constant 0 : i32
    %c0_i32_0 = arith.constant 0 : i32
    return %arg0, %arg1, %c0_i32 : i32, i32, i32
  }
  func.func @transform_1(%arg0: i32, %arg1: i32) -> (i32, i32, i32) {
    %c0_i32 = arith.constant 0 : i32
    %c0_i32_0 = arith.constant 0 : i32
    %c0_i32_1 = arith.constant 0 : i32
    return %arg0, %c0_i32, %c0_i32_0 : i32, i32, i32
  }
  func.func @transform_2(%arg0: i32, %arg1: i32) -> (i32, i32) {
    %c0_i32 = arith.constant 0 : i32
    %c0_i32_0 = arith.constant 0 : i32
    %c0_i32_1 = arith.constant 0 : i32
    return %c0_i32, %c0_i32_0 : i32, i32
  }
  func.func @transform_3(%arg0: i32, %arg1: i32) -> (i32, i32, i32) {
    %c0_i32 = arith.constant 0 : i32
    %c0_i32_0 = arith.constant 0 : i32
    return %arg0, %arg1, %c0_i32 : i32, i32, i32
  }
}

</mosaic_0001>

<llo_original>
// kernel: _lambda_.7
$region0: #{_lambda_.7}
  #allocation0 [shape = 'u32[]', space=smem, size = 0x4, offset = 0x4, fixed_abs, tag = 'smem constant byte address 0x4 - core index']
  #allocation1 [shape = 'u32[144,128]{1,0:T(1,128)}', space=vmem, size = 0x12000, scoped, tag = 'internal scratch']
  %s0 = inlined_call_operand.vmem [shape: f32[1,512,48], index: 0, kind: input, shape index: {}]
  %s1 = inlined_call_operand.vmem [shape: f32[1,48,128], index: 1, kind: input, shape index: {}]
  %s2 = inlined_call_operand.vmem [shape: f32[1,128], index: 2, kind: input, shape index: {}]
  %s3 = inlined_call_operand.vmem [shape: f32[1,512,128], index: 3, kind: output, shape index: {}]
  %s4 = sld [smem:[#allocation0]]
  $region45: #{_lambda_.7} parent=0
    _
  %s6 = ssub.s32 1, %s4
  %s7 = scalar_select 0, %s6, %s4
  loop: start=0, step=1, limit=4
  $region2: #{_lambda_.7} parent=0 // loop_pre_header
    _
  $region3: #{_lambda_.7} parent=0 // loop_header
    %s9 = sphi 0, %s13
    %p10 = scmp.ge.s32.totalorder %s9, 4
    %s16 = sphi 0, %s28
    %s17 = sphi 0, %s24
    %s18 = sphi 0, %s16
    %s19 = sphi 0, %s17
    %s20 = sphi 0, %s18
    %s21 = sphi 0, %s19
    %s33 = sphi 0, %s35
    %s36 = sphi 0, %s33
    %s37 = sphi 0, %s36
    %s53 = sphi 0, %s37
    %s59 = sphi 0, %s61
    %s62 = sphi 0, %s59
    %s63 = sphi 0, %s62
    %s79 = sphi 0, %s63
    %s83 = sphi 0, %s83
    %s85 = sphi 0, %s83
    %s86 = sphi 0, %s85
    %s100 = sphi 0, %s86
    %s108 = sphi 0, %s110
    %s111 = sphi 0, %s108
    %s112 = sphi 0, %s111
    %s128 = sphi 0, %s112
  $region4: #{_lambda_.7} parent=0 // loop_header_branch
    %12 = sbr.rel (%p10) target = $region8
  $region5: #{_lambda_.7} parent=0 // loop_body
    %s14 = ssub.s32 %s9, 1
    %s15 = ssub.s32 %s9, 2
    %s22 = sadd.s32 1, %s17
    %p23 = scmp.ge.s32.totalorder %s22, 2
    %s24 = scalar_select %p23, 0, %s22
    %s25 = sadd.s32 1, %s16
    %s26 = scalar_select %p23, %s25, %s16
    %p27 = scmp.ge.s32.totalorder %s26, 1
    %s28 = scalar_select %p27, 0, %s26
    %s29 = ssub.s32 %s16, %s28
    %s30 = ssub.s32 %s17, %s24
    %s31 = sor.u32 %s29, %s30
    %p32 = scmp.eq.s32.totalorder %s31, 0
    %s34 = sadd.s32 %s33, 1
    %s35 = scalar_select %p32, %s33, %s34
    %p38 = pneg %p32
    %p39 = scmp.eq.s32.totalorder %s9, 1
    %p40 = por %p38, %p39
    %p41 = scmp.ne.s32.totalorder %s33, %s36
    %p42 = scmp.eq.s32.totalorder %s9, 0
    %p43 = por %p41, %p42
    %p44 = scmp.ne.s32.totalorder %s33, %s36
    %p45 = scmp.eq.s32.totalorder %s14, 1
    %p46 = por %p44, %p45
    %p47 = scmp.ne.s32.totalorder %s36, %s37
    %p48 = scmp.eq.s32.totalorder %s14, 0
    %p49 = por %p47, %p48
    %p50 = scmp.ne.s32.totalorder %s36, %s37
    %p51 = scmp.eq.s32.totalorder %s15, 1
    %p52 = por %p50, %p51
    %p54 = scmp.ne.s32.totalorder %s37, %s53
    %p55 = scmp.eq.s32.totalorder %s15, 0
    %p56 = por %p54, %p55
    %s57 = ssub.s32 %s16, %s28
    %p58 = scmp.eq.s32.totalorder %s57, 0
    %s60 = sadd.s32 %s59, 1
    %s61 = scalar_select %p58, %s59, %s60
    %p64 = pneg %p58
    %p65 = scmp.eq.s32.totalorder %s9, 1
    %p66 = por %p64, %p65
    %p67 = scmp.ne.s32.totalorder %s59, %s62
    %p68 = scmp.eq.s32.totalorder %s9, 0
    %p69 = por %p67, %p68
    %p70 = scmp.ne.s32.totalorder %s59, %s62
    %p71 = scmp.eq.s32.totalorder %s14, 1
    %p72 = por %p70, %p71
    %p73 = scmp.ne.s32.totalorder %s62, %s63
    %p74 = scmp.eq.s32.totalorder %s14, 0
    %p75 = por %p73, %p74
    %p76 = scmp.ne.s32.totalorder %s62, %s63
    %p77 = scmp.eq.s32.totalorder %s15, 1
    %p78 = por %p76, %p77
    %p80 = scmp.ne.s32.totalorder %s63, %s79
    %p81 = scmp.eq.s32.totalorder %s15, 0
    %p82 = por %p80, %p81
    %s84 = sadd.s32 %s83, 1
    %p87 = scmp.eq.s32.totalorder %s9, 1
    %p88 = scmp.ne.s32.totalorder %s83, %s85
    %p89 = scmp.eq.s32.totalorder %s9, 0
    %p90 = por %p88, %p89
    %p91 = scmp.ne.s32.totalorder %s83, %s85
    %p92 = scmp.eq.s32.totalorder %s14, 1
    %p93 = por %p91, %p92
    %p94 = scmp.ne.s32.totalorder %s85, %s86
    %p95 = scmp.eq.s32.totalorder %s14, 0
    %p96 = por %p94, %p95
    %p97 = scmp.ne.s32.totalorder %s85, %s86
    %p98 = scmp.eq.s32.totalorder %s15, 1
    %p99 = por %p97, %p98
    %p101 = scmp.ne.s32.totalorder %s86, %s100
    %p102 = scmp.eq.s32.totalorder %s15, 0
    %p103 = por %p101, %p102
    %s104 = ssub.s32 %s16, %s28
    %s105 = ssub.s32 %s17, %s24
    %s106 = sor.u32 %s104, %s105
    %p107 = scmp.eq.s32.totalorder %s106, 0
    %s109 = sadd.s32 %s108, 1
    %s110 = scalar_select %p107, %s108, %s109
    %p113 = pneg %p107
    %p114 = scmp.eq.s32.totalorder %s9, 1
    %p115 = por %p113, %p114
    %p116 = scmp.ne.s32.totalorder %s108, %s111
    %p117 = scmp.eq.s32.totalorder %s9, 0
    %p118 = por %p116, %p117
    %p119 = scmp.ne.s32.totalorder %s108, %s111
    %p120 = scmp.eq.s32.totalorder %s14, 1
    %p121 = por %p119, %p120
    %p122 = scmp.ne.s32.totalorder %s111, %s112
    %p123 = scmp.eq.s32.totalorder %s14, 0
    %p124 = por %p122, %p123
    %p125 = scmp.ne.s32.totalorder %s111, %s112
    %p126 = scmp.eq.s32.totalorder %s15, 1
    %p127 = por %p125, %p126
    %p129 = scmp.ne.s32.totalorder %s112, %s128
    %p130 = scmp.eq.s32.totalorder %s15, 0
    %p131 = por %p129, %p130
    %p132 = scmp.le.s32.totalorder 1, %s9
    %p133 = scmp.lt.s32.totalorder %s9, 3
    %p134 = pnand %p132, %p133
    %p135 = pneg %p134
    // Predicated region
    $region9: #{_lambda_.7} parent=5 // pred_check
      _
    $region10: #{_lambda_.7} parent=5 // pred_check_branch
      %137 = sbr.rel (%p134) target = $region12
    $region11: #{_lambda_.7} parent=5 // pred_region
      %s138 = ssub.s32 %s9, 1
      // Predicated region
      $region13: #{_lambda_.7} parent=11 // pred_check
        %p139 = pneg %p75
      $region14: #{_lambda_.7} parent=11 // pred_check_branch
        %141 = sbr.rel (%p139) target = $region16
      $region15: #{_lambda_.7} parent=11 // pred_region
        %p142 = scmp.lt.s32.totalorder %s18, 0
        %s143 = scalar_select %p142, %s18, 0
        %s144 = smul.addr %s143, 6
        %s145 = smul.addr %s144, 8
        %s146 = scalar_lea.vmem %s1, %s145
      $region16: #{_lambda_.7} parent=11 // pred_fallthru
        _
      // Predicated region
      $region17: #{_lambda_.7} parent=11 // pred_check
        %p147 = pneg %p96
      $region18: #{_lambda_.7} parent=11 // pred_check_branch
        %149 = sbr.rel (%p147) target = $region20
      $region19: #{_lambda_.7} parent=11 // pred_region
        _
      $region20: #{_lambda_.7} parent=11 // pred_fallthru
        _
    $region12: #{_lambda_.7} parent=5 // pred_fallthru
      _
    %p150 = scmp.lt.s32.totalorder %s9, 2
    // Predicated region
    $region21: #{_lambda_.7} parent=5 // pred_check
      %p151 = pneg %p150
    $region22: #{_lambda_.7} parent=5 // pred_check_branch
      %153 = sbr.rel (%p151) target = $region24
    $region23: #{_lambda_.7} parent=5 // pred_region
      // Predicated region
      $region25: #{_lambda_.7} parent=23 // pred_check
        %p154 = pneg %p43
      $region26: #{_lambda_.7} parent=23 // pred_check_branch
        %156 = sbr.rel (%p154) target = $region28
      $region27: #{_lambda_.7} parent=23 // pred_region
        %s157 = smul.u32 32, %s17
        %p158 = scmp.lt.s32.totalorder %s16, 0
        %s159 = scalar_select %p158, %s16, 0
        %p160 = scmp.lt.s32.totalorder %s157, 63
        %s161 = scalar_select %p160, %s157, 63
        %s162 = smul.addr %s159, 64
        %s163 = sadd.s32 %s161, %s162
        %s164 = smul.addr %s163, 8
        %s165 = scalar_lea.vmem %s0, %s164
        %s166 = smul.u32 32, %s17
      $region28: #{_lambda_.7} parent=23 // pred_fallthru
        _
    $region24: #{_lambda_.7} parent=5 // pred_fallthru
      _
    %p167 = scmp.le.s32.totalorder 1, %s9
    %p168 = scmp.lt.s32.totalorder %s9, 3
    %p169 = pnand %p167, %p168
    %p170 = pneg %p169
    // Predicated region
    $region29: #{_lambda_.7} parent=5 // pred_check
      _
    $region30: #{_lambda_.7} parent=5 // pred_check_branch
      %172 = sbr.rel (%p169) target = $region32
    $region31: #{_lambda_.7} parent=5 // pred_region
      %s173 = ssub.s32 %s9, 1
      %s174 = smul.u32 32, %s19
      %p175 = scmp.lt.s32.totalorder %s18, 0
      %s176 = scalar_select %p175, %s18, 0
      %p177 = scmp.lt.s32.totalorder %s174, 63
      %s178 = scalar_select %p177, %s174, 63
      %s179 = smul.addr %s176, 64
      %s180 = sadd.s32 %s178, %s179
      %s181 = smul.addr %s180, 8
      %s182 = scalar_lea.vmem %s0, %s181
      %p183 = pneg %p49
      %p184 = pneg %p46
      %p185 = scmp.lt.s32.totalorder %s18, 0
      %s186 = scalar_select %p185, %s18, 0
      %s187 = smul.addr %s186, 6
      %s188 = smul.addr %s187, 8
      %s189 = scalar_lea.vmem %s1, %s188
      %p190 = pneg %p75
      %p191 = pneg %p72
      %p192 = pneg %p96
      %p193 = pneg %p93
      %p194 = pneg %p124
      %p195 = pneg %p121
      %s196 = smul.u32 32, %s19
      %p197 = scmp.lt.s32.totalorder %s18, 0
      %s198 = scalar_select %p197, %s18, 0
      %p199 = scmp.lt.s32.totalorder %s196, 63
      %s200 = scalar_select %p199, %s196, 63
      %s201 = smul.addr %s198, 64
      %s202 = sadd.s32 %s200, %s201
      %s203 = smul.addr %s202, 8
      %s204 = scalar_lea.vmem %s3, %s203
      %s205 = smul.u32 32, %s19
      %p206 = scmp.lt.s32.totalorder %s18, 0
      %s207 = scalar_select %p206, %s18, 0
      %p208 = scmp.lt.s32.totalorder %s205, 63
      %s209 = scalar_select %p208, %s205, 63
      %s210 = smul.addr %s207, 64
      %s211 = sadd.s32 %s209, %s210
      %s212 = smul.addr %s211, 8
      %s213 = scalar_lea.vmem %s0, %s212
      %s214 = smul.u32 32, %s19
      %p215 = scmp.lt.s32.totalorder %s18, 0
      %s216 = scalar_select %p215, %s18, 0
      %s217 = smul.addr %s216, 6
      %s218 = smul.addr %s217, 8
      %s219 = scalar_lea.vmem %s1, %s218
      %s220 = smul.u32 32, %s19
      %p221 = scmp.lt.s32.totalorder %s18, 0
      %s222 = scalar_select %p221, %s18, 0
      %p223 = scmp.lt.s32.totalorder %s220, 63
      %s224 = scalar_select %p223, %s220, 63
      %s225 = smul.addr %s222, 64
      %s226 = sadd.s32 %s224, %s225
      %s227 = smul.addr %s226, 8
      %s228 = scalar_lea.vmem %s3, %s227
      %s229 = smul.u32 32, %s19
      %v230 = vld [vmem:[%s213] sm:$0xff]
      %v231 = vld [vmem:[%s213 + $0x8] sm:$0xff]
      %v232 = vld [vmem:[%s213 + $0x10] sm:$0xff]
      %v233 = vld [vmem:[%s213 + $0x18] sm:$0xff]
      %v234 = vld [vmem:[%s213 + $0x20] sm:$0xff]
      %v235 = vld [vmem:[%s213 + $0x28] sm:$0xff]
      %v236 = vld [vmem:[%s213 + $0x30] sm:$0xff]
      %v237 = vld [vmem:[%s213 + $0x38] sm:$0xff]
      %v238 = vld [vmem:[%s213 + $0x40] sm:$0xff]
      %v239 = vld [vmem:[%s213 + $0x48] sm:$0xff]
      %v240 = vld [vmem:[%s213 + $0x50] sm:$0xff]
      %v241 = vld [vmem:[%s213 + $0x58] sm:$0xff]
      %v242 = vld [vmem:[%s213 + $0x60] sm:$0xff]
      %v243 = vld [vmem:[%s213 + $0x68] sm:$0xff]
      %v244 = vld [vmem:[%s213 + $0x70] sm:$0xff]
      %v245 = vld [vmem:[%s213 + $0x78] sm:$0xff]
      %v246 = vld [vmem:[%s213 + $0x80] sm:$0xff]
      %v247 = vld [vmem:[%s213 + $0x88] sm:$0xff]
      %v248 = vld [vmem:[%s213 + $0x90] sm:$0xff]
      %v249 = vld [vmem:[%s213 + $0x98] sm:$0xff]
      %v250 = vld [vmem:[%s213 + $0xa0] sm:$0xff]
      %v251 = vld [vmem:[%s213 + $0xa8] sm:$0xff]
      %v252 = vld [vmem:[%s213 + $0xb0] sm:$0xff]
      %v253 = vld [vmem:[%s213 + $0xb8] sm:$0xff]
      %v254 = vld [vmem:[%s213 + $0xc0] sm:$0xff]
      %v255 = vld [vmem:[%s213 + $0xc8] sm:$0xff]
      %v256 = vld [vmem:[%s213 + $0xd0] sm:$0xff]
      %v257 = vld [vmem:[%s213 + $0xd8] sm:$0xff]
      %v258 = vld [vmem:[%s213 + $0xe0] sm:$0xff]
      %v259 = vld [vmem:[%s213 + $0xe8] sm:$0xff]
      %v260 = vld [vmem:[%s213 + $0xf0] sm:$0xff]
      %v261 = vld [vmem:[%s213 + $0xf8] sm:$0xff]
      %v262 = vld [vmem:[%s219] sm:$0xff]
      %v263 = vld [vmem:[%s219 + $0x8] sm:$0xff]
      %v264 = vld [vmem:[%s219 + $0x10] sm:$0xff]
      %v265 = vld [vmem:[%s219 + $0x18] sm:$0xff]
      %v266 = vld [vmem:[%s219 + $0x20] sm:$0xff]
      %v267 = vld [vmem:[%s219 + $0x28] sm:$0xff]
      %v268 = vld [vmem:[%s2] sm:$0x1]
      %v270 = vlaneseq
      %v271 = vshrl.u32 %v270, 7
      %v272 = vsub.s32 0, %v271
      %v273 = vrot.slane %v268, %v272
      %vm275 = vcmask 392192
      %v277 = vsel %vm275, %v230, 0
      %v280 = vsel %vm275, %v231, 0
      %v283 = vsel %vm275, %v232, 0
      %v286 = vsel %vm275, %v233, 0
      %v289 = vsel %vm275, %v234, 0
      %v292 = vsel %vm275, %v235, 0
      %v295 = vsel %vm275, %v236, 0
      %v298 = vsel %vm275, %v237, 0
      %v301 = vsel %vm275, %v238, 0
      %v304 = vsel %vm275, %v239, 0
      %v307 = vsel %vm275, %v240, 0
      %v310 = vsel %vm275, %v241, 0
      %v313 = vsel %vm275, %v242, 0
      %v316 = vsel %vm275, %v243, 0
      %v319 = vsel %vm275, %v244, 0
      %v322 = vsel %vm275, %v245, 0
      %v325 = vsel %vm275, %v246, 0
      %v328 = vsel %vm275, %v247, 0
      %v331 = vsel %vm275, %v248, 0
      %v334 = vsel %vm275, %v249, 0
      %v337 = vsel %vm275, %v250, 0
      %v340 = vsel %vm275, %v251, 0
      %v343 = vsel %vm275, %v252, 0
      %v346 = vsel %vm275, %v253, 0
      %v349 = vsel %vm275, %v254, 0
      %v352 = vsel %vm275, %v255, 0
      %v355 = vsel %vm275, %v256, 0
      %v358 = vsel %vm275, %v257, 0
      %v361 = vsel %vm275, %v258, 0
      %v364 = vsel %vm275, %v259, 0
      %v367 = vsel %vm275, %v260, 0
      %v370 = vsel %vm275, %v261, 0
      %372 = vmatprep.subr.mxu0 0.0
      %373 = vmatpush1.msra.mxu0 %v262
      %374 = vmatprep.subr.mxu0 0.0
      %375 = vmatpush1.msra.mxu0 %v263
      %376 = vmatprep.subr.mxu0 0.0
      %377 = vmatpush1.msra.mxu0 %v264
      %378 = vmatprep.subr.mxu0 0.0
      %379 = vmatpush1.msra.mxu0 %v265
      %380 = vmatprep.subr.mxu0 0.0
      %381 = vmatpush1.msra.mxu0 %v266
      %382 = vmatprep.subr.mxu0 0.0
      %383 = vmatpush1.msra.mxu0 %v267
      %384 = vmatprep.subr.mxu0 0.0
      %385 = vmatpush1.msra.mxu0 0.0
      %386 = vmatprep.subr.mxu0 0.0
      %387 = vmatpush1.msra.mxu0 0.0
      %388 = vmatprep.subr.mxu0 0.0
      %389 = vmatpush1.msra.mxu0 0.0
      %390 = vmatprep.subr.mxu0 0.0
      %391 = vmatpush1.msra.mxu0 0.0
      %392 = vmatprep.subr.mxu0 0.0
      %393 = vmatpush1.msra.mxu0 0.0
      %394 = vmatprep.subr.mxu0 0.0
      %395 = vmatpush1.msra.mxu0 0.0
      %396 = vmatprep.subr.mxu0 0.0
      %397 = vmatpush1.msra.mxu0 0.0
      %398 = vmatprep.subr.mxu0 0.0
      %399 = vmatpush1.msra.mxu0 0.0
      %400 = vmatprep.subr.mxu0 0.0
      %401 = vmatpush1.msra.mxu0 0.0
      %402 = vmatprep.subr.mxu0 0.0
      %403 = vmatpush1.msra.mxu0 0.0
      %404 = vmatprep.subr.mxu0 0.0
      %405 = vmatpush1.msra.mxu0 0.0
      %406 = vmatprep.subr.mxu0 0.0
      %407 = vmatpush1.msra.mxu0 0.0
      %408 = vmatprep.subr.mxu0 0.0
      %409 = vmatpush1.msra.mxu0 0.0
      %410 = vmatprep.subr.mxu0 0.0
      %411 = vmatpush1.msra.mxu0 0.0
      %412 = vmatprep.subr.mxu0 0.0
      %413 = vmatpush1.msra.mxu0 0.0
      %414 = vmatprep.subr.mxu0 0.0
      %415 = vmatpush1.msra.mxu0 0.0
      %416 = vmatprep.subr.mxu0 0.0
      %417 = vmatpush1.msra.mxu0 0.0
      %418 = vmatprep.subr.mxu0 0.0
      %419 = vmatpush1.msra.mxu0 0.0
      %420 = vmatprep.subr.mxu0 0.0
      %421 = vmatpush1.msra.mxu0 0.0
      %422 = vmatprep.subr.mxu0 0.0
      %423 = vmatpush1.msra.mxu0 0.0
      %424 = vmatprep.subr.mxu0 0.0
      %425 = vmatpush1.msra.mxu0 0.0
      %426 = vmatprep.subr.mxu0 0.0
      %427 = vmatpush1.msra.mxu0 0.0
      %428 = vmatprep.subr.mxu0 0.0
      %429 = vmatpush1.msra.mxu0 0.0
      %430 = vmatprep.subr.mxu0 0.0
      %431 = vmatpush1.msra.mxu0 0.0
      %432 = vmatprep.subr.mxu0 0.0
      %433 = vmatpush1.msra.mxu0 0.0
      %434 = vmatprep.subr.mxu0 0.0
      %435 = vmatpush1.msra.mxu0 0.0
      %436 = vmatprep.mubr.f32.mxu0 0.0
      %437 = vmatmul.mubr.f32.gmra.mrb[0].mxu0 %v277
      %v438 = vpop.f32.mrb[0].mxu0
      %v439 = vadd.f32 %v273, %v438
      %v440 = vpop.f32.mrb[0].mxu0
      %441 = vmatprep.mubr.f32.mxu0 0.0
      %442 = vmatmul.mubr.f32.gmra.mrb[0].mxu0 %v280
      %v443 = vpop.f32.mrb[0].mxu0
      %v444 = vadd.f32 %v273, %v443
      %v445 = vpop.f32.mrb[0].mxu0
      %446 = vmatprep.mubr.f32.mxu0 0.0
      %447 = vmatmul.mubr.f32.gmra.mrb[0].mxu0 %v283
      %v448 = vpop.f32.mrb[0].mxu0
      %v449 = vadd.f32 %v273, %v448
      %v450 = vpop.f32.mrb[0].mxu0
      %451 = vmatprep.mubr.f32.mxu0 0.0
      %452 = vmatmul.mubr.f32.gmra.mrb[0].mxu0 %v286
      %v453 = vpop.f32.mrb[0].mxu0
      %v454 = vadd.f32 %v273, %v453
      %v455 = vpop.f32.mrb[0].mxu0
      %456 = vmatprep.mubr.f32.mxu0 0.0
      %457 = vmatmul.mubr.f32.gmra.mrb[0].mxu0 %v289
      %v458 = vpop.f32.mrb[0].mxu0
      %v459 = vadd.f32 %v273, %v458
      %v460 = vpop.f32.mrb[0].mxu0
      %461 = vmatprep.mubr.f32.mxu0 0.0
      %462 = vmatmul.mubr.f32.gmra.mrb[0].mxu0 %v292
      %v463 = vpop.f32.mrb[0].mxu0
      %v464 = vadd.f32 %v273, %v463
      %v465 = vpop.f32.mrb[0].mxu0
      %466 = vmatprep.mubr.f32.mxu0 0.0
      %467 = vmatmul.mubr.f32.gmra.mrb[0].mxu0 %v295
      %v468 = vpop.f32.mrb[0].mxu0
      %v469 = vadd.f32 %v273, %v468
      %v470 = vpop.f32.mrb[0].mxu0
      %471 = vmatprep.mubr.f32.mxu0 0.0
      %472 = vmatmul.mubr.f32.gmra.mrb[0].mxu0 %v298
      %v473 = vpop.f32.mrb[0].mxu0
      %v474 = vadd.f32 %v273, %v473
      %v475 = vpop.f32.mrb[0].mxu0
      %476 = vmatprep.mubr.f32.mxu0 0.0
      %477 = vmatmul.mubr.f32.gmra.mrb[0].mxu0 %v301
      %v478 = vpop.f32.mrb[0].mxu0
      %v479 = vadd.f32 %v273, %v478
      %v480 = vpop.f32.mrb[0].mxu0
      %481 = vmatprep.mubr.f32.mxu0 0.0
      %482 = vmatmul.mubr.f32.gmra.mrb[0].mxu0 %v304
      %v483 = vpop.f32.mrb[0].mxu0
      %v484 = vadd.f32 %v273, %v483
      %v485 = vpop.f32.mrb[0].mxu0
      %486 = vmatprep.mubr.f32.mxu0 0.0
      %487 = vmatmul.mubr.f32.gmra.mrb[0].mxu0 %v307
      %v488 = vpop.f32.mrb[0].mxu0
      %v489 = vadd.f32 %v273, %v488
      %v490 = vpop.f32.mrb[0].mxu0
      %491 = vmatprep.mubr.f32.mxu0 0.0
      %492 = vmatmul.mubr.f32.gmra.mrb[0].mxu0 %v310
      %v493 = vpop.f32.mrb[0].mxu0
      %v494 = vadd.f32 %v273, %v493
      %v495 = vpop.f32.mrb[0].mxu0
      %496 = vmatprep.mubr.f32.mxu0 0.0
      %497 = vmatmul.mubr.f32.gmra.mrb[0].mxu0 %v313
      %v498 = vpop.f32.mrb[0].mxu0
      %v499 = vadd.f32 %v273, %v498
      %v500 = vpop.f32.mrb[0].mxu0
      %501 = vmatprep.mubr.f32.mxu0 0.0
      %502 = vmatmul.mubr.f32.gmra.mrb[0].mxu0 %v316
      %v503 = vpop.f32.mrb[0].mxu0
      %v504 = vadd.f32 %v273, %v503
      %v505 = vpop.f32.mrb[0].mxu0
      %506 = vmatprep.mubr.f32.mxu0 0.0
      %507 = vmatmul.mubr.f32.gmra.mrb[0].mxu0 %v319
      %v508 = vpop.f32.mrb[0].mxu0
      %v509 = vadd.f32 %v273, %v508
      %v510 = vpop.f32.mrb[0].mxu0
      %511 = vmatprep.mubr.f32.mxu0 0.0
      %512 = vmatmul.mubr.f32.gmra.mrb[0].mxu0 %v322
      %v513 = vpop.f32.mrb[0].mxu0
      %v514 = vadd.f32 %v273, %v513
      %v515 = vpop.f32.mrb[0].mxu0
      %516 = vmatprep.mubr.f32.mxu0 0.0
      %517 = vmatmul.mubr.f32.gmra.mrb[0].mxu0 %v325
      %v518 = vpop.f32.mrb[0].mxu0
      %v519 = vadd.f32 %v273, %v518
      %v520 = vpop.f32.mrb[0].mxu0
      %521 = vmatprep.mubr.f32.mxu0 0.0
      %522 = vmatmul.mubr.f32.gmra.mrb[0].mxu0 %v328
      %v523 = vpop.f32.mrb[0].mxu0
      %v524 = vadd.f32 %v273, %v523
      %v525 = vpop.f32.mrb[0].mxu0
      %526 = vmatprep.mubr.f32.mxu0 0.0
      %527 = vmatmul.mubr.f32.gmra.mrb[0].mxu0 %v331
      %v528 = vpop.f32.mrb[0].mxu0
      %v529 = vadd.f32 %v273, %v528
      %v530 = vpop.f32.mrb[0].mxu0
      %531 = vmatprep.mubr.f32.mxu0 0.0
      %532 = vmatmul.mubr.f32.gmra.mrb[0].mxu0 %v334
      %v533 = vpop.f32.mrb[0].mxu0
      %v534 = vadd.f32 %v273, %v533
      %v535 = vpop.f32.mrb[0].mxu0
      %536 = vmatprep.mubr.f32.mxu0 0.0
      %537 = vmatmul.mubr.f32.gmra.mrb[0].mxu0 %v337
      %v538 = vpop.f32.mrb[0].mxu0
      %v539 = vadd.f32 %v273, %v538
      %v540 = vpop.f32.mrb[0].mxu0
      %541 = vmatprep.mubr.f32.mxu0 0.0
      %542 = vmatmul.mubr.f32.gmra.mrb[0].mxu0 %v340
      %v543 = vpop.f32.mrb[0].mxu0
      %v544 = vadd.f32 %v273, %v543
      %v545 = vpop.f32.mrb[0].mxu0
      %546 = vmatprep.mubr.f32.mxu0 0.0
      %547 = vmatmul.mubr.f32.gmra.mrb[0].mxu0 %v343
      %v548 = vpop.f32.mrb[0].mxu0
      %v549 = vadd.f32 %v273, %v548
      %v550 = vpop.f32.mrb[0].mxu0
      %551 = vmatprep.mubr.f32.mxu0 0.0
      %552 = vmatmul.mubr.f32.gmra.mrb[0].mxu0 %v346
      %v553 = vpop.f32.mrb[0].mxu0
      %v554 = vadd.f32 %v273, %v553
      %v555 = vpop.f32.mrb[0].mxu0
      %556 = vmatprep.mubr.f32.mxu0 0.0
      %557 = vmatmul.mubr.f32.gmra.mrb[0].mxu0 %v349
      %v558 = vpop.f32.mrb[0].mxu0
      %v559 = vadd.f32 %v273, %v558
      %v560 = vpop.f32.mrb[0].mxu0
      %561 = vmatprep.mubr.f32.mxu0 0.0
      %562 = vmatmul.mubr.f32.gmra.mrb[0].mxu0 %v352
      %v563 = vpop.f32.mrb[0].mxu0
      %v564 = vadd.f32 %v273, %v563
      %v565 = vpop.f32.mrb[0].mxu0
      %566 = vmatprep.mubr.f32.mxu0 0.0
      %567 = vmatmul.mubr.f32.gmra.mrb[0].mxu0 %v355
      %v568 = vpop.f32.mrb[0].mxu0
      %v569 = vadd.f32 %v273, %v568
      %v570 = vpop.f32.mrb[0].mxu0
      %571 = vmatprep.mubr.f32.mxu0 0.0
      %572 = vmatmul.mubr.f32.gmra.mrb[0].mxu0 %v358
      %v573 = vpop.f32.mrb[0].mxu0
      %v574 = vadd.f32 %v273, %v573
      %v575 = vpop.f32.mrb[0].mxu0
      %576 = vmatprep.mubr.f32.mxu0 0.0
      %577 = vmatmul.mubr.f32.gmra.mrb[0].mxu0 %v361
      %v578 = vpop.f32.mrb[0].mxu0
      %v579 = vadd.f32 %v273, %v578
      %v580 = vpop.f32.mrb[0].mxu0
      %581 = vmatprep.mubr.f32.mxu0 0.0
      %582 = vmatmul.mubr.f32.gmra.mrb[0].mxu0 %v364
      %v583 = vpop.f32.mrb[0].mxu0
      %v584 = vadd.f32 %v273, %v583
      %v585 = vpop.f32.mrb[0].mxu0
      %586 = vmatprep.mubr.f32.mxu0 0.0
      %587 = vmatmul.mubr.f32.gmra.mrb[0].mxu0 %v367
      %v588 = vpop.f32.mrb[0].mxu0
      %v589 = vadd.f32 %v273, %v588
      %v590 = vpop.f32.mrb[0].mxu0
      %591 = vmatprep.mubr.f32.mxu0 0.0
      %592 = vmatmul.mubr.f32.gmra.mrb[0].mxu0 %v370
      %v593 = vpop.f32.mrb[0].mxu0
      %v594 = vadd.f32 %v273, %v593
      %v595 = vpop.f32.mrb[0].mxu0
      %596 = vdwg.mxu0
      %v597 = vmax.f32 %v439, 0.0
      %v598 = vmax.f32 %v444, 0.0
      %v599 = vmax.f32 %v449, 0.0
      %v600 = vmax.f32 %v454, 0.0
      %v601 = vmax.f32 %v459, 0.0
      %v602 = vmax.f32 %v464, 0.0
      %v603 = vmax.f32 %v469, 0.0
      %v604 = vmax.f32 %v474, 0.0
      %v605 = vmax.f32 %v479, 0.0
      %v606 = vmax.f32 %v484, 0.0
      %v607 = vmax.f32 %v489, 0.0
      %v608 = vmax.f32 %v494, 0.0
      %v609 = vmax.f32 %v499, 0.0
      %v610 = vmax.f32 %v504, 0.0
      %v611 = vmax.f32 %v509, 0.0
      %v612 = vmax.f32 %v514, 0.0
      %v613 = vmax.f32 %v519, 0.0
      %v614 = vmax.f32 %v524, 0.0
      %v615 = vmax.f32 %v529, 0.0
      %v616 = vmax.f32 %v534, 0.0
      %v617 = vmax.f32 %v539, 0.0
      %v618 = vmax.f32 %v544, 0.0
      %v619 = vmax.f32 %v549, 0.0
      %v620 = vmax.f32 %v554, 0.0
      %v621 = vmax.f32 %v559, 0.0
      %v622 = vmax.f32 %v564, 0.0
      %v623 = vmax.f32 %v569, 0.0
      %v624 = vmax.f32 %v574, 0.0
      %v625 = vmax.f32 %v579, 0.0
      %v626 = vmax.f32 %v584, 0.0
      %v627 = vmax.f32 %v589, 0.0
      %v628 = vmax.f32 %v594, 0.0
      %629 = vst [vmem:[%s228] sm:$0xff] %v597
      %630 = vst [vmem:[%s228 + $0x8] sm:$0xff] %v598
      %631 = vst [vmem:[%s228 + $0x10] sm:$0xff] %v599
      %632 = vst [vmem:[%s228 + $0x18] sm:$0xff] %v600
      %633 = vst [vmem:[%s228 + $0x20] sm:$0xff] %v601
      %634 = vst [vmem:[%s228 + $0x28] sm:$0xff] %v602
      %635 = vst [vmem:[%s228 + $0x30] sm:$0xff] %v603
      %636 = vst [vmem:[%s228 + $0x38] sm:$0xff] %v604
      %637 = vst [vmem:[%s228 + $0x40] sm:$0xff] %v605
      %638 = vst [vmem:[%s228 + $0x48] sm:$0xff] %v606
      %639 = vst [vmem:[%s228 + $0x50] sm:$0xff] %v607
      %640 = vst [vmem:[%s228 + $0x58] sm:$0xff] %v608
      %641 = vst [vmem:[%s228 + $0x60] sm:$0xff] %v609
      %642 = vst [vmem:[%s228 + $0x68] sm:$0xff] %v610
      %643 = vst [vmem:[%s228 + $0x70] sm:$0xff] %v611
      %644 = vst [vmem:[%s228 + $0x78] sm:$0xff] %v612
      %645 = vst [vmem:[%s228 + $0x80] sm:$0xff] %v613
      %646 = vst [vmem:[%s228 + $0x88] sm:$0xff] %v614
      %647 = vst [vmem:[%s228 + $0x90] sm:$0xff] %v615
      %648 = vst [vmem:[%s228 + $0x98] sm:$0xff] %v616
      %649 = vst [vmem:[%s228 + $0xa0] sm:$0xff] %v617
      %650 = vst [vmem:[%s228 + $0xa8] sm:$0xff] %v618
      %651 = vst [vmem:[%s228 + $0xb0] sm:$0xff] %v619
      %652 = vst [vmem:[%s228 + $0xb8] sm:$0xff] %v620
      %653 = vst [vmem:[%s228 + $0xc0] sm:$0xff] %v621
      %654 = vst [vmem:[%s228 + $0xc8] sm:$0xff] %v622
      %655 = vst [vmem:[%s228 + $0xd0] sm:$0xff] %v623
      %656 = vst [vmem:[%s228 + $0xd8] sm:$0xff] %v624
      %657 = vst [vmem:[%s228 + $0xe0] sm:$0xff] %v625
      %658 = vst [vmem:[%s228 + $0xe8] sm:$0xff] %v626
      %659 = vst [vmem:[%s228 + $0xf0] sm:$0xff] %v627
      %660 = vst [vmem:[%s228 + $0xf8] sm:$0xff] %v628
      %s661 = smul.u32 32, %s19
      %p662 = scmp.lt.s32.totalorder %s18, 0
      %s663 = scalar_select %p662, %s18, 0
      %p664 = scmp.lt.s32.totalorder %s661, 63
      %s665 = scalar_select %p664, %s661, 63
      %s666 = smul.addr %s663, 64
      %s667 = sadd.s32 %s665, %s666
      %s668 = smul.addr %s667, 8
      %s669 = scalar_lea.vmem %s3, %s668
      // Predicated region
      $region33: #{_lambda_.7} parent=31 // pred_check
        %p670 = pneg %p121
      $region34: #{_lambda_.7} parent=31 // pred_check_branch
        %672 = sbr.rel (%p670) target = $region36
      $region35: #{_lambda_.7} parent=31 // pred_region
        %s673 = smul.u32 32, %s19
      $region36: #{_lambda_.7} parent=31 // pred_fallthru
        _
    $region32: #{_lambda_.7} parent=5 // pred_fallthru
      _
    %p674 = scmp.le.s32.totalorder 2, %s9
    // Predicated region
    $region37: #{_lambda_.7} parent=5 // pred_check
      %p675 = pneg %p674
    $region38: #{_lambda_.7} parent=5 // pred_check_branch
      %677 = sbr.rel (%p675) target = $region40
    $region39: #{_lambda_.7} parent=5 // pred_region
      %s678 = ssub.s32 %s9, 2
      // Predicated region
      $region41: #{_lambda_.7} parent=39 // pred_check
        %p679 = pneg %p127
      $region42: #{_lambda_.7} parent=39 // pred_check_branch
        %681 = sbr.rel (%p679) target = $region44
      $region43: #{_lambda_.7} parent=39 // pred_region
        %s682 = smul.u32 32, %s21
        %p683 = scmp.lt.s32.totalorder %s20, 0
        %s684 = scalar_select %p683, %s20, 0
        %p685 = scmp.lt.s32.totalorder %s682, 63
        %s686 = scalar_select %p685, %s682, 63
        %s687 = smul.addr %s684, 64
        %s688 = sadd.s32 %s686, %s687
        %s689 = smul.addr %s688, 8
        %s690 = scalar_lea.vmem %s3, %s689
      $region44: #{_lambda_.7} parent=39 // pred_fallthru
        _
    $region40: #{_lambda_.7} parent=5 // pred_fallthru
      _
  $region6: #{_lambda_.7} parent=0 // loop_footer
    %s13 = sadd.s32 1, %s9
  $region7: #{_lambda_.7} parent=0 // loop_footer_branch
    %8 = sbr.rel target = $region3
  $region8: #{_lambda_.7} parent=0 // loop_exit
    _

// kernel: _lambda_.8
$region0: #{_lambda_.8}
  #allocation0 [shape = 'u32[]', space=smem, size = 0x4, offset = 0x4, fixed_abs, tag = 'smem constant byte address 0x4 - core index']
  #allocation1 [shape = 'u32[144,128]{1,0:T(1,128)}', space=vmem, size = 0x12000, scoped, tag = 'internal scratch']
  %s0 = inlined_call_operand.vmem [shape: f32[1,128,1024], index: 0, kind: input, shape index: {}]
  %s1 = inlined_call_operand.vmem [shape: f32[1,1024,128], index: 1, kind: input, shape index: {}]
  %s2 = inlined_call_operand.vmem [shape: f32[1,128], index: 2, kind: input, shape index: {}]
  %s3 = inlined_call_operand.vmem [shape: f32[1,128,128], index: 3, kind: output, shape index: {}]
  %s4 = sld [smem:[#allocation0]]
  $region22: #{_lambda_.8} parent=0
    _
  %s6 = ssub.s32 1, %s4
  %s7 = scalar_select 0, %s6, %s4
  // Predicated region
  $region2: #{_lambda_.8} parent=0 // pred_check
    _
  $region3: #{_lambda_.8} parent=0 // pred_check_branch
    %9 = sbr.rel (0) target = $region5
  $region4: #{_lambda_.8} parent=0 // pred_region
    _
  $region5: #{_lambda_.8} parent=0 // pred_fallthru
    _
  // Predicated region
  $region6: #{_lambda_.8} parent=0 // pred_check
    _
  $region7: #{_lambda_.8} parent=0 // pred_check_branch
    %11 = sbr.rel (0) target = $region9
  $region8: #{_lambda_.8} parent=0 // pred_region
    _
  $region9: #{_lambda_.8} parent=0 // pred_fallthru
    _
  // Predicated region
  $region10: #{_lambda_.8} parent=0 // pred_check
    _
  $region11: #{_lambda_.8} parent=0 // pred_check_branch
    %13 = sbr.rel (0) target = $region13
  $region12: #{_lambda_.8} parent=0 // pred_region
    _
  $region13: #{_lambda_.8} parent=0 // pred_fallthru
    _
  %v14 = vld [vmem:[%s0] sm:$0xff]
  %v15 = vld [vmem:[%s0 + $0x8] sm:$0xff]
  %v16 = vld [vmem:[%s0 + $0x10] sm:$0xff]
  %v17 = vld [vmem:[%s0 + $0x18] sm:$0xff]
  %v18 = vld [vmem:[%s0 + $0x20] sm:$0xff]
  %v19 = vld [vmem:[%s0 + $0x28] sm:$0xff]
  %v20 = vld [vmem:[%s0 + $0x30] sm:$0xff]
  %v21 = vld [vmem:[%s0 + $0x38] sm:$0xff]
  %v22 = vld [vmem:[%s0 + $0x40] sm:$0xff]
  %v23 = vld [vmem:[%s0 + $0x48] sm:$0xff]
  %v24 = vld [vmem:[%s0 + $0x50] sm:$0xff]
  %v25 = vld [vmem:[%s0 + $0x58] sm:$0xff]
  %v26 = vld [vmem:[%s0 + $0x60] sm:$0xff]
  %v27 = vld [vmem:[%s0 + $0x68] sm:$0xff]
  %v28 = vld [vmem:[%s0 + $0x70] sm:$0xff]
  %v29 = vld [vmem:[%s0 + $0x78] sm:$0xff]
  %v30 = vld [vmem:[%s0 + $0x80] sm:$0xff]
  %v31 = vld [vmem:[%s0 + $0x88] sm:$0xff]
  %v32 = vld [vmem:[%s0 + $0x90] sm:$0xff]
  %v33 = vld [vmem:[%s0 + $0x98] sm:$0xff]
  %v34 = vld [vmem:[%s0 + $0xa0] sm:$0xff]
  %v35 = vld [vmem:[%s0 + $0xa8] sm:$0xff]
  %v36 = vld [vmem:[%s0 + $0xb0] sm:$0xff]
  %v37 = vld [vmem:[%s0 + $0xb8] sm:$0xff]
  %v38 = vld [vmem:[%s0 + $0xc0] sm:$0xff]
  %v39 = vld [vmem:[%s0 + $0xc8] sm:$0xff]
  %v40 = vld [vmem:[%s0 + $0xd0] sm:$0xff]
  %v41 = vld [vmem:[%s0 + $0xd8] sm:$0xff]
  %v42 = vld [vmem:[%s0 + $0xe0] sm:$0xff]
  %v43 = vld [vmem:[%s0 + $0xe8] sm:$0xff]
  %v44 = vld [vmem:[%s0 + $0xf0] sm:$0xff]
  %v45 = vld [vmem:[%s0 + $0xf8] sm:$0xff]
  %v46 = vld [vmem:[%s0 + $0x100] sm:$0xff]
  %v47 = vld [vmem:[%s0 + $0x108] sm:$0xff]
  %v48 = vld [vmem:[%s0 + $0x110] sm:$0xff]
  %v49 = vld [vmem:[%s0 + $0x118] sm:$0xff]
  %v50 = vld [vmem:[%s0 + $0x120] sm:$0xff]
  %v51 = vld [vmem:[%s0 + $0x128] sm:$0xff]
  %v52 = vld [vmem:[%s0 + $0x130] sm:$0xff]
  %v53 = vld [vmem:[%s0 + $0x138] sm:$0xff]
  %v54 = vld [vmem:[%s0 + $0x140] sm:$0xff]
  %v55 = vld [vmem:[%s0 + $0x148] sm:$0xff]
  %v56 = vld [vmem:[%s0 + $0x150] sm:$0xff]
  %v57 = vld [vmem:[%s0 + $0x158] sm:$0xff]
  %v58 = vld [vmem:[%s0 + $0x160] sm:$0xff]
  %v59 = vld [vmem:[%s0 + $0x168] sm:$0xff]
  %v60 = vld [vmem:[%s0 + $0x170] sm:$0xff]
  %v61 = vld [vmem:[%s0 + $0x178] sm:$0xff]
  %v62 = vld [vmem:[%s0 + $0x180] sm:$0xff]
  %v63 = vld [vmem:[%s0 + $0x188] sm:$0xff]
  %v64 = vld [vmem:[%s0 + $0x190] sm:$0xff]
  %v65 = vld [vmem:[%s0 + $0x198] sm:$0xff]
  %v66 = vld [vmem:[%s0 + $0x1a0] sm:$0xff]
  %v67 = vld [vmem:[%s0 + $0x1a8] sm:$0xff]
  %v68 = vld [vmem:[%s0 + $0x1b0] sm:$0xff]
  %v69 = vld [vmem:[%s0 + $0x1b8] sm:$0xff]
  %v70 = vld [vmem:[%s0 + $0x1c0] sm:$0xff]
  %v71 = vld [vmem:[%s0 + $0x1c8] sm:$0xff]
  %v72 = vld [vmem:[%s0 + $0x1d0] sm:$0xff]
  %v73 = vld [vmem:[%s0 + $0x1d8] sm:$0xff]
  %v74 = vld [vmem:[%s0 + $0x1e0] sm:$0xff]
  %v75 = vld [vmem:[%s0 + $0x1e8] sm:$0xff]
  %v76 = vld [vmem:[%s0 + $0x1f0] sm:$0xff]
  %v77 = vld [vmem:[%s0 + $0x1f8] sm:$0xff]
  %v78 = vld [vmem:[%s0 + $0x200] sm:$0xff]
  %v79 = vld [vmem:[%s0 + $0x208] sm:$0xff]
  %v80 = vld [vmem:[%s0 + $0x210] sm:$0xff]
  %v81 = vld [vmem:[%s0 + $0x218] sm:$0xff]
  %v82 = vld [vmem:[%s0 + $0x220] sm:$0xff]
  %v83 = vld [vmem:[%s0 + $0x228] sm:$0xff]
  %v84 = vld [vmem:[%s0 + $0x230] sm:$0xff]
  %v85 = vld [vmem:[%s0 + $0x238] sm:$0xff]
  %v86 = vld [vmem:[%s0 + $0x240] sm:$0xff]
  %v87 = vld [vmem:[%s0 + $0x248] sm:$0xff]
  %v88 = vld [vmem:[%s0 + $0x250] sm:$0xff]
  %v89 = vld [vmem:[%s0 + $0x258] sm:$0xff]
  %v90 = vld [vmem:[%s0 + $0x260] sm:$0xff]
  %v91 = vld [vmem:[%s0 + $0x268] sm:$0xff]
  %v92 = vld [vmem:[%s0 + $0x270] sm:$0xff]
  %v93 = vld [vmem:[%s0 + $0x278] sm:$0xff]
  %v94 = vld [vmem:[%s0 + $0x280] sm:$0xff]
  %v95 = vld [vmem:[%s0 + $0x288] sm:$0xff]
  %v96 = vld [vmem:[%s0 + $0x290] sm:$0xff]
  %v97 = vld [vmem:[%s0 + $0x298] sm:$0xff]
  %v98 = vld [vmem:[%s0 + $0x2a0] sm:$0xff]
  %v99 = vld [vmem:[%s0 + $0x2a8] sm:$0xff]
  %v100 = vld [vmem:[%s0 + $0x2b0] sm:$0xff]
  %v101 = vld [vmem:[%s0 + $0x2b8] sm:$0xff]
  %v102 = vld [vmem:[%s0 + $0x2c0] sm:$0xff]
  %v103 = vld [vmem:[%s0 + $0x2c8] sm:$0xff]
  %v104 = vld [vmem:[%s0 + $0x2d0] sm:$0xff]
  %v105 = vld [vmem:[%s0 + $0x2d8] sm:$0xff]
  %v106 = vld [vmem:[%s0 + $0x2e0] sm:$0xff]
  %v107 = vld [vmem:[%s0 + $0x2e8] sm:$0xff]
  %v108 = vld [vmem:[%s0 + $0x2f0] sm:$0xff]
  %v109 = vld [vmem:[%s0 + $0x2f8] sm:$0xff]
  %v110 = vld [vmem:[%s0 + $0x300] sm:$0xff]
  %v111 = vld [vmem:[%s0 + $0x308] sm:$0xff]
  %v112 = vld [vmem:[%s0 + $0x310] sm:$0xff]
  %v113 = vld [vmem:[%s0 + $0x318] sm:$0xff]
  %v114 = vld [vmem:[%s0 + $0x320] sm:$0xff]
  %v115 = vld [vmem:[%s0 + $0x328] sm:$0xff]
  %v116 = vld [vmem:[%s0 + $0x330] sm:$0xff]
  %v117 = vld [vmem:[%s0 + $0x338] sm:$0xff]
  %v118 = vld [vmem:[%s0 + $0x340] sm:$0xff]
  %v119 = vld [vmem:[%s0 + $0x348] sm:$0xff]
  %v120 = vld [vmem:[%s0 + $0x350] sm:$0xff]
  %v121 = vld [vmem:[%s0 + $0x358] sm:$0xff]
  %v122 = vld [vmem:[%s0 + $0x360] sm:$0xff]
  %v123 = vld [vmem:[%s0 + $0x368] sm:$0xff]
  %v124 = vld [vmem:[%s0 + $0x370] sm:$0xff]
  %v125 = vld [vmem:[%s0 + $0x378] sm:$0xff]
  %v126 = vld [vmem:[%s0 + $0x380] sm:$0xff]
  %v127 = vld [vmem:[%s0 + $0x388] sm:$0xff]
  %v128 = vld [vmem:[%s0 + $0x390] sm:$0xff]
  %v129 = vld [vmem:[%s0 + $0x398] sm:$0xff]
  %v130 = vld [vmem:[%s0 + $0x3a0] sm:$0xff]
  %v131 = vld [vmem:[%s0 + $0x3a8] sm:$0xff]
  %v132 = vld [vmem:[%s0 + $0x3b0] sm:$0xff]
  %v133 = vld [vmem:[%s0 + $0x3b8] sm:$0xff]
  %v134 = vld [vmem:[%s0 + $0x3c0] sm:$0xff]
  %v135 = vld [vmem:[%s0 + $0x3c8] sm:$0xff]
  %v136 = vld [vmem:[%s0 + $0x3d0] sm:$0xff]
  %v137 = vld [vmem:[%s0 + $0x3d8] sm:$0xff]
  %v138 = vld [vmem:[%s0 + $0x3e0] sm:$0xff]
  %v139 = vld [vmem:[%s0 + $0x3e8] sm:$0xff]
  %v140 = vld [vmem:[%s0 + $0x3f0] sm:$0xff]
  %v141 = vld [vmem:[%s0 + $0x3f8] sm:$0xff]
  %v142 = vld [vmem:[%s1] sm:$0xff]
  %v143 = vld [vmem:[%s1 + $0x8] sm:$0xff]
  %v144 = vld [vmem:[%s1 + $0x10] sm:$0xff]
  %v145 = vld [vmem:[%s1 + $0x18] sm:$0xff]
  %v146 = vld [vmem:[%s1 + $0x20] sm:$0xff]
  %v147 = vld [vmem:[%s1 + $0x28] sm:$0xff]
  %v148 = vld [vmem:[%s1 + $0x30] sm:$0xff]
  %v149 = vld [vmem:[%s1 + $0x38] sm:$0xff]
  %v150 = vld [vmem:[%s1 + $0x40] sm:$0xff]
  %v151 = vld [vmem:[%s1 + $0x48] sm:$0xff]
  %v152 = vld [vmem:[%s1 + $0x50] sm:$0xff]
  %v153 = vld [vmem:[%s1 + $0x58] sm:$0xff]
  %v154 = vld [vmem:[%s1 + $0x60] sm:$0xff]
  %v155 = vld [vmem:[%s1 + $0x68] sm:$0xff]
  %v156 = vld [vmem:[%s1 + $0x70] sm:$0xff]
  %v157 = vld [vmem:[%s1 + $0x78] sm:$0xff]
  %v158 = vld [vmem:[%s1 + $0x80] sm:$0xff]
  %v159 = vld [vmem:[%s1 + $0x88] sm:$0xff]
  %v160 = vld [vmem:[%s1 + $0x90] sm:$0xff]
  %v161 = vld [vmem:[%s1 + $0x98] sm:$0xff]
  %v162 = vld [vmem:[%s1 + $0xa0] sm:$0xff]
  %v163 = vld [vmem:[%s1 + $0xa8] sm:$0xff]
  %v164 = vld [vmem:[%s1 + $0xb0] sm:$0xff]
  %v165 = vld [vmem:[%s1 + $0xb8] sm:$0xff]
  %v166 = vld [vmem:[%s1 + $0xc0] sm:$0xff]
  %v167 = vld [vmem:[%s1 + $0xc8] sm:$0xff]
  %v168 = vld [vmem:[%s1 + $0xd0] sm:$0xff]
  %v169 = vld [vmem:[%s1 + $0xd8] sm:$0xff]
  %v170 = vld [vmem:[%s1 + $0xe0] sm:$0xff]
  %v171 = vld [vmem:[%s1 + $0xe8] sm:$0xff]
  %v172 = vld [vmem:[%s1 + $0xf0] sm:$0xff]
  %v173 = vld [vmem:[%s1 + $0xf8] sm:$0xff]
  %v174 = vld [vmem:[%s1 + $0x100] sm:$0xff]
  %v175 = vld [vmem:[%s1 + $0x108] sm:$0xff]
  %v176 = vld [vmem:[%s1 + $0x110] sm:$0xff]
  %v177 = vld [vmem:[%s1 + $0x118] sm:$0xff]
  %v178 = vld [vmem:[%s1 + $0x120] sm:$0xff]
  %v179 = vld [vmem:[%s1 + $0x128] sm:$0xff]
  %v180 = vld [vmem:[%s1 + $0x130] sm:$0xff]
  %v181 = vld [vmem:[%s1 + $0x138] sm:$0xff]
  %v182 = vld [vmem:[%s1 + $0x140] sm:$0xff]
  %v183 = vld [vmem:[%s1 + $0x148] sm:$0xff]
  %v184 = vld [vmem:[%s1 + $0x150] sm:$0xff]
  %v185 = vld [vmem:[%s1 + $0x158] sm:$0xff]
  %v186 = vld [vmem:[%s1 + $0x160] sm:$0xff]
  %v187 = vld [vmem:[%s1 + $0x168] sm:$0xff]
  %v188 = vld [vmem:[%s1 + $0x170] sm:$0xff]
  %v189 = vld [vmem:[%s1 + $0x178] sm:$0xff]
  %v190 = vld [vmem:[%s1 + $0x180] sm:$0xff]
  %v191 = vld [vmem:[%s1 + $0x188] sm:$0xff]
  %v192 = vld [vmem:[%s1 + $0x190] sm:$0xff]
  %v193 = vld [vmem:[%s1 + $0x198] sm:$0xff]
  %v194 = vld [vmem:[%s1 + $0x1a0] sm:$0xff]
  %v195 = vld [vmem:[%s1 + $0x1a8] sm:$0xff]
  %v196 = vld [vmem:[%s1 + $0x1b0] sm:$0xff]
  %v197 = vld [vmem:[%s1 + $0x1b8] sm:$0xff]
  %v198 = vld [vmem:[%s1 + $0x1c0] sm:$0xff]
  %v199 = vld [vmem:[%s1 + $0x1c8] sm:$0xff]
  %v200 = vld [vmem:[%s1 + $0x1d0] sm:$0xff]
  %v201 = vld [vmem:[%s1 + $0x1d8] sm:$0xff]
  %v202 = vld [vmem:[%s1 + $0x1e0] sm:$0xff]
  %v203 = vld [vmem:[%s1 + $0x1e8] sm:$0xff]
  %v204 = vld [vmem:[%s1 + $0x1f0] sm:$0xff]
  %v205 = vld [vmem:[%s1 + $0x1f8] sm:$0xff]
  %v206 = vld [vmem:[%s1 + $0x200] sm:$0xff]
  %v207 = vld [vmem:[%s1 + $0x208] sm:$0xff]
  %v208 = vld [vmem:[%s1 + $0x210] sm:$0xff]
  %v209 = vld [vmem:[%s1 + $0x218] sm:$0xff]
  %v210 = vld [vmem:[%s1 + $0x220] sm:$0xff]
  %v211 = vld [vmem:[%s1 + $0x228] sm:$0xff]
  %v212 = vld [vmem:[%s1 + $0x230] sm:$0xff]
  %v213 = vld [vmem:[%s1 + $0x238] sm:$0xff]
  %v214 = vld [vmem:[%s1 + $0x240] sm:$0xff]
  %v215 = vld [vmem:[%s1 + $0x248] sm:$0xff]
  %v216 = vld [vmem:[%s1 + $0x250] sm:$0xff]
  %v217 = vld [vmem:[%s1 + $0x258] sm:$0xff]
  %v218 = vld [vmem:[%s1 + $0x260] sm:$0xff]
  %v219 = vld [vmem:[%s1 + $0x268] sm:$0xff]
  %v220 = vld [vmem:[%s1 + $0x270] sm:$0xff]
  %v221 = vld [vmem:[%s1 + $0x278] sm:$0xff]
  %v222 = vld [vmem:[%s1 + $0x280] sm:$0xff]
  %v223 = vld [vmem:[%s1 + $0x288] sm:$0xff]
  %v224 = vld [vmem:[%s1 + $0x290] sm:$0xff]
  %v225 = vld [vmem:[%s1 + $0x298] sm:$0xff]
  %v226 = vld [vmem:[%s1 + $0x2a0] sm:$0xff]
  %v227 = vld [vmem:[%s1 + $0x2a8] sm:$0xff]
  %v228 = vld [vmem:[%s1 + $0x2b0] sm:$0xff]
  %v229 = vld [vmem:[%s1 + $0x2b8] sm:$0xff]
  %v230 = vld [vmem:[%s1 + $0x2c0] sm:$0xff]
  %v231 = vld [vmem:[%s1 + $0x2c8] sm:$0xff]
  %v232 = vld [vmem:[%s1 + $0x2d0] sm:$0xff]
  %v233 = vld [vmem:[%s1 + $0x2d8] sm:$0xff]
  %v234 = vld [vmem:[%s1 + $0x2e0] sm:$0xff]
  %v235 = vld [vmem:[%s1 + $0x2e8] sm:$0xff]
  %v236 = vld [vmem:[%s1 + $0x2f0] sm:$0xff]
  %v237 = vld [vmem:[%s1 + $0x2f8] sm:$0xff]
  %v238 = vld [vmem:[%s1 + $0x300] sm:$0xff]
  %v239 = vld [vmem:[%s1 + $0x308] sm:$0xff]
  %v240 = vld [vmem:[%s1 + $0x310] sm:$0xff]
  %v241 = vld [vmem:[%s1 + $0x318] sm:$0xff]
  %v242 = vld [vmem:[%s1 + $0x320] sm:$0xff]
  %v243 = vld [vmem:[%s1 + $0x328] sm:$0xff]
  %v244 = vld [vmem:[%s1 + $0x330] sm:$0xff]
  %v245 = vld [vmem:[%s1 + $0x338] sm:$0xff]
  %v246 = vld [vmem:[%s1 + $0x340] sm:$0xff]
  %v247 = vld [vmem:[%s1 + $0x348] sm:$0xff]
  %v248 = vld [vmem:[%s1 + $0x350] sm:$0xff]
  %v249 = vld [vmem:[%s1 + $0x358] sm:$0xff]
  %v250 = vld [vmem:[%s1 + $0x360] sm:$0xff]
  %v251 = vld [vmem:[%s1 + $0x368] sm:$0xff]
  %v252 = vld [vmem:[%s1 + $0x370] sm:$0xff]
  %v253 = vld [vmem:[%s1 + $0x378] sm:$0xff]
  %v254 = vld [vmem:[%s1 + $0x380] sm:$0xff]
  %v255 = vld [vmem:[%s1 + $0x388] sm:$0xff]
  %v256 = vld [vmem:[%s1 + $0x390] sm:$0xff]
  %v257 = vld [vmem:[%s1 + $0x398] sm:$0xff]
  %v258 = vld [vmem:[%s1 + $0x3a0] sm:$0xff]
  %v259 = vld [vmem:[%s1 + $0x3a8] sm:$0xff]
  %v260 = vld [vmem:[%s1 + $0x3b0] sm:$0xff]
  %v261 = vld [vmem:[%s1 + $0x3b8] sm:$0xff]
  %v262 = vld [vmem:[%s1 + $0x3c0] sm:$0xff]
  %v263 = vld [vmem:[%s1 + $0x3c8] sm:$0xff]
  %v264 = vld [vmem:[%s1 + $0x3d0] sm:$0xff]
  %v265 = vld [vmem:[%s1 + $0x3d8] sm:$0xff]
  %v266 = vld [vmem:[%s1 + $0x3e0] sm:$0xff]
  %v267 = vld [vmem:[%s1 + $0x3e8] sm:$0xff]
  %v268 = vld [vmem:[%s1 + $0x3f0] sm:$0xff]
  %v269 = vld [vmem:[%s1 + $0x3f8] sm:$0xff]
  %v270 = vld [vmem:[%s2] sm:$0x1]
  %v272 = vlaneseq
  %v273 = vshrl.u32 %v272, 7
  %v274 = vsub.s32 0, %v273
  %v275 = vrot.slane %v270, %v274
  %277 = vmatprep.subr.mxu0 0.0
  %278 = vmatpush1.msra.mxu0 %v142
  %279 = vmatprep.subr.mxu0 0.0
  %280 = vmatpush1.msra.mxu0 %v143
  %281 = vmatprep.subr.mxu0 0.0
  %282 = vmatpush1.msra.mxu0 %v144
  %283 = vmatprep.subr.mxu0 0.0
  %284 = vmatpush1.msra.mxu0 %v145
  %285 = vmatprep.subr.mxu0 0.0
  %286 = vmatpush1.msra.mxu0 %v146
  %287 = vmatprep.subr.mxu0 0.0
  %288 = vmatpush1.msra.mxu0 %v147
  %289 = vmatprep.subr.mxu0 0.0
  %290 = vmatpush1.msra.mxu0 %v148
  %291 = vmatprep.subr.mxu0 0.0
  %292 = vmatpush1.msra.mxu0 %v149
  %293 = vmatprep.subr.mxu0 0.0
  %294 = vmatpush1.msra.mxu0 %v150
  %295 = vmatprep.subr.mxu0 0.0
  %296 = vmatpush1.msra.mxu0 %v151
  %297 = vmatprep.subr.mxu0 0.0
  %298 = vmatpush1.msra.mxu0 %v152
  %299 = vmatprep.subr.mxu0 0.0
  %300 = vmatpush1.msra.mxu0 %v153
  %301 = vmatprep.subr.mxu0 0.0
  %302 = vmatpush1.msra.mxu0 %v154
  %303 = vmatprep.subr.mxu0 0.0
  %304 = vmatpush1.msra.mxu0 %v155
  %305 = vmatprep.subr.mxu0 0.0
  %306 = vmatpush1.msra.mxu0 %v156
  %307 = vmatprep.subr.mxu0 0.0
  %308 = vmatpush1.msra.mxu0 %v157
  %309 = vmatprep.subr.mxu0 0.0
  %310 = vmatpush1.msra.mxu0 %v158
  %311 = vmatprep.subr.mxu0 0.0
  %312 = vmatpush1.msra.mxu0 %v159
  %313 = vmatprep.subr.mxu0 0.0
  %314 = vmatpush1.msra.mxu0 %v160
  %315 = vmatprep.subr.mxu0 0.0
  %316 = vmatpush1.msra.mxu0 %v161
  %317 = vmatprep.subr.mxu0 0.0
  %318 = vmatpush1.msra.mxu0 %v162
  %319 = vmatprep.subr.mxu0 0.0
  %320 = vmatpush1.msra.mxu0 %v163
  %321 = vmatprep.subr.mxu0 0.0
  %322 = vmatpush1.msra.mxu0 %v164
  %323 = vmatprep.subr.mxu0 0.0
  %324 = vmatpush1.msra.mxu0 %v165
  %325 = vmatprep.subr.mxu0 0.0
  %326 = vmatpush1.msra.mxu0 %v166
  %327 = vmatprep.subr.mxu0 0.0
  %328 = vmatpush1.msra.mxu0 %v167
  %329 = vmatprep.subr.mxu0 0.0
  %330 = vmatpush1.msra.mxu0 %v168
  %331 = vmatprep.subr.mxu0 0.0
  %332 = vmatpush1.msra.mxu0 %v169
  %333 = vmatprep.subr.mxu0 0.0
  %334 = vmatpush1.msra.mxu0 %v170
  %335 = vmatprep.subr.mxu0 0.0
  %336 = vmatpush1.msra.mxu0 %v171
  %337 = vmatprep.subr.mxu0 0.0
  %338 = vmatpush1.msra.mxu0 %v172
  %339 = vmatprep.subr.mxu0 0.0
  %340 = vmatpush1.msra.mxu0 %v173
  %341 = vmatprep.mubr.f32.mxu0 %v15
  %342 = vmatmul.mubr.f32.gmra.mrb[0].mxu0 %v14
  %v343 = vpop.f32.mrb[0].mxu0
  %v344 = vadd.f32 %v275, %v343
  %v345 = vpop.f32.mrb[0].mxu0
  %346 = vmatprep.mubr.f32.mxu0 %v23
  %347 = vmatmul.mubr.f32.gmra.mrb[0].mxu0 %v22
  %v348 = vpop.f32.mrb[0].mxu0
  %v349 = vadd.f32 %v275, %v348
  %v350 = vpop.f32.mrb[0].mxu0
  %351 = vmatprep.mubr.f32.mxu0 %v31
  %352 = vmatmul.mubr.f32.gmra.mrb[0].mxu0 %v30
  %v353 = vpop.f32.mrb[0].mxu0
  %v354 = vadd.f32 %v275, %v353
  %v355 = vpop.f32.mrb[0].mxu0
  %356 = vmatprep.mubr.f32.mxu0 %v39
  %357 = vmatmul.mubr.f32.gmra.mrb[0].mxu0 %v38
  %v358 = vpop.f32.mrb[0].mxu0
  %v359 = vadd.f32 %v275, %v358
  %v360 = vpop.f32.mrb[0].mxu0
  %361 = vmatprep.mubr.f32.mxu0 %v47
  %362 = vmatmul.mubr.f32.gmra.mrb[0].mxu0 %v46
  %v363 = vpop.f32.mrb[0].mxu0
  %v364 = vadd.f32 %v275, %v363
  %v365 = vpop.f32.mrb[0].mxu0
  %366 = vmatprep.mubr.f32.mxu0 %v55
  %367 = vmatmul.mubr.f32.gmra.mrb[0].mxu0 %v54
  %v368 = vpop.f32.mrb[0].mxu0
  %v369 = vadd.f32 %v275, %v368
  %v370 = vpop.f32.mrb[0].mxu0
  %371 = vmatprep.mubr.f32.mxu0 %v63
  %372 = vmatmul.mubr.f32.gmra.mrb[0].mxu0 %v62
  %v373 = vpop.f32.mrb[0].mxu0
  %v374 = vadd.f32 %v275, %v373
  %v375 = vpop.f32.mrb[0].mxu0
  %376 = vmatprep.mubr.f32.mxu0 %v71
  %377 = vmatmul.mubr.f32.gmra.mrb[0].mxu0 %v70
  %v378 = vpop.f32.mrb[0].mxu0
  %v379 = vadd.f32 %v275, %v378
  %v380 = vpop.f32.mrb[0].mxu0
  %381 = vmatprep.mubr.f32.mxu0 %v79
  %382 = vmatmul.mubr.f32.gmra.mrb[0].mxu0 %v78
  %v383 = vpop.f32.mrb[0].mxu0
  %v384 = vadd.f32 %v275, %v383
  %v385 = vpop.f32.mrb[0].mxu0
  %386 = vmatprep.mubr.f32.mxu0 %v87
  %387 = vmatmul.mubr.f32.gmra.mrb[0].mxu0 %v86
  %v388 = vpop.f32.mrb[0].mxu0
  %v389 = vadd.f32 %v275, %v388
  %v390 = vpop.f32.mrb[0].mxu0
  %391 = vmatprep.mubr.f32.mxu0 %v95
  %392 = vmatmul.mubr.f32.gmra.mrb[0].mxu0 %v94
  %v393 = vpop.f32.mrb[0].mxu0
  %v394 = vadd.f32 %v275, %v393
  %v395 = vpop.f32.mrb[0].mxu0
  %396 = vmatprep.mubr.f32.mxu0 %v103
  %397 = vmatmul.mubr.f32.gmra.mrb[0].mxu0 %v102
  %v398 = vpop.f32.mrb[0].mxu0
  %v399 = vadd.f32 %v275, %v398
  %v400 = vpop.f32.mrb[0].mxu0
  %401 = vmatprep.mubr.f32.mxu0 %v111
  %402 = vmatmul.mubr.f32.gmra.mrb[0].mxu0 %v110
  %v403 = vpop.f32.mrb[0].mxu0
  %v404 = vadd.f32 %v275, %v403
  %v405 = vpop.f32.mrb[0].mxu0
  %406 = vmatprep.mubr.f32.mxu0 %v119
  %407 = vmatmul.mubr.f32.gmra.mrb[0].mxu0 %v118
  %v408 = vpop.f32.mrb[0].mxu0
  %v409 = vadd.f32 %v275, %v408
  %v410 = vpop.f32.mrb[0].mxu0
  %411 = vmatprep.mubr.f32.mxu0 %v127
  %412 = vmatmul.mubr.f32.gmra.mrb[0].mxu0 %v126
  %v413 = vpop.f32.mrb[0].mxu0
  %v414 = vadd.f32 %v275, %v413
  %v415 = vpop.f32.mrb[0].mxu0
  %416 = vmatprep.mubr.f32.mxu0 %v135
  %417 = vmatmul.mubr.f32.gmra.mrb[0].mxu0 %v134
  %v418 = vpop.f32.mrb[0].mxu0
  %v419 = vadd.f32 %v275, %v418
  %v420 = vpop.f32.mrb[0].mxu0
  %421 = vdwg.mxu0
  %422 = vmatprep.subr.mxu0 0.0
  %423 = vmatpush1.msra.mxu0 %v174
  %424 = vmatprep.subr.mxu0 0.0
  %425 = vmatpush1.msra.mxu0 %v175
  %426 = vmatprep.subr.mxu0 0.0
  %427 = vmatpush1.msra.mxu0 %v176
  %428 = vmatprep.subr.mxu0 0.0
  %429 = vmatpush1.msra.mxu0 %v177
  %430 = vmatprep.subr.mxu0 0.0
  %431 = vmatpush1.msra.mxu0 %v178
  %432 = vmatprep.subr.mxu0 0.0
  %433 = vmatpush1.msra.mxu0 %v179
  %434 = vmatprep.subr.mxu0 0.0
  %435 = vmatpush1.msra.mxu0 %v180
  %436 = vmatprep.subr.mxu0 0.0
  %437 = vmatpush1.msra.mxu0 %v181
  %438 = vmatprep.subr.mxu0 0.0
  %439 = vmatpush1.msra.mxu0 %v182
  %440 = vmatprep.subr.mxu0 0.0
  %441 = vmatpush1.msra.mxu0 %v183
  %442 = vmatprep.subr.mxu0 0.0
  %443 = vmatpush1.msra.mxu0 %v184
  %444 = vmatprep.subr.mxu0 0.0
  %445 = vmatpush1.msra.mxu0 %v185
  %446 = vmatprep.subr.mxu0 0.0
  %447 = vmatpush1.msra.mxu0 %v186
  %448 = vmatprep.subr.mxu0 0.0
  %449 = vmatpush1.msra.mxu0 %v187
  %450 = vmatprep.subr.mxu0 0.0
  %451 = vmatpush1.msra.mxu0 %v188
  %452 = vmatprep.subr.mxu0 0.0
  %453 = vmatpush1.msra.mxu0 %v189
  %454 = vmatprep.subr.mxu0 0.0
  %455 = vmatpush1.msra.mxu0 %v190
  %456 = vmatprep.subr.mxu0 0.0
  %457 = vmatpush1.msra.mxu0 %v191
  %458 = vmatprep.subr.mxu0 0.0
  %459 = vmatpush1.msra.mxu0 %v192
  %460 = vmatprep.subr.mxu0 0.0
  %461 = vmatpush1.msra.mxu0 %v193
  %462 = vmatprep.subr.mxu0 0.0
  %463 = vmatpush1.msra.mxu0 %v194
  %464 = vmatprep.subr.mxu0 0.0
  %465 = vmatpush1.msra.mxu0 %v195
  %466 = vmatprep.subr.mxu0 0.0
  %467 = vmatpush1.msra.mxu0 %v196
  %468 = vmatprep.subr.mxu0 0.0
  %469 = vmatpush1.msra.mxu0 %v197
  %470 = vmatprep.subr.mxu0 0.0
  %471 = vmatpush1.msra.mxu0 %v198
  %472 = vmatprep.subr.mxu0 0.0
  %473 = vmatpush1.msra.mxu0 %v199
  %474 = vmatprep.subr.mxu0 0.0
  %475 = vmatpush1.msra.mxu0 %v200
  %476 = vmatprep.subr.mxu0 0.0
  %477 = vmatpush1.msra.mxu0 %v201
  %478 = vmatprep.subr.mxu0 0.0
  %479 = vmatpush1.msra.mxu0 %v202
  %480 = vmatprep.subr.mxu0 0.0
  %481 = vmatpush1.msra.mxu0 %v203
  %482 = vmatprep.subr.mxu0 0.0
  %483 = vmatpush1.msra.mxu0 %v204
  %484 = vmatprep.subr.mxu0 0.0
  %485 = vmatpush1.msra.mxu0 %v205
  %486 = vmatprep.mubr.f32.mxu0 %v17
  %487 = vmatmul.mubr.f32.gmra.mrb[0].mxu0 %v16
  %v488 = vpop.f32.mrb[0].mxu0
  %v489 = vadd.f32 %v344, %v488
  %v490 = vpop.f32.mrb[0].mxu0
  %491 = vmatprep.mubr.f32.mxu0 %v25
  %492 = vmatmul.mubr.f32.gmra.mrb[0].mxu0 %v24
  %v493 = vpop.f32.mrb[0].mxu0
  %v494 = vadd.f32 %v349, %v493
  %v495 = vpop.f32.mrb[0].mxu0
  %496 = vmatprep.mubr.f32.mxu0 %v33
  %497 = vmatmul.mubr.f32.gmra.mrb[0].mxu0 %v32
  %v498 = vpop.f32.mrb[0].mxu0
  %v499 = vadd.f32 %v354, %v498
  %v500 = vpop.f32.mrb[0].mxu0
  %501 = vmatprep.mubr.f32.mxu0 %v41
  %502 = vmatmul.mubr.f32.gmra.mrb[0].mxu0 %v40
  %v503 = vpop.f32.mrb[0].mxu0
  %v504 = vadd.f32 %v359, %v503
  %v505 = vpop.f32.mrb[0].mxu0
  %506 = vmatprep.mubr.f32.mxu0 %v49
  %507 = vmatmul.mubr.f32.gmra.mrb[0].mxu0 %v48
  %v508 = vpop.f32.mrb[0].mxu0
  %v509 = vadd.f32 %v364, %v508
  %v510 = vpop.f32.mrb[0].mxu0
  %511 = vmatprep.mubr.f32.mxu0 %v57
  %512 = vmatmul.mubr.f32.gmra.mrb[0].mxu0 %v56
  %v513 = vpop.f32.mrb[0].mxu0
  %v514 = vadd.f32 %v369, %v513
  %v515 = vpop.f32.mrb[0].mxu0
  %516 = vmatprep.mubr.f32.mxu0 %v65
  %517 = vmatmul.mubr.f32.gmra.mrb[0].mxu0 %v64
  %v518 = vpop.f32.mrb[0].mxu0
  %v519 = vadd.f32 %v374, %v518
  %v520 = vpop.f32.mrb[0].mxu0
  %521 = vmatprep.mubr.f32.mxu0 %v73
  %522 = vmatmul.mubr.f32.gmra.mrb[0].mxu0 %v72
  %v523 = vpop.f32.mrb[0].mxu0
  %v524 = vadd.f32 %v379, %v523
  %v525 = vpop.f32.mrb[0].mxu0
  %526 = vmatprep.mubr.f32.mxu0 %v81
  %527 = vmatmul.mubr.f32.gmra.mrb[0].mxu0 %v80
  %v528 = vpop.f32.mrb[0].mxu0
  %v529 = vadd.f32 %v384, %v528
  %v530 = vpop.f32.mrb[0].mxu0
  %531 = vmatprep.mubr.f32.mxu0 %v89
  %532 = vmatmul.mubr.f32.gmra.mrb[0].mxu0 %v88
  %v533 = vpop.f32.mrb[0].mxu0
  %v534 = vadd.f32 %v389, %v533
  %v535 = vpop.f32.mrb[0].mxu0
  %536 = vmatprep.mubr.f32.mxu0 %v97
  %537 = vmatmul.mubr.f32.gmra.mrb[0].mxu0 %v96
  %v538 = vpop.f32.mrb[0].mxu0
  %v539 = vadd.f32 %v394, %v538
  %v540 = vpop.f32.mrb[0].mxu0
  %541 = vmatprep.mubr.f32.mxu0 %v105
  %542 = vmatmul.mubr.f32.gmra.mrb[0].mxu0 %v104
  %v543 = vpop.f32.mrb[0].mxu0
  %v544 = vadd.f32 %v399, %v543
  %v545 = vpop.f32.mrb[0].mxu0
  %546 = vmatprep.mubr.f32.mxu0 %v113
  %547 = vmatmul.mubr.f32.gmra.mrb[0].mxu0 %v112
  %v548 = vpop.f32.mrb[0].mxu0
  %v549 = vadd.f32 %v404, %v548
  %v550 = vpop.f32.mrb[0].mxu0
  %551 = vmatprep.mubr.f32.mxu0 %v121
  %552 = vmatmul.mubr.f32.gmra.mrb[0].mxu0 %v120
  %v553 = vpop.f32.mrb[0].mxu0
  %v554 = vadd.f32 %v409, %v553
  %v555 = vpop.f32.mrb[0].mxu0
  %556 = vmatprep.mubr.f32.mxu0 %v129
  %557 = vmatmul.mubr.f32.gmra.mrb[0].mxu0 %v128
  %v558 = vpop.f32.mrb[0].mxu0
  %v559 = vadd.f32 %v414, %v558
  %v560 = vpop.f32.mrb[0].mxu0
  %561 = vmatprep.mubr.f32.mxu0 %v137
  %562 = vmatmul.mubr.f32.gmra.mrb[0].mxu0 %v136
  %v563 = vpop.f32.mrb[0].mxu0
  %v564 = vadd.f32 %v419, %v563
  %v565 = vpop.f32.mrb[0].mxu0
  %566 = vdwg.mxu0
  %567 = vmatprep.subr.mxu0 0.0
  %568 = vmatpush1.msra.mxu0 %v206
  %569 = vmatprep.subr.mxu0 0.0
  %570 = vmatpush1.msra.mxu0 %v207
  %571 = vmatprep.subr.mxu0 0.0
  %572 = vmatpush1.msra.mxu0 %v208
  %573 = vmatprep.subr.mxu0 0.0
  %574 = vmatpush1.msra.mxu0 %v209
  %575 = vmatprep.subr.mxu0 0.0
  %576 = vmatpush1.msra.mxu0 %v210
  %577 = vmatprep.subr.mxu0 0.0
  %578 = vmatpush1.msra.mxu0 %v211
  %579 = vmatprep.subr.mxu0 0.0
  %580 = vmatpush1.msra.mxu0 %v212
  %581 = vmatprep.subr.mxu0 0.0
  %582 = vmatpush1.msra.mxu0 %v213
  %583 = vmatprep.subr.mxu0 0.0
  %584 = vmatpush1.msra.mxu0 %v214
  %585 = vmatprep.subr.mxu0 0.0
  %586 = vmatpush1.msra.mxu0 %v215
  %587 = vmatprep.subr.mxu0 0.0
  %588 = vmatpush1.msra.mxu0 %v216
  %589 = vmatprep.subr.mxu0 0.0
  %590 = vmatpush1.msra.mxu0 %v217
  %591 = vmatprep.subr.mxu0 0.0
  %592 = vmatpush1.msra.mxu0 %v218
  %593 = vmatprep.subr.mxu0 0.0
  %594 = vmatpush1.msra.mxu0 %v219
  %595 = vmatprep.subr.mxu0 0.0
  %596 = vmatpush1.msra.mxu0 %v220
  %597 = vmatprep.subr.mxu0 0.0
  %598 = vmatpush1.msra.mxu0 %v221
  %599 = vmatprep.subr.mxu0 0.0
  %600 = vmatpush1.msra.mxu0 %v222
  %601 = vmatprep.subr.mxu0 0.0
  %602 = vmatpush1.msra.mxu0 %v223
  %603 = vmatprep.subr.mxu0 0.0
  %604 = vmatpush1.msra.mxu0 %v224
  %605 = vmatprep.subr.mxu0 0.0
  %606 = vmatpush1.msra.mxu0 %v225
  %607 = vmatprep.subr.mxu0 0.0
  %608 = vmatpush1.msra.mxu0 %v226
  %609 = vmatprep.subr.mxu0 0.0
  %610 = vmatpush1.msra.mxu0 %v227
  %611 = vmatprep.subr.mxu0 0.0
  %612 = vmatpush1.msra.mxu0 %v228
  %613 = vmatprep.subr.mxu0 0.0
  %614 = vmatpush1.msra.mxu0 %v229
  %615 = vmatprep.subr.mxu0 0.0
  %616 = vmatpush1.msra.mxu0 %v230
  %617 = vmatprep.subr.mxu0 0.0
  %618 = vmatpush1.msra.mxu0 %v231
  %619 = vmatprep.subr.mxu0 0.0
  %620 = vmatpush1.msra.mxu0 %v232
  %621 = vmatprep.subr.mxu0 0.0
  %622 = vmatpush1.msra.mxu0 %v233
  %623 = vmatprep.subr.mxu0 0.0
  %624 = vmatpush1.msra.mxu0 %v234
  %625 = vmatprep.subr.mxu0 0.0
  %626 = vmatpush1.msra.mxu0 %v235
  %627 = vmatprep.subr.mxu0 0.0
  %628 = vmatpush1.msra.mxu0 %v236
  %629 = vmatprep.subr.mxu0 0.0
  %630 = vmatpush1.msra.mxu0 %v237
  %631 = vmatprep.mubr.f32.mxu0 %v19
  %632 = vmatmul.mubr.f32.gmra.mrb[0].mxu0 %v18
  %v633 = vpop.f32.mrb[0].mxu0
  %v634 = vadd.f32 %v489, %v633
  %v635 = vpop.f32.mrb[0].mxu0
  %636 = vmatprep.mubr.f32.mxu0 %v27
  %637 = vmatmul.mubr.f32.gmra.mrb[0].mxu0 %v26
  %v638 = vpop.f32.mrb[0].mxu0
  %v639 = vadd.f32 %v494, %v638
  %v640 = vpop.f32.mrb[0].mxu0
  %641 = vmatprep.mubr.f32.mxu0 %v35
  %642 = vmatmul.mubr.f32.gmra.mrb[0].mxu0 %v34
  %v643 = vpop.f32.mrb[0].mxu0
  %v644 = vadd.f32 %v499, %v643
  %v645 = vpop.f32.mrb[0].mxu0
  %646 = vmatprep.mubr.f32.mxu0 %v43
  %647 = vmatmul.mubr.f32.gmra.mrb[0].mxu0 %v42
  %v648 = vpop.f32.mrb[0].mxu0
  %v649 = vadd.f32 %v504, %v648
  %v650 = vpop.f32.mrb[0].mxu0
  %651 = vmatprep.mubr.f32.mxu0 %v51
  %652 = vmatmul.mubr.f32.gmra.mrb[0].mxu0 %v50
  %v653 = vpop.f32.mrb[0].mxu0
  %v654 = vadd.f32 %v509, %v653
  %v655 = vpop.f32.mrb[0].mxu0
  %656 = vmatprep.mubr.f32.mxu0 %v59
  %657 = vmatmul.mubr.f32.gmra.mrb[0].mxu0 %v58
  %v658 = vpop.f32.mrb[0].mxu0
  %v659 = vadd.f32 %v514, %v658
  %v660 = vpop.f32.mrb[0].mxu0
  %661 = vmatprep.mubr.f32.mxu0 %v67
  %662 = vmatmul.mubr.f32.gmra.mrb[0].mxu0 %v66
  %v663 = vpop.f32.mrb[0].mxu0
  %v664 = vadd.f32 %v519, %v663
  %v665 = vpop.f32.mrb[0].mxu0
  %666 = vmatprep.mubr.f32.mxu0 %v75
  %667 = vmatmul.mubr.f32.gmra.mrb[0].mxu0 %v74
  %v668 = vpop.f32.mrb[0].mxu0
  %v669 = vadd.f32 %v524, %v668
  %v670 = vpop.f32.mrb[0].mxu0
  %671 = vmatprep.mubr.f32.mxu0 %v83
  %672 = vmatmul.mubr.f32.gmra.mrb[0].mxu0 %v82
  %v673 = vpop.f32.mrb[0].mxu0
  %v674 = vadd.f32 %v529, %v673
  %v675 = vpop.f32.mrb[0].mxu0
  %676 = vmatprep.mubr.f32.mxu0 %v91
  %677 = vmatmul.mubr.f32.gmra.mrb[0].mxu0 %v90
  %v678 = vpop.f32.mrb[0].mxu0
  %v679 = vadd.f32 %v534, %v678
  %v680 = vpop.f32.mrb[0].mxu0
  %681 = vmatprep.mubr.f32.mxu0 %v99
  %682 = vmatmul.mubr.f32.gmra.mrb[0].mxu0 %v98
  %v683 = vpop.f32.mrb[0].mxu0
  %v684 = vadd.f32 %v539, %v683
  %v685 = vpop.f32.mrb[0].mxu0
  %686 = vmatprep.mubr.f32.mxu0 %v107
  %687 = vmatmul.mubr.f32.gmra.mrb[0].mxu0 %v106
  %v688 = vpop.f32.mrb[0].mxu0
  %v689 = vadd.f32 %v544, %v688
  %v690 = vpop.f32.mrb[0].mxu0
  %691 = vmatprep.mubr.f32.mxu0 %v115
  %692 = vmatmul.mubr.f32.gmra.mrb[0].mxu0 %v114
  %v693 = vpop.f32.mrb[0].mxu0
  %v694 = vadd.f32 %v549, %v693
  %v695 = vpop.f32.mrb[0].mxu0
  %696 = vmatprep.mubr.f32.mxu0 %v123
  %697 = vmatmul.mubr.f32.gmra.mrb[0].mxu0 %v122
  %v698 = vpop.f32.mrb[0].mxu0
  %v699 = vadd.f32 %v554, %v698
  %v700 = vpop.f32.mrb[0].mxu0
  %701 = vmatprep.mubr.f32.mxu0 %v131
  %702 = vmatmul.mubr.f32.gmra.mrb[0].mxu0 %v130
  %v703 = vpop.f32.mrb[0].mxu0
  %v704 = vadd.f32 %v559, %v703
  %v705 = vpop.f32.mrb[0].mxu0
  %706 = vmatprep.mubr.f32.mxu0 %v139
  %707 = vmatmul.mubr.f32.gmra.mrb[0].mxu0 %v138
  %v708 = vpop.f32.mrb[0].mxu0
  %v709 = vadd.f32 %v564, %v708
  %v710 = vpop.f32.mrb[0].mxu0
  %711 = vdwg.mxu0
  %712 = vmatprep.subr.mxu0 0.0
  %713 = vmatpush1.msra.mxu0 %v238
  %714 = vmatprep.subr.mxu0 0.0
  %715 = vmatpush1.msra.mxu0 %v239
  %716 = vmatprep.subr.mxu0 0.0
  %717 = vmatpush1.msra.mxu0 %v240
  %718 = vmatprep.subr.mxu0 0.0
  %719 = vmatpush1.msra.mxu0 %v241
  %720 = vmatprep.subr.mxu0 0.0
  %721 = vmatpush1.msra.mxu0 %v242
  %722 = vmatprep.subr.mxu0 0.0
  %723 = vmatpush1.msra.mxu0 %v243
  %724 = vmatprep.subr.mxu0 0.0
  %725 = vmatpush1.msra.mxu0 %v244
  %726 = vmatprep.subr.mxu0 0.0
  %727 = vmatpush1.msra.mxu0 %v245
  %728 = vmatprep.subr.mxu0 0.0
  %729 = vmatpush1.msra.mxu0 %v246
  %730 = vmatprep.subr.mxu0 0.0
  %731 = vmatpush1.msra.mxu0 %v247
  %732 = vmatprep.subr.mxu0 0.0
  %733 = vmatpush1.msra.mxu0 %v248
  %734 = vmatprep.subr.mxu0 0.0
  %735 = vmatpush1.msra.mxu0 %v249
  %736 = vmatprep.subr.mxu0 0.0
  %737 = vmatpush1.msra.mxu0 %v250
  %738 = vmatprep.subr.mxu0 0.0
  %739 = vmatpush1.msra.mxu0 %v251
  %740 = vmatprep.subr.mxu0 0.0
  %741 = vmatpush1.msra.mxu0 %v252
  %742 = vmatprep.subr.mxu0 0.0
  %743 = vmatpush1.msra.mxu0 %v253
  %744 = vmatprep.subr.mxu0 0.0
  %745 = vmatpush1.msra.mxu0 %v254
  %746 = vmatprep.subr.mxu0 0.0
  %747 = vmatpush1.msra.mxu0 %v255
  %748 = vmatprep.subr.mxu0 0.0
  %749 = vmatpush1.msra.mxu0 %v256
  %750 = vmatprep.subr.mxu0 0.0
  %751 = vmatpush1.msra.mxu0 %v257
  %752 = vmatprep.subr.mxu0 0.0
  %753 = vmatpush1.msra.mxu0 %v258
  %754 = vmatprep.subr.mxu0 0.0
  %755 = vmatpush1.msra.mxu0 %v259
  %756 = vmatprep.subr.mxu0 0.0
  %757 = vmatpush1.msra.mxu0 %v260
  %758 = vmatprep.subr.mxu0 0.0
  %759 = vmatpush1.msra.mxu0 %v261
  %760 = vmatprep.subr.mxu0 0.0
  %761 = vmatpush1.msra.mxu0 %v262
  %762 = vmatprep.subr.mxu0 0.0
  %763 = vmatpush1.msra.mxu0 %v263
  %764 = vmatprep.subr.mxu0 0.0
  %765 = vmatpush1.msra.mxu0 %v264
  %766 = vmatprep.subr.mxu0 0.0
  %767 = vmatpush1.msra.mxu0 %v265
  %768 = vmatprep.subr.mxu0 0.0
  %769 = vmatpush1.msra.mxu0 %v266
  %770 = vmatprep.subr.mxu0 0.0
  %771 = vmatpush1.msra.mxu0 %v267
  %772 = vmatprep.subr.mxu0 0.0
  %773 = vmatpush1.msra.mxu0 %v268
  %774 = vmatprep.subr.mxu0 0.0
  %775 = vmatpush1.msra.mxu0 %v269
  %776 = vmatprep.mubr.f32.mxu0 %v21
  %777 = vmatmul.mubr.f32.gmra.mrb[0].mxu0 %v20
  %v778 = vpop.f32.mrb[0].mxu0
  %v779 = vadd.f32 %v634, %v778
  %v780 = vpop.f32.mrb[0].mxu0
  %781 = vmatprep.mubr.f32.mxu0 %v29
  %782 = vmatmul.mubr.f32.gmra.mrb[0].mxu0 %v28
  %v783 = vpop.f32.mrb[0].mxu0
  %v784 = vadd.f32 %v639, %v783
  %v785 = vpop.f32.mrb[0].mxu0
  %786 = vmatprep.mubr.f32.mxu0 %v37
  %787 = vmatmul.mubr.f32.gmra.mrb[0].mxu0 %v36
  %v788 = vpop.f32.mrb[0].mxu0
  %v789 = vadd.f32 %v644, %v788
  %v790 = vpop.f32.mrb[0].mxu0
  %791 = vmatprep.mubr.f32.mxu0 %v45
  %792 = vmatmul.mubr.f32.gmra.mrb[0].mxu0 %v44
  %v793 = vpop.f32.mrb[0].mxu0
  %v794 = vadd.f32 %v649, %v793
  %v795 = vpop.f32.mrb[0].mxu0
  %796 = vmatprep.mubr.f32.mxu0 %v53
  %797 = vmatmul.mubr.f32.gmra.mrb[0].mxu0 %v52
  %v798 = vpop.f32.mrb[0].mxu0
  %v799 = vadd.f32 %v654, %v798
  %v800 = vpop.f32.mrb[0].mxu0
  %801 = vmatprep.mubr.f32.mxu0 %v61
  %802 = vmatmul.mubr.f32.gmra.mrb[0].mxu0 %v60
  %v803 = vpop.f32.mrb[0].mxu0
  %v804 = vadd.f32 %v659, %v803
  %v805 = vpop.f32.mrb[0].mxu0
  %806 = vmatprep.mubr.f32.mxu0 %v69
  %807 = vmatmul.mubr.f32.gmra.mrb[0].mxu0 %v68
  %v808 = vpop.f32.mrb[0].mxu0
  %v809 = vadd.f32 %v664, %v808
  %v810 = vpop.f32.mrb[0].mxu0
  %811 = vmatprep.mubr.f32.mxu0 %v77
  %812 = vmatmul.mubr.f32.gmra.mrb[0].mxu0 %v76
  %v813 = vpop.f32.mrb[0].mxu0
  %v814 = vadd.f32 %v669, %v813
  %v815 = vpop.f32.mrb[0].mxu0
  %816 = vmatprep.mubr.f32.mxu0 %v85
  %817 = vmatmul.mubr.f32.gmra.mrb[0].mxu0 %v84
  %v818 = vpop.f32.mrb[0].mxu0
  %v819 = vadd.f32 %v674, %v818
  %v820 = vpop.f32.mrb[0].mxu0
  %821 = vmatprep.mubr.f32.mxu0 %v93
  %822 = vmatmul.mubr.f32.gmra.mrb[0].mxu0 %v92
  %v823 = vpop.f32.mrb[0].mxu0
  %v824 = vadd.f32 %v679, %v823
  %v825 = vpop.f32.mrb[0].mxu0
  %826 = vmatprep.mubr.f32.mxu0 %v101
  %827 = vmatmul.mubr.f32.gmra.mrb[0].mxu0 %v100
  %v828 = vpop.f32.mrb[0].mxu0
  %v829 = vadd.f32 %v684, %v828
  %v830 = vpop.f32.mrb[0].mxu0
  %831 = vmatprep.mubr.f32.mxu0 %v109
  %832 = vmatmul.mubr.f32.gmra.mrb[0].mxu0 %v108
  %v833 = vpop.f32.mrb[0].mxu0
  %v834 = vadd.f32 %v689, %v833
  %v835 = vpop.f32.mrb[0].mxu0
  %836 = vmatprep.mubr.f32.mxu0 %v117
  %837 = vmatmul.mubr.f32.gmra.mrb[0].mxu0 %v116
  %v838 = vpop.f32.mrb[0].mxu0
  %v839 = vadd.f32 %v694, %v838
  %v840 = vpop.f32.mrb[0].mxu0
  %841 = vmatprep.mubr.f32.mxu0 %v125
  %842 = vmatmul.mubr.f32.gmra.mrb[0].mxu0 %v124
  %v843 = vpop.f32.mrb[0].mxu0
  %v844 = vadd.f32 %v699, %v843
  %v845 = vpop.f32.mrb[0].mxu0
  %846 = vmatprep.mubr.f32.mxu0 %v133
  %847 = vmatmul.mubr.f32.gmra.mrb[0].mxu0 %v132
  %v848 = vpop.f32.mrb[0].mxu0
  %v849 = vadd.f32 %v704, %v848
  %v850 = vpop.f32.mrb[0].mxu0
  %851 = vmatprep.mubr.f32.mxu0 %v141
  %852 = vmatmul.mubr.f32.gmra.mrb[0].mxu0 %v140
  %v853 = vpop.f32.mrb[0].mxu0
  %v854 = vadd.f32 %v709, %v853
  %v855 = vpop.f32.mrb[0].mxu0
  %856 = vdwg.mxu0
  %v857 = vmax.f32 %v779, 0.0
  %v858 = vmax.f32 %v784, 0.0
  %v859 = vmax.f32 %v789, 0.0
  %v860 = vmax.f32 %v794, 0.0
  %v861 = vmax.f32 %v799, 0.0
  %v862 = vmax.f32 %v804, 0.0
  %v863 = vmax.f32 %v809, 0.0
  %v864 = vmax.f32 %v814, 0.0
  %v865 = vmax.f32 %v819, 0.0
  %v866 = vmax.f32 %v824, 0.0
  %v867 = vmax.f32 %v829, 0.0
  %v868 = vmax.f32 %v834, 0.0
  %v869 = vmax.f32 %v839, 0.0
  %v870 = vmax.f32 %v844, 0.0
  %v871 = vmax.f32 %v849, 0.0
  %v872 = vmax.f32 %v854, 0.0
  %873 = vst [vmem:[%s3] sm:$0xff] %v857
  %874 = vst [vmem:[%s3 + $0x8] sm:$0xff] %v858
  %875 = vst [vmem:[%s3 + $0x10] sm:$0xff] %v859
  %876 = vst [vmem:[%s3 + $0x18] sm:$0xff] %v860
  %877 = vst [vmem:[%s3 + $0x20] sm:$0xff] %v861
  %878 = vst [vmem:[%s3 + $0x28] sm:$0xff] %v862
  %879 = vst [vmem:[%s3 + $0x30] sm:$0xff] %v863
  %880 = vst [vmem:[%s3 + $0x38] sm:$0xff] %v864
  %881 = vst [vmem:[%s3 + $0x40] sm:$0xff] %v865
  %882 = vst [vmem:[%s3 + $0x48] sm:$0xff] %v866
  %883 = vst [vmem:[%s3 + $0x50] sm:$0xff] %v867
  %884 = vst [vmem:[%s3 + $0x58] sm:$0xff] %v868
  %885 = vst [vmem:[%s3 + $0x60] sm:$0xff] %v869
  %886 = vst [vmem:[%s3 + $0x68] sm:$0xff] %v870
  %887 = vst [vmem:[%s3 + $0x70] sm:$0xff] %v871
  %888 = vst [vmem:[%s3 + $0x78] sm:$0xff] %v872
  // Predicated region
  $region14: #{_lambda_.8} parent=0 // pred_check
    _
  $region15: #{_lambda_.8} parent=0 // pred_check_branch
    %890 = sbr.rel (0) target = $region17
  $region16: #{_lambda_.8} parent=0 // pred_region
    _
  $region17: #{_lambda_.8} parent=0 // pred_fallthru
    _
  // Predicated region
  $region18: #{_lambda_.8} parent=0 // pred_check
    _
  $region19: #{_lambda_.8} parent=0 // pred_check_branch
    %892 = sbr.rel (0) target = $region21
  $region20: #{_lambda_.8} parent=0 // pred_region
    _
  $region21: #{_lambda_.8} parent=0 // pred_fallthru
    _

// kernel: _lambda_.9
$region0: #{_lambda_.9}
  #allocation0 [shape = 'u32[]', space=smem, size = 0x4, offset = 0x4, fixed_abs, tag = 'smem constant byte address 0x4 - core index']
  #allocation1 [shape = 'u32[144,128]{1,0:T(1,128)}', space=vmem, size = 0x12000, scoped, tag = 'internal scratch']
  %s0 = inlined_call_operand.vmem [shape: f32[1,32,2048], index: 0, kind: input, shape index: {}]
  %s1 = inlined_call_operand.vmem [shape: f32[1,2048,256], index: 1, kind: input, shape index: {}]
  %s2 = inlined_call_operand.vmem [shape: f32[1,256], index: 2, kind: input, shape index: {}]
  %s3 = inlined_call_operand.vmem [shape: f32[1,32,256], index: 3, kind: output, shape index: {}]
  %s4 = sld [smem:[#allocation0]]
  $region22: #{_lambda_.9} parent=0
    _
  %s6 = ssub.s32 1, %s4
  %s7 = scalar_select 0, %s6, %s4
  // Predicated region
  $region2: #{_lambda_.9} parent=0 // pred_check
    _
  $region3: #{_lambda_.9} parent=0 // pred_check_branch
    %9 = sbr.rel (0) target = $region5
  $region4: #{_lambda_.9} parent=0 // pred_region
    _
  $region5: #{_lambda_.9} parent=0 // pred_fallthru
    _
  // Predicated region
  $region6: #{_lambda_.9} parent=0 // pred_check
    _
  $region7: #{_lambda_.9} parent=0 // pred_check_branch
    %11 = sbr.rel (0) target = $region9
  $region8: #{_lambda_.9} parent=0 // pred_region
    _
  $region9: #{_lambda_.9} parent=0 // pred_fallthru
    _
  // Predicated region
  $region10: #{_lambda_.9} parent=0 // pred_check
    _
  $region11: #{_lambda_.9} parent=0 // pred_check_branch
    %13 = sbr.rel (0) target = $region13
  $region12: #{_lambda_.9} parent=0 // pred_region
    _
  $region13: #{_lambda_.9} parent=0 // pred_fallthru
    _
  %v14 = vld [vmem:[%s0] sm:$0xff]
  %v15 = vld [vmem:[%s0 + $0x8] sm:$0xff]
  %v16 = vld [vmem:[%s0 + $0x10] sm:$0xff]
  %v17 = vld [vmem:[%s0 + $0x18] sm:$0xff]
  %v18 = vld [vmem:[%s0 + $0x20] sm:$0xff]
  %v19 = vld [vmem:[%s0 + $0x28] sm:$0xff]
  %v20 = vld [vmem:[%s0 + $0x30] sm:$0xff]
  %v21 = vld [vmem:[%s0 + $0x38] sm:$0xff]
  %v22 = vld [vmem:[%s0 + $0x40] sm:$0xff]
  %v23 = vld [vmem:[%s0 + $0x48] sm:$0xff]
  %v24 = vld [vmem:[%s0 + $0x50] sm:$0xff]
  %v25 = vld [vmem:[%s0 + $0x58] sm:$0xff]
  %v26 = vld [vmem:[%s0 + $0x60] sm:$0xff]
  %v27 = vld [vmem:[%s0 + $0x68] sm:$0xff]
  %v28 = vld [vmem:[%s0 + $0x70] sm:$0xff]
  %v29 = vld [vmem:[%s0 + $0x78] sm:$0xff]
  %v30 = vld [vmem:[%s0 + $0x80] sm:$0xff]
  %v31 = vld [vmem:[%s0 + $0x88] sm:$0xff]
  %v32 = vld [vmem:[%s0 + $0x90] sm:$0xff]
  %v33 = vld [vmem:[%s0 + $0x98] sm:$0xff]
  %v34 = vld [vmem:[%s0 + $0xa0] sm:$0xff]
  %v35 = vld [vmem:[%s0 + $0xa8] sm:$0xff]
  %v36 = vld [vmem:[%s0 + $0xb0] sm:$0xff]
  %v37 = vld [vmem:[%s0 + $0xb8] sm:$0xff]
  %v38 = vld [vmem:[%s0 + $0xc0] sm:$0xff]
  %v39 = vld [vmem:[%s0 + $0xc8] sm:$0xff]
  %v40 = vld [vmem:[%s0 + $0xd0] sm:$0xff]
  %v41 = vld [vmem:[%s0 + $0xd8] sm:$0xff]
  %v42 = vld [vmem:[%s0 + $0xe0] sm:$0xff]
  %v43 = vld [vmem:[%s0 + $0xe8] sm:$0xff]
  %v44 = vld [vmem:[%s0 + $0xf0] sm:$0xff]
  %v45 = vld [vmem:[%s0 + $0xf8] sm:$0xff]
  %v46 = vld [vmem:[%s0 + $0x100] sm:$0xff]
  %v47 = vld [vmem:[%s0 + $0x108] sm:$0xff]
  %v48 = vld [vmem:[%s0 + $0x110] sm:$0xff]
  %v49 = vld [vmem:[%s0 + $0x118] sm:$0xff]
  %v50 = vld [vmem:[%s0 + $0x120] sm:$0xff]
  %v51 = vld [vmem:[%s0 + $0x128] sm:$0xff]
  %v52 = vld [vmem:[%s0 + $0x130] sm:$0xff]
  %v53 = vld [vmem:[%s0 + $0x138] sm:$0xff]
  %v54 = vld [vmem:[%s0 + $0x140] sm:$0xff]
  %v55 = vld [vmem:[%s0 + $0x148] sm:$0xff]
  %v56 = vld [vmem:[%s0 + $0x150] sm:$0xff]
  %v57 = vld [vmem:[%s0 + $0x158] sm:$0xff]
  %v58 = vld [vmem:[%s0 + $0x160] sm:$0xff]
  %v59 = vld [vmem:[%s0 + $0x168] sm:$0xff]
  %v60 = vld [vmem:[%s0 + $0x170] sm:$0xff]
  %v61 = vld [vmem:[%s0 + $0x178] sm:$0xff]
  %v62 = vld [vmem:[%s0 + $0x180] sm:$0xff]
  %v63 = vld [vmem:[%s0 + $0x188] sm:$0xff]
  %v64 = vld [vmem:[%s0 + $0x190] sm:$0xff]
  %v65 = vld [vmem:[%s0 + $0x198] sm:$0xff]
  %v66 = vld [vmem:[%s0 + $0x1a0] sm:$0xff]
  %v67 = vld [vmem:[%s0 + $0x1a8] sm:$0xff]
  %v68 = vld [vmem:[%s0 + $0x1b0] sm:$0xff]
  %v69 = vld [vmem:[%s0 + $0x1b8] sm:$0xff]
  %v70 = vld [vmem:[%s0 + $0x1c0] sm:$0xff]
  %v71 = vld [vmem:[%s0 + $0x1c8] sm:$0xff]
  %v72 = vld [vmem:[%s0 + $0x1d0] sm:$0xff]
  %v73 = vld [vmem:[%s0 + $0x1d8] sm:$0xff]
  %v74 = vld [vmem:[%s0 + $0x1e0] sm:$0xff]
  %v75 = vld [vmem:[%s0 + $0x1e8] sm:$0xff]
  %v76 = vld [vmem:[%s0 + $0x1f0] sm:$0xff]
  %v77 = vld [vmem:[%s0 + $0x1f8] sm:$0xff]
  %v78 = vld [vmem:[%s1] sm:$0xff]
  %v79 = vld [vmem:[%s1 + $0x8] sm:$0xff]
  %v80 = vld [vmem:[%s1 + $0x10] sm:$0xff]
  %v81 = vld [vmem:[%s1 + $0x18] sm:$0xff]
  %v82 = vld [vmem:[%s1 + $0x20] sm:$0xff]
  %v83 = vld [vmem:[%s1 + $0x28] sm:$0xff]
  %v84 = vld [vmem:[%s1 + $0x30] sm:$0xff]
  %v85 = vld [vmem:[%s1 + $0x38] sm:$0xff]
  %v86 = vld [vmem:[%s1 + $0x40] sm:$0xff]
  %v87 = vld [vmem:[%s1 + $0x48] sm:$0xff]
  %v88 = vld [vmem:[%s1 + $0x50] sm:$0xff]
  %v89 = vld [vmem:[%s1 + $0x58] sm:$0xff]
  %v90 = vld [vmem:[%s1 + $0x60] sm:$0xff]
  %v91 = vld [vmem:[%s1 + $0x68] sm:$0xff]
  %v92 = vld [vmem:[%s1 + $0x70] sm:$0xff]
  %v93 = vld [vmem:[%s1 + $0x78] sm:$0xff]
  %v94 = vld [vmem:[%s1 + $0x80] sm:$0xff]
  %v95 = vld [vmem:[%s1 + $0x88] sm:$0xff]
  %v96 = vld [vmem:[%s1 + $0x90] sm:$0xff]
  %v97 = vld [vmem:[%s1 + $0x98] sm:$0xff]
  %v98 = vld [vmem:[%s1 + $0xa0] sm:$0xff]
  %v99 = vld [vmem:[%s1 + $0xa8] sm:$0xff]
  %v100 = vld [vmem:[%s1 + $0xb0] sm:$0xff]
  %v101 = vld [vmem:[%s1 + $0xb8] sm:$0xff]
  %v102 = vld [vmem:[%s1 + $0xc0] sm:$0xff]
  %v103 = vld [vmem:[%s1 + $0xc8] sm:$0xff]
  %v104 = vld [vmem:[%s1 + $0xd0] sm:$0xff]
  %v105 = vld [vmem:[%s1 + $0xd8] sm:$0xff]
  %v106 = vld [vmem:[%s1 + $0xe0] sm:$0xff]
  %v107 = vld [vmem:[%s1 + $0xe8] sm:$0xff]
  %v108 = vld [vmem:[%s1 + $0xf0] sm:$0xff]
  %v109 = vld [vmem:[%s1 + $0xf8] sm:$0xff]
  %v110 = vld [vmem:[%s1 + $0x100] sm:$0xff]
  %v111 = vld [vmem:[%s1 + $0x108] sm:$0xff]
  %v112 = vld [vmem:[%s1 + $0x110] sm:$0xff]
  %v113 = vld [vmem:[%s1 + $0x118] sm:$0xff]
  %v114 = vld [vmem:[%s1 + $0x120] sm:$0xff]
  %v115 = vld [vmem:[%s1 + $0x128] sm:$0xff]
  %v116 = vld [vmem:[%s1 + $0x130] sm:$0xff]
  %v117 = vld [vmem:[%s1 + $0x138] sm:$0xff]
  %v118 = vld [vmem:[%s1 + $0x140] sm:$0xff]
  %v119 = vld [vmem:[%s1 + $0x148] sm:$0xff]
  %v120 = vld [vmem:[%s1 + $0x150] sm:$0xff]
  %v121 = vld [vmem:[%s1 + $0x158] sm:$0xff]
  %v122 = vld [vmem:[%s1 + $0x160] sm:$0xff]
  %v123 = vld [vmem:[%s1 + $0x168] sm:$0xff]
  %v124 = vld [vmem:[%s1 + $0x170] sm:$0xff]
  %v125 = vld [vmem:[%s1 + $0x178] sm:$0xff]
  %v126 = vld [vmem:[%s1 + $0x180] sm:$0xff]
  %v127 = vld [vmem:[%s1 + $0x188] sm:$0xff]
  %v128 = vld [vmem:[%s1 + $0x190] sm:$0xff]
  %v129 = vld [vmem:[%s1 + $0x198] sm:$0xff]
  %v130 = vld [vmem:[%s1 + $0x1a0] sm:$0xff]
  %v131 = vld [vmem:[%s1 + $0x1a8] sm:$0xff]
  %v132 = vld [vmem:[%s1 + $0x1b0] sm:$0xff]
  %v133 = vld [vmem:[%s1 + $0x1b8] sm:$0xff]
  %v134 = vld [vmem:[%s1 + $0x1c0] sm:$0xff]
  %v135 = vld [vmem:[%s1 + $0x1c8] sm:$0xff]
  %v136 = vld [vmem:[%s1 + $0x1d0] sm:$0xff]
  %v137 = vld [vmem:[%s1 + $0x1d8] sm:$0xff]
  %v138 = vld [vmem:[%s1 + $0x1e0] sm:$0xff]
  %v139 = vld [vmem:[%s1 + $0x1e8] sm:$0xff]
  %v140 = vld [vmem:[%s1 + $0x1f0] sm:$0xff]
  %v141 = vld [vmem:[%s1 + $0x1f8] sm:$0xff]
  %v142 = vld [vmem:[%s1 + $0x200] sm:$0xff]
  %v143 = vld [vmem:[%s1 + $0x208] sm:$0xff]
  %v144 = vld [vmem:[%s1 + $0x210] sm:$0xff]
  %v145 = vld [vmem:[%s1 + $0x218] sm:$0xff]
  %v146 = vld [vmem:[%s1 + $0x220] sm:$0xff]
  %v147 = vld [vmem:[%s1 + $0x228] sm:$0xff]
  %v148 = vld [vmem:[%s1 + $0x230] sm:$0xff]
  %v149 = vld [vmem:[%s1 + $0x238] sm:$0xff]
  %v150 = vld [vmem:[%s1 + $0x240] sm:$0xff]
  %v151 = vld [vmem:[%s1 + $0x248] sm:$0xff]
  %v152 = vld [vmem:[%s1 + $0x250] sm:$0xff]
  %v153 = vld [vmem:[%s1 + $0x258] sm:$0xff]
  %v154 = vld [vmem:[%s1 + $0x260] sm:$0xff]
  %v155 = vld [vmem:[%s1 + $0x268] sm:$0xff]
  %v156 = vld [vmem:[%s1 + $0x270] sm:$0xff]
  %v157 = vld [vmem:[%s1 + $0x278] sm:$0xff]
  %v158 = vld [vmem:[%s1 + $0x280] sm:$0xff]
  %v159 = vld [vmem:[%s1 + $0x288] sm:$0xff]
  %v160 = vld [vmem:[%s1 + $0x290] sm:$0xff]
  %v161 = vld [vmem:[%s1 + $0x298] sm:$0xff]
  %v162 = vld [vmem:[%s1 + $0x2a0] sm:$0xff]
  %v163 = vld [vmem:[%s1 + $0x2a8] sm:$0xff]
  %v164 = vld [vmem:[%s1 + $0x2b0] sm:$0xff]
  %v165 = vld [vmem:[%s1 + $0x2b8] sm:$0xff]
  %v166 = vld [vmem:[%s1 + $0x2c0] sm:$0xff]
  %v167 = vld [vmem:[%s1 + $0x2c8] sm:$0xff]
  %v168 = vld [vmem:[%s1 + $0x2d0] sm:$0xff]
  %v169 = vld [vmem:[%s1 + $0x2d8] sm:$0xff]
  %v170 = vld [vmem:[%s1 + $0x2e0] sm:$0xff]
  %v171 = vld [vmem:[%s1 + $0x2e8] sm:$0xff]
  %v172 = vld [vmem:[%s1 + $0x2f0] sm:$0xff]
  %v173 = vld [vmem:[%s1 + $0x2f8] sm:$0xff]
  %v174 = vld [vmem:[%s1 + $0x300] sm:$0xff]
  %v175 = vld [vmem:[%s1 + $0x308] sm:$0xff]
  %v176 = vld [vmem:[%s1 + $0x310] sm:$0xff]
  %v177 = vld [vmem:[%s1 + $0x318] sm:$0xff]
  %v178 = vld [vmem:[%s1 + $0x320] sm:$0xff]
  %v179 = vld [vmem:[%s1 + $0x328] sm:$0xff]
  %v180 = vld [vmem:[%s1 + $0x330] sm:$0xff]
  %v181 = vld [vmem:[%s1 + $0x338] sm:$0xff]
  %v182 = vld [vmem:[%s1 + $0x340] sm:$0xff]
  %v183 = vld [vmem:[%s1 + $0x348] sm:$0xff]
  %v184 = vld [vmem:[%s1 + $0x350] sm:$0xff]
  %v185 = vld [vmem:[%s1 + $0x358] sm:$0xff]
  %v186 = vld [vmem:[%s1 + $0x360] sm:$0xff]
  %v187 = vld [vmem:[%s1 + $0x368] sm:$0xff]
  %v188 = vld [vmem:[%s1 + $0x370] sm:$0xff]
  %v189 = vld [vmem:[%s1 + $0x378] sm:$0xff]
  %v190 = vld [vmem:[%s1 + $0x380] sm:$0xff]
  %v191 = vld [vmem:[%s1 + $0x388] sm:$0xff]
  %v192 = vld [vmem:[%s1 + $0x390] sm:$0xff]
  %v193 = vld [vmem:[%s1 + $0x398] sm:$0xff]
  %v194 = vld [vmem:[%s1 + $0x3a0] sm:$0xff]
  %v195 = vld [vmem:[%s1 + $0x3a8] sm:$0xff]
  %v196 = vld [vmem:[%s1 + $0x3b0] sm:$0xff]
  %v197 = vld [vmem:[%s1 + $0x3b8] sm:$0xff]
  %v198 = vld [vmem:[%s1 + $0x3c0] sm:$0xff]
  %v199 = vld [vmem:[%s1 + $0x3c8] sm:$0xff]
  %v200 = vld [vmem:[%s1 + $0x3d0] sm:$0xff]
  %v201 = vld [vmem:[%s1 + $0x3d8] sm:$0xff]
  %v202 = vld [vmem:[%s1 + $0x3e0] sm:$0xff]
  %v203 = vld [vmem:[%s1 + $0x3e8] sm:$0xff]
  %v204 = vld [vmem:[%s1 + $0x3f0] sm:$0xff]
  %v205 = vld [vmem:[%s1 + $0x3f8] sm:$0xff]
  %v206 = vld [vmem:[%s1 + $0x400] sm:$0xff]
  %v207 = vld [vmem:[%s1 + $0x408] sm:$0xff]
  %v208 = vld [vmem:[%s1 + $0x410] sm:$0xff]
  %v209 = vld [vmem:[%s1 + $0x418] sm:$0xff]
  %v210 = vld [vmem:[%s1 + $0x420] sm:$0xff]
  %v211 = vld [vmem:[%s1 + $0x428] sm:$0xff]
  %v212 = vld [vmem:[%s1 + $0x430] sm:$0xff]
  %v213 = vld [vmem:[%s1 + $0x438] sm:$0xff]
  %v214 = vld [vmem:[%s1 + $0x440] sm:$0xff]
  %v215 = vld [vmem:[%s1 + $0x448] sm:$0xff]
  %v216 = vld [vmem:[%s1 + $0x450] sm:$0xff]
  %v217 = vld [vmem:[%s1 + $0x458] sm:$0xff]
  %v218 = vld [vmem:[%s1 + $0x460] sm:$0xff]
  %v219 = vld [vmem:[%s1 + $0x468] sm:$0xff]
  %v220 = vld [vmem:[%s1 + $0x470] sm:$0xff]
  %v221 = vld [vmem:[%s1 + $0x478] sm:$0xff]
  %v222 = vld [vmem:[%s1 + $0x480] sm:$0xff]
  %v223 = vld [vmem:[%s1 + $0x488] sm:$0xff]
  %v224 = vld [vmem:[%s1 + $0x490] sm:$0xff]
  %v225 = vld [vmem:[%s1 + $0x498] sm:$0xff]
  %v226 = vld [vmem:[%s1 + $0x4a0] sm:$0xff]
  %v227 = vld [vmem:[%s1 + $0x4a8] sm:$0xff]
  %v228 = vld [vmem:[%s1 + $0x4b0] sm:$0xff]
  %v229 = vld [vmem:[%s1 + $0x4b8] sm:$0xff]
  %v230 = vld [vmem:[%s1 + $0x4c0] sm:$0xff]
  %v231 = vld [vmem:[%s1 + $0x4c8] sm:$0xff]
  %v232 = vld [vmem:[%s1 + $0x4d0] sm:$0xff]
  %v233 = vld [vmem:[%s1 + $0x4d8] sm:$0xff]
  %v234 = vld [vmem:[%s1 + $0x4e0] sm:$0xff]
  %v235 = vld [vmem:[%s1 + $0x4e8] sm:$0xff]
  %v236 = vld [vmem:[%s1 + $0x4f0] sm:$0xff]
  %v237 = vld [vmem:[%s1 + $0x4f8] sm:$0xff]
  %v238 = vld [vmem:[%s1 + $0x500] sm:$0xff]
  %v239 = vld [vmem:[%s1 + $0x508] sm:$0xff]
  %v240 = vld [vmem:[%s1 + $0x510] sm:$0xff]
  %v241 = vld [vmem:[%s1 + $0x518] sm:$0xff]
  %v242 = vld [vmem:[%s1 + $0x520] sm:$0xff]
  %v243 = vld [vmem:[%s1 + $0x528] sm:$0xff]
  %v244 = vld [vmem:[%s1 + $0x530] sm:$0xff]
  %v245 = vld [vmem:[%s1 + $0x538] sm:$0xff]
  %v246 = vld [vmem:[%s1 + $0x540] sm:$0xff]
  %v247 = vld [vmem:[%s1 + $0x548] sm:$0xff]
  %v248 = vld [vmem:[%s1 + $0x550] sm:$0xff]
  %v249 = vld [vmem:[%s1 + $0x558] sm:$0xff]
  %v250 = vld [vmem:[%s1 + $0x560] sm:$0xff]
  %v251 = vld [vmem:[%s1 + $0x568] sm:$0xff]
  %v252 = vld [vmem:[%s1 + $0x570] sm:$0xff]
  %v253 = vld [vmem:[%s1 + $0x578] sm:$0xff]
  %v254 = vld [vmem:[%s1 + $0x580] sm:$0xff]
  %v255 = vld [vmem:[%s1 + $0x588] sm:$0xff]
  %v256 = vld [vmem:[%s1 + $0x590] sm:$0xff]
  %v257 = vld [vmem:[%s1 + $0x598] sm:$0xff]
  %v258 = vld [vmem:[%s1 + $0x5a0] sm:$0xff]
  %v259 = vld [vmem:[%s1 + $0x5a8] sm:$0xff]
  %v260 = vld [vmem:[%s1 + $0x5b0] sm:$0xff]
  %v261 = vld [vmem:[%s1 + $0x5b8] sm:$0xff]
  %v262 = vld [vmem:[%s1 + $0x5c0] sm:$0xff]
  %v263 = vld [vmem:[%s1 + $0x5c8] sm:$0xff]
  %v264 = vld [vmem:[%s1 + $0x5d0] sm:$0xff]
  %v265 = vld [vmem:[%s1 + $0x5d8] sm:$0xff]
  %v266 = vld [vmem:[%s1 + $0x5e0] sm:$0xff]
  %v267 = vld [vmem:[%s1 + $0x5e8] sm:$0xff]
  %v268 = vld [vmem:[%s1 + $0x5f0] sm:$0xff]
  %v269 = vld [vmem:[%s1 + $0x5f8] sm:$0xff]
  %v270 = vld [vmem:[%s1 + $0x600] sm:$0xff]
  %v271 = vld [vmem:[%s1 + $0x608] sm:$0xff]
  %v272 = vld [vmem:[%s1 + $0x610] sm:$0xff]
  %v273 = vld [vmem:[%s1 + $0x618] sm:$0xff]
  %v274 = vld [vmem:[%s1 + $0x620] sm:$0xff]
  %v275 = vld [vmem:[%s1 + $0x628] sm:$0xff]
  %v276 = vld [vmem:[%s1 + $0x630] sm:$0xff]
  %v277 = vld [vmem:[%s1 + $0x638] sm:$0xff]
  %v278 = vld [vmem:[%s1 + $0x640] sm:$0xff]
  %v279 = vld [vmem:[%s1 + $0x648] sm:$0xff]
  %v280 = vld [vmem:[%s1 + $0x650] sm:$0xff]
  %v281 = vld [vmem:[%s1 + $0x658] sm:$0xff]
  %v282 = vld [vmem:[%s1 + $0x660] sm:$0xff]
  %v283 = vld [vmem:[%s1 + $0x668] sm:$0xff]
  %v284 = vld [vmem:[%s1 + $0x670] sm:$0xff]
  %v285 = vld [vmem:[%s1 + $0x678] sm:$0xff]
  %v286 = vld [vmem:[%s1 + $0x680] sm:$0xff]
  %v287 = vld [vmem:[%s1 + $0x688] sm:$0xff]
  %v288 = vld [vmem:[%s1 + $0x690] sm:$0xff]
  %v289 = vld [vmem:[%s1 + $0x698] sm:$0xff]
  %v290 = vld [vmem:[%s1 + $0x6a0] sm:$0xff]
  %v291 = vld [vmem:[%s1 + $0x6a8] sm:$0xff]
  %v292 = vld [vmem:[%s1 + $0x6b0] sm:$0xff]
  %v293 = vld [vmem:[%s1 + $0x6b8] sm:$0xff]
  %v294 = vld [vmem:[%s1 + $0x6c0] sm:$0xff]
  %v295 = vld [vmem:[%s1 + $0x6c8] sm:$0xff]
  %v296 = vld [vmem:[%s1 + $0x6d0] sm:$0xff]
  %v297 = vld [vmem:[%s1 + $0x6d8] sm:$0xff]
  %v298 = vld [vmem:[%s1 + $0x6e0] sm:$0xff]
  %v299 = vld [vmem:[%s1 + $0x6e8] sm:$0xff]
  %v300 = vld [vmem:[%s1 + $0x6f0] sm:$0xff]
  %v301 = vld [vmem:[%s1 + $0x6f8] sm:$0xff]
  %v302 = vld [vmem:[%s1 + $0x700] sm:$0xff]
  %v303 = vld [vmem:[%s1 + $0x708] sm:$0xff]
  %v304 = vld [vmem:[%s1 + $0x710] sm:$0xff]
  %v305 = vld [vmem:[%s1 + $0x718] sm:$0xff]
  %v306 = vld [vmem:[%s1 + $0x720] sm:$0xff]
  %v307 = vld [vmem:[%s1 + $0x728] sm:$0xff]
  %v308 = vld [vmem:[%s1 + $0x730] sm:$0xff]
  %v309 = vld [vmem:[%s1 + $0x738] sm:$0xff]
  %v310 = vld [vmem:[%s1 + $0x740] sm:$0xff]
  %v311 = vld [vmem:[%s1 + $0x748] sm:$0xff]
  %v312 = vld [vmem:[%s1 + $0x750] sm:$0xff]
  %v313 = vld [vmem:[%s1 + $0x758] sm:$0xff]
  %v314 = vld [vmem:[%s1 + $0x760] sm:$0xff]
  %v315 = vld [vmem:[%s1 + $0x768] sm:$0xff]
  %v316 = vld [vmem:[%s1 + $0x770] sm:$0xff]
  %v317 = vld [vmem:[%s1 + $0x778] sm:$0xff]
  %v318 = vld [vmem:[%s1 + $0x780] sm:$0xff]
  %v319 = vld [vmem:[%s1 + $0x788] sm:$0xff]
  %v320 = vld [vmem:[%s1 + $0x790] sm:$0xff]
  %v321 = vld [vmem:[%s1 + $0x798] sm:$0xff]
  %v322 = vld [vmem:[%s1 + $0x7a0] sm:$0xff]
  %v323 = vld [vmem:[%s1 + $0x7a8] sm:$0xff]
  %v324 = vld [vmem:[%s1 + $0x7b0] sm:$0xff]
  %v325 = vld [vmem:[%s1 + $0x7b8] sm:$0xff]
  %v326 = vld [vmem:[%s1 + $0x7c0] sm:$0xff]
  %v327 = vld [vmem:[%s1 + $0x7c8] sm:$0xff]
  %v328 = vld [vmem:[%s1 + $0x7d0] sm:$0xff]
  %v329 = vld [vmem:[%s1 + $0x7d8] sm:$0xff]
  %v330 = vld [vmem:[%s1 + $0x7e0] sm:$0xff]
  %v331 = vld [vmem:[%s1 + $0x7e8] sm:$0xff]
  %v332 = vld [vmem:[%s1 + $0x7f0] sm:$0xff]
  %v333 = vld [vmem:[%s1 + $0x7f8] sm:$0xff]
  %v334 = vld [vmem:[%s1 + $0x800] sm:$0xff]
  %v335 = vld [vmem:[%s1 + $0x808] sm:$0xff]
  %v336 = vld [vmem:[%s1 + $0x810] sm:$0xff]
  %v337 = vld [vmem:[%s1 + $0x818] sm:$0xff]
  %v338 = vld [vmem:[%s1 + $0x820] sm:$0xff]
  %v339 = vld [vmem:[%s1 + $0x828] sm:$0xff]
  %v340 = vld [vmem:[%s1 + $0x830] sm:$0xff]
  %v341 = vld [vmem:[%s1 + $0x838] sm:$0xff]
  %v342 = vld [vmem:[%s1 + $0x840] sm:$0xff]
  %v343 = vld [vmem:[%s1 + $0x848] sm:$0xff]
  %v344 = vld [vmem:[%s1 + $0x850] sm:$0xff]
  %v345 = vld [vmem:[%s1 + $0x858] sm:$0xff]
  %v346 = vld [vmem:[%s1 + $0x860] sm:$0xff]
  %v347 = vld [vmem:[%s1 + $0x868] sm:$0xff]
  %v348 = vld [vmem:[%s1 + $0x870] sm:$0xff]
  %v349 = vld [vmem:[%s1 + $0x878] sm:$0xff]
  %v350 = vld [vmem:[%s1 + $0x880] sm:$0xff]
  %v351 = vld [vmem:[%s1 + $0x888] sm:$0xff]
  %v352 = vld [vmem:[%s1 + $0x890] sm:$0xff]
  %v353 = vld [vmem:[%s1 + $0x898] sm:$0xff]
  %v354 = vld [vmem:[%s1 + $0x8a0] sm:$0xff]
  %v355 = vld [vmem:[%s1 + $0x8a8] sm:$0xff]
  %v356 = vld [vmem:[%s1 + $0x8b0] sm:$0xff]
  %v357 = vld [vmem:[%s1 + $0x8b8] sm:$0xff]
  %v358 = vld [vmem:[%s1 + $0x8c0] sm:$0xff]
  %v359 = vld [vmem:[%s1 + $0x8c8] sm:$0xff]
  %v360 = vld [vmem:[%s1 + $0x8d0] sm:$0xff]
  %v361 = vld [vmem:[%s1 + $0x8d8] sm:$0xff]
  %v362 = vld [vmem:[%s1 + $0x8e0] sm:$0xff]
  %v363 = vld [vmem:[%s1 + $0x8e8] sm:$0xff]
  %v364 = vld [vmem:[%s1 + $0x8f0] sm:$0xff]
  %v365 = vld [vmem:[%s1 + $0x8f8] sm:$0xff]
  %v366 = vld [vmem:[%s1 + $0x900] sm:$0xff]
  %v367 = vld [vmem:[%s1 + $0x908] sm:$0xff]
  %v368 = vld [vmem:[%s1 + $0x910] sm:$0xff]
  %v369 = vld [vmem:[%s1 + $0x918] sm:$0xff]
  %v370 = vld [vmem:[%s1 + $0x920] sm:$0xff]
  %v371 = vld [vmem:[%s1 + $0x928] sm:$0xff]
  %v372 = vld [vmem:[%s1 + $0x930] sm:$0xff]
  %v373 = vld [vmem:[%s1 + $0x938] sm:$0xff]
  %v374 = vld [vmem:[%s1 + $0x940] sm:$0xff]
  %v375 = vld [vmem:[%s1 + $0x948] sm:$0xff]
  %v376 = vld [vmem:[%s1 + $0x950] sm:$0xff]
  %v377 = vld [vmem:[%s1 + $0x958] sm:$0xff]
  %v378 = vld [vmem:[%s1 + $0x960] sm:$0xff]
  %v379 = vld [vmem:[%s1 + $0x968] sm:$0xff]
  %v380 = vld [vmem:[%s1 + $0x970] sm:$0xff]
  %v381 = vld [vmem:[%s1 + $0x978] sm:$0xff]
  %v382 = vld [vmem:[%s1 + $0x980] sm:$0xff]
  %v383 = vld [vmem:[%s1 + $0x988] sm:$0xff]
  %v384 = vld [vmem:[%s1 + $0x990] sm:$0xff]
  %v385 = vld [vmem:[%s1 + $0x998] sm:$0xff]
  %v386 = vld [vmem:[%s1 + $0x9a0] sm:$0xff]
  %v387 = vld [vmem:[%s1 + $0x9a8] sm:$0xff]
  %v388 = vld [vmem:[%s1 + $0x9b0] sm:$0xff]
  %v389 = vld [vmem:[%s1 + $0x9b8] sm:$0xff]
  %v390 = vld [vmem:[%s1 + $0x9c0] sm:$0xff]
  %v391 = vld [vmem:[%s1 + $0x9c8] sm:$0xff]
  %v392 = vld [vmem:[%s1 + $0x9d0] sm:$0xff]
  %v393 = vld [vmem:[%s1 + $0x9d8] sm:$0xff]
  %v394 = vld [vmem:[%s1 + $0x9e0] sm:$0xff]
  %v395 = vld [vmem:[%s1 + $0x9e8] sm:$0xff]
  %v396 = vld [vmem:[%s1 + $0x9f0] sm:$0xff]
  %v397 = vld [vmem:[%s1 + $0x9f8] sm:$0xff]
  %v398 = vld [vmem:[%s1 + $0xa00] sm:$0xff]
  %v399 = vld [vmem:[%s1 + $0xa08] sm:$0xff]
  %v400 = vld [vmem:[%s1 + $0xa10] sm:$0xff]
  %v401 = vld [vmem:[%s1 + $0xa18] sm:$0xff]
  %v402 = vld [vmem:[%s1 + $0xa20] sm:$0xff]
  %v403 = vld [vmem:[%s1 + $0xa28] sm:$0xff]
  %v404 = vld [vmem:[%s1 + $0xa30] sm:$0xff]
  %v405 = vld [vmem:[%s1 + $0xa38] sm:$0xff]
  %v406 = vld [vmem:[%s1 + $0xa40] sm:$0xff]
  %v407 = vld [vmem:[%s1 + $0xa48] sm:$0xff]
  %v408 = vld [vmem:[%s1 + $0xa50] sm:$0xff]
  %v409 = vld [vmem:[%s1 + $0xa58] sm:$0xff]
  %v410 = vld [vmem:[%s1 + $0xa60] sm:$0xff]
  %v411 = vld [vmem:[%s1 + $0xa68] sm:$0xff]
  %v412 = vld [vmem:[%s1 + $0xa70] sm:$0xff]
  %v413 = vld [vmem:[%s1 + $0xa78] sm:$0xff]
  %v414 = vld [vmem:[%s1 + $0xa80] sm:$0xff]
  %v415 = vld [vmem:[%s1 + $0xa88] sm:$0xff]
  %v416 = vld [vmem:[%s1 + $0xa90] sm:$0xff]
  %v417 = vld [vmem:[%s1 + $0xa98] sm:$0xff]
  %v418 = vld [vmem:[%s1 + $0xaa0] sm:$0xff]
  %v419 = vld [vmem:[%s1 + $0xaa8] sm:$0xff]
  %v420 = vld [vmem:[%s1 + $0xab0] sm:$0xff]
  %v421 = vld [vmem:[%s1 + $0xab8] sm:$0xff]
  %v422 = vld [vmem:[%s1 + $0xac0] sm:$0xff]
  %v423 = vld [vmem:[%s1 + $0xac8] sm:$0xff]
  %v424 = vld [vmem:[%s1 + $0xad0] sm:$0xff]
  %v425 = vld [vmem:[%s1 + $0xad8] sm:$0xff]
  %v426 = vld [vmem:[%s1 + $0xae0] sm:$0xff]
  %v427 = vld [vmem:[%s1 + $0xae8] sm:$0xff]
  %v428 = vld [vmem:[%s1 + $0xaf0] sm:$0xff]
  %v429 = vld [vmem:[%s1 + $0xaf8] sm:$0xff]
  %v430 = vld [vmem:[%s1 + $0xb00] sm:$0xff]
  %v431 = vld [vmem:[%s1 + $0xb08] sm:$0xff]
  %v432 = vld [vmem:[%s1 + $0xb10] sm:$0xff]
  %v433 = vld [vmem:[%s1 + $0xb18] sm:$0xff]
  %v434 = vld [vmem:[%s1 + $0xb20] sm:$0xff]
  %v435 = vld [vmem:[%s1 + $0xb28] sm:$0xff]
  %v436 = vld [vmem:[%s1 + $0xb30] sm:$0xff]
  %v437 = vld [vmem:[%s1 + $0xb38] sm:$0xff]
  %v438 = vld [vmem:[%s1 + $0xb40] sm:$0xff]
  %v439 = vld [vmem:[%s1 + $0xb48] sm:$0xff]
  %v440 = vld [vmem:[%s1 + $0xb50] sm:$0xff]
  %v441 = vld [vmem:[%s1 + $0xb58] sm:$0xff]
  %v442 = vld [vmem:[%s1 + $0xb60] sm:$0xff]
  %v443 = vld [vmem:[%s1 + $0xb68] sm:$0xff]
  %v444 = vld [vmem:[%s1 + $0xb70] sm:$0xff]
  %v445 = vld [vmem:[%s1 + $0xb78] sm:$0xff]
  %v446 = vld [vmem:[%s1 + $0xb80] sm:$0xff]
  %v447 = vld [vmem:[%s1 + $0xb88] sm:$0xff]
  %v448 = vld [vmem:[%s1 + $0xb90] sm:$0xff]
  %v449 = vld [vmem:[%s1 + $0xb98] sm:$0xff]
  %v450 = vld [vmem:[%s1 + $0xba0] sm:$0xff]
  %v451 = vld [vmem:[%s1 + $0xba8] sm:$0xff]
  %v452 = vld [vmem:[%s1 + $0xbb0] sm:$0xff]
  %v453 = vld [vmem:[%s1 + $0xbb8] sm:$0xff]
  %v454 = vld [vmem:[%s1 + $0xbc0] sm:$0xff]
  %v455 = vld [vmem:[%s1 + $0xbc8] sm:$0xff]
  %v456 = vld [vmem:[%s1 + $0xbd0] sm:$0xff]
  %v457 = vld [vmem:[%s1 + $0xbd8] sm:$0xff]
  %v458 = vld [vmem:[%s1 + $0xbe0] sm:$0xff]
  %v459 = vld [vmem:[%s1 + $0xbe8] sm:$0xff]
  %v460 = vld [vmem:[%s1 + $0xbf0] sm:$0xff]
  %v461 = vld [vmem:[%s1 + $0xbf8] sm:$0xff]
  %v462 = vld [vmem:[%s1 + $0xc00] sm:$0xff]
  %v463 = vld [vmem:[%s1 + $0xc08] sm:$0xff]
  %v464 = vld [vmem:[%s1 + $0xc10] sm:$0xff]
  %v465 = vld [vmem:[%s1 + $0xc18] sm:$0xff]
  %v466 = vld [vmem:[%s1 + $0xc20] sm:$0xff]
  %v467 = vld [vmem:[%s1 + $0xc28] sm:$0xff]
  %v468 = vld [vmem:[%s1 + $0xc30] sm:$0xff]
  %v469 = vld [vmem:[%s1 + $0xc38] sm:$0xff]
  %v470 = vld [vmem:[%s1 + $0xc40] sm:$0xff]
  %v471 = vld [vmem:[%s1 + $0xc48] sm:$0xff]
  %v472 = vld [vmem:[%s1 + $0xc50] sm:$0xff]
  %v473 = vld [vmem:[%s1 + $0xc58] sm:$0xff]
  %v474 = vld [vmem:[%s1 + $0xc60] sm:$0xff]
  %v475 = vld [vmem:[%s1 + $0xc68] sm:$0xff]
  %v476 = vld [vmem:[%s1 + $0xc70] sm:$0xff]
  %v477 = vld [vmem:[%s1 + $0xc78] sm:$0xff]
  %v478 = vld [vmem:[%s1 + $0xc80] sm:$0xff]
  %v479 = vld [vmem:[%s1 + $0xc88] sm:$0xff]
  %v480 = vld [vmem:[%s1 + $0xc90] sm:$0xff]
  %v481 = vld [vmem:[%s1 + $0xc98] sm:$0xff]
  %v482 = vld [vmem:[%s1 + $0xca0] sm:$0xff]
  %v483 = vld [vmem:[%s1 + $0xca8] sm:$0xff]
  %v484 = vld [vmem:[%s1 + $0xcb0] sm:$0xff]
  %v485 = vld [vmem:[%s1 + $0xcb8] sm:$0xff]
  %v486 = vld [vmem:[%s1 + $0xcc0] sm:$0xff]
  %v487 = vld [vmem:[%s1 + $0xcc8] sm:$0xff]
  %v488 = vld [vmem:[%s1 + $0xcd0] sm:$0xff]
  %v489 = vld [vmem:[%s1 + $0xcd8] sm:$0xff]
  %v490 = vld [vmem:[%s1 + $0xce0] sm:$0xff]
  %v491 = vld [vmem:[%s1 + $0xce8] sm:$0xff]
  %v492 = vld [vmem:[%s1 + $0xcf0] sm:$0xff]
  %v493 = vld [vmem:[%s1 + $0xcf8] sm:$0xff]
  %v494 = vld [vmem:[%s1 + $0xd00] sm:$0xff]
  %v495 = vld [vmem:[%s1 + $0xd08] sm:$0xff]
  %v496 = vld [vmem:[%s1 + $0xd10] sm:$0xff]
  %v497 = vld [vmem:[%s1 + $0xd18] sm:$0xff]
  %v498 = vld [vmem:[%s1 + $0xd20] sm:$0xff]
  %v499 = vld [vmem:[%s1 + $0xd28] sm:$0xff]
  %v500 = vld [vmem:[%s1 + $0xd30] sm:$0xff]
  %v501 = vld [vmem:[%s1 + $0xd38] sm:$0xff]
  %v502 = vld [vmem:[%s1 + $0xd40] sm:$0xff]
  %v503 = vld [vmem:[%s1 + $0xd48] sm:$0xff]
  %v504 = vld [vmem:[%s1 + $0xd50] sm:$0xff]
  %v505 = vld [vmem:[%s1 + $0xd58] sm:$0xff]
  %v506 = vld [vmem:[%s1 + $0xd60] sm:$0xff]
  %v507 = vld [vmem:[%s1 + $0xd68] sm:$0xff]
  %v508 = vld [vmem:[%s1 + $0xd70] sm:$0xff]
  %v509 = vld [vmem:[%s1 + $0xd78] sm:$0xff]
  %v510 = vld [vmem:[%s1 + $0xd80] sm:$0xff]
  %v511 = vld [vmem:[%s1 + $0xd88] sm:$0xff]
  %v512 = vld [vmem:[%s1 + $0xd90] sm:$0xff]
  %v513 = vld [vmem:[%s1 + $0xd98] sm:$0xff]
  %v514 = vld [vmem:[%s1 + $0xda0] sm:$0xff]
  %v515 = vld [vmem:[%s1 + $0xda8] sm:$0xff]
  %v516 = vld [vmem:[%s1 + $0xdb0] sm:$0xff]
  %v517 = vld [vmem:[%s1 + $0xdb8] sm:$0xff]
  %v518 = vld [vmem:[%s1 + $0xdc0] sm:$0xff]
  %v519 = vld [vmem:[%s1 + $0xdc8] sm:$0xff]
  %v520 = vld [vmem:[%s1 + $0xdd0] sm:$0xff]
  %v521 = vld [vmem:[%s1 + $0xdd8] sm:$0xff]
  %v522 = vld [vmem:[%s1 + $0xde0] sm:$0xff]
  %v523 = vld [vmem:[%s1 + $0xde8] sm:$0xff]
  %v524 = vld [vmem:[%s1 + $0xdf0] sm:$0xff]
  %v525 = vld [vmem:[%s1 + $0xdf8] sm:$0xff]
  %v526 = vld [vmem:[%s1 + $0xe00] sm:$0xff]
  %v527 = vld [vmem:[%s1 + $0xe08] sm:$0xff]
  %v528 = vld [vmem:[%s1 + $0xe10] sm:$0xff]
  %v529 = vld [vmem:[%s1 + $0xe18] sm:$0xff]
  %v530 = vld [vmem:[%s1 + $0xe20] sm:$0xff]
  %v531 = vld [vmem:[%s1 + $0xe28] sm:$0xff]
  %v532 = vld [vmem:[%s1 + $0xe30] sm:$0xff]
  %v533 = vld [vmem:[%s1 + $0xe38] sm:$0xff]
  %v534 = vld [vmem:[%s1 + $0xe40] sm:$0xff]
  %v535 = vld [vmem:[%s1 + $0xe48] sm:$0xff]
  %v536 = vld [vmem:[%s1 + $0xe50] sm:$0xff]
  %v537 = vld [vmem:[%s1 + $0xe58] sm:$0xff]
  %v538 = vld [vmem:[%s1 + $0xe60] sm:$0xff]
  %v539 = vld [vmem:[%s1 + $0xe68] sm:$0xff]
  %v540 = vld [vmem:[%s1 + $0xe70] sm:$0xff]
  %v541 = vld [vmem:[%s1 + $0xe78] sm:$0xff]
  %v542 = vld [vmem:[%s1 + $0xe80] sm:$0xff]
  %v543 = vld [vmem:[%s1 + $0xe88] sm:$0xff]
  %v544 = vld [vmem:[%s1 + $0xe90] sm:$0xff]
  %v545 = vld [vmem:[%s1 + $0xe98] sm:$0xff]
  %v546 = vld [vmem:[%s1 + $0xea0] sm:$0xff]
  %v547 = vld [vmem:[%s1 + $0xea8] sm:$0xff]
  %v548 = vld [vmem:[%s1 + $0xeb0] sm:$0xff]
  %v549 = vld [vmem:[%s1 + $0xeb8] sm:$0xff]
  %v550 = vld [vmem:[%s1 + $0xec0] sm:$0xff]
  %v551 = vld [vmem:[%s1 + $0xec8] sm:$0xff]
  %v552 = vld [vmem:[%s1 + $0xed0] sm:$0xff]
  %v553 = vld [vmem:[%s1 + $0xed8] sm:$0xff]
  %v554 = vld [vmem:[%s1 + $0xee0] sm:$0xff]
  %v555 = vld [vmem:[%s1 + $0xee8] sm:$0xff]
  %v556 = vld [vmem:[%s1 + $0xef0] sm:$0xff]
  %v557 = vld [vmem:[%s1 + $0xef8] sm:$0xff]
  %v558 = vld [vmem:[%s1 + $0xf00] sm:$0xff]
  %v559 = vld [vmem:[%s1 + $0xf08] sm:$0xff]
  %v560 = vld [vmem:[%s1 + $0xf10] sm:$0xff]
  %v561 = vld [vmem:[%s1 + $0xf18] sm:$0xff]
  %v562 = vld [vmem:[%s1 + $0xf20] sm:$0xff]
  %v563 = vld [vmem:[%s1 + $0xf28] sm:$0xff]
  %v564 = vld [vmem:[%s1 + $0xf30] sm:$0xff]
  %v565 = vld [vmem:[%s1 + $0xf38] sm:$0xff]
  %v566 = vld [vmem:[%s1 + $0xf40] sm:$0xff]
  %v567 = vld [vmem:[%s1 + $0xf48] sm:$0xff]
  %v568 = vld [vmem:[%s1 + $0xf50] sm:$0xff]
  %v569 = vld [vmem:[%s1 + $0xf58] sm:$0xff]
  %v570 = vld [vmem:[%s1 + $0xf60] sm:$0xff]
  %v571 = vld [vmem:[%s1 + $0xf68] sm:$0xff]
  %v572 = vld [vmem:[%s1 + $0xf70] sm:$0xff]
  %v573 = vld [vmem:[%s1 + $0xf78] sm:$0xff]
  %v574 = vld [vmem:[%s1 + $0xf80] sm:$0xff]
  %v575 = vld [vmem:[%s1 + $0xf88] sm:$0xff]
  %v576 = vld [vmem:[%s1 + $0xf90] sm:$0xff]
  %v577 = vld [vmem:[%s1 + $0xf98] sm:$0xff]
  %v578 = vld [vmem:[%s1 + $0xfa0] sm:$0xff]
  %v579 = vld [vmem:[%s1 + $0xfa8] sm:$0xff]
  %v580 = vld [vmem:[%s1 + $0xfb0] sm:$0xff]
  %v581 = vld [vmem:[%s1 + $0xfb8] sm:$0xff]
  %v582 = vld [vmem:[%s1 + $0xfc0] sm:$0xff]
  %v583 = vld [vmem:[%s1 + $0xfc8] sm:$0xff]
  %v584 = vld [vmem:[%s1 + $0xfd0] sm:$0xff]
  %v585 = vld [vmem:[%s1 + $0xfd8] sm:$0xff]
  %v586 = vld [vmem:[%s1 + $0xfe0] sm:$0xff]
  %v587 = vld [vmem:[%s1 + $0xfe8] sm:$0xff]
  %v588 = vld [vmem:[%s1 + $0xff0] sm:$0xff]
  %v589 = vld [vmem:[%s1 + $0xff8] sm:$0xff]
  %v590 = vld [vmem:[%s2] sm:$0x3]
  %v592 = vlaneseq
  %v593 = vshrl.u32 %v592, 7
  %v594 = vsub.s32 0, %v593
  %v595 = vrot.slane %v590, %v594
  %v596 = vlaneseq
  %v597 = vshrl.u32 %v596, 7
  %v598 = vsub.s32 1, %v597
  %v599 = vrot.slane %v590, %v598
  %602 = vmatprep.subr.mxu0 %v79
  %603 = vmatpush1.msra.mxu0 %v78
  %604 = vmatprep.subr.mxu0 %v81
  %605 = vmatpush1.msra.mxu0 %v80
  %606 = vmatprep.subr.mxu0 %v83
  %607 = vmatpush1.msra.mxu0 %v82
  %608 = vmatprep.subr.mxu0 %v85
  %609 = vmatpush1.msra.mxu0 %v84
  %610 = vmatprep.subr.mxu0 %v87
  %611 = vmatpush1.msra.mxu0 %v86
  %612 = vmatprep.subr.mxu0 %v89
  %613 = vmatpush1.msra.mxu0 %v88
  %614 = vmatprep.subr.mxu0 %v91
  %615 = vmatpush1.msra.mxu0 %v90
  %616 = vmatprep.subr.mxu0 %v93
  %617 = vmatpush1.msra.mxu0 %v92
  %618 = vmatprep.subr.mxu0 %v95
  %619 = vmatpush1.msra.mxu0 %v94
  %620 = vmatprep.subr.mxu0 %v97
  %621 = vmatpush1.msra.mxu0 %v96
  %622 = vmatprep.subr.mxu0 %v99
  %623 = vmatpush1.msra.mxu0 %v98
  %624 = vmatprep.subr.mxu0 %v101
  %625 = vmatpush1.msra.mxu0 %v100
  %626 = vmatprep.subr.mxu0 %v103
  %627 = vmatpush1.msra.mxu0 %v102
  %628 = vmatprep.subr.mxu0 %v105
  %629 = vmatpush1.msra.mxu0 %v104
  %630 = vmatprep.subr.mxu0 %v107
  %631 = vmatpush1.msra.mxu0 %v106
  %632 = vmatprep.subr.mxu0 %v109
  %633 = vmatpush1.msra.mxu0 %v108
  %634 = vmatprep.subr.mxu0 %v111
  %635 = vmatpush1.msra.mxu0 %v110
  %636 = vmatprep.subr.mxu0 %v113
  %637 = vmatpush1.msra.mxu0 %v112
  %638 = vmatprep.subr.mxu0 %v115
  %639 = vmatpush1.msra.mxu0 %v114
  %640 = vmatprep.subr.mxu0 %v117
  %641 = vmatpush1.msra.mxu0 %v116
  %642 = vmatprep.subr.mxu0 %v119
  %643 = vmatpush1.msra.mxu0 %v118
  %644 = vmatprep.subr.mxu0 %v121
  %645 = vmatpush1.msra.mxu0 %v120
  %646 = vmatprep.subr.mxu0 %v123
  %647 = vmatpush1.msra.mxu0 %v122
  %648 = vmatprep.subr.mxu0 %v125
  %649 = vmatpush1.msra.mxu0 %v124
  %650 = vmatprep.subr.mxu0 %v127
  %651 = vmatpush1.msra.mxu0 %v126
  %652 = vmatprep.subr.mxu0 %v129
  %653 = vmatpush1.msra.mxu0 %v128
  %654 = vmatprep.subr.mxu0 %v131
  %655 = vmatpush1.msra.mxu0 %v130
  %656 = vmatprep.subr.mxu0 %v133
  %657 = vmatpush1.msra.mxu0 %v132
  %658 = vmatprep.subr.mxu0 %v135
  %659 = vmatpush1.msra.mxu0 %v134
  %660 = vmatprep.subr.mxu0 %v137
  %661 = vmatpush1.msra.mxu0 %v136
  %662 = vmatprep.subr.mxu0 %v139
  %663 = vmatpush1.msra.mxu0 %v138
  %664 = vmatprep.subr.mxu0 %v141
  %665 = vmatpush1.msra.mxu0 %v140
  %666 = vmatprep.mubr.f32.mxu0 %v15
  %667 = vmatmul.mubr.f32.gmra.mrb[0].mxu0 %v14
  %v668 = vpop.f32.mrb[0].mxu0
  %v669 = vadd.f32 %v595, %v668
  %v670 = vpop.f32.mrb[0].mxu0
  %v671 = vadd.f32 %v599, %v670
  %672 = vmatprep.mubr.f32.mxu0 %v31
  %673 = vmatmul.mubr.f32.gmra.mrb[0].mxu0 %v30
  %v674 = vpop.f32.mrb[0].mxu0
  %v675 = vadd.f32 %v595, %v674
  %v676 = vpop.f32.mrb[0].mxu0
  %v677 = vadd.f32 %v599, %v676
  %678 = vmatprep.mubr.f32.mxu0 %v47
  %679 = vmatmul.mubr.f32.gmra.mrb[0].mxu0 %v46
  %v680 = vpop.f32.mrb[0].mxu0
  %v681 = vadd.f32 %v595, %v680
  %v682 = vpop.f32.mrb[0].mxu0
  %v683 = vadd.f32 %v599, %v682
  %684 = vmatprep.mubr.f32.mxu0 %v63
  %685 = vmatmul.mubr.f32.gmra.mrb[0].mxu0 %v62
  %v686 = vpop.f32.mrb[0].mxu0
  %v687 = vadd.f32 %v595, %v686
  %v688 = vpop.f32.mrb[0].mxu0
  %v689 = vadd.f32 %v599, %v688
  %690 = vdwg.mxu0
  %691 = vmatprep.subr.mxu0 %v143
  %692 = vmatpush1.msra.mxu0 %v142
  %693 = vmatprep.subr.mxu0 %v145
  %694 = vmatpush1.msra.mxu0 %v144
  %695 = vmatprep.subr.mxu0 %v147
  %696 = vmatpush1.msra.mxu0 %v146
  %697 = vmatprep.subr.mxu0 %v149
  %698 = vmatpush1.msra.mxu0 %v148
  %699 = vmatprep.subr.mxu0 %v151
  %700 = vmatpush1.msra.mxu0 %v150
  %701 = vmatprep.subr.mxu0 %v153
  %702 = vmatpush1.msra.mxu0 %v152
  %703 = vmatprep.subr.mxu0 %v155
  %704 = vmatpush1.msra.mxu0 %v154
  %705 = vmatprep.subr.mxu0 %v157
  %706 = vmatpush1.msra.mxu0 %v156
  %707 = vmatprep.subr.mxu0 %v159
  %708 = vmatpush1.msra.mxu0 %v158
  %709 = vmatprep.subr.mxu0 %v161
  %710 = vmatpush1.msra.mxu0 %v160
  %711 = vmatprep.subr.mxu0 %v163
  %712 = vmatpush1.msra.mxu0 %v162
  %713 = vmatprep.subr.mxu0 %v165
  %714 = vmatpush1.msra.mxu0 %v164
  %715 = vmatprep.subr.mxu0 %v167
  %716 = vmatpush1.msra.mxu0 %v166
  %717 = vmatprep.subr.mxu0 %v169
  %718 = vmatpush1.msra.mxu0 %v168
  %719 = vmatprep.subr.mxu0 %v171
  %720 = vmatpush1.msra.mxu0 %v170
  %721 = vmatprep.subr.mxu0 %v173
  %722 = vmatpush1.msra.mxu0 %v172
  %723 = vmatprep.subr.mxu0 %v175
  %724 = vmatpush1.msra.mxu0 %v174
  %725 = vmatprep.subr.mxu0 %v177
  %726 = vmatpush1.msra.mxu0 %v176
  %727 = vmatprep.subr.mxu0 %v179
  %728 = vmatpush1.msra.mxu0 %v178
  %729 = vmatprep.subr.mxu0 %v181
  %730 = vmatpush1.msra.mxu0 %v180
  %731 = vmatprep.subr.mxu0 %v183
  %732 = vmatpush1.msra.mxu0 %v182
  %733 = vmatprep.subr.mxu0 %v185
  %734 = vmatpush1.msra.mxu0 %v184
  %735 = vmatprep.subr.mxu0 %v187
  %736 = vmatpush1.msra.mxu0 %v186
  %737 = vmatprep.subr.mxu0 %v189
  %738 = vmatpush1.msra.mxu0 %v188
  %739 = vmatprep.subr.mxu0 %v191
  %740 = vmatpush1.msra.mxu0 %v190
  %741 = vmatprep.subr.mxu0 %v193
  %742 = vmatpush1.msra.mxu0 %v192
  %743 = vmatprep.subr.mxu0 %v195
  %744 = vmatpush1.msra.mxu0 %v194
  %745 = vmatprep.subr.mxu0 %v197
  %746 = vmatpush1.msra.mxu0 %v196
  %747 = vmatprep.subr.mxu0 %v199
  %748 = vmatpush1.msra.mxu0 %v198
  %749 = vmatprep.subr.mxu0 %v201
  %750 = vmatpush1.msra.mxu0 %v200
  %751 = vmatprep.subr.mxu0 %v203
  %752 = vmatpush1.msra.mxu0 %v202
  %753 = vmatprep.subr.mxu0 %v205
  %754 = vmatpush1.msra.mxu0 %v204
  %755 = vmatprep.mubr.f32.mxu0 %v17
  %756 = vmatmul.mubr.f32.gmra.mrb[0].mxu0 %v16
  %v757 = vpop.f32.mrb[0].mxu0
  %v758 = vadd.f32 %v669, %v757
  %v759 = vpop.f32.mrb[0].mxu0
  %v760 = vadd.f32 %v671, %v759
  %761 = vmatprep.mubr.f32.mxu0 %v33
  %762 = vmatmul.mubr.f32.gmra.mrb[0].mxu0 %v32
  %v763 = vpop.f32.mrb[0].mxu0
  %v764 = vadd.f32 %v675, %v763
  %v765 = vpop.f32.mrb[0].mxu0
  %v766 = vadd.f32 %v677, %v765
  %767 = vmatprep.mubr.f32.mxu0 %v49
  %768 = vmatmul.mubr.f32.gmra.mrb[0].mxu0 %v48
  %v769 = vpop.f32.mrb[0].mxu0
  %v770 = vadd.f32 %v681, %v769
  %v771 = vpop.f32.mrb[0].mxu0
  %v772 = vadd.f32 %v683, %v771
  %773 = vmatprep.mubr.f32.mxu0 %v65
  %774 = vmatmul.mubr.f32.gmra.mrb[0].mxu0 %v64
  %v775 = vpop.f32.mrb[0].mxu0
  %v776 = vadd.f32 %v687, %v775
  %v777 = vpop.f32.mrb[0].mxu0
  %v778 = vadd.f32 %v689, %v777
  %779 = vdwg.mxu0
  %780 = vmatprep.subr.mxu0 %v207
  %781 = vmatpush1.msra.mxu0 %v206
  %782 = vmatprep.subr.mxu0 %v209
  %783 = vmatpush1.msra.mxu0 %v208
  %784 = vmatprep.subr.mxu0 %v211
  %785 = vmatpush1.msra.mxu0 %v210
  %786 = vmatprep.subr.mxu0 %v213
  %787 = vmatpush1.msra.mxu0 %v212
  %788 = vmatprep.subr.mxu0 %v215
  %789 = vmatpush1.msra.mxu0 %v214
  %790 = vmatprep.subr.mxu0 %v217
  %791 = vmatpush1.msra.mxu0 %v216
  %792 = vmatprep.subr.mxu0 %v219
  %793 = vmatpush1.msra.mxu0 %v218
  %794 = vmatprep.subr.mxu0 %v221
  %795 = vmatpush1.msra.mxu0 %v220
  %796 = vmatprep.subr.mxu0 %v223
  %797 = vmatpush1.msra.mxu0 %v222
  %798 = vmatprep.subr.mxu0 %v225
  %799 = vmatpush1.msra.mxu0 %v224
  %800 = vmatprep.subr.mxu0 %v227
  %801 = vmatpush1.msra.mxu0 %v226
  %802 = vmatprep.subr.mxu0 %v229
  %803 = vmatpush1.msra.mxu0 %v228
  %804 = vmatprep.subr.mxu0 %v231
  %805 = vmatpush1.msra.mxu0 %v230
  %806 = vmatprep.subr.mxu0 %v233
  %807 = vmatpush1.msra.mxu0 %v232
  %808 = vmatprep.subr.mxu0 %v235
  %809 = vmatpush1.msra.mxu0 %v234
  %810 = vmatprep.subr.mxu0 %v237
  %811 = vmatpush1.msra.mxu0 %v236
  %812 = vmatprep.subr.mxu0 %v239
  %813 = vmatpush1.msra.mxu0 %v238
  %814 = vmatprep.subr.mxu0 %v241
  %815 = vmatpush1.msra.mxu0 %v240
  %816 = vmatprep.subr.mxu0 %v243
  %817 = vmatpush1.msra.mxu0 %v242
  %818 = vmatprep.subr.mxu0 %v245
  %819 = vmatpush1.msra.mxu0 %v244
  %820 = vmatprep.subr.mxu0 %v247
  %821 = vmatpush1.msra.mxu0 %v246
  %822 = vmatprep.subr.mxu0 %v249
  %823 = vmatpush1.msra.mxu0 %v248
  %824 = vmatprep.subr.mxu0 %v251
  %825 = vmatpush1.msra.mxu0 %v250
  %826 = vmatprep.subr.mxu0 %v253
  %827 = vmatpush1.msra.mxu0 %v252
  %828 = vmatprep.subr.mxu0 %v255
  %829 = vmatpush1.msra.mxu0 %v254
  %830 = vmatprep.subr.mxu0 %v257
  %831 = vmatpush1.msra.mxu0 %v256
  %832 = vmatprep.subr.mxu0 %v259
  %833 = vmatpush1.msra.mxu0 %v258
  %834 = vmatprep.subr.mxu0 %v261
  %835 = vmatpush1.msra.mxu0 %v260
  %836 = vmatprep.subr.mxu0 %v263
  %837 = vmatpush1.msra.mxu0 %v262
  %838 = vmatprep.subr.mxu0 %v265
  %839 = vmatpush1.msra.mxu0 %v264
  %840 = vmatprep.subr.mxu0 %v267
  %841 = vmatpush1.msra.mxu0 %v266
  %842 = vmatprep.subr.mxu0 %v269
  %843 = vmatpush1.msra.mxu0 %v268
  %844 = vmatprep.mubr.f32.mxu0 %v19
  %845 = vmatmul.mubr.f32.gmra.mrb[0].mxu0 %v18
  %v846 = vpop.f32.mrb[0].mxu0
  %v847 = vadd.f32 %v758, %v846
  %v848 = vpop.f32.mrb[0].mxu0
  %v849 = vadd.f32 %v760, %v848
  %850 = vmatprep.mubr.f32.mxu0 %v35
  %851 = vmatmul.mubr.f32.gmra.mrb[0].mxu0 %v34
  %v852 = vpop.f32.mrb[0].mxu0
  %v853 = vadd.f32 %v764, %v852
  %v854 = vpop.f32.mrb[0].mxu0
  %v855 = vadd.f32 %v766, %v854
  %856 = vmatprep.mubr.f32.mxu0 %v51
  %857 = vmatmul.mubr.f32.gmra.mrb[0].mxu0 %v50
  %v858 = vpop.f32.mrb[0].mxu0
  %v859 = vadd.f32 %v770, %v858
  %v860 = vpop.f32.mrb[0].mxu0
  %v861 = vadd.f32 %v772, %v860
  %862 = vmatprep.mubr.f32.mxu0 %v67
  %863 = vmatmul.mubr.f32.gmra.mrb[0].mxu0 %v66
  %v864 = vpop.f32.mrb[0].mxu0
  %v865 = vadd.f32 %v776, %v864
  %v866 = vpop.f32.mrb[0].mxu0
  %v867 = vadd.f32 %v778, %v866
  %868 = vdwg.mxu0
  %869 = vmatprep.subr.mxu0 %v271
  %870 = vmatpush1.msra.mxu0 %v270
  %871 = vmatprep.subr.mxu0 %v273
  %872 = vmatpush1.msra.mxu0 %v272
  %873 = vmatprep.subr.mxu0 %v275
  %874 = vmatpush1.msra.mxu0 %v274
  %875 = vmatprep.subr.mxu0 %v277
  %876 = vmatpush1.msra.mxu0 %v276
  %877 = vmatprep.subr.mxu0 %v279
  %878 = vmatpush1.msra.mxu0 %v278
  %879 = vmatprep.subr.mxu0 %v281
  %880 = vmatpush1.msra.mxu0 %v280
  %881 = vmatprep.subr.mxu0 %v283
  %882 = vmatpush1.msra.mxu0 %v282
  %883 = vmatprep.subr.mxu0 %v285
  %884 = vmatpush1.msra.mxu0 %v284
  %885 = vmatprep.subr.mxu0 %v287
  %886 = vmatpush1.msra.mxu0 %v286
  %887 = vmatprep.subr.mxu0 %v289
  %888 = vmatpush1.msra.mxu0 %v288
  %889 = vmatprep.subr.mxu0 %v291
  %890 = vmatpush1.msra.mxu0 %v290
  %891 = vmatprep.subr.mxu0 %v293
  %892 = vmatpush1.msra.mxu0 %v292
  %893 = vmatprep.subr.mxu0 %v295
  %894 = vmatpush1.msra.mxu0 %v294
  %895 = vmatprep.subr.mxu0 %v297
  %896 = vmatpush1.msra.mxu0 %v296
  %897 = vmatprep.subr.mxu0 %v299
  %898 = vmatpush1.msra.mxu0 %v298
  %899 = vmatprep.subr.mxu0 %v301
  %900 = vmatpush1.msra.mxu0 %v300
  %901 = vmatprep.subr.mxu0 %v303
  %902 = vmatpush1.msra.mxu0 %v302
  %903 = vmatprep.subr.mxu0 %v305
  %904 = vmatpush1.msra.mxu0 %v304
  %905 = vmatprep.subr.mxu0 %v307
  %906 = vmatpush1.msra.mxu0 %v306
  %907 = vmatprep.subr.mxu0 %v309
  %908 = vmatpush1.msra.mxu0 %v308
  %909 = vmatprep.subr.mxu0 %v311
  %910 = vmatpush1.msra.mxu0 %v310
  %911 = vmatprep.subr.mxu0 %v313
  %912 = vmatpush1.msra.mxu0 %v312
  %913 = vmatprep.subr.mxu0 %v315
  %914 = vmatpush1.msra.mxu0 %v314
  %915 = vmatprep.subr.mxu0 %v317
  %916 = vmatpush1.msra.mxu0 %v316
  %917 = vmatprep.subr.mxu0 %v319
  %918 = vmatpush1.msra.mxu0 %v318
  %919 = vmatprep.subr.mxu0 %v321
  %920 = vmatpush1.msra.mxu0 %v320
  %921 = vmatprep.subr.mxu0 %v323
  %922 = vmatpush1.msra.mxu0 %v322
  %923 = vmatprep.subr.mxu0 %v325
  %924 = vmatpush1.msra.mxu0 %v324
  %925 = vmatprep.subr.mxu0 %v327
  %926 = vmatpush1.msra.mxu0 %v326
  %927 = vmatprep.subr.mxu0 %v329
  %928 = vmatpush1.msra.mxu0 %v328
  %929 = vmatprep.subr.mxu0 %v331
  %930 = vmatpush1.msra.mxu0 %v330
  %931 = vmatprep.subr.mxu0 %v333
  %932 = vmatpush1.msra.mxu0 %v332
  %933 = vmatprep.mubr.f32.mxu0 %v21
  %934 = vmatmul.mubr.f32.gmra.mrb[0].mxu0 %v20
  %v935 = vpop.f32.mrb[0].mxu0
  %v936 = vadd.f32 %v847, %v935
  %v937 = vpop.f32.mrb[0].mxu0
  %v938 = vadd.f32 %v849, %v937
  %939 = vmatprep.mubr.f32.mxu0 %v37
  %940 = vmatmul.mubr.f32.gmra.mrb[0].mxu0 %v36
  %v941 = vpop.f32.mrb[0].mxu0
  %v942 = vadd.f32 %v853, %v941
  %v943 = vpop.f32.mrb[0].mxu0
  %v944 = vadd.f32 %v855, %v943
  %945 = vmatprep.mubr.f32.mxu0 %v53
  %946 = vmatmul.mubr.f32.gmra.mrb[0].mxu0 %v52
  %v947 = vpop.f32.mrb[0].mxu0
  %v948 = vadd.f32 %v859, %v947
  %v949 = vpop.f32.mrb[0].mxu0
  %v950 = vadd.f32 %v861, %v949
  %951 = vmatprep.mubr.f32.mxu0 %v69
  %952 = vmatmul.mubr.f32.gmra.mrb[0].mxu0 %v68
  %v953 = vpop.f32.mrb[0].mxu0
  %v954 = vadd.f32 %v865, %v953
  %v955 = vpop.f32.mrb[0].mxu0
  %v956 = vadd.f32 %v867, %v955
  %957 = vdwg.mxu0
  %958 = vmatprep.subr.mxu0 %v335
  %959 = vmatpush1.msra.mxu0 %v334
  %960 = vmatprep.subr.mxu0 %v337
  %961 = vmatpush1.msra.mxu0 %v336
  %962 = vmatprep.subr.mxu0 %v339
  %963 = vmatpush1.msra.mxu0 %v338
  %964 = vmatprep.subr.mxu0 %v341
  %965 = vmatpush1.msra.mxu0 %v340
  %966 = vmatprep.subr.mxu0 %v343
  %967 = vmatpush1.msra.mxu0 %v342
  %968 = vmatprep.subr.mxu0 %v345
  %969 = vmatpush1.msra.mxu0 %v344
  %970 = vmatprep.subr.mxu0 %v347
  %971 = vmatpush1.msra.mxu0 %v346
  %972 = vmatprep.subr.mxu0 %v349
  %973 = vmatpush1.msra.mxu0 %v348
  %974 = vmatprep.subr.mxu0 %v351
  %975 = vmatpush1.msra.mxu0 %v350
  %976 = vmatprep.subr.mxu0 %v353
  %977 = vmatpush1.msra.mxu0 %v352
  %978 = vmatprep.subr.mxu0 %v355
  %979 = vmatpush1.msra.mxu0 %v354
  %980 = vmatprep.subr.mxu0 %v357
  %981 = vmatpush1.msra.mxu0 %v356
  %982 = vmatprep.subr.mxu0 %v359
  %983 = vmatpush1.msra.mxu0 %v358
  %984 = vmatprep.subr.mxu0 %v361
  %985 = vmatpush1.msra.mxu0 %v360
  %986 = vmatprep.subr.mxu0 %v363
  %987 = vmatpush1.msra.mxu0 %v362
  %988 = vmatprep.subr.mxu0 %v365
  %989 = vmatpush1.msra.mxu0 %v364
  %990 = vmatprep.subr.mxu0 %v367
  %991 = vmatpush1.msra.mxu0 %v366
  %992 = vmatprep.subr.mxu0 %v369
  %993 = vmatpush1.msra.mxu0 %v368
  %994 = vmatprep.subr.mxu0 %v371
  %995 = vmatpush1.msra.mxu0 %v370
  %996 = vmatprep.subr.mxu0 %v373
  %997 = vmatpush1.msra.mxu0 %v372
  %998 = vmatprep.subr.mxu0 %v375
  %999 = vmatpush1.msra.mxu0 %v374
  %1000 = vmatprep.subr.mxu0 %v377
  %1001 = vmatpush1.msra.mxu0 %v376
  %1002 = vmatprep.subr.mxu0 %v379
  %1003 = vmatpush1.msra.mxu0 %v378
  %1004 = vmatprep.subr.mxu0 %v381
  %1005 = vmatpush1.msra.mxu0 %v380
  %1006 = vmatprep.subr.mxu0 %v383
  %1007 = vmatpush1.msra.mxu0 %v382
  %1008 = vmatprep.subr.mxu0 %v385
  %1009 = vmatpush1.msra.mxu0 %v384
  %1010 = vmatprep.subr.mxu0 %v387
  %1011 = vmatpush1.msra.mxu0 %v386
  %1012 = vmatprep.subr.mxu0 %v389
  %1013 = vmatpush1.msra.mxu0 %v388
  %1014 = vmatprep.subr.mxu0 %v391
  %1015 = vmatpush1.msra.mxu0 %v390
  %1016 = vmatprep.subr.mxu0 %v393
  %1017 = vmatpush1.msra.mxu0 %v392
  %1018 = vmatprep.subr.mxu0 %v395
  %1019 = vmatpush1.msra.mxu0 %v394
  %1020 = vmatprep.subr.mxu0 %v397
  %1021 = vmatpush1.msra.mxu0 %v396
  %1022 = vmatprep.mubr.f32.mxu0 %v23
  %1023 = vmatmul.mubr.f32.gmra.mrb[0].mxu0 %v22
  %v1024 = vpop.f32.mrb[0].mxu0
  %v1025 = vadd.f32 %v936, %v1024
  %v1026 = vpop.f32.mrb[0].mxu0
  %v1027 = vadd.f32 %v938, %v1026
  %1028 = vmatprep.mubr.f32.mxu0 %v39
  %1029 = vmatmul.mubr.f32.gmra.mrb[0].mxu0 %v38
  %v1030 = vpop.f32.mrb[0].mxu0
  %v1031 = vadd.f32 %v942, %v1030
  %v1032 = vpop.f32.mrb[0].mxu0
  %v1033 = vadd.f32 %v944, %v1032
  %1034 = vmatprep.mubr.f32.mxu0 %v55
  %1035 = vmatmul.mubr.f32.gmra.mrb[0].mxu0 %v54
  %v1036 = vpop.f32.mrb[0].mxu0
  %v1037 = vadd.f32 %v948, %v1036
  %v1038 = vpop.f32.mrb[0].mxu0
  %v1039 = vadd.f32 %v950, %v1038
  %1040 = vmatprep.mubr.f32.mxu0 %v71
  %1041 = vmatmul.mubr.f32.gmra.mrb[0].mxu0 %v70
  %v1042 = vpop.f32.mrb[0].mxu0
  %v1043 = vadd.f32 %v954, %v1042
  %v1044 = vpop.f32.mrb[0].mxu0
  %v1045 = vadd.f32 %v956, %v1044
  %1046 = vdwg.mxu0
  %1047 = vmatprep.subr.mxu0 %v399
  %1048 = vmatpush1.msra.mxu0 %v398
  %1049 = vmatprep.subr.mxu0 %v401
  %1050 = vmatpush1.msra.mxu0 %v400
  %1051 = vmatprep.subr.mxu0 %v403
  %1052 = vmatpush1.msra.mxu0 %v402
  %1053 = vmatprep.subr.mxu0 %v405
  %1054 = vmatpush1.msra.mxu0 %v404
  %1055 = vmatprep.subr.mxu0 %v407
  %1056 = vmatpush1.msra.mxu0 %v406
  %1057 = vmatprep.subr.mxu0 %v409
  %1058 = vmatpush1.msra.mxu0 %v408
  %1059 = vmatprep.subr.mxu0 %v411
  %1060 = vmatpush1.msra.mxu0 %v410
  %1061 = vmatprep.subr.mxu0 %v413
  %1062 = vmatpush1.msra.mxu0 %v412
  %1063 = vmatprep.subr.mxu0 %v415
  %1064 = vmatpush1.msra.mxu0 %v414
  %1065 = vmatprep.subr.mxu0 %v417
  %1066 = vmatpush1.msra.mxu0 %v416
  %1067 = vmatprep.subr.mxu0 %v419
  %1068 = vmatpush1.msra.mxu0 %v418
  %1069 = vmatprep.subr.mxu0 %v421
  %1070 = vmatpush1.msra.mxu0 %v420
  %1071 = vmatprep.subr.mxu0 %v423
  %1072 = vmatpush1.msra.mxu0 %v422
  %1073 = vmatprep.subr.mxu0 %v425
  %1074 = vmatpush1.msra.mxu0 %v424
  %1075 = vmatprep.subr.mxu0 %v427
  %1076 = vmatpush1.msra.mxu0 %v426
  %1077 = vmatprep.subr.mxu0 %v429
  %1078 = vmatpush1.msra.mxu0 %v428
  %1079 = vmatprep.subr.mxu0 %v431
  %1080 = vmatpush1.msra.mxu0 %v430
  %1081 = vmatprep.subr.mxu0 %v433
  %1082 = vmatpush1.msra.mxu0 %v432
  %1083 = vmatprep.subr.mxu0 %v435
  %1084 = vmatpush1.msra.mxu0 %v434
  %1085 = vmatprep.subr.mxu0 %v437
  %1086 = vmatpush1.msra.mxu0 %v436
  %1087 = vmatprep.subr.mxu0 %v439
  %1088 = vmatpush1.msra.mxu0 %v438
  %1089 = vmatprep.subr.mxu0 %v441
  %1090 = vmatpush1.msra.mxu0 %v440
  %1091 = vmatprep.subr.mxu0 %v443
  %1092 = vmatpush1.msra.mxu0 %v442
  %1093 = vmatprep.subr.mxu0 %v445
  %1094 = vmatpush1.msra.mxu0 %v444
  %1095 = vmatprep.subr.mxu0 %v447
  %1096 = vmatpush1.msra.mxu0 %v446
  %1097 = vmatprep.subr.mxu0 %v449
  %1098 = vmatpush1.msra.mxu0 %v448
  %1099 = vmatprep.subr.mxu0 %v451
  %1100 = vmatpush1.msra.mxu0 %v450
  %1101 = vmatprep.subr.mxu0 %v453
  %1102 = vmatpush1.msra.mxu0 %v452
  %1103 = vmatprep.subr.mxu0 %v455
  %1104 = vmatpush1.msra.mxu0 %v454
  %1105 = vmatprep.subr.mxu0 %v457
  %1106 = vmatpush1.msra.mxu0 %v456
  %1107 = vmatprep.subr.mxu0 %v459
  %1108 = vmatpush1.msra.mxu0 %v458
  %1109 = vmatprep.subr.mxu0 %v461
  %1110 = vmatpush1.msra.mxu0 %v460
  %1111 = vmatprep.mubr.f32.mxu0 %v25
  %1112 = vmatmul.mubr.f32.gmra.mrb[0].mxu0 %v24
  %v1113 = vpop.f32.mrb[0].mxu0
  %v1114 = vadd.f32 %v1025, %v1113
  %v1115 = vpop.f32.mrb[0].mxu0
  %v1116 = vadd.f32 %v1027, %v1115
  %1117 = vmatprep.mubr.f32.mxu0 %v41
  %1118 = vmatmul.mubr.f32.gmra.mrb[0].mxu0 %v40
  %v1119 = vpop.f32.mrb[0].mxu0
  %v1120 = vadd.f32 %v1031, %v1119
  %v1121 = vpop.f32.mrb[0].mxu0
  %v1122 = vadd.f32 %v1033, %v1121
  %1123 = vmatprep.mubr.f32.mxu0 %v57
  %1124 = vmatmul.mubr.f32.gmra.mrb[0].mxu0 %v56
  %v1125 = vpop.f32.mrb[0].mxu0
  %v1126 = vadd.f32 %v1037, %v1125
  %v1127 = vpop.f32.mrb[0].mxu0
  %v1128 = vadd.f32 %v1039, %v1127
  %1129 = vmatprep.mubr.f32.mxu0 %v73
  %1130 = vmatmul.mubr.f32.gmra.mrb[0].mxu0 %v72
  %v1131 = vpop.f32.mrb[0].mxu0
  %v1132 = vadd.f32 %v1043, %v1131
  %v1133 = vpop.f32.mrb[0].mxu0
  %v1134 = vadd.f32 %v1045, %v1133
  %1135 = vdwg.mxu0
  %1136 = vmatprep.subr.mxu0 %v463
  %1137 = vmatpush1.msra.mxu0 %v462
  %1138 = vmatprep.subr.mxu0 %v465
  %1139 = vmatpush1.msra.mxu0 %v464
  %1140 = vmatprep.subr.mxu0 %v467
  %1141 = vmatpush1.msra.mxu0 %v466
  %1142 = vmatprep.subr.mxu0 %v469
  %1143 = vmatpush1.msra.mxu0 %v468
  %1144 = vmatprep.subr.mxu0 %v471
  %1145 = vmatpush1.msra.mxu0 %v470
  %1146 = vmatprep.subr.mxu0 %v473
  %1147 = vmatpush1.msra.mxu0 %v472
  %1148 = vmatprep.subr.mxu0 %v475
  %1149 = vmatpush1.msra.mxu0 %v474
  %1150 = vmatprep.subr.mxu0 %v477
  %1151 = vmatpush1.msra.mxu0 %v476
  %1152 = vmatprep.subr.mxu0 %v479
  %1153 = vmatpush1.msra.mxu0 %v478
  %1154 = vmatprep.subr.mxu0 %v481
  %1155 = vmatpush1.msra.mxu0 %v480
  %1156 = vmatprep.subr.mxu0 %v483
  %1157 = vmatpush1.msra.mxu0 %v482
  %1158 = vmatprep.subr.mxu0 %v485
  %1159 = vmatpush1.msra.mxu0 %v484
  %1160 = vmatprep.subr.mxu0 %v487
  %1161 = vmatpush1.msra.mxu0 %v486
  %1162 = vmatprep.subr.mxu0 %v489
  %1163 = vmatpush1.msra.mxu0 %v488
  %1164 = vmatprep.subr.mxu0 %v491
  %1165 = vmatpush1.msra.mxu0 %v490
  %1166 = vmatprep.subr.mxu0 %v493
  %1167 = vmatpush1.msra.mxu0 %v492
  %1168 = vmatprep.subr.mxu0 %v495
  %1169 = vmatpush1.msra.mxu0 %v494
  %1170 = vmatprep.subr.mxu0 %v497
  %1171 = vmatpush1.msra.mxu0 %v496
  %1172 = vmatprep.subr.mxu0 %v499
  %1173 = vmatpush1.msra.mxu0 %v498
  %1174 = vmatprep.subr.mxu0 %v501
  %1175 = vmatpush1.msra.mxu0 %v500
  %1176 = vmatprep.subr.mxu0 %v503
  %1177 = vmatpush1.msra.mxu0 %v502
  %1178 = vmatprep.subr.mxu0 %v505
  %1179 = vmatpush1.msra.mxu0 %v504
  %1180 = vmatprep.subr.mxu0 %v507
  %1181 = vmatpush1.msra.mxu0 %v506
  %1182 = vmatprep.subr.mxu0 %v509
  %1183 = vmatpush1.msra.mxu0 %v508
  %1184 = vmatprep.subr.mxu0 %v511
  %1185 = vmatpush1.msra.mxu0 %v510
  %1186 = vmatprep.subr.mxu0 %v513
  %1187 = vmatpush1.msra.mxu0 %v512
  %1188 = vmatprep.subr.mxu0 %v515
  %1189 = vmatpush1.msra.mxu0 %v514
  %1190 = vmatprep.subr.mxu0 %v517
  %1191 = vmatpush1.msra.mxu0 %v516
  %1192 = vmatprep.subr.mxu0 %v519
  %1193 = vmatpush1.msra.mxu0 %v518
  %1194 = vmatprep.subr.mxu0 %v521
  %1195 = vmatpush1.msra.mxu0 %v520
  %1196 = vmatprep.subr.mxu0 %v523
  %1197 = vmatpush1.msra.mxu0 %v522
  %1198 = vmatprep.subr.mxu0 %v525
  %1199 = vmatpush1.msra.mxu0 %v524
  %1200 = vmatprep.mubr.f32.mxu0 %v27
  %1201 = vmatmul.mubr.f32.gmra.mrb[0].mxu0 %v26
  %v1202 = vpop.f32.mrb[0].mxu0
  %v1203 = vadd.f32 %v1114, %v1202
  %v1204 = vpop.f32.mrb[0].mxu0
  %v1205 = vadd.f32 %v1116, %v1204
  %1206 = vmatprep.mubr.f32.mxu0 %v43
  %1207 = vmatmul.mubr.f32.gmra.mrb[0].mxu0 %v42
  %v1208 = vpop.f32.mrb[0].mxu0
  %v1209 = vadd.f32 %v1120, %v1208
  %v1210 = vpop.f32.mrb[0].mxu0
  %v1211 = vadd.f32 %v1122, %v1210
  %1212 = vmatprep.mubr.f32.mxu0 %v59
  %1213 = vmatmul.mubr.f32.gmra.mrb[0].mxu0 %v58
  %v1214 = vpop.f32.mrb[0].mxu0
  %v1215 = vadd.f32 %v1126, %v1214
  %v1216 = vpop.f32.mrb[0].mxu0
  %v1217 = vadd.f32 %v1128, %v1216
  %1218 = vmatprep.mubr.f32.mxu0 %v75
  %1219 = vmatmul.mubr.f32.gmra.mrb[0].mxu0 %v74
  %v1220 = vpop.f32.mrb[0].mxu0
  %v1221 = vadd.f32 %v1132, %v1220
  %v1222 = vpop.f32.mrb[0].mxu0
  %v1223 = vadd.f32 %v1134, %v1222
  %1224 = vdwg.mxu0
  %1225 = vmatprep.subr.mxu0 %v527
  %1226 = vmatpush1.msra.mxu0 %v526
  %1227 = vmatprep.subr.mxu0 %v529
  %1228 = vmatpush1.msra.mxu0 %v528
  %1229 = vmatprep.subr.mxu0 %v531
  %1230 = vmatpush1.msra.mxu0 %v530
  %1231 = vmatprep.subr.mxu0 %v533
  %1232 = vmatpush1.msra.mxu0 %v532
  %1233 = vmatprep.subr.mxu0 %v535
  %1234 = vmatpush1.msra.mxu0 %v534
  %1235 = vmatprep.subr.mxu0 %v537
  %1236 = vmatpush1.msra.mxu0 %v536
  %1237 = vmatprep.subr.mxu0 %v539
  %1238 = vmatpush1.msra.mxu0 %v538
  %1239 = vmatprep.subr.mxu0 %v541
  %1240 = vmatpush1.msra.mxu0 %v540
  %1241 = vmatprep.subr.mxu0 %v543
  %1242 = vmatpush1.msra.mxu0 %v542
  %1243 = vmatprep.subr.mxu0 %v545
  %1244 = vmatpush1.msra.mxu0 %v544
  %1245 = vmatprep.subr.mxu0 %v547
  %1246 = vmatpush1.msra.mxu0 %v546
  %1247 = vmatprep.subr.mxu0 %v549
  %1248 = vmatpush1.msra.mxu0 %v548
  %1249 = vmatprep.subr.mxu0 %v551
  %1250 = vmatpush1.msra.mxu0 %v550
  %1251 = vmatprep.subr.mxu0 %v553
  %1252 = vmatpush1.msra.mxu0 %v552
  %1253 = vmatprep.subr.mxu0 %v555
  %1254 = vmatpush1.msra.mxu0 %v554
  %1255 = vmatprep.subr.mxu0 %v557
  %1256 = vmatpush1.msra.mxu0 %v556
  %1257 = vmatprep.subr.mxu0 %v559
  %1258 = vmatpush1.msra.mxu0 %v558
  %1259 = vmatprep.subr.mxu0 %v561
  %1260 = vmatpush1.msra.mxu0 %v560
  %1261 = vmatprep.subr.mxu0 %v563
  %1262 = vmatpush1.msra.mxu0 %v562
  %1263 = vmatprep.subr.mxu0 %v565
  %1264 = vmatpush1.msra.mxu0 %v564
  %1265 = vmatprep.subr.mxu0 %v567
  %1266 = vmatpush1.msra.mxu0 %v566
  %1267 = vmatprep.subr.mxu0 %v569
  %1268 = vmatpush1.msra.mxu0 %v568
  %1269 = vmatprep.subr.mxu0 %v571
  %1270 = vmatpush1.msra.mxu0 %v570
  %1271 = vmatprep.subr.mxu0 %v573
  %1272 = vmatpush1.msra.mxu0 %v572
  %1273 = vmatprep.subr.mxu0 %v575
  %1274 = vmatpush1.msra.mxu0 %v574
  %1275 = vmatprep.subr.mxu0 %v577
  %1276 = vmatpush1.msra.mxu0 %v576
  %1277 = vmatprep.subr.mxu0 %v579
  %1278 = vmatpush1.msra.mxu0 %v578
  %1279 = vmatprep.subr.mxu0 %v581
  %1280 = vmatpush1.msra.mxu0 %v580
  %1281 = vmatprep.subr.mxu0 %v583
  %1282 = vmatpush1.msra.mxu0 %v582
  %1283 = vmatprep.subr.mxu0 %v585
  %1284 = vmatpush1.msra.mxu0 %v584
  %1285 = vmatprep.subr.mxu0 %v587
  %1286 = vmatpush1.msra.mxu0 %v586
  %1287 = vmatprep.subr.mxu0 %v589
  %1288 = vmatpush1.msra.mxu0 %v588
  %1289 = vmatprep.mubr.f32.mxu0 %v29
  %1290 = vmatmul.mubr.f32.gmra.mrb[0].mxu0 %v28
  %v1291 = vpop.f32.mrb[0].mxu0
  %v1292 = vadd.f32 %v1203, %v1291
  %v1293 = vpop.f32.mrb[0].mxu0
  %v1294 = vadd.f32 %v1205, %v1293
  %1295 = vmatprep.mubr.f32.mxu0 %v45
  %1296 = vmatmul.mubr.f32.gmra.mrb[0].mxu0 %v44
  %v1297 = vpop.f32.mrb[0].mxu0
  %v1298 = vadd.f32 %v1209, %v1297
  %v1299 = vpop.f32.mrb[0].mxu0
  %v1300 = vadd.f32 %v1211, %v1299
  %1301 = vmatprep.mubr.f32.mxu0 %v61
  %1302 = vmatmul.mubr.f32.gmra.mrb[0].mxu0 %v60
  %v1303 = vpop.f32.mrb[0].mxu0
  %v1304 = vadd.f32 %v1215, %v1303
  %v1305 = vpop.f32.mrb[0].mxu0
  %v1306 = vadd.f32 %v1217, %v1305
  %1307 = vmatprep.mubr.f32.mxu0 %v77
  %1308 = vmatmul.mubr.f32.gmra.mrb[0].mxu0 %v76
  %v1309 = vpop.f32.mrb[0].mxu0
  %v1310 = vadd.f32 %v1221, %v1309
  %v1311 = vpop.f32.mrb[0].mxu0
  %v1312 = vadd.f32 %v1223, %v1311
  %1313 = vdwg.mxu0
  %v1314 = vmax.f32 %v1292, 0.0
  %v1315 = vmax.f32 %v1294, 0.0
  %v1316 = vmax.f32 %v1298, 0.0
  %v1317 = vmax.f32 %v1300, 0.0
  %v1318 = vmax.f32 %v1304, 0.0
  %v1319 = vmax.f32 %v1306, 0.0
  %v1320 = vmax.f32 %v1310, 0.0
  %v1321 = vmax.f32 %v1312, 0.0
  %1322 = vst [vmem:[%s3] sm:$0xff] %v1314
  %1323 = vst [vmem:[%s3 + $0x8] sm:$0xff] %v1315
  %1324 = vst [vmem:[%s3 + $0x10] sm:$0xff] %v1316
  %1325 = vst [vmem:[%s3 + $0x18] sm:$0xff] %v1317
  %1326 = vst [vmem:[%s3 + $0x20] sm:$0xff] %v1318
  %1327 = vst [vmem:[%s3 + $0x28] sm:$0xff] %v1319
  %1328 = vst [vmem:[%s3 + $0x30] sm:$0xff] %v1320
  %1329 = vst [vmem:[%s3 + $0x38] sm:$0xff] %v1321
  // Predicated region
  $region14: #{_lambda_.9} parent=0 // pred_check
    _
  $region15: #{_lambda_.9} parent=0 // pred_check_branch
    %1331 = sbr.rel (0) target = $region17
  $region16: #{_lambda_.9} parent=0 // pred_region
    _
  $region17: #{_lambda_.9} parent=0 // pred_fallthru
    _
  // Predicated region
  $region18: #{_lambda_.9} parent=0 // pred_check
    _
  $region19: #{_lambda_.9} parent=0 // pred_check_branch
    %1333 = sbr.rel (0) target = $region21
  $region20: #{_lambda_.9} parent=0 // pred_region
    _
  $region21: #{_lambda_.9} parent=0 // pred_fallthru
    _

// kernel: squeeze.5
$region0: #{squeeze.5}
  %s0 = inlined_call_operand.vmem [shape: f32[1,32,256], index: 0, kind: input, shape index: {}]
  %s1 = inlined_call_operand.vmem [shape: f32[2,4,4,256], index: 1, kind: output, shape index: {}]
  $region1: #{squeeze.5} parent=0
    #allocation0 [shape = 'u8[65536]{0}', space=vmem, size = 0x10000, scoped, tag = 'scoped mem for output reshape']
    %v2 = vld [vmem:[%s0] sm:$0xff]
    %3 = vst [vmem:[#allocation0] sm:$0xf] %v2
    %s4 = scalar_lea.vmem [#allocation0], 12
    %5 = vst [vmem:[%s4] sm:$0xf0] %v2
    %s6 = scalar_lea.vmem %s0, 8
    %v7 = vld [vmem:[%s6] sm:$0xff]
    %s8 = scalar_lea.vmem [#allocation0], 8
    %9 = vst [vmem:[%s8] sm:$0xf] %v7
    %s10 = scalar_lea.vmem [#allocation0], 20
    %11 = vst [vmem:[%s10] sm:$0xf0] %v7
    %s12 = scalar_lea.vmem %s0, 16
    %v13 = vld [vmem:[%s12] sm:$0xff]
    %s14 = scalar_lea.vmem [#allocation0], 32
    %15 = vst [vmem:[%s14] sm:$0xf] %v13
    %s16 = scalar_lea.vmem [#allocation0], 44
    %17 = vst [vmem:[%s16] sm:$0xf0] %v13
    %s18 = scalar_lea.vmem %s0, 24
    %v19 = vld [vmem:[%s18] sm:$0xff]
    %s20 = scalar_lea.vmem [#allocation0], 40
    %21 = vst [vmem:[%s20] sm:$0xf] %v19
    %s22 = scalar_lea.vmem [#allocation0], 52
    %23 = vst [vmem:[%s22] sm:$0xf0] %v19
    %s24 = scalar_lea.vmem %s0, 32
    %v25 = vld [vmem:[%s24] sm:$0xff]
    %s26 = scalar_lea.vmem [#allocation0], 64
    %27 = vst [vmem:[%s26] sm:$0xf] %v25
    %s28 = scalar_lea.vmem [#allocation0], 76
    %29 = vst [vmem:[%s28] sm:$0xf0] %v25
    %s30 = scalar_lea.vmem %s0, 40
    %v31 = vld [vmem:[%s30] sm:$0xff]
    %s32 = scalar_lea.vmem [#allocation0], 72
    %33 = vst [vmem:[%s32] sm:$0xf] %v31
    %s34 = scalar_lea.vmem [#allocation0], 84
    %35 = vst [vmem:[%s34] sm:$0xf0] %v31
    %s36 = scalar_lea.vmem %s0, 48
    %v37 = vld [vmem:[%s36] sm:$0xff]
    %s38 = scalar_lea.vmem [#allocation0], 96
    %39 = vst [vmem:[%s38] sm:$0xf] %v37
    %s40 = scalar_lea.vmem [#allocation0], 108
    %41 = vst [vmem:[%s40] sm:$0xf0] %v37
    %s42 = scalar_lea.vmem %s0, 56
    %v43 = vld [vmem:[%s42] sm:$0xff]
    %s44 = scalar_lea.vmem [#allocation0], 104
    %45 = vst [vmem:[%s44] sm:$0xf] %v43
    %s46 = scalar_lea.vmem [#allocation0], 116
    %47 = vst [vmem:[%s46] sm:$0xf0] %v43
    %s49 = sshllo.u32 0, 4
    %v51 = vld [vmem:[#allocation0] sm:%s49]
    %s52 = sshllo.u32 0, 4
    %53 = vst [vmem:[%s1] sm:%s52] %v51
    %s54 = scalar_lea.vmem [#allocation0], 8
    %v55 = vld [vmem:[%s54] sm:%s49]
    %s56 = sshllo.u32 0, 4
    %s57 = scalar_lea.vmem %s1, 4
    %58 = vst [vmem:[%s57] sm:%s56] %v55
    %s59 = scalar_lea.vmem [#allocation0], 16
    %v60 = vld [vmem:[%s59] sm:%s49]
    %s61 = sshllo.u32 0, 4
    %s62 = smul.addr 4, 2
    %s63 = scalar_lea.vmem %s1, %s62
    %64 = vst [vmem:[%s63] sm:%s61] %v60
    %s65 = scalar_lea.vmem [#allocation0], 24
    %v66 = vld [vmem:[%s65] sm:%s49]
    %s67 = sshllo.u32 0, 4
    %s68 = smul.addr 4, 3
    %s69 = scalar_lea.vmem %s1, %s68
    %70 = vst [vmem:[%s69] sm:%s67] %v66
    %s71 = scalar_lea.vmem [#allocation0], 32
    %v72 = vld [vmem:[%s71] sm:%s49]
    %s73 = sshllo.u32 0, 4
    %s74 = smul.addr 4, 4
    %s75 = scalar_lea.vmem %s1, %s74
    %76 = vst [vmem:[%s75] sm:%s73] %v72
    %s77 = scalar_lea.vmem [#allocation0], 40
    %v78 = vld [vmem:[%s77] sm:%s49]
    %s79 = sshllo.u32 0, 4
    %s80 = smul.addr 4, 5
    %s81 = scalar_lea.vmem %s1, %s80
    %82 = vst [vmem:[%s81] sm:%s79] %v78
    %s83 = scalar_lea.vmem [#allocation0], 48
    %v84 = vld [vmem:[%s83] sm:%s49]
    %s85 = sshllo.u32 0, 4
    %s86 = smul.addr 4, 6
    %s87 = scalar_lea.vmem %s1, %s86
    %88 = vst [vmem:[%s87] sm:%s85] %v84
    %s89 = scalar_lea.vmem [#allocation0], 56
    %v90 = vld [vmem:[%s89] sm:%s49]
    %s91 = sshllo.u32 0, 4
    %s92 = smul.addr 4, 7
    %s93 = scalar_lea.vmem %s1, %s92
    %94 = vst [vmem:[%s93] sm:%s91] %v90
    %s95 = scalar_lea.vmem [#allocation0], 64
    %v96 = vld [vmem:[%s95] sm:%s49]
    %s97 = sshllo.u32 0, 4
    %s98 = smul.addr 4, 8
    %s99 = scalar_lea.vmem %s1, %s98
    %100 = vst [vmem:[%s99] sm:%s97] %v96
    %s101 = scalar_lea.vmem [#allocation0], 72
    %v102 = vld [vmem:[%s101] sm:%s49]
    %s103 = sshllo.u32 0, 4
    %s104 = smul.addr 4, 9
    %s105 = scalar_lea.vmem %s1, %s104
    %106 = vst [vmem:[%s105] sm:%s103] %v102
    %s107 = scalar_lea.vmem [#allocation0], 80
    %v108 = vld [vmem:[%s107] sm:%s49]
    %s109 = sshllo.u32 0, 4
    %s110 = smul.addr 4, 10
    %s111 = scalar_lea.vmem %s1, %s110
    %112 = vst [vmem:[%s111] sm:%s109] %v108
    %s113 = scalar_lea.vmem [#allocation0], 88
    %v114 = vld [vmem:[%s113] sm:%s49]
    %s115 = sshllo.u32 0, 4
    %s116 = smul.addr 4, 11
    %s117 = scalar_lea.vmem %s1, %s116
    %118 = vst [vmem:[%s117] sm:%s115] %v114
    %s119 = scalar_lea.vmem [#allocation0], 96
    %v120 = vld [vmem:[%s119] sm:%s49]
    %s121 = sshllo.u32 0, 4
    %s122 = smul.addr 4, 12
    %s123 = scalar_lea.vmem %s1, %s122
    %124 = vst [vmem:[%s123] sm:%s121] %v120
    %s125 = scalar_lea.vmem [#allocation0], 104
    %v126 = vld [vmem:[%s125] sm:%s49]
    %s127 = sshllo.u32 0, 4
    %s128 = smul.addr 4, 13
    %s129 = scalar_lea.vmem %s1, %s128
    %130 = vst [vmem:[%s129] sm:%s127] %v126
    %s131 = scalar_lea.vmem [#allocation0], 112
    %v132 = vld [vmem:[%s131] sm:%s49]
    %s133 = sshllo.u32 0, 4
    %s134 = smul.addr 4, 14
    %s135 = scalar_lea.vmem %s1, %s134
    %136 = vst [vmem:[%s135] sm:%s133] %v132
    %s137 = scalar_lea.vmem [#allocation0], 120
    %v138 = vld [vmem:[%s137] sm:%s49]
    %s139 = sshllo.u32 0, 4
    %s140 = smul.addr 4, 15
    %s141 = scalar_lea.vmem %s1, %s140
    %142 = vst [vmem:[%s141] sm:%s139] %v138

// kernel: _lambda_.10
$region0: #{_lambda_.10}
  #allocation0 [shape = 'u32[]', space=smem, size = 0x4, offset = 0x4, fixed_abs, tag = 'smem constant byte address 0x4 - core index']
  #allocation1 [shape = 'u32[144,128]{1,0:T(1,128)}', space=vmem, size = 0x12000, scoped, tag = 'internal scratch']
  %s0 = inlined_call_operand.vmem [shape: f32[2,4096], index: 0, kind: input, shape index: {}]
  %s1 = inlined_call_operand.vmem [shape: f32[4096,128], index: 1, kind: input, shape index: {}]
  %s2 = inlined_call_operand.vmem [shape: f32[1,128], index: 2, kind: input, shape index: {}]
  %s3 = inlined_call_operand.vmem [shape: f32[128,4096], index: 3, kind: input, shape index: {}]
  %s4 = inlined_call_operand.vmem [shape: f32[1,4096], index: 4, kind: input, shape index: {}]
  %s5 = inlined_call_operand.hbm [shape: f32[2,128], index: 5, kind: output, shape index: {0}]
  %s6 = inlined_call_operand.vmem [shape: f32[2,4096], index: 6, kind: output, shape index: {1}]
  %7 = xla_tuple %s5, %s6
  %s8 = sld [smem:[#allocation0]]
  $region38: #{_lambda_.10} parent=0
    _
  %s10 = ssub.s32 1, %s8
  %s11 = scalar_select 0, %s10, %s8
  $region1: #{_lambda_.10} parent=0
    #allocation2 [shape = 'u8[1024]{0}', space=vmem, size = 0x400, scoped, tag = 'output window, operand 0, single buffered']
    #allocation3 [shape = 's32[1]{0}', space=sflag, size = 0x4, scoped, tag = 'scoped memory for _lambda_.10']
    %12 = vsyncpa [#allocation3], 0
    // Predicated region
    $region2: #{_lambda_.10} parent=1 // pred_check
      _
    $region3: #{_lambda_.10} parent=1 // pred_check_branch
      %14 = sbr.rel (0) target = $region5
    $region4: #{_lambda_.10} parent=1 // pred_region
      _
    $region5: #{_lambda_.10} parent=1 // pred_fallthru
      _
    // Predicated region
    $region6: #{_lambda_.10} parent=1 // pred_check
      _
    $region7: #{_lambda_.10} parent=1 // pred_check_branch
      %16 = sbr.rel (0) target = $region9
    $region8: #{_lambda_.10} parent=1 // pred_region
      _
    $region9: #{_lambda_.10} parent=1 // pred_fallthru
      _
    // Predicated region
    $region10: #{_lambda_.10} parent=1 // pred_check
      _
    $region11: #{_lambda_.10} parent=1 // pred_check_branch
      %18 = sbr.rel (0) target = $region13
    $region12: #{_lambda_.10} parent=1 // pred_region
      _
    $region13: #{_lambda_.10} parent=1 // pred_fallthru
      _
    // Predicated region
    $region14: #{_lambda_.10} parent=1 // pred_check
      _
    $region15: #{_lambda_.10} parent=1 // pred_check_branch
      %20 = sbr.rel (0) target = $region17
    $region16: #{_lambda_.10} parent=1 // pred_region
      _
    $region17: #{_lambda_.10} parent=1 // pred_fallthru
      _
    // Predicated region
    $region18: #{_lambda_.10} parent=1 // pred_check
      _
    $region19: #{_lambda_.10} parent=1 // pred_check_branch
      %22 = sbr.rel (0) target = $region21
    $region20: #{_lambda_.10} parent=1 // pred_region
      _
    $region21: #{_lambda_.10} parent=1 // pred_fallthru
      _
    %v23 = vld [vmem:[%s0] sm:$0xff]
    %v24 = vld [vmem:[%s0 + $0x8] sm:$0xff]
    %v25 = vld [vmem:[%s0 + $0x10] sm:$0xff]
    %v26 = vld [vmem:[%s0 + $0x18] sm:$0xff]
    %v27 = vld [vmem:[%s0 + $0x20] sm:$0xff]
    %v28 = vld [vmem:[%s0 + $0x28] sm:$0xff]
    %v29 = vld [vmem:[%s0 + $0x30] sm:$0xff]
    %v30 = vld [vmem:[%s0 + $0x38] sm:$0xff]
    %v31 = vld [vmem:[%s1] sm:$0xff]
    %v32 = vld [vmem:[%s1 + $0x8] sm:$0xff]
    %v33 = vld [vmem:[%s1 + $0x10] sm:$0xff]
    %v34 = vld [vmem:[%s1 + $0x18] sm:$0xff]
    %v35 = vld [vmem:[%s1 + $0x20] sm:$0xff]
    %v36 = vld [vmem:[%s1 + $0x28] sm:$0xff]
    %v37 = vld [vmem:[%s1 + $0x30] sm:$0xff]
    %v38 = vld [vmem:[%s1 + $0x38] sm:$0xff]
    %v39 = vld [vmem:[%s1 + $0x40] sm:$0xff]
    %v40 = vld [vmem:[%s1 + $0x48] sm:$0xff]
    %v41 = vld [vmem:[%s1 + $0x50] sm:$0xff]
    %v42 = vld [vmem:[%s1 + $0x58] sm:$0xff]
    %v43 = vld [vmem:[%s1 + $0x60] sm:$0xff]
    %v44 = vld [vmem:[%s1 + $0x68] sm:$0xff]
    %v45 = vld [vmem:[%s1 + $0x70] sm:$0xff]
    %v46 = vld [vmem:[%s1 + $0x78] sm:$0xff]
    %v47 = vld [vmem:[%s1 + $0x80] sm:$0xff]
    %v48 = vld [vmem:[%s1 + $0x88] sm:$0xff]
    %v49 = vld [vmem:[%s1 + $0x90] sm:$0xff]
    %v50 = vld [vmem:[%s1 + $0x98] sm:$0xff]
    %v51 = vld [vmem:[%s1 + $0xa0] sm:$0xff]
    %v52 = vld [vmem:[%s1 + $0xa8] sm:$0xff]
    %v53 = vld [vmem:[%s1 + $0xb0] sm:$0xff]
    %v54 = vld [vmem:[%s1 + $0xb8] sm:$0xff]
    %v55 = vld [vmem:[%s1 + $0xc0] sm:$0xff]
    %v56 = vld [vmem:[%s1 + $0xc8] sm:$0xff]
    %v57 = vld [vmem:[%s1 + $0xd0] sm:$0xff]
    %v58 = vld [vmem:[%s1 + $0xd8] sm:$0xff]
    %v59 = vld [vmem:[%s1 + $0xe0] sm:$0xff]
    %v60 = vld [vmem:[%s1 + $0xe8] sm:$0xff]
    %v61 = vld [vmem:[%s1 + $0xf0] sm:$0xff]
    %v62 = vld [vmem:[%s1 + $0xf8] sm:$0xff]
    %v63 = vld [vmem:[%s1 + $0x100] sm:$0xff]
    %v64 = vld [vmem:[%s1 + $0x108] sm:$0xff]
    %v65 = vld [vmem:[%s1 + $0x110] sm:$0xff]
    %v66 = vld [vmem:[%s1 + $0x118] sm:$0xff]
    %v67 = vld [vmem:[%s1 + $0x120] sm:$0xff]
    %v68 = vld [vmem:[%s1 + $0x128] sm:$0xff]
    %v69 = vld [vmem:[%s1 + $0x130] sm:$0xff]
    %v70 = vld [vmem:[%s1 + $0x138] sm:$0xff]
    %v71 = vld [vmem:[%s1 + $0x140] sm:$0xff]
    %v72 = vld [vmem:[%s1 + $0x148] sm:$0xff]
    %v73 = vld [vmem:[%s1 + $0x150] sm:$0xff]
    %v74 = vld [vmem:[%s1 + $0x158] sm:$0xff]
    %v75 = vld [vmem:[%s1 + $0x160] sm:$0xff]
    %v76 = vld [vmem:[%s1 + $0x168] sm:$0xff]
    %v77 = vld [vmem:[%s1 + $0x170] sm:$0xff]
    %v78 = vld [vmem:[%s1 + $0x178] sm:$0xff]
    %v79 = vld [vmem:[%s1 + $0x180] sm:$0xff]
    %v80 = vld [vmem:[%s1 + $0x188] sm:$0xff]
    %v81 = vld [vmem:[%s1 + $0x190] sm:$0xff]
    %v82 = vld [vmem:[%s1 + $0x198] sm:$0xff]
    %v83 = vld [vmem:[%s1 + $0x1a0] sm:$0xff]
    %v84 = vld [vmem:[%s1 + $0x1a8] sm:$0xff]
    %v85 = vld [vmem:[%s1 + $0x1b0] sm:$0xff]
    %v86 = vld [vmem:[%s1 + $0x1b8] sm:$0xff]
    %v87 = vld [vmem:[%s1 + $0x1c0] sm:$0xff]
    %v88 = vld [vmem:[%s1 + $0x1c8] sm:$0xff]
    %v89 = vld [vmem:[%s1 + $0x1d0] sm:$0xff]
    %v90 = vld [vmem:[%s1 + $0x1d8] sm:$0xff]
    %v91 = vld [vmem:[%s1 + $0x1e0] sm:$0xff]
    %v92 = vld [vmem:[%s1 + $0x1e8] sm:$0xff]
    %v93 = vld [vmem:[%s1 + $0x1f0] sm:$0xff]
    %v94 = vld [vmem:[%s1 + $0x1f8] sm:$0xff]
    %v95 = vld [vmem:[%s1 + $0x200] sm:$0xff]
    %v96 = vld [vmem:[%s1 + $0x208] sm:$0xff]
    %v97 = vld [vmem:[%s1 + $0x210] sm:$0xff]
    %v98 = vld [vmem:[%s1 + $0x218] sm:$0xff]
    %v99 = vld [vmem:[%s1 + $0x220] sm:$0xff]
    %v100 = vld [vmem:[%s1 + $0x228] sm:$0xff]
    %v101 = vld [vmem:[%s1 + $0x230] sm:$0xff]
    %v102 = vld [vmem:[%s1 + $0x238] sm:$0xff]
    %v103 = vld [vmem:[%s1 + $0x240] sm:$0xff]
    %v104 = vld [vmem:[%s1 + $0x248] sm:$0xff]
    %v105 = vld [vmem:[%s1 + $0x250] sm:$0xff]
    %v106 = vld [vmem:[%s1 + $0x258] sm:$0xff]
    %v107 = vld [vmem:[%s1 + $0x260] sm:$0xff]
    %v108 = vld [vmem:[%s1 + $0x268] sm:$0xff]
    %v109 = vld [vmem:[%s1 + $0x270] sm:$0xff]
    %v110 = vld [vmem:[%s1 + $0x278] sm:$0xff]
    %v111 = vld [vmem:[%s1 + $0x280] sm:$0xff]
    %v112 = vld [vmem:[%s1 + $0x288] sm:$0xff]
    %v113 = vld [vmem:[%s1 + $0x290] sm:$0xff]
    %v114 = vld [vmem:[%s1 + $0x298] sm:$0xff]
    %v115 = vld [vmem:[%s1 + $0x2a0] sm:$0xff]
    %v116 = vld [vmem:[%s1 + $0x2a8] sm:$0xff]
    %v117 = vld [vmem:[%s1 + $0x2b0] sm:$0xff]
    %v118 = vld [vmem:[%s1 + $0x2b8] sm:$0xff]
    %v119 = vld [vmem:[%s1 + $0x2c0] sm:$0xff]
    %v120 = vld [vmem:[%s1 + $0x2c8] sm:$0xff]
    %v121 = vld [vmem:[%s1 + $0x2d0] sm:$0xff]
    %v122 = vld [vmem:[%s1 + $0x2d8] sm:$0xff]
    %v123 = vld [vmem:[%s1 + $0x2e0] sm:$0xff]
    %v124 = vld [vmem:[%s1 + $0x2e8] sm:$0xff]
    %v125 = vld [vmem:[%s1 + $0x2f0] sm:$0xff]
    %v126 = vld [vmem:[%s1 + $0x2f8] sm:$0xff]
    %v127 = vld [vmem:[%s1 + $0x300] sm:$0xff]
    %v128 = vld [vmem:[%s1 + $0x308] sm:$0xff]
    %v129 = vld [vmem:[%s1 + $0x310] sm:$0xff]
    %v130 = vld [vmem:[%s1 + $0x318] sm:$0xff]
    %v131 = vld [vmem:[%s1 + $0x320] sm:$0xff]
    %v132 = vld [vmem:[%s1 + $0x328] sm:$0xff]
    %v133 = vld [vmem:[%s1 + $0x330] sm:$0xff]
    %v134 = vld [vmem:[%s1 + $0x338] sm:$0xff]
    %v135 = vld [vmem:[%s1 + $0x340] sm:$0xff]
    %v136 = vld [vmem:[%s1 + $0x348] sm:$0xff]
    %v137 = vld [vmem:[%s1 + $0x350] sm:$0xff]
    %v138 = vld [vmem:[%s1 + $0x358] sm:$0xff]
    %v139 = vld [vmem:[%s1 + $0x360] sm:$0xff]
    %v140 = vld [vmem:[%s1 + $0x368] sm:$0xff]
    %v141 = vld [vmem:[%s1 + $0x370] sm:$0xff]
    %v142 = vld [vmem:[%s1 + $0x378] sm:$0xff]
    %v143 = vld [vmem:[%s1 + $0x380] sm:$0xff]
    %v144 = vld [vmem:[%s1 + $0x388] sm:$0xff]
    %v145 = vld [vmem:[%s1 + $0x390] sm:$0xff]
    %v146 = vld [vmem:[%s1 + $0x398] sm:$0xff]
    %v147 = vld [vmem:[%s1 + $0x3a0] sm:$0xff]
    %v148 = vld [vmem:[%s1 + $0x3a8] sm:$0xff]
    %v149 = vld [vmem:[%s1 + $0x3b0] sm:$0xff]
    %v150 = vld [vmem:[%s1 + $0x3b8] sm:$0xff]
    %v151 = vld [vmem:[%s1 + $0x3c0] sm:$0xff]
    %v152 = vld [vmem:[%s1 + $0x3c8] sm:$0xff]
    %v153 = vld [vmem:[%s1 + $0x3d0] sm:$0xff]
    %v154 = vld [vmem:[%s1 + $0x3d8] sm:$0xff]
    %v155 = vld [vmem:[%s1 + $0x3e0] sm:$0xff]
    %v156 = vld [vmem:[%s1 + $0x3e8] sm:$0xff]
    %v157 = vld [vmem:[%s1 + $0x3f0] sm:$0xff]
    %v158 = vld [vmem:[%s1 + $0x3f8] sm:$0xff]
    %v159 = vld [vmem:[%s1 + $0x400] sm:$0xff]
    %v160 = vld [vmem:[%s1 + $0x408] sm:$0xff]
    %v161 = vld [vmem:[%s1 + $0x410] sm:$0xff]
    %v162 = vld [vmem:[%s1 + $0x418] sm:$0xff]
    %v163 = vld [vmem:[%s1 + $0x420] sm:$0xff]
    %v164 = vld [vmem:[%s1 + $0x428] sm:$0xff]
    %v165 = vld [vmem:[%s1 + $0x430] sm:$0xff]
    %v166 = vld [vmem:[%s1 + $0x438] sm:$0xff]
    %v167 = vld [vmem:[%s1 + $0x440] sm:$0xff]
    %v168 = vld [vmem:[%s1 + $0x448] sm:$0xff]
    %v169 = vld [vmem:[%s1 + $0x450] sm:$0xff]
    %v170 = vld [vmem:[%s1 + $0x458] sm:$0xff]
    %v171 = vld [vmem:[%s1 + $0x460] sm:$0xff]
    %v172 = vld [vmem:[%s1 + $0x468] sm:$0xff]
    %v173 = vld [vmem:[%s1 + $0x470] sm:$0xff]
    %v174 = vld [vmem:[%s1 + $0x478] sm:$0xff]
    %v175 = vld [vmem:[%s1 + $0x480] sm:$0xff]
    %v176 = vld [vmem:[%s1 + $0x488] sm:$0xff]
    %v177 = vld [vmem:[%s1 + $0x490] sm:$0xff]
    %v178 = vld [vmem:[%s1 + $0x498] sm:$0xff]
    %v179 = vld [vmem:[%s1 + $0x4a0] sm:$0xff]
    %v180 = vld [vmem:[%s1 + $0x4a8] sm:$0xff]
    %v181 = vld [vmem:[%s1 + $0x4b0] sm:$0xff]
    %v182 = vld [vmem:[%s1 + $0x4b8] sm:$0xff]
    %v183 = vld [vmem:[%s1 + $0x4c0] sm:$0xff]
    %v184 = vld [vmem:[%s1 + $0x4c8] sm:$0xff]
    %v185 = vld [vmem:[%s1 + $0x4d0] sm:$0xff]
    %v186 = vld [vmem:[%s1 + $0x4d8] sm:$0xff]
    %v187 = vld [vmem:[%s1 + $0x4e0] sm:$0xff]
    %v188 = vld [vmem:[%s1 + $0x4e8] sm:$0xff]
    %v189 = vld [vmem:[%s1 + $0x4f0] sm:$0xff]
    %v190 = vld [vmem:[%s1 + $0x4f8] sm:$0xff]
    %v191 = vld [vmem:[%s1 + $0x500] sm:$0xff]
    %v192 = vld [vmem:[%s1 + $0x508] sm:$0xff]
    %v193 = vld [vmem:[%s1 + $0x510] sm:$0xff]
    %v194 = vld [vmem:[%s1 + $0x518] sm:$0xff]
    %v195 = vld [vmem:[%s1 + $0x520] sm:$0xff]
    %v196 = vld [vmem:[%s1 + $0x528] sm:$0xff]
    %v197 = vld [vmem:[%s1 + $0x530] sm:$0xff]
    %v198 = vld [vmem:[%s1 + $0x538] sm:$0xff]
    %v199 = vld [vmem:[%s1 + $0x540] sm:$0xff]
    %v200 = vld [vmem:[%s1 + $0x548] sm:$0xff]
    %v201 = vld [vmem:[%s1 + $0x550] sm:$0xff]
    %v202 = vld [vmem:[%s1 + $0x558] sm:$0xff]
    %v203 = vld [vmem:[%s1 + $0x560] sm:$0xff]
    %v204 = vld [vmem:[%s1 + $0x568] sm:$0xff]
    %v205 = vld [vmem:[%s1 + $0x570] sm:$0xff]
    %v206 = vld [vmem:[%s1 + $0x578] sm:$0xff]
    %v207 = vld [vmem:[%s1 + $0x580] sm:$0xff]
    %v208 = vld [vmem:[%s1 + $0x588] sm:$0xff]
    %v209 = vld [vmem:[%s1 + $0x590] sm:$0xff]
    %v210 = vld [vmem:[%s1 + $0x598] sm:$0xff]
    %v211 = vld [vmem:[%s1 + $0x5a0] sm:$0xff]
    %v212 = vld [vmem:[%s1 + $0x5a8] sm:$0xff]
    %v213 = vld [vmem:[%s1 + $0x5b0] sm:$0xff]
    %v214 = vld [vmem:[%s1 + $0x5b8] sm:$0xff]
    %v215 = vld [vmem:[%s1 + $0x5c0] sm:$0xff]
    %v216 = vld [vmem:[%s1 + $0x5c8] sm:$0xff]
    %v217 = vld [vmem:[%s1 + $0x5d0] sm:$0xff]
    %v218 = vld [vmem:[%s1 + $0x5d8] sm:$0xff]
    %v219 = vld [vmem:[%s1 + $0x5e0] sm:$0xff]
    %v220 = vld [vmem:[%s1 + $0x5e8] sm:$0xff]
    %v221 = vld [vmem:[%s1 + $0x5f0] sm:$0xff]
    %v222 = vld [vmem:[%s1 + $0x5f8] sm:$0xff]
    %v223 = vld [vmem:[%s1 + $0x600] sm:$0xff]
    %v224 = vld [vmem:[%s1 + $0x608] sm:$0xff]
    %v225 = vld [vmem:[%s1 + $0x610] sm:$0xff]
    %v226 = vld [vmem:[%s1 + $0x618] sm:$0xff]
    %v227 = vld [vmem:[%s1 + $0x620] sm:$0xff]
    %v228 = vld [vmem:[%s1 + $0x628] sm:$0xff]
    %v229 = vld [vmem:[%s1 + $0x630] sm:$0xff]
    %v230 = vld [vmem:[%s1 + $0x638] sm:$0xff]
    %v231 = vld [vmem:[%s1 + $0x640] sm:$0xff]
    %v232 = vld [vmem:[%s1 + $0x648] sm:$0xff]
    %v233 = vld [vmem:[%s1 + $0x650] sm:$0xff]
    %v234 = vld [vmem:[%s1 + $0x658] sm:$0xff]
    %v235 = vld [vmem:[%s1 + $0x660] sm:$0xff]
    %v236 = vld [vmem:[%s1 + $0x668] sm:$0xff]
    %v237 = vld [vmem:[%s1 + $0x670] sm:$0xff]
    %v238 = vld [vmem:[%s1 + $0x678] sm:$0xff]
    %v239 = vld [vmem:[%s1 + $0x680] sm:$0xff]
    %v240 = vld [vmem:[%s1 + $0x688] sm:$0xff]
    %v241 = vld [vmem:[%s1 + $0x690] sm:$0xff]
    %v242 = vld [vmem:[%s1 + $0x698] sm:$0xff]
    %v243 = vld [vmem:[%s1 + $0x6a0] sm:$0xff]
    %v244 = vld [vmem:[%s1 + $0x6a8] sm:$0xff]
    %v245 = vld [vmem:[%s1 + $0x6b0] sm:$0xff]
    %v246 = vld [vmem:[%s1 + $0x6b8] sm:$0xff]
    %v247 = vld [vmem:[%s1 + $0x6c0] sm:$0xff]
    %v248 = vld [vmem:[%s1 + $0x6c8] sm:$0xff]
    %v249 = vld [vmem:[%s1 + $0x6d0] sm:$0xff]
    %v250 = vld [vmem:[%s1 + $0x6d8] sm:$0xff]
    %v251 = vld [vmem:[%s1 + $0x6e0] sm:$0xff]
    %v252 = vld [vmem:[%s1 + $0x6e8] sm:$0xff]
    %v253 = vld [vmem:[%s1 + $0x6f0] sm:$0xff]
    %v254 = vld [vmem:[%s1 + $0x6f8] sm:$0xff]
    %v255 = vld [vmem:[%s1 + $0x700] sm:$0xff]
    %v256 = vld [vmem:[%s1 + $0x708] sm:$0xff]
    %v257 = vld [vmem:[%s1 + $0x710] sm:$0xff]
    %v258 = vld [vmem:[%s1 + $0x718] sm:$0xff]
    %v259 = vld [vmem:[%s1 + $0x720] sm:$0xff]
    %v260 = vld [vmem:[%s1 + $0x728] sm:$0xff]
    %v261 = vld [vmem:[%s1 + $0x730] sm:$0xff]
    %v262 = vld [vmem:[%s1 + $0x738] sm:$0xff]
    %v263 = vld [vmem:[%s1 + $0x740] sm:$0xff]
    %v264 = vld [vmem:[%s1 + $0x748] sm:$0xff]
    %v265 = vld [vmem:[%s1 + $0x750] sm:$0xff]
    %v266 = vld [vmem:[%s1 + $0x758] sm:$0xff]
    %v267 = vld [vmem:[%s1 + $0x760] sm:$0xff]
    %v268 = vld [vmem:[%s1 + $0x768] sm:$0xff]
    %v269 = vld [vmem:[%s1 + $0x770] sm:$0xff]
    %v270 = vld [vmem:[%s1 + $0x778] sm:$0xff]
    %v271 = vld [vmem:[%s1 + $0x780] sm:$0xff]
    %v272 = vld [vmem:[%s1 + $0x788] sm:$0xff]
    %v273 = vld [vmem:[%s1 + $0x790] sm:$0xff]
    %v274 = vld [vmem:[%s1 + $0x798] sm:$0xff]
    %v275 = vld [vmem:[%s1 + $0x7a0] sm:$0xff]
    %v276 = vld [vmem:[%s1 + $0x7a8] sm:$0xff]
    %v277 = vld [vmem:[%s1 + $0x7b0] sm:$0xff]
    %v278 = vld [vmem:[%s1 + $0x7b8] sm:$0xff]
    %v279 = vld [vmem:[%s1 + $0x7c0] sm:$0xff]
    %v280 = vld [vmem:[%s1 + $0x7c8] sm:$0xff]
    %v281 = vld [vmem:[%s1 + $0x7d0] sm:$0xff]
    %v282 = vld [vmem:[%s1 + $0x7d8] sm:$0xff]
    %v283 = vld [vmem:[%s1 + $0x7e0] sm:$0xff]
    %v284 = vld [vmem:[%s1 + $0x7e8] sm:$0xff]
    %v285 = vld [vmem:[%s1 + $0x7f0] sm:$0xff]
    %v286 = vld [vmem:[%s1 + $0x7f8] sm:$0xff]
    %v287 = vld [vmem:[%s1 + $0x800] sm:$0xff]
    %v288 = vld [vmem:[%s1 + $0x808] sm:$0xff]
    %v289 = vld [vmem:[%s1 + $0x810] sm:$0xff]
    %v290 = vld [vmem:[%s1 + $0x818] sm:$0xff]
    %v291 = vld [vmem:[%s1 + $0x820] sm:$0xff]
    %v292 = vld [vmem:[%s1 + $0x828] sm:$0xff]
    %v293 = vld [vmem:[%s1 + $0x830] sm:$0xff]
    %v294 = vld [vmem:[%s1 + $0x838] sm:$0xff]
    %v295 = vld [vmem:[%s1 + $0x840] sm:$0xff]
    %v296 = vld [vmem:[%s1 + $0x848] sm:$0xff]
    %v297 = vld [vmem:[%s1 + $0x850] sm:$0xff]
    %v298 = vld [vmem:[%s1 + $0x858] sm:$0xff]
    %v299 = vld [vmem:[%s1 + $0x860] sm:$0xff]
    %v300 = vld [vmem:[%s1 + $0x868] sm:$0xff]
    %v301 = vld [vmem:[%s1 + $0x870] sm:$0xff]
    %v302 = vld [vmem:[%s1 + $0x878] sm:$0xff]
    %v303 = vld [vmem:[%s1 + $0x880] sm:$0xff]
    %v304 = vld [vmem:[%s1 + $0x888] sm:$0xff]
    %v305 = vld [vmem:[%s1 + $0x890] sm:$0xff]
    %v306 = vld [vmem:[%s1 + $0x898] sm:$0xff]
    %v307 = vld [vmem:[%s1 + $0x8a0] sm:$0xff]
    %v308 = vld [vmem:[%s1 + $0x8a8] sm:$0xff]
    %v309 = vld [vmem:[%s1 + $0x8b0] sm:$0xff]
    %v310 = vld [vmem:[%s1 + $0x8b8] sm:$0xff]
    %v311 = vld [vmem:[%s1 + $0x8c0] sm:$0xff]
    %v312 = vld [vmem:[%s1 + $0x8c8] sm:$0xff]
    %v313 = vld [vmem:[%s1 + $0x8d0] sm:$0xff]
    %v314 = vld [vmem:[%s1 + $0x8d8] sm:$0xff]
    %v315 = vld [vmem:[%s1 + $0x8e0] sm:$0xff]
    %v316 = vld [vmem:[%s1 + $0x8e8] sm:$0xff]
    %v317 = vld [vmem:[%s1 + $0x8f0] sm:$0xff]
    %v318 = vld [vmem:[%s1 + $0x8f8] sm:$0xff]
    %v319 = vld [vmem:[%s1 + $0x900] sm:$0xff]
    %v320 = vld [vmem:[%s1 + $0x908] sm:$0xff]
    %v321 = vld [vmem:[%s1 + $0x910] sm:$0xff]
    %v322 = vld [vmem:[%s1 + $0x918] sm:$0xff]
    %v323 = vld [vmem:[%s1 + $0x920] sm:$0xff]
    %v324 = vld [vmem:[%s1 + $0x928] sm:$0xff]
    %v325 = vld [vmem:[%s1 + $0x930] sm:$0xff]
    %v326 = vld [vmem:[%s1 + $0x938] sm:$0xff]
    %v327 = vld [vmem:[%s1 + $0x940] sm:$0xff]
    %v328 = vld [vmem:[%s1 + $0x948] sm:$0xff]
    %v329 = vld [vmem:[%s1 + $0x950] sm:$0xff]
    %v330 = vld [vmem:[%s1 + $0x958] sm:$0xff]
    %v331 = vld [vmem:[%s1 + $0x960] sm:$0xff]
    %v332 = vld [vmem:[%s1 + $0x968] sm:$0xff]
    %v333 = vld [vmem:[%s1 + $0x970] sm:$0xff]
    %v334 = vld [vmem:[%s1 + $0x978] sm:$0xff]
    %v335 = vld [vmem:[%s1 + $0x980] sm:$0xff]
    %v336 = vld [vmem:[%s1 + $0x988] sm:$0xff]
    %v337 = vld [vmem:[%s1 + $0x990] sm:$0xff]
    %v338 = vld [vmem:[%s1 + $0x998] sm:$0xff]
    %v339 = vld [vmem:[%s1 + $0x9a0] sm:$0xff]
    %v340 = vld [vmem:[%s1 + $0x9a8] sm:$0xff]
    %v341 = vld [vmem:[%s1 + $0x9b0] sm:$0xff]
    %v342 = vld [vmem:[%s1 + $0x9b8] sm:$0xff]
    %v343 = vld [vmem:[%s1 + $0x9c0] sm:$0xff]
    %v344 = vld [vmem:[%s1 + $0x9c8] sm:$0xff]
    %v345 = vld [vmem:[%s1 + $0x9d0] sm:$0xff]
    %v346 = vld [vmem:[%s1 + $0x9d8] sm:$0xff]
    %v347 = vld [vmem:[%s1 + $0x9e0] sm:$0xff]
    %v348 = vld [vmem:[%s1 + $0x9e8] sm:$0xff]
    %v349 = vld [vmem:[%s1 + $0x9f0] sm:$0xff]
    %v350 = vld [vmem:[%s1 + $0x9f8] sm:$0xff]
    %v351 = vld [vmem:[%s1 + $0xa00] sm:$0xff]
    %v352 = vld [vmem:[%s1 + $0xa08] sm:$0xff]
    %v353 = vld [vmem:[%s1 + $0xa10] sm:$0xff]
    %v354 = vld [vmem:[%s1 + $0xa18] sm:$0xff]
    %v355 = vld [vmem:[%s1 + $0xa20] sm:$0xff]
    %v356 = vld [vmem:[%s1 + $0xa28] sm:$0xff]
    %v357 = vld [vmem:[%s1 + $0xa30] sm:$0xff]
    %v358 = vld [vmem:[%s1 + $0xa38] sm:$0xff]
    %v359 = vld [vmem:[%s1 + $0xa40] sm:$0xff]
    %v360 = vld [vmem:[%s1 + $0xa48] sm:$0xff]
    %v361 = vld [vmem:[%s1 + $0xa50] sm:$0xff]
    %v362 = vld [vmem:[%s1 + $0xa58] sm:$0xff]
    %v363 = vld [vmem:[%s1 + $0xa60] sm:$0xff]
    %v364 = vld [vmem:[%s1 + $0xa68] sm:$0xff]
    %v365 = vld [vmem:[%s1 + $0xa70] sm:$0xff]
    %v366 = vld [vmem:[%s1 + $0xa78] sm:$0xff]
    %v367 = vld [vmem:[%s1 + $0xa80] sm:$0xff]
    %v368 = vld [vmem:[%s1 + $0xa88] sm:$0xff]
    %v369 = vld [vmem:[%s1 + $0xa90] sm:$0xff]
    %v370 = vld [vmem:[%s1 + $0xa98] sm:$0xff]
    %v371 = vld [vmem:[%s1 + $0xaa0] sm:$0xff]
    %v372 = vld [vmem:[%s1 + $0xaa8] sm:$0xff]
    %v373 = vld [vmem:[%s1 + $0xab0] sm:$0xff]
    %v374 = vld [vmem:[%s1 + $0xab8] sm:$0xff]
    %v375 = vld [vmem:[%s1 + $0xac0] sm:$0xff]
    %v376 = vld [vmem:[%s1 + $0xac8] sm:$0xff]
    %v377 = vld [vmem:[%s1 + $0xad0] sm:$0xff]
    %v378 = vld [vmem:[%s1 + $0xad8] sm:$0xff]
    %v379 = vld [vmem:[%s1 + $0xae0] sm:$0xff]
    %v380 = vld [vmem:[%s1 + $0xae8] sm:$0xff]
    %v381 = vld [vmem:[%s1 + $0xaf0] sm:$0xff]
    %v382 = vld [vmem:[%s1 + $0xaf8] sm:$0xff]
    %v383 = vld [vmem:[%s1 + $0xb00] sm:$0xff]
    %v384 = vld [vmem:[%s1 + $0xb08] sm:$0xff]
    %v385 = vld [vmem:[%s1 + $0xb10] sm:$0xff]
    %v386 = vld [vmem:[%s1 + $0xb18] sm:$0xff]
    %v387 = vld [vmem:[%s1 + $0xb20] sm:$0xff]
    %v388 = vld [vmem:[%s1 + $0xb28] sm:$0xff]
    %v389 = vld [vmem:[%s1 + $0xb30] sm:$0xff]
    %v390 = vld [vmem:[%s1 + $0xb38] sm:$0xff]
    %v391 = vld [vmem:[%s1 + $0xb40] sm:$0xff]
    %v392 = vld [vmem:[%s1 + $0xb48] sm:$0xff]
    %v393 = vld [vmem:[%s1 + $0xb50] sm:$0xff]
    %v394 = vld [vmem:[%s1 + $0xb58] sm:$0xff]
    %v395 = vld [vmem:[%s1 + $0xb60] sm:$0xff]
    %v396 = vld [vmem:[%s1 + $0xb68] sm:$0xff]
    %v397 = vld [vmem:[%s1 + $0xb70] sm:$0xff]
    %v398 = vld [vmem:[%s1 + $0xb78] sm:$0xff]
    %v399 = vld [vmem:[%s1 + $0xb80] sm:$0xff]
    %v400 = vld [vmem:[%s1 + $0xb88] sm:$0xff]
    %v401 = vld [vmem:[%s1 + $0xb90] sm:$0xff]
    %v402 = vld [vmem:[%s1 + $0xb98] sm:$0xff]
    %v403 = vld [vmem:[%s1 + $0xba0] sm:$0xff]
    %v404 = vld [vmem:[%s1 + $0xba8] sm:$0xff]
    %v405 = vld [vmem:[%s1 + $0xbb0] sm:$0xff]
    %v406 = vld [vmem:[%s1 + $0xbb8] sm:$0xff]
    %v407 = vld [vmem:[%s1 + $0xbc0] sm:$0xff]
    %v408 = vld [vmem:[%s1 + $0xbc8] sm:$0xff]
    %v409 = vld [vmem:[%s1 + $0xbd0] sm:$0xff]
    %v410 = vld [vmem:[%s1 + $0xbd8] sm:$0xff]
    %v411 = vld [vmem:[%s1 + $0xbe0] sm:$0xff]
    %v412 = vld [vmem:[%s1 + $0xbe8] sm:$0xff]
    %v413 = vld [vmem:[%s1 + $0xbf0] sm:$0xff]
    %v414 = vld [vmem:[%s1 + $0xbf8] sm:$0xff]
    %v415 = vld [vmem:[%s1 + $0xc00] sm:$0xff]
    %v416 = vld [vmem:[%s1 + $0xc08] sm:$0xff]
    %v417 = vld [vmem:[%s1 + $0xc10] sm:$0xff]
    %v418 = vld [vmem:[%s1 + $0xc18] sm:$0xff]
    %v419 = vld [vmem:[%s1 + $0xc20] sm:$0xff]
    %v420 = vld [vmem:[%s1 + $0xc28] sm:$0xff]
    %v421 = vld [vmem:[%s1 + $0xc30] sm:$0xff]
    %v422 = vld [vmem:[%s1 + $0xc38] sm:$0xff]
    %v423 = vld [vmem:[%s1 + $0xc40] sm:$0xff]
    %v424 = vld [vmem:[%s1 + $0xc48] sm:$0xff]
    %v425 = vld [vmem:[%s1 + $0xc50] sm:$0xff]
    %v426 = vld [vmem:[%s1 + $0xc58] sm:$0xff]
    %v427 = vld [vmem:[%s1 + $0xc60] sm:$0xff]
    %v428 = vld [vmem:[%s1 + $0xc68] sm:$0xff]
    %v429 = vld [vmem:[%s1 + $0xc70] sm:$0xff]
    %v430 = vld [vmem:[%s1 + $0xc78] sm:$0xff]
    %v431 = vld [vmem:[%s1 + $0xc80] sm:$0xff]
    %v432 = vld [vmem:[%s1 + $0xc88] sm:$0xff]
    %v433 = vld [vmem:[%s1 + $0xc90] sm:$0xff]
    %v434 = vld [vmem:[%s1 + $0xc98] sm:$0xff]
    %v435 = vld [vmem:[%s1 + $0xca0] sm:$0xff]
    %v436 = vld [vmem:[%s1 + $0xca8] sm:$0xff]
    %v437 = vld [vmem:[%s1 + $0xcb0] sm:$0xff]
    %v438 = vld [vmem:[%s1 + $0xcb8] sm:$0xff]
    %v439 = vld [vmem:[%s1 + $0xcc0] sm:$0xff]
    %v440 = vld [vmem:[%s1 + $0xcc8] sm:$0xff]
    %v441 = vld [vmem:[%s1 + $0xcd0] sm:$0xff]
    %v442 = vld [vmem:[%s1 + $0xcd8] sm:$0xff]
    %v443 = vld [vmem:[%s1 + $0xce0] sm:$0xff]
    %v444 = vld [vmem:[%s1 + $0xce8] sm:$0xff]
    %v445 = vld [vmem:[%s1 + $0xcf0] sm:$0xff]
    %v446 = vld [vmem:[%s1 + $0xcf8] sm:$0xff]
    %v447 = vld [vmem:[%s1 + $0xd00] sm:$0xff]
    %v448 = vld [vmem:[%s1 + $0xd08] sm:$0xff]
    %v449 = vld [vmem:[%s1 + $0xd10] sm:$0xff]
    %v450 = vld [vmem:[%s1 + $0xd18] sm:$0xff]
    %v451 = vld [vmem:[%s1 + $0xd20] sm:$0xff]
    %v452 = vld [vmem:[%s1 + $0xd28] sm:$0xff]
    %v453 = vld [vmem:[%s1 + $0xd30] sm:$0xff]
    %v454 = vld [vmem:[%s1 + $0xd38] sm:$0xff]
    %v455 = vld [vmem:[%s1 + $0xd40] sm:$0xff]
    %v456 = vld [vmem:[%s1 + $0xd48] sm:$0xff]
    %v457 = vld [vmem:[%s1 + $0xd50] sm:$0xff]
    %v458 = vld [vmem:[%s1 + $0xd58] sm:$0xff]
    %v459 = vld [vmem:[%s1 + $0xd60] sm:$0xff]
    %v460 = vld [vmem:[%s1 + $0xd68] sm:$0xff]
    %v461 = vld [vmem:[%s1 + $0xd70] sm:$0xff]
    %v462 = vld [vmem:[%s1 + $0xd78] sm:$0xff]
    %v463 = vld [vmem:[%s1 + $0xd80] sm:$0xff]
    %v464 = vld [vmem:[%s1 + $0xd88] sm:$0xff]
    %v465 = vld [vmem:[%s1 + $0xd90] sm:$0xff]
    %v466 = vld [vmem:[%s1 + $0xd98] sm:$0xff]
    %v467 = vld [vmem:[%s1 + $0xda0] sm:$0xff]
    %v468 = vld [vmem:[%s1 + $0xda8] sm:$0xff]
    %v469 = vld [vmem:[%s1 + $0xdb0] sm:$0xff]
    %v470 = vld [vmem:[%s1 + $0xdb8] sm:$0xff]
    %v471 = vld [vmem:[%s1 + $0xdc0] sm:$0xff]
    %v472 = vld [vmem:[%s1 + $0xdc8] sm:$0xff]
    %v473 = vld [vmem:[%s1 + $0xdd0] sm:$0xff]
    %v474 = vld [vmem:[%s1 + $0xdd8] sm:$0xff]
    %v475 = vld [vmem:[%s1 + $0xde0] sm:$0xff]
    %v476 = vld [vmem:[%s1 + $0xde8] sm:$0xff]
    %v477 = vld [vmem:[%s1 + $0xdf0] sm:$0xff]
    %v478 = vld [vmem:[%s1 + $0xdf8] sm:$0xff]
    %v479 = vld [vmem:[%s1 + $0xe00] sm:$0xff]
    %v480 = vld [vmem:[%s1 + $0xe08] sm:$0xff]
    %v481 = vld [vmem:[%s1 + $0xe10] sm:$0xff]
    %v482 = vld [vmem:[%s1 + $0xe18] sm:$0xff]
    %v483 = vld [vmem:[%s1 + $0xe20] sm:$0xff]
    %v484 = vld [vmem:[%s1 + $0xe28] sm:$0xff]
    %v485 = vld [vmem:[%s1 + $0xe30] sm:$0xff]
    %v486 = vld [vmem:[%s1 + $0xe38] sm:$0xff]
    %v487 = vld [vmem:[%s1 + $0xe40] sm:$0xff]
    %v488 = vld [vmem:[%s1 + $0xe48] sm:$0xff]
    %v489 = vld [vmem:[%s1 + $0xe50] sm:$0xff]
    %v490 = vld [vmem:[%s1 + $0xe58] sm:$0xff]
    %v491 = vld [vmem:[%s1 + $0xe60] sm:$0xff]
    %v492 = vld [vmem:[%s1 + $0xe68] sm:$0xff]
    %v493 = vld [vmem:[%s1 + $0xe70] sm:$0xff]
    %v494 = vld [vmem:[%s1 + $0xe78] sm:$0xff]
    %v495 = vld [vmem:[%s1 + $0xe80] sm:$0xff]
    %v496 = vld [vmem:[%s1 + $0xe88] sm:$0xff]
    %v497 = vld [vmem:[%s1 + $0xe90] sm:$0xff]
    %v498 = vld [vmem:[%s1 + $0xe98] sm:$0xff]
    %v499 = vld [vmem:[%s1 + $0xea0] sm:$0xff]
    %v500 = vld [vmem:[%s1 + $0xea8] sm:$0xff]
    %v501 = vld [vmem:[%s1 + $0xeb0] sm:$0xff]
    %v502 = vld [vmem:[%s1 + $0xeb8] sm:$0xff]
    %v503 = vld [vmem:[%s1 + $0xec0] sm:$0xff]
    %v504 = vld [vmem:[%s1 + $0xec8] sm:$0xff]
    %v505 = vld [vmem:[%s1 + $0xed0] sm:$0xff]
    %v506 = vld [vmem:[%s1 + $0xed8] sm:$0xff]
    %v507 = vld [vmem:[%s1 + $0xee0] sm:$0xff]
    %v508 = vld [vmem:[%s1 + $0xee8] sm:$0xff]
    %v509 = vld [vmem:[%s1 + $0xef0] sm:$0xff]
    %v510 = vld [vmem:[%s1 + $0xef8] sm:$0xff]
    %v511 = vld [vmem:[%s1 + $0xf00] sm:$0xff]
    %v512 = vld [vmem:[%s1 + $0xf08] sm:$0xff]
    %v513 = vld [vmem:[%s1 + $0xf10] sm:$0xff]
    %v514 = vld [vmem:[%s1 + $0xf18] sm:$0xff]
    %v515 = vld [vmem:[%s1 + $0xf20] sm:$0xff]
    %v516 = vld [vmem:[%s1 + $0xf28] sm:$0xff]
    %v517 = vld [vmem:[%s1 + $0xf30] sm:$0xff]
    %v518 = vld [vmem:[%s1 + $0xf38] sm:$0xff]
    %v519 = vld [vmem:[%s1 + $0xf40] sm:$0xff]
    %v520 = vld [vmem:[%s1 + $0xf48] sm:$0xff]
    %v521 = vld [vmem:[%s1 + $0xf50] sm:$0xff]
    %v522 = vld [vmem:[%s1 + $0xf58] sm:$0xff]
    %v523 = vld [vmem:[%s1 + $0xf60] sm:$0xff]
    %v524 = vld [vmem:[%s1 + $0xf68] sm:$0xff]
    %v525 = vld [vmem:[%s1 + $0xf70] sm:$0xff]
    %v526 = vld [vmem:[%s1 + $0xf78] sm:$0xff]
    %v527 = vld [vmem:[%s1 + $0xf80] sm:$0xff]
    %v528 = vld [vmem:[%s1 + $0xf88] sm:$0xff]
    %v529 = vld [vmem:[%s1 + $0xf90] sm:$0xff]
    %v530 = vld [vmem:[%s1 + $0xf98] sm:$0xff]
    %v531 = vld [vmem:[%s1 + $0xfa0] sm:$0xff]
    %v532 = vld [vmem:[%s1 + $0xfa8] sm:$0xff]
    %v533 = vld [vmem:[%s1 + $0xfb0] sm:$0xff]
    %v534 = vld [vmem:[%s1 + $0xfb8] sm:$0xff]
    %v535 = vld [vmem:[%s1 + $0xfc0] sm:$0xff]
    %v536 = vld [vmem:[%s1 + $0xfc8] sm:$0xff]
    %v537 = vld [vmem:[%s1 + $0xfd0] sm:$0xff]
    %v538 = vld [vmem:[%s1 + $0xfd8] sm:$0xff]
    %v539 = vld [vmem:[%s1 + $0xfe0] sm:$0xff]
    %v540 = vld [vmem:[%s1 + $0xfe8] sm:$0xff]
    %v541 = vld [vmem:[%s1 + $0xff0] sm:$0xff]
    %v542 = vld [vmem:[%s1 + $0xff8] sm:$0xff]
    %v543 = vld [vmem:[%s2] sm:$0x1]
    %v545 = vlaneseq
    %v546 = vshrl.u32 %v545, 7
    %v547 = vsub.s32 0, %v546
    %v548 = vrot.slane %v543, %v547
    %v558 = vcombine.high %v23, %v23
    %v560 = vunpack.c.l.s4 1983009808
    %v561 = vunpack.c.0.s8 %v560
    %v562 = vlaneseq
    %v563 = vshrl.u32 %v562, 7
    %v564 = vsub.s32 %v561, %v563
    %v565 = vrot.slane %v23, %v564
    %v567 = vunpack.c.l.s4 1983009808
    %v568 = vunpack.c.0.s8 %v567
    %v569 = vlaneseq
    %v570 = vshrl.u32 %v569, 7
    %v571 = vsub.s32 %v568, %v570
    %v572 = vrot.slane %v558, %v571
    %v573 = vcombine.high %v565, %v565
    %v574 = vcombine.high %v572, %v572
    %v575 = vcombine.high %v24, %v24
    %v577 = vunpack.c.l.s4 1983009808
    %v578 = vunpack.c.0.s8 %v577
    %v579 = vlaneseq
    %v580 = vshrl.u32 %v579, 7
    %v581 = vsub.s32 %v578, %v580
    %v582 = vrot.slane %v24, %v581
    %v584 = vunpack.c.l.s4 1983009808
    %v585 = vunpack.c.0.s8 %v584
    %v586 = vlaneseq
    %v587 = vshrl.u32 %v586, 7
    %v588 = vsub.s32 %v585, %v587
    %v589 = vrot.slane %v575, %v588
    %v590 = vcombine.high %v582, %v582
    %v591 = vcombine.high %v589, %v589
    %v592 = vcombine.high %v25, %v25
    %v594 = vunpack.c.l.s4 1983009808
    %v595 = vunpack.c.0.s8 %v594
    %v596 = vlaneseq
    %v597 = vshrl.u32 %v596, 7
    %v598 = vsub.s32 %v595, %v597
    %v599 = vrot.slane %v25, %v598
    %v601 = vunpack.c.l.s4 1983009808
    %v602 = vunpack.c.0.s8 %v601
    %v603 = vlaneseq
    %v604 = vshrl.u32 %v603, 7
    %v605 = vsub.s32 %v602, %v604
    %v606 = vrot.slane %v592, %v605
    %v607 = vcombine.high %v599, %v599
    %v608 = vcombine.high %v606, %v606
    %v609 = vcombine.high %v26, %v26
    %v611 = vunpack.c.l.s4 1983009808
    %v612 = vunpack.c.0.s8 %v611
    %v613 = vlaneseq
    %v614 = vshrl.u32 %v613, 7
    %v615 = vsub.s32 %v612, %v614
    %v616 = vrot.slane %v26, %v615
    %v618 = vunpack.c.l.s4 1983009808
    %v619 = vunpack.c.0.s8 %v618
    %v620 = vlaneseq
    %v621 = vshrl.u32 %v620, 7
    %v622 = vsub.s32 %v619, %v621
    %v623 = vrot.slane %v609, %v622
    %v624 = vcombine.high %v616, %v616
    %v625 = vcombine.high %v623, %v623
    %v626 = vcombine.high %v27, %v27
    %v628 = vunpack.c.l.s4 1983009808
    %v629 = vunpack.c.0.s8 %v628
    %v630 = vlaneseq
    %v631 = vshrl.u32 %v630, 7
    %v632 = vsub.s32 %v629, %v631
    %v633 = vrot.slane %v27, %v632
    %v635 = vunpack.c.l.s4 1983009808
    %v636 = vunpack.c.0.s8 %v635
    %v637 = vlaneseq
    %v638 = vshrl.u32 %v637, 7
    %v639 = vsub.s32 %v636, %v638
    %v640 = vrot.slane %v626, %v639
    %v641 = vcombine.high %v633, %v633
    %v642 = vcombine.high %v640, %v640
    %v643 = vcombine.high %v28, %v28
    %v645 = vunpack.c.l.s4 1983009808
    %v646 = vunpack.c.0.s8 %v645
    %v647 = vlaneseq
    %v648 = vshrl.u32 %v647, 7
    %v649 = vsub.s32 %v646, %v648
    %v650 = vrot.slane %v28, %v649
    %v652 = vunpack.c.l.s4 1983009808
    %v653 = vunpack.c.0.s8 %v652
    %v654 = vlaneseq
    %v655 = vshrl.u32 %v654, 7
    %v656 = vsub.s32 %v653, %v655
    %v657 = vrot.slane %v643, %v656
    %v658 = vcombine.high %v650, %v650
    %v659 = vcombine.high %v657, %v657
    %v660 = vcombine.high %v29, %v29
    %v662 = vunpack.c.l.s4 1983009808
    %v663 = vunpack.c.0.s8 %v662
    %v664 = vlaneseq
    %v665 = vshrl.u32 %v664, 7
    %v666 = vsub.s32 %v663, %v665
    %v667 = vrot.slane %v29, %v666
    %v669 = vunpack.c.l.s4 1983009808
    %v670 = vunpack.c.0.s8 %v669
    %v671 = vlaneseq
    %v672 = vshrl.u32 %v671, 7
    %v673 = vsub.s32 %v670, %v672
    %v674 = vrot.slane %v660, %v673
    %v675 = vcombine.high %v667, %v667
    %v676 = vcombine.high %v674, %v674
    %v677 = vcombine.high %v30, %v30
    %v679 = vunpack.c.l.s4 1983009808
    %v680 = vunpack.c.0.s8 %v679
    %v681 = vlaneseq
    %v682 = vshrl.u32 %v681, 7
    %v683 = vsub.s32 %v680, %v682
    %v684 = vrot.slane %v30, %v683
    %v686 = vunpack.c.l.s4 1983009808
    %v687 = vunpack.c.0.s8 %v686
    %v688 = vlaneseq
    %v689 = vshrl.u32 %v688, 7
    %v690 = vsub.s32 %v687, %v689
    %v691 = vrot.slane %v677, %v690
    %v692 = vcombine.high %v684, %v684
    %v693 = vcombine.high %v691, %v691
    %726 = vmatprep.subr.mxu0 0.0
    %727 = vmatpush1.msra.mxu0 %v31
    %728 = vmatprep.subr.mxu0 0.0
    %729 = vmatpush1.msra.mxu0 %v32
    %730 = vmatprep.subr.mxu0 0.0
    %731 = vmatpush1.msra.mxu0 %v33
    %732 = vmatprep.subr.mxu0 0.0
    %733 = vmatpush1.msra.mxu0 %v34
    %734 = vmatprep.subr.mxu0 0.0
    %735 = vmatpush1.msra.mxu0 %v35
    %736 = vmatprep.subr.mxu0 0.0
    %737 = vmatpush1.msra.mxu0 %v36
    %738 = vmatprep.subr.mxu0 0.0
    %739 = vmatpush1.msra.mxu0 %v37
    %740 = vmatprep.subr.mxu0 0.0
    %741 = vmatpush1.msra.mxu0 %v38
    %742 = vmatprep.subr.mxu0 0.0
    %743 = vmatpush1.msra.mxu0 %v39
    %744 = vmatprep.subr.mxu0 0.0
    %745 = vmatpush1.msra.mxu0 %v40
    %746 = vmatprep.subr.mxu0 0.0
    %747 = vmatpush1.msra.mxu0 %v41
    %748 = vmatprep.subr.mxu0 0.0
    %749 = vmatpush1.msra.mxu0 %v42
    %750 = vmatprep.subr.mxu0 0.0
    %751 = vmatpush1.msra.mxu0 %v43
    %752 = vmatprep.subr.mxu0 0.0
    %753 = vmatpush1.msra.mxu0 %v44
    %754 = vmatprep.subr.mxu0 0.0
    %755 = vmatpush1.msra.mxu0 %v45
    %756 = vmatprep.subr.mxu0 0.0
    %757 = vmatpush1.msra.mxu0 %v46
    %758 = vmatprep.subr.mxu0 0.0
    %759 = vmatpush1.msra.mxu0 %v47
    %760 = vmatprep.subr.mxu0 0.0
    %761 = vmatpush1.msra.mxu0 %v48
    %762 = vmatprep.subr.mxu0 0.0
    %763 = vmatpush1.msra.mxu0 %v49
    %764 = vmatprep.subr.mxu0 0.0
    %765 = vmatpush1.msra.mxu0 %v50
    %766 = vmatprep.subr.mxu0 0.0
    %767 = vmatpush1.msra.mxu0 %v51
    %768 = vmatprep.subr.mxu0 0.0
    %769 = vmatpush1.msra.mxu0 %v52
    %770 = vmatprep.subr.mxu0 0.0
    %771 = vmatpush1.msra.mxu0 %v53
    %772 = vmatprep.subr.mxu0 0.0
    %773 = vmatpush1.msra.mxu0 %v54
    %774 = vmatprep.subr.mxu0 0.0
    %775 = vmatpush1.msra.mxu0 %v55
    %776 = vmatprep.subr.mxu0 0.0
    %777 = vmatpush1.msra.mxu0 %v56
    %778 = vmatprep.subr.mxu0 0.0
    %779 = vmatpush1.msra.mxu0 %v57
    %780 = vmatprep.subr.mxu0 0.0
    %781 = vmatpush1.msra.mxu0 %v58
    %782 = vmatprep.subr.mxu0 0.0
    %783 = vmatpush1.msra.mxu0 %v59
    %784 = vmatprep.subr.mxu0 0.0
    %785 = vmatpush1.msra.mxu0 %v60
    %786 = vmatprep.subr.mxu0 0.0
    %787 = vmatpush1.msra.mxu0 %v61
    %788 = vmatprep.subr.mxu0 0.0
    %789 = vmatpush1.msra.mxu0 %v62
    %790 = vmatprep.mubr.f32.mxu0 %v573
    %791 = vmatmul.mubr.f32.gmra.mrb[0].mxu0 %v565
    %v792 = vpop.f32.mrb[0].mxu0
    %v793 = vadd.f32 %v548, %v792
    %v794 = vpop.f32.mrb[0].mxu0
    %795 = vdwg.mxu0
    %796 = vmatprep.subr.mxu0 0.0
    %797 = vmatpush1.msra.mxu0 %v63
    %798 = vmatprep.subr.mxu0 0.0
    %799 = vmatpush1.msra.mxu0 %v64
    %800 = vmatprep.subr.mxu0 0.0
    %801 = vmatpush1.msra.mxu0 %v65
    %802 = vmatprep.subr.mxu0 0.0
    %803 = vmatpush1.msra.mxu0 %v66
    %804 = vmatprep.subr.mxu0 0.0
    %805 = vmatpush1.msra.mxu0 %v67
    %806 = vmatprep.subr.mxu0 0.0
    %807 = vmatpush1.msra.mxu0 %v68
    %808 = vmatprep.subr.mxu0 0.0
    %809 = vmatpush1.msra.mxu0 %v69
    %810 = vmatprep.subr.mxu0 0.0
    %811 = vmatpush1.msra.mxu0 %v70
    %812 = vmatprep.subr.mxu0 0.0
    %813 = vmatpush1.msra.mxu0 %v71
    %814 = vmatprep.subr.mxu0 0.0
    %815 = vmatpush1.msra.mxu0 %v72
    %816 = vmatprep.subr.mxu0 0.0
    %817 = vmatpush1.msra.mxu0 %v73
    %818 = vmatprep.subr.mxu0 0.0
    %819 = vmatpush1.msra.mxu0 %v74
    %820 = vmatprep.subr.mxu0 0.0
    %821 = vmatpush1.msra.mxu0 %v75
    %822 = vmatprep.subr.mxu0 0.0
    %823 = vmatpush1.msra.mxu0 %v76
    %824 = vmatprep.subr.mxu0 0.0
    %825 = vmatpush1.msra.mxu0 %v77
    %826 = vmatprep.subr.mxu0 0.0
    %827 = vmatpush1.msra.mxu0 %v78
    %828 = vmatprep.subr.mxu0 0.0
    %829 = vmatpush1.msra.mxu0 %v79
    %830 = vmatprep.subr.mxu0 0.0
    %831 = vmatpush1.msra.mxu0 %v80
    %832 = vmatprep.subr.mxu0 0.0
    %833 = vmatpush1.msra.mxu0 %v81
    %834 = vmatprep.subr.mxu0 0.0
    %835 = vmatpush1.msra.mxu0 %v82
    %836 = vmatprep.subr.mxu0 0.0
    %837 = vmatpush1.msra.mxu0 %v83
    %838 = vmatprep.subr.mxu0 0.0
    %839 = vmatpush1.msra.mxu0 %v84
    %840 = vmatprep.subr.mxu0 0.0
    %841 = vmatpush1.msra.mxu0 %v85
    %842 = vmatprep.subr.mxu0 0.0
    %843 = vmatpush1.msra.mxu0 %v86
    %844 = vmatprep.subr.mxu0 0.0
    %845 = vmatpush1.msra.mxu0 %v87
    %846 = vmatprep.subr.mxu0 0.0
    %847 = vmatpush1.msra.mxu0 %v88
    %848 = vmatprep.subr.mxu0 0.0
    %849 = vmatpush1.msra.mxu0 %v89
    %850 = vmatprep.subr.mxu0 0.0
    %851 = vmatpush1.msra.mxu0 %v90
    %852 = vmatprep.subr.mxu0 0.0
    %853 = vmatpush1.msra.mxu0 %v91
    %854 = vmatprep.subr.mxu0 0.0
    %855 = vmatpush1.msra.mxu0 %v92
    %856 = vmatprep.subr.mxu0 0.0
    %857 = vmatpush1.msra.mxu0 %v93
    %858 = vmatprep.subr.mxu0 0.0
    %859 = vmatpush1.msra.mxu0 %v94
    %860 = vmatprep.mubr.f32.mxu0 %v574
    %861 = vmatmul.mubr.f32.gmra.mrb[0].mxu0 %v572
    %v862 = vpop.f32.mrb[0].mxu0
    %v863 = vadd.f32 %v793, %v862
    %v864 = vpop.f32.mrb[0].mxu0
    %865 = vdwg.mxu0
    %866 = vmatprep.subr.mxu0 0.0
    %867 = vmatpush1.msra.mxu0 %v95
    %868 = vmatprep.subr.mxu0 0.0
    %869 = vmatpush1.msra.mxu0 %v96
    %870 = vmatprep.subr.mxu0 0.0
    %871 = vmatpush1.msra.mxu0 %v97
    %872 = vmatprep.subr.mxu0 0.0
    %873 = vmatpush1.msra.mxu0 %v98
    %874 = vmatprep.subr.mxu0 0.0
    %875 = vmatpush1.msra.mxu0 %v99
    %876 = vmatprep.subr.mxu0 0.0
    %877 = vmatpush1.msra.mxu0 %v100
    %878 = vmatprep.subr.mxu0 0.0
    %879 = vmatpush1.msra.mxu0 %v101
    %880 = vmatprep.subr.mxu0 0.0
    %881 = vmatpush1.msra.mxu0 %v102
    %882 = vmatprep.subr.mxu0 0.0
    %883 = vmatpush1.msra.mxu0 %v103
    %884 = vmatprep.subr.mxu0 0.0
    %885 = vmatpush1.msra.mxu0 %v104
    %886 = vmatprep.subr.mxu0 0.0
    %887 = vmatpush1.msra.mxu0 %v105
    %888 = vmatprep.subr.mxu0 0.0
    %889 = vmatpush1.msra.mxu0 %v106
    %890 = vmatprep.subr.mxu0 0.0
    %891 = vmatpush1.msra.mxu0 %v107
    %892 = vmatprep.subr.mxu0 0.0
    %893 = vmatpush1.msra.mxu0 %v108
    %894 = vmatprep.subr.mxu0 0.0
    %895 = vmatpush1.msra.mxu0 %v109
    %896 = vmatprep.subr.mxu0 0.0
    %897 = vmatpush1.msra.mxu0 %v110
    %898 = vmatprep.subr.mxu0 0.0
    %899 = vmatpush1.msra.mxu0 %v111
    %900 = vmatprep.subr.mxu0 0.0
    %901 = vmatpush1.msra.mxu0 %v112
    %902 = vmatprep.subr.mxu0 0.0
    %903 = vmatpush1.msra.mxu0 %v113
    %904 = vmatprep.subr.mxu0 0.0
    %905 = vmatpush1.msra.mxu0 %v114
    %906 = vmatprep.subr.mxu0 0.0
    %907 = vmatpush1.msra.mxu0 %v115
    %908 = vmatprep.subr.mxu0 0.0
    %909 = vmatpush1.msra.mxu0 %v116
    %910 = vmatprep.subr.mxu0 0.0
    %911 = vmatpush1.msra.mxu0 %v117
    %912 = vmatprep.subr.mxu0 0.0
    %913 = vmatpush1.msra.mxu0 %v118
    %914 = vmatprep.subr.mxu0 0.0
    %915 = vmatpush1.msra.mxu0 %v119
    %916 = vmatprep.subr.mxu0 0.0
    %917 = vmatpush1.msra.mxu0 %v120
    %918 = vmatprep.subr.mxu0 0.0
    %919 = vmatpush1.msra.mxu0 %v121
    %920 = vmatprep.subr.mxu0 0.0
    %921 = vmatpush1.msra.mxu0 %v122
    %922 = vmatprep.subr.mxu0 0.0
    %923 = vmatpush1.msra.mxu0 %v123
    %924 = vmatprep.subr.mxu0 0.0
    %925 = vmatpush1.msra.mxu0 %v124
    %926 = vmatprep.subr.mxu0 0.0
    %927 = vmatpush1.msra.mxu0 %v125
    %928 = vmatprep.subr.mxu0 0.0
    %929 = vmatpush1.msra.mxu0 %v126
    %930 = vmatprep.mubr.f32.mxu0 %v590
    %931 = vmatmul.mubr.f32.gmra.mrb[0].mxu0 %v582
    %v932 = vpop.f32.mrb[0].mxu0
    %v933 = vadd.f32 %v863, %v932
    %v934 = vpop.f32.mrb[0].mxu0
    %935 = vdwg.mxu0
    %936 = vmatprep.subr.mxu0 0.0
    %937 = vmatpush1.msra.mxu0 %v127
    %938 = vmatprep.subr.mxu0 0.0
    %939 = vmatpush1.msra.mxu0 %v128
    %940 = vmatprep.subr.mxu0 0.0
    %941 = vmatpush1.msra.mxu0 %v129
    %942 = vmatprep.subr.mxu0 0.0
    %943 = vmatpush1.msra.mxu0 %v130
    %944 = vmatprep.subr.mxu0 0.0
    %945 = vmatpush1.msra.mxu0 %v131
    %946 = vmatprep.subr.mxu0 0.0
    %947 = vmatpush1.msra.mxu0 %v132
    %948 = vmatprep.subr.mxu0 0.0
    %949 = vmatpush1.msra.mxu0 %v133
    %950 = vmatprep.subr.mxu0 0.0
    %951 = vmatpush1.msra.mxu0 %v134
    %952 = vmatprep.subr.mxu0 0.0
    %953 = vmatpush1.msra.mxu0 %v135
    %954 = vmatprep.subr.mxu0 0.0
    %955 = vmatpush1.msra.mxu0 %v136
    %956 = vmatprep.subr.mxu0 0.0
    %957 = vmatpush1.msra.mxu0 %v137
    %958 = vmatprep.subr.mxu0 0.0
    %959 = vmatpush1.msra.mxu0 %v138
    %960 = vmatprep.subr.mxu0 0.0
    %961 = vmatpush1.msra.mxu0 %v139
    %962 = vmatprep.subr.mxu0 0.0
    %963 = vmatpush1.msra.mxu0 %v140
    %964 = vmatprep.subr.mxu0 0.0
    %965 = vmatpush1.msra.mxu0 %v141
    %966 = vmatprep.subr.mxu0 0.0
    %967 = vmatpush1.msra.mxu0 %v142
    %968 = vmatprep.subr.mxu0 0.0
    %969 = vmatpush1.msra.mxu0 %v143
    %970 = vmatprep.subr.mxu0 0.0
    %971 = vmatpush1.msra.mxu0 %v144
    %972 = vmatprep.subr.mxu0 0.0
    %973 = vmatpush1.msra.mxu0 %v145
    %974 = vmatprep.subr.mxu0 0.0
    %975 = vmatpush1.msra.mxu0 %v146
    %976 = vmatprep.subr.mxu0 0.0
    %977 = vmatpush1.msra.mxu0 %v147
    %978 = vmatprep.subr.mxu0 0.0
    %979 = vmatpush1.msra.mxu0 %v148
    %980 = vmatprep.subr.mxu0 0.0
    %981 = vmatpush1.msra.mxu0 %v149
    %982 = vmatprep.subr.mxu0 0.0
    %983 = vmatpush1.msra.mxu0 %v150
    %984 = vmatprep.subr.mxu0 0.0
    %985 = vmatpush1.msra.mxu0 %v151
    %986 = vmatprep.subr.mxu0 0.0
    %987 = vmatpush1.msra.mxu0 %v152
    %988 = vmatprep.subr.mxu0 0.0
    %989 = vmatpush1.msra.mxu0 %v153
    %990 = vmatprep.subr.mxu0 0.0
    %991 = vmatpush1.msra.mxu0 %v154
    %992 = vmatprep.subr.mxu0 0.0
    %993 = vmatpush1.msra.mxu0 %v155
    %994 = vmatprep.subr.mxu0 0.0
    %995 = vmatpush1.msra.mxu0 %v156
    %996 = vmatprep.subr.mxu0 0.0
    %997 = vmatpush1.msra.mxu0 %v157
    %998 = vmatprep.subr.mxu0 0.0
    %999 = vmatpush1.msra.mxu0 %v158
    %1000 = vmatprep.mubr.f32.mxu0 %v591
    %1001 = vmatmul.mubr.f32.gmra.mrb[0].mxu0 %v589
    %v1002 = vpop.f32.mrb[0].mxu0
    %v1003 = vadd.f32 %v933, %v1002
    %v1004 = vpop.f32.mrb[0].mxu0
    %1005 = vdwg.mxu0
    %1006 = vmatprep.subr.mxu0 0.0
    %1007 = vmatpush1.msra.mxu0 %v159
    %1008 = vmatprep.subr.mxu0 0.0
    %1009 = vmatpush1.msra.mxu0 %v160
    %1010 = vmatprep.subr.mxu0 0.0
    %1011 = vmatpush1.msra.mxu0 %v161
    %1012 = vmatprep.subr.mxu0 0.0
    %1013 = vmatpush1.msra.mxu0 %v162
    %1014 = vmatprep.subr.mxu0 0.0
    %1015 = vmatpush1.msra.mxu0 %v163
    %1016 = vmatprep.subr.mxu0 0.0
    %1017 = vmatpush1.msra.mxu0 %v164
    %1018 = vmatprep.subr.mxu0 0.0
    %1019 = vmatpush1.msra.mxu0 %v165
    %1020 = vmatprep.subr.mxu0 0.0
    %1021 = vmatpush1.msra.mxu0 %v166
    %1022 = vmatprep.subr.mxu0 0.0
    %1023 = vmatpush1.msra.mxu0 %v167
    %1024 = vmatprep.subr.mxu0 0.0
    %1025 = vmatpush1.msra.mxu0 %v168
    %1026 = vmatprep.subr.mxu0 0.0
    %1027 = vmatpush1.msra.mxu0 %v169
    %1028 = vmatprep.subr.mxu0 0.0
    %1029 = vmatpush1.msra.mxu0 %v170
    %1030 = vmatprep.subr.mxu0 0.0
    %1031 = vmatpush1.msra.mxu0 %v171
    %1032 = vmatprep.subr.mxu0 0.0
    %1033 = vmatpush1.msra.mxu0 %v172
    %1034 = vmatprep.subr.mxu0 0.0
    %1035 = vmatpush1.msra.mxu0 %v173
    %1036 = vmatprep.subr.mxu0 0.0
    %1037 = vmatpush1.msra.mxu0 %v174
    %1038 = vmatprep.subr.mxu0 0.0
    %1039 = vmatpush1.msra.mxu0 %v175
    %1040 = vmatprep.subr.mxu0 0.0
    %1041 = vmatpush1.msra.mxu0 %v176
    %1042 = vmatprep.subr.mxu0 0.0
    %1043 = vmatpush1.msra.mxu0 %v177
    %1044 = vmatprep.subr.mxu0 0.0
    %1045 = vmatpush1.msra.mxu0 %v178
    %1046 = vmatprep.subr.mxu0 0.0
    %1047 = vmatpush1.msra.mxu0 %v179
    %1048 = vmatprep.subr.mxu0 0.0
    %1049 = vmatpush1.msra.mxu0 %v180
    %1050 = vmatprep.subr.mxu0 0.0
    %1051 = vmatpush1.msra.mxu0 %v181
    %1052 = vmatprep.subr.mxu0 0.0
    %1053 = vmatpush1.msra.mxu0 %v182
    %1054 = vmatprep.subr.mxu0 0.0
    %1055 = vmatpush1.msra.mxu0 %v183
    %1056 = vmatprep.subr.mxu0 0.0
    %1057 = vmatpush1.msra.mxu0 %v184
    %1058 = vmatprep.subr.mxu0 0.0
    %1059 = vmatpush1.msra.mxu0 %v185
    %1060 = vmatprep.subr.mxu0 0.0
    %1061 = vmatpush1.msra.mxu0 %v186
    %1062 = vmatprep.subr.mxu0 0.0
    %1063 = vmatpush1.msra.mxu0 %v187
    %1064 = vmatprep.subr.mxu0 0.0
    %1065 = vmatpush1.msra.mxu0 %v188
    %1066 = vmatprep.subr.mxu0 0.0
    %1067 = vmatpush1.msra.mxu0 %v189
    %1068 = vmatprep.subr.mxu0 0.0
    %1069 = vmatpush1.msra.mxu0 %v190
    %1070 = vmatprep.mubr.f32.mxu0 %v607
    %1071 = vmatmul.mubr.f32.gmra.mrb[0].mxu0 %v599
    %v1072 = vpop.f32.mrb[0].mxu0
    %v1073 = vadd.f32 %v1003, %v1072
    %v1074 = vpop.f32.mrb[0].mxu0
    %1075 = vdwg.mxu0
    %1076 = vmatprep.subr.mxu0 0.0
    %1077 = vmatpush1.msra.mxu0 %v191
    %1078 = vmatprep.subr.mxu0 0.0
    %1079 = vmatpush1.msra.mxu0 %v192
    %1080 = vmatprep.subr.mxu0 0.0
    %1081 = vmatpush1.msra.mxu0 %v193
    %1082 = vmatprep.subr.mxu0 0.0
    %1083 = vmatpush1.msra.mxu0 %v194
    %1084 = vmatprep.subr.mxu0 0.0
    %1085 = vmatpush1.msra.mxu0 %v195
    %1086 = vmatprep.subr.mxu0 0.0
    %1087 = vmatpush1.msra.mxu0 %v196
    %1088 = vmatprep.subr.mxu0 0.0
    %1089 = vmatpush1.msra.mxu0 %v197
    %1090 = vmatprep.subr.mxu0 0.0
    %1091 = vmatpush1.msra.mxu0 %v198
    %1092 = vmatprep.subr.mxu0 0.0
    %1093 = vmatpush1.msra.mxu0 %v199
    %1094 = vmatprep.subr.mxu0 0.0
    %1095 = vmatpush1.msra.mxu0 %v200
    %1096 = vmatprep.subr.mxu0 0.0
    %1097 = vmatpush1.msra.mxu0 %v201
    %1098 = vmatprep.subr.mxu0 0.0
    %1099 = vmatpush1.msra.mxu0 %v202
    %1100 = vmatprep.subr.mxu0 0.0
    %1101 = vmatpush1.msra.mxu0 %v203
    %1102 = vmatprep.subr.mxu0 0.0
    %1103 = vmatpush1.msra.mxu0 %v204
    %1104 = vmatprep.subr.mxu0 0.0
    %1105 = vmatpush1.msra.mxu0 %v205
    %1106 = vmatprep.subr.mxu0 0.0
    %1107 = vmatpush1.msra.mxu0 %v206
    %1108 = vmatprep.subr.mxu0 0.0
    %1109 = vmatpush1.msra.mxu0 %v207
    %1110 = vmatprep.subr.mxu0 0.0
    %1111 = vmatpush1.msra.mxu0 %v208
    %1112 = vmatprep.subr.mxu0 0.0
    %1113 = vmatpush1.msra.mxu0 %v209
    %1114 = vmatprep.subr.mxu0 0.0
    %1115 = vmatpush1.msra.mxu0 %v210
    %1116 = vmatprep.subr.mxu0 0.0
    %1117 = vmatpush1.msra.mxu0 %v211
    %1118 = vmatprep.subr.mxu0 0.0
    %1119 = vmatpush1.msra.mxu0 %v212
    %1120 = vmatprep.subr.mxu0 0.0
    %1121 = vmatpush1.msra.mxu0 %v213
    %1122 = vmatprep.subr.mxu0 0.0
    %1123 = vmatpush1.msra.mxu0 %v214
    %1124 = vmatprep.subr.mxu0 0.0
    %1125 = vmatpush1.msra.mxu0 %v215
    %1126 = vmatprep.subr.mxu0 0.0
    %1127 = vmatpush1.msra.mxu0 %v216
    %1128 = vmatprep.subr.mxu0 0.0
    %1129 = vmatpush1.msra.mxu0 %v217
    %1130 = vmatprep.subr.mxu0 0.0
    %1131 = vmatpush1.msra.mxu0 %v218
    %1132 = vmatprep.subr.mxu0 0.0
    %1133 = vmatpush1.msra.mxu0 %v219
    %1134 = vmatprep.subr.mxu0 0.0
    %1135 = vmatpush1.msra.mxu0 %v220
    %1136 = vmatprep.subr.mxu0 0.0
    %1137 = vmatpush1.msra.mxu0 %v221
    %1138 = vmatprep.subr.mxu0 0.0
    %1139 = vmatpush1.msra.mxu0 %v222
    %1140 = vmatprep.mubr.f32.mxu0 %v608
    %1141 = vmatmul.mubr.f32.gmra.mrb[0].mxu0 %v606
    %v1142 = vpop.f32.mrb[0].mxu0
    %v1143 = vadd.f32 %v1073, %v1142
    %v1144 = vpop.f32.mrb[0].mxu0
    %1145 = vdwg.mxu0
    %1146 = vmatprep.subr.mxu0 0.0
    %1147 = vmatpush1.msra.mxu0 %v223
    %1148 = vmatprep.subr.mxu0 0.0
    %1149 = vmatpush1.msra.mxu0 %v224
    %1150 = vmatprep.subr.mxu0 0.0
    %1151 = vmatpush1.msra.mxu0 %v225
    %1152 = vmatprep.subr.mxu0 0.0
    %1153 = vmatpush1.msra.mxu0 %v226
    %1154 = vmatprep.subr.mxu0 0.0
    %1155 = vmatpush1.msra.mxu0 %v227
    %1156 = vmatprep.subr.mxu0 0.0
    %1157 = vmatpush1.msra.mxu0 %v228
    %1158 = vmatprep.subr.mxu0 0.0
    %1159 = vmatpush1.msra.mxu0 %v229
    %1160 = vmatprep.subr.mxu0 0.0
    %1161 = vmatpush1.msra.mxu0 %v230
    %1162 = vmatprep.subr.mxu0 0.0
    %1163 = vmatpush1.msra.mxu0 %v231
    %1164 = vmatprep.subr.mxu0 0.0
    %1165 = vmatpush1.msra.mxu0 %v232
    %1166 = vmatprep.subr.mxu0 0.0
    %1167 = vmatpush1.msra.mxu0 %v233
    %1168 = vmatprep.subr.mxu0 0.0
    %1169 = vmatpush1.msra.mxu0 %v234
    %1170 = vmatprep.subr.mxu0 0.0
    %1171 = vmatpush1.msra.mxu0 %v235
    %1172 = vmatprep.subr.mxu0 0.0
    %1173 = vmatpush1.msra.mxu0 %v236
    %1174 = vmatprep.subr.mxu0 0.0
    %1175 = vmatpush1.msra.mxu0 %v237
    %1176 = vmatprep.subr.mxu0 0.0
    %1177 = vmatpush1.msra.mxu0 %v238
    %1178 = vmatprep.subr.mxu0 0.0
    %1179 = vmatpush1.msra.mxu0 %v239
    %1180 = vmatprep.subr.mxu0 0.0
    %1181 = vmatpush1.msra.mxu0 %v240
    %1182 = vmatprep.subr.mxu0 0.0
    %1183 = vmatpush1.msra.mxu0 %v241
    %1184 = vmatprep.subr.mxu0 0.0
    %1185 = vmatpush1.msra.mxu0 %v242
    %1186 = vmatprep.subr.mxu0 0.0
    %1187 = vmatpush1.msra.mxu0 %v243
    %1188 = vmatprep.subr.mxu0 0.0
    %1189 = vmatpush1.msra.mxu0 %v244
    %1190 = vmatprep.subr.mxu0 0.0
    %1191 = vmatpush1.msra.mxu0 %v245
    %1192 = vmatprep.subr.mxu0 0.0
    %1193 = vmatpush1.msra.mxu0 %v246
    %1194 = vmatprep.subr.mxu0 0.0
    %1195 = vmatpush1.msra.mxu0 %v247
    %1196 = vmatprep.subr.mxu0 0.0
    %1197 = vmatpush1.msra.mxu0 %v248
    %1198 = vmatprep.subr.mxu0 0.0
    %1199 = vmatpush1.msra.mxu0 %v249
    %1200 = vmatprep.subr.mxu0 0.0
    %1201 = vmatpush1.msra.mxu0 %v250
    %1202 = vmatprep.subr.mxu0 0.0
    %1203 = vmatpush1.msra.mxu0 %v251
    %1204 = vmatprep.subr.mxu0 0.0
    %1205 = vmatpush1.msra.mxu0 %v252
    %1206 = vmatprep.subr.mxu0 0.0
    %1207 = vmatpush1.msra.mxu0 %v253
    %1208 = vmatprep.subr.mxu0 0.0
    %1209 = vmatpush1.msra.mxu0 %v254
    %1210 = vmatprep.mubr.f32.mxu0 %v624
    %1211 = vmatmul.mubr.f32.gmra.mrb[0].mxu0 %v616
    %v1212 = vpop.f32.mrb[0].mxu0
    %v1213 = vadd.f32 %v1143, %v1212
    %v1214 = vpop.f32.mrb[0].mxu0
    %1215 = vdwg.mxu0
    %1216 = vmatprep.subr.mxu0 0.0
    %1217 = vmatpush1.msra.mxu0 %v255
    %1218 = vmatprep.subr.mxu0 0.0
    %1219 = vmatpush1.msra.mxu0 %v256
    %1220 = vmatprep.subr.mxu0 0.0
    %1221 = vmatpush1.msra.mxu0 %v257
    %1222 = vmatprep.subr.mxu0 0.0
    %1223 = vmatpush1.msra.mxu0 %v258
    %1224 = vmatprep.subr.mxu0 0.0
    %1225 = vmatpush1.msra.mxu0 %v259
    %1226 = vmatprep.subr.mxu0 0.0
    %1227 = vmatpush1.msra.mxu0 %v260
    %1228 = vmatprep.subr.mxu0 0.0
    %1229 = vmatpush1.msra.mxu0 %v261
    %1230 = vmatprep.subr.mxu0 0.0
    %1231 = vmatpush1.msra.mxu0 %v262
    %1232 = vmatprep.subr.mxu0 0.0
    %1233 = vmatpush1.msra.mxu0 %v263
    %1234 = vmatprep.subr.mxu0 0.0
    %1235 = vmatpush1.msra.mxu0 %v264
    %1236 = vmatprep.subr.mxu0 0.0
    %1237 = vmatpush1.msra.mxu0 %v265
    %1238 = vmatprep.subr.mxu0 0.0
    %1239 = vmatpush1.msra.mxu0 %v266
    %1240 = vmatprep.subr.mxu0 0.0
    %1241 = vmatpush1.msra.mxu0 %v267
    %1242 = vmatprep.subr.mxu0 0.0
    %1243 = vmatpush1.msra.mxu0 %v268
    %1244 = vmatprep.subr.mxu0 0.0
    %1245 = vmatpush1.msra.mxu0 %v269
    %1246 = vmatprep.subr.mxu0 0.0
    %1247 = vmatpush1.msra.mxu0 %v270
    %1248 = vmatprep.subr.mxu0 0.0
    %1249 = vmatpush1.msra.mxu0 %v271
    %1250 = vmatprep.subr.mxu0 0.0
    %1251 = vmatpush1.msra.mxu0 %v272
    %1252 = vmatprep.subr.mxu0 0.0
    %1253 = vmatpush1.msra.mxu0 %v273
    %1254 = vmatprep.subr.mxu0 0.0
    %1255 = vmatpush1.msra.mxu0 %v274
    %1256 = vmatprep.subr.mxu0 0.0
    %1257 = vmatpush1.msra.mxu0 %v275
    %1258 = vmatprep.subr.mxu0 0.0
    %1259 = vmatpush1.msra.mxu0 %v276
    %1260 = vmatprep.subr.mxu0 0.0
    %1261 = vmatpush1.msra.mxu0 %v277
    %1262 = vmatprep.subr.mxu0 0.0
    %1263 = vmatpush1.msra.mxu0 %v278
    %1264 = vmatprep.subr.mxu0 0.0
    %1265 = vmatpush1.msra.mxu0 %v279
    %1266 = vmatprep.subr.mxu0 0.0
    %1267 = vmatpush1.msra.mxu0 %v280
    %1268 = vmatprep.subr.mxu0 0.0
    %1269 = vmatpush1.msra.mxu0 %v281
    %1270 = vmatprep.subr.mxu0 0.0
    %1271 = vmatpush1.msra.mxu0 %v282
    %1272 = vmatprep.subr.mxu0 0.0
    %1273 = vmatpush1.msra.mxu0 %v283
    %1274 = vmatprep.subr.mxu0 0.0
    %1275 = vmatpush1.msra.mxu0 %v284
    %1276 = vmatprep.subr.mxu0 0.0
    %1277 = vmatpush1.msra.mxu0 %v285
    %1278 = vmatprep.subr.mxu0 0.0
    %1279 = vmatpush1.msra.mxu0 %v286
    %1280 = vmatprep.mubr.f32.mxu0 %v625
    %1281 = vmatmul.mubr.f32.gmra.mrb[0].mxu0 %v623
    %v1282 = vpop.f32.mrb[0].mxu0
    %v1283 = vadd.f32 %v1213, %v1282
    %v1284 = vpop.f32.mrb[0].mxu0
    %1285 = vdwg.mxu0
    %1286 = vmatprep.subr.mxu0 0.0
    %1287 = vmatpush1.msra.mxu0 %v287
    %1288 = vmatprep.subr.mxu0 0.0
    %1289 = vmatpush1.msra.mxu0 %v288
    %1290 = vmatprep.subr.mxu0 0.0
    %1291 = vmatpush1.msra.mxu0 %v289
    %1292 = vmatprep.subr.mxu0 0.0
    %1293 = vmatpush1.msra.mxu0 %v290
    %1294 = vmatprep.subr.mxu0 0.0
    %1295 = vmatpush1.msra.mxu0 %v291
    %1296 = vmatprep.subr.mxu0 0.0
    %1297 = vmatpush1.msra.mxu0 %v292
    %1298 = vmatprep.subr.mxu0 0.0
    %1299 = vmatpush1.msra.mxu0 %v293
    %1300 = vmatprep.subr.mxu0 0.0
    %1301 = vmatpush1.msra.mxu0 %v294
    %1302 = vmatprep.subr.mxu0 0.0
    %1303 = vmatpush1.msra.mxu0 %v295
    %1304 = vmatprep.subr.mxu0 0.0
    %1305 = vmatpush1.msra.mxu0 %v296
    %1306 = vmatprep.subr.mxu0 0.0
    %1307 = vmatpush1.msra.mxu0 %v297
    %1308 = vmatprep.subr.mxu0 0.0
    %1309 = vmatpush1.msra.mxu0 %v298
    %1310 = vmatprep.subr.mxu0 0.0
    %1311 = vmatpush1.msra.mxu0 %v299
    %1312 = vmatprep.subr.mxu0 0.0
    %1313 = vmatpush1.msra.mxu0 %v300
    %1314 = vmatprep.subr.mxu0 0.0
    %1315 = vmatpush1.msra.mxu0 %v301
    %1316 = vmatprep.subr.mxu0 0.0
    %1317 = vmatpush1.msra.mxu0 %v302
    %1318 = vmatprep.subr.mxu0 0.0
    %1319 = vmatpush1.msra.mxu0 %v303
    %1320 = vmatprep.subr.mxu0 0.0
    %1321 = vmatpush1.msra.mxu0 %v304
    %1322 = vmatprep.subr.mxu0 0.0
    %1323 = vmatpush1.msra.mxu0 %v305
    %1324 = vmatprep.subr.mxu0 0.0
    %1325 = vmatpush1.msra.mxu0 %v306
    %1326 = vmatprep.subr.mxu0 0.0
    %1327 = vmatpush1.msra.mxu0 %v307
    %1328 = vmatprep.subr.mxu0 0.0
    %1329 = vmatpush1.msra.mxu0 %v308
    %1330 = vmatprep.subr.mxu0 0.0
    %1331 = vmatpush1.msra.mxu0 %v309
    %1332 = vmatprep.subr.mxu0 0.0
    %1333 = vmatpush1.msra.mxu0 %v310
    %1334 = vmatprep.subr.mxu0 0.0
    %1335 = vmatpush1.msra.mxu0 %v311
    %1336 = vmatprep.subr.mxu0 0.0
    %1337 = vmatpush1.msra.mxu0 %v312
    %1338 = vmatprep.subr.mxu0 0.0
    %1339 = vmatpush1.msra.mxu0 %v313
    %1340 = vmatprep.subr.mxu0 0.0
    %1341 = vmatpush1.msra.mxu0 %v314
    %1342 = vmatprep.subr.mxu0 0.0
    %1343 = vmatpush1.msra.mxu0 %v315
    %1344 = vmatprep.subr.mxu0 0.0
    %1345 = vmatpush1.msra.mxu0 %v316
    %1346 = vmatprep.subr.mxu0 0.0
    %1347 = vmatpush1.msra.mxu0 %v317
    %1348 = vmatprep.subr.mxu0 0.0
    %1349 = vmatpush1.msra.mxu0 %v318
    %1350 = vmatprep.mubr.f32.mxu0 %v641
    %1351 = vmatmul.mubr.f32.gmra.mrb[0].mxu0 %v633
    %v1352 = vpop.f32.mrb[0].mxu0
    %v1353 = vadd.f32 %v1283, %v1352
    %v1354 = vpop.f32.mrb[0].mxu0
    %1355 = vdwg.mxu0
    %1356 = vmatprep.subr.mxu0 0.0
    %1357 = vmatpush1.msra.mxu0 %v319
    %1358 = vmatprep.subr.mxu0 0.0
    %1359 = vmatpush1.msra.mxu0 %v320
    %1360 = vmatprep.subr.mxu0 0.0
    %1361 = vmatpush1.msra.mxu0 %v321
    %1362 = vmatprep.subr.mxu0 0.0
    %1363 = vmatpush1.msra.mxu0 %v322
    %1364 = vmatprep.subr.mxu0 0.0
    %1365 = vmatpush1.msra.mxu0 %v323
    %1366 = vmatprep.subr.mxu0 0.0
    %1367 = vmatpush1.msra.mxu0 %v324
    %1368 = vmatprep.subr.mxu0 0.0
    %1369 = vmatpush1.msra.mxu0 %v325
    %1370 = vmatprep.subr.mxu0 0.0
    %1371 = vmatpush1.msra.mxu0 %v326
    %1372 = vmatprep.subr.mxu0 0.0
    %1373 = vmatpush1.msra.mxu0 %v327
    %1374 = vmatprep.subr.mxu0 0.0
    %1375 = vmatpush1.msra.mxu0 %v328
    %1376 = vmatprep.subr.mxu0 0.0
    %1377 = vmatpush1.msra.mxu0 %v329
    %1378 = vmatprep.subr.mxu0 0.0
    %1379 = vmatpush1.msra.mxu0 %v330
    %1380 = vmatprep.subr.mxu0 0.0
    %1381 = vmatpush1.msra.mxu0 %v331
    %1382 = vmatprep.subr.mxu0 0.0
    %1383 = vmatpush1.msra.mxu0 %v332
    %1384 = vmatprep.subr.mxu0 0.0
    %1385 = vmatpush1.msra.mxu0 %v333
    %1386 = vmatprep.subr.mxu0 0.0
    %1387 = vmatpush1.msra.mxu0 %v334
    %1388 = vmatprep.subr.mxu0 0.0
    %1389 = vmatpush1.msra.mxu0 %v335
    %1390 = vmatprep.subr.mxu0 0.0
    %1391 = vmatpush1.msra.mxu0 %v336
    %1392 = vmatprep.subr.mxu0 0.0
    %1393 = vmatpush1.msra.mxu0 %v337
    %1394 = vmatprep.subr.mxu0 0.0
    %1395 = vmatpush1.msra.mxu0 %v338
    %1396 = vmatprep.subr.mxu0 0.0
    %1397 = vmatpush1.msra.mxu0 %v339
    %1398 = vmatprep.subr.mxu0 0.0
    %1399 = vmatpush1.msra.mxu0 %v340
    %1400 = vmatprep.subr.mxu0 0.0
    %1401 = vmatpush1.msra.mxu0 %v341
    %1402 = vmatprep.subr.mxu0 0.0
    %1403 = vmatpush1.msra.mxu0 %v342
    %1404 = vmatprep.subr.mxu0 0.0
    %1405 = vmatpush1.msra.mxu0 %v343
    %1406 = vmatprep.subr.mxu0 0.0
    %1407 = vmatpush1.msra.mxu0 %v344
    %1408 = vmatprep.subr.mxu0 0.0
    %1409 = vmatpush1.msra.mxu0 %v345
    %1410 = vmatprep.subr.mxu0 0.0
    %1411 = vmatpush1.msra.mxu0 %v346
    %1412 = vmatprep.subr.mxu0 0.0
    %1413 = vmatpush1.msra.mxu0 %v347
    %1414 = vmatprep.subr.mxu0 0.0
    %1415 = vmatpush1.msra.mxu0 %v348
    %1416 = vmatprep.subr.mxu0 0.0
    %1417 = vmatpush1.msra.mxu0 %v349
    %1418 = vmatprep.subr.mxu0 0.0
    %1419 = vmatpush1.msra.mxu0 %v350
    %1420 = vmatprep.mubr.f32.mxu0 %v642
    %1421 = vmatmul.mubr.f32.gmra.mrb[0].mxu0 %v640
    %v1422 = vpop.f32.mrb[0].mxu0
    %v1423 = vadd.f32 %v1353, %v1422
    %v1424 = vpop.f32.mrb[0].mxu0
    %1425 = vdwg.mxu0
    %1426 = vmatprep.subr.mxu0 0.0
    %1427 = vmatpush1.msra.mxu0 %v351
    %1428 = vmatprep.subr.mxu0 0.0
    %1429 = vmatpush1.msra.mxu0 %v352
    %1430 = vmatprep.subr.mxu0 0.0
    %1431 = vmatpush1.msra.mxu0 %v353
    %1432 = vmatprep.subr.mxu0 0.0
    %1433 = vmatpush1.msra.mxu0 %v354
    %1434 = vmatprep.subr.mxu0 0.0
    %1435 = vmatpush1.msra.mxu0 %v355
    %1436 = vmatprep.subr.mxu0 0.0
    %1437 = vmatpush1.msra.mxu0 %v356
    %1438 = vmatprep.subr.mxu0 0.0
    %1439 = vmatpush1.msra.mxu0 %v357
    %1440 = vmatprep.subr.mxu0 0.0
    %1441 = vmatpush1.msra.mxu0 %v358
    %1442 = vmatprep.subr.mxu0 0.0
    %1443 = vmatpush1.msra.mxu0 %v359
    %1444 = vmatprep.subr.mxu0 0.0
    %1445 = vmatpush1.msra.mxu0 %v360
    %1446 = vmatprep.subr.mxu0 0.0
    %1447 = vmatpush1.msra.mxu0 %v361
    %1448 = vmatprep.subr.mxu0 0.0
    %1449 = vmatpush1.msra.mxu0 %v362
    %1450 = vmatprep.subr.mxu0 0.0
    %1451 = vmatpush1.msra.mxu0 %v363
    %1452 = vmatprep.subr.mxu0 0.0
    %1453 = vmatpush1.msra.mxu0 %v364
    %1454 = vmatprep.subr.mxu0 0.0
    %1455 = vmatpush1.msra.mxu0 %v365
    %1456 = vmatprep.subr.mxu0 0.0
    %1457 = vmatpush1.msra.mxu0 %v366
    %1458 = vmatprep.subr.mxu0 0.0
    %1459 = vmatpush1.msra.mxu0 %v367
    %1460 = vmatprep.subr.mxu0 0.0
    %1461 = vmatpush1.msra.mxu0 %v368
    %1462 = vmatprep.subr.mxu0 0.0
    %1463 = vmatpush1.msra.mxu0 %v369
    %1464 = vmatprep.subr.mxu0 0.0
    %1465 = vmatpush1.msra.mxu0 %v370
    %1466 = vmatprep.subr.mxu0 0.0
    %1467 = vmatpush1.msra.mxu0 %v371
    %1468 = vmatprep.subr.mxu0 0.0
    %1469 = vmatpush1.msra.mxu0 %v372
    %1470 = vmatprep.subr.mxu0 0.0
    %1471 = vmatpush1.msra.mxu0 %v373
    %1472 = vmatprep.subr.mxu0 0.0
    %1473 = vmatpush1.msra.mxu0 %v374
    %1474 = vmatprep.subr.mxu0 0.0
    %1475 = vmatpush1.msra.mxu0 %v375
    %1476 = vmatprep.subr.mxu0 0.0
    %1477 = vmatpush1.msra.mxu0 %v376
    %1478 = vmatprep.subr.mxu0 0.0
    %1479 = vmatpush1.msra.mxu0 %v377
    %1480 = vmatprep.subr.mxu0 0.0
    %1481 = vmatpush1.msra.mxu0 %v378
    %1482 = vmatprep.subr.mxu0 0.0
    %1483 = vmatpush1.msra.mxu0 %v379
    %1484 = vmatprep.subr.mxu0 0.0
    %1485 = vmatpush1.msra.mxu0 %v380
    %1486 = vmatprep.subr.mxu0 0.0
    %1487 = vmatpush1.msra.mxu0 %v381
    %1488 = vmatprep.subr.mxu0 0.0
    %1489 = vmatpush1.msra.mxu0 %v382
    %1490 = vmatprep.mubr.f32.mxu0 %v658
    %1491 = vmatmul.mubr.f32.gmra.mrb[0].mxu0 %v650
    %v1492 = vpop.f32.mrb[0].mxu0
    %v1493 = vadd.f32 %v1423, %v1492
    %v1494 = vpop.f32.mrb[0].mxu0
    %1495 = vdwg.mxu0
    %1496 = vmatprep.subr.mxu0 0.0
    %1497 = vmatpush1.msra.mxu0 %v383
    %1498 = vmatprep.subr.mxu0 0.0
    %1499 = vmatpush1.msra.mxu0 %v384
    %1500 = vmatprep.subr.mxu0 0.0
    %1501 = vmatpush1.msra.mxu0 %v385
    %1502 = vmatprep.subr.mxu0 0.0
    %1503 = vmatpush1.msra.mxu0 %v386
    %1504 = vmatprep.subr.mxu0 0.0
    %1505 = vmatpush1.msra.mxu0 %v387
    %1506 = vmatprep.subr.mxu0 0.0
    %1507 = vmatpush1.msra.mxu0 %v388
    %1508 = vmatprep.subr.mxu0 0.0
    %1509 = vmatpush1.msra.mxu0 %v389
    %1510 = vmatprep.subr.mxu0 0.0
    %1511 = vmatpush1.msra.mxu0 %v390
    %1512 = vmatprep.subr.mxu0 0.0
    %1513 = vmatpush1.msra.mxu0 %v391
    %1514 = vmatprep.subr.mxu0 0.0
    %1515 = vmatpush1.msra.mxu0 %v392
    %1516 = vmatprep.subr.mxu0 0.0
    %1517 = vmatpush1.msra.mxu0 %v393
    %1518 = vmatprep.subr.mxu0 0.0
    %1519 = vmatpush1.msra.mxu0 %v394
    %1520 = vmatprep.subr.mxu0 0.0
    %1521 = vmatpush1.msra.mxu0 %v395
    %1522 = vmatprep.subr.mxu0 0.0
    %1523 = vmatpush1.msra.mxu0 %v396
    %1524 = vmatprep.subr.mxu0 0.0
    %1525 = vmatpush1.msra.mxu0 %v397
    %1526 = vmatprep.subr.mxu0 0.0
    %1527 = vmatpush1.msra.mxu0 %v398
    %1528 = vmatprep.subr.mxu0 0.0
    %1529 = vmatpush1.msra.mxu0 %v399
    %1530 = vmatprep.subr.mxu0 0.0
    %1531 = vmatpush1.msra.mxu0 %v400
    %1532 = vmatprep.subr.mxu0 0.0
    %1533 = vmatpush1.msra.mxu0 %v401
    %1534 = vmatprep.subr.mxu0 0.0
    %1535 = vmatpush1.msra.mxu0 %v402
    %1536 = vmatprep.subr.mxu0 0.0
    %1537 = vmatpush1.msra.mxu0 %v403
    %1538 = vmatprep.subr.mxu0 0.0
    %1539 = vmatpush1.msra.mxu0 %v404
    %1540 = vmatprep.subr.mxu0 0.0
    %1541 = vmatpush1.msra.mxu0 %v405
    %1542 = vmatprep.subr.mxu0 0.0
    %1543 = vmatpush1.msra.mxu0 %v406
    %1544 = vmatprep.subr.mxu0 0.0
    %1545 = vmatpush1.msra.mxu0 %v407
    %1546 = vmatprep.subr.mxu0 0.0
    %1547 = vmatpush1.msra.mxu0 %v408
    %1548 = vmatprep.subr.mxu0 0.0
    %1549 = vmatpush1.msra.mxu0 %v409
    %1550 = vmatprep.subr.mxu0 0.0
    %1551 = vmatpush1.msra.mxu0 %v410
    %1552 = vmatprep.subr.mxu0 0.0
    %1553 = vmatpush1.msra.mxu0 %v411
    %1554 = vmatprep.subr.mxu0 0.0
    %1555 = vmatpush1.msra.mxu0 %v412
    %1556 = vmatprep.subr.mxu0 0.0
    %1557 = vmatpush1.msra.mxu0 %v413
    %1558 = vmatprep.subr.mxu0 0.0
    %1559 = vmatpush1.msra.mxu0 %v414
    %1560 = vmatprep.mubr.f32.mxu0 %v659
    %1561 = vmatmul.mubr.f32.gmra.mrb[0].mxu0 %v657
    %v1562 = vpop.f32.mrb[0].mxu0
    %v1563 = vadd.f32 %v1493, %v1562
    %v1564 = vpop.f32.mrb[0].mxu0
    %1565 = vdwg.mxu0
    %1566 = vmatprep.subr.mxu0 0.0
    %1567 = vmatpush1.msra.mxu0 %v415
    %1568 = vmatprep.subr.mxu0 0.0
    %1569 = vmatpush1.msra.mxu0 %v416
    %1570 = vmatprep.subr.mxu0 0.0
    %1571 = vmatpush1.msra.mxu0 %v417
    %1572 = vmatprep.subr.mxu0 0.0
    %1573 = vmatpush1.msra.mxu0 %v418
    %1574 = vmatprep.subr.mxu0 0.0
    %1575 = vmatpush1.msra.mxu0 %v419
    %1576 = vmatprep.subr.mxu0 0.0
    %1577 = vmatpush1.msra.mxu0 %v420
    %1578 = vmatprep.subr.mxu0 0.0
    %1579 = vmatpush1.msra.mxu0 %v421
    %1580 = vmatprep.subr.mxu0 0.0
    %1581 = vmatpush1.msra.mxu0 %v422
    %1582 = vmatprep.subr.mxu0 0.0
    %1583 = vmatpush1.msra.mxu0 %v423
    %1584 = vmatprep.subr.mxu0 0.0
    %1585 = vmatpush1.msra.mxu0 %v424
    %1586 = vmatprep.subr.mxu0 0.0
    %1587 = vmatpush1.msra.mxu0 %v425
    %1588 = vmatprep.subr.mxu0 0.0
    %1589 = vmatpush1.msra.mxu0 %v426
    %1590 = vmatprep.subr.mxu0 0.0
    %1591 = vmatpush1.msra.mxu0 %v427
    %1592 = vmatprep.subr.mxu0 0.0
    %1593 = vmatpush1.msra.mxu0 %v428
    %1594 = vmatprep.subr.mxu0 0.0
    %1595 = vmatpush1.msra.mxu0 %v429
    %1596 = vmatprep.subr.mxu0 0.0
    %1597 = vmatpush1.msra.mxu0 %v430
    %1598 = vmatprep.subr.mxu0 0.0
    %1599 = vmatpush1.msra.mxu0 %v431
    %1600 = vmatprep.subr.mxu0 0.0
    %1601 = vmatpush1.msra.mxu0 %v432
    %1602 = vmatprep.subr.mxu0 0.0
    %1603 = vmatpush1.msra.mxu0 %v433
    %1604 = vmatprep.subr.mxu0 0.0
    %1605 = vmatpush1.msra.mxu0 %v434
    %1606 = vmatprep.subr.mxu0 0.0
    %1607 = vmatpush1.msra.mxu0 %v435
    %1608 = vmatprep.subr.mxu0 0.0
    %1609 = vmatpush1.msra.mxu0 %v436
    %1610 = vmatprep.subr.mxu0 0.0
    %1611 = vmatpush1.msra.mxu0 %v437
    %1612 = vmatprep.subr.mxu0 0.0
    %1613 = vmatpush1.msra.mxu0 %v438
    %1614 = vmatprep.subr.mxu0 0.0
    %1615 = vmatpush1.msra.mxu0 %v439
    %1616 = vmatprep.subr.mxu0 0.0
    %1617 = vmatpush1.msra.mxu0 %v440
    %1618 = vmatprep.subr.mxu0 0.0
    %1619 = vmatpush1.msra.mxu0 %v441
    %1620 = vmatprep.subr.mxu0 0.0
    %1621 = vmatpush1.msra.mxu0 %v442
    %1622 = vmatprep.subr.mxu0 0.0
    %1623 = vmatpush1.msra.mxu0 %v443
    %1624 = vmatprep.subr.mxu0 0.0
    %1625 = vmatpush1.msra.mxu0 %v444
    %1626 = vmatprep.subr.mxu0 0.0
    %1627 = vmatpush1.msra.mxu0 %v445
    %1628 = vmatprep.subr.mxu0 0.0
    %1629 = vmatpush1.msra.mxu0 %v446
    %1630 = vmatprep.mubr.f32.mxu0 %v675
    %1631 = vmatmul.mubr.f32.gmra.mrb[0].mxu0 %v667
    %v1632 = vpop.f32.mrb[0].mxu0
    %v1633 = vadd.f32 %v1563, %v1632
    %v1634 = vpop.f32.mrb[0].mxu0
    %1635 = vdwg.mxu0
    %1636 = vmatprep.subr.mxu0 0.0
    %1637 = vmatpush1.msra.mxu0 %v447
    %1638 = vmatprep.subr.mxu0 0.0
    %1639 = vmatpush1.msra.mxu0 %v448
    %1640 = vmatprep.subr.mxu0 0.0
    %1641 = vmatpush1.msra.mxu0 %v449
    %1642 = vmatprep.subr.mxu0 0.0
    %1643 = vmatpush1.msra.mxu0 %v450
    %1644 = vmatprep.subr.mxu0 0.0
    %1645 = vmatpush1.msra.mxu0 %v451
    %1646 = vmatprep.subr.mxu0 0.0
    %1647 = vmatpush1.msra.mxu0 %v452
    %1648 = vmatprep.subr.mxu0 0.0
    %1649 = vmatpush1.msra.mxu0 %v453
    %1650 = vmatprep.subr.mxu0 0.0
    %1651 = vmatpush1.msra.mxu0 %v454
    %1652 = vmatprep.subr.mxu0 0.0
    %1653 = vmatpush1.msra.mxu0 %v455
    %1654 = vmatprep.subr.mxu0 0.0
    %1655 = vmatpush1.msra.mxu0 %v456
    %1656 = vmatprep.subr.mxu0 0.0
    %1657 = vmatpush1.msra.mxu0 %v457
    %1658 = vmatprep.subr.mxu0 0.0
    %1659 = vmatpush1.msra.mxu0 %v458
    %1660 = vmatprep.subr.mxu0 0.0
    %1661 = vmatpush1.msra.mxu0 %v459
    %1662 = vmatprep.subr.mxu0 0.0
    %1663 = vmatpush1.msra.mxu0 %v460
    %1664 = vmatprep.subr.mxu0 0.0
    %1665 = vmatpush1.msra.mxu0 %v461
    %1666 = vmatprep.subr.mxu0 0.0
    %1667 = vmatpush1.msra.mxu0 %v462
    %1668 = vmatprep.subr.mxu0 0.0
    %1669 = vmatpush1.msra.mxu0 %v463
    %1670 = vmatprep.subr.mxu0 0.0
    %1671 = vmatpush1.msra.mxu0 %v464
    %1672 = vmatprep.subr.mxu0 0.0
    %1673 = vmatpush1.msra.mxu0 %v465
    %1674 = vmatprep.subr.mxu0 0.0
    %1675 = vmatpush1.msra.mxu0 %v466
    %1676 = vmatprep.subr.mxu0 0.0
    %1677 = vmatpush1.msra.mxu0 %v467
    %1678 = vmatprep.subr.mxu0 0.0
    %1679 = vmatpush1.msra.mxu0 %v468
    %1680 = vmatprep.subr.mxu0 0.0
    %1681 = vmatpush1.msra.mxu0 %v469
    %1682 = vmatprep.subr.mxu0 0.0
    %1683 = vmatpush1.msra.mxu0 %v470
    %1684 = vmatprep.subr.mxu0 0.0
    %1685 = vmatpush1.msra.mxu0 %v471
    %1686 = vmatprep.subr.mxu0 0.0
    %1687 = vmatpush1.msra.mxu0 %v472
    %1688 = vmatprep.subr.mxu0 0.0
    %1689 = vmatpush1.msra.mxu0 %v473
    %1690 = vmatprep.subr.mxu0 0.0
    %1691 = vmatpush1.msra.mxu0 %v474
    %1692 = vmatprep.subr.mxu0 0.0
    %1693 = vmatpush1.msra.mxu0 %v475
    %1694 = vmatprep.subr.mxu0 0.0
    %1695 = vmatpush1.msra.mxu0 %v476
    %1696 = vmatprep.subr.mxu0 0.0
    %1697 = vmatpush1.msra.mxu0 %v477
    %1698 = vmatprep.subr.mxu0 0.0
    %1699 = vmatpush1.msra.mxu0 %v478
    %1700 = vmatprep.mubr.f32.mxu0 %v676
    %1701 = vmatmul.mubr.f32.gmra.mrb[0].mxu0 %v674
    %v1702 = vpop.f32.mrb[0].mxu0
    %v1703 = vadd.f32 %v1633, %v1702
    %v1704 = vpop.f32.mrb[0].mxu0
    %1705 = vdwg.mxu0
    %1706 = vmatprep.subr.mxu0 0.0
    %1707 = vmatpush1.msra.mxu0 %v479
    %1708 = vmatprep.subr.mxu0 0.0
    %1709 = vmatpush1.msra.mxu0 %v480
    %1710 = vmatprep.subr.mxu0 0.0
    %1711 = vmatpush1.msra.mxu0 %v481
    %1712 = vmatprep.subr.mxu0 0.0
    %1713 = vmatpush1.msra.mxu0 %v482
    %1714 = vmatprep.subr.mxu0 0.0
    %1715 = vmatpush1.msra.mxu0 %v483
    %1716 = vmatprep.subr.mxu0 0.0
    %1717 = vmatpush1.msra.mxu0 %v484
    %1718 = vmatprep.subr.mxu0 0.0
    %1719 = vmatpush1.msra.mxu0 %v485
    %1720 = vmatprep.subr.mxu0 0.0
    %1721 = vmatpush1.msra.mxu0 %v486
    %1722 = vmatprep.subr.mxu0 0.0
    %1723 = vmatpush1.msra.mxu0 %v487
    %1724 = vmatprep.subr.mxu0 0.0
    %1725 = vmatpush1.msra.mxu0 %v488
    %1726 = vmatprep.subr.mxu0 0.0
    %1727 = vmatpush1.msra.mxu0 %v489
    %1728 = vmatprep.subr.mxu0 0.0
    %1729 = vmatpush1.msra.mxu0 %v490
    %1730 = vmatprep.subr.mxu0 0.0
    %1731 = vmatpush1.msra.mxu0 %v491
    %1732 = vmatprep.subr.mxu0 0.0
    %1733 = vmatpush1.msra.mxu0 %v492
    %1734 = vmatprep.subr.mxu0 0.0
    %1735 = vmatpush1.msra.mxu0 %v493
    %1736 = vmatprep.subr.mxu0 0.0
    %1737 = vmatpush1.msra.mxu0 %v494
    %1738 = vmatprep.subr.mxu0 0.0
    %1739 = vmatpush1.msra.mxu0 %v495
    %1740 = vmatprep.subr.mxu0 0.0
    %1741 = vmatpush1.msra.mxu0 %v496
    %1742 = vmatprep.subr.mxu0 0.0
    %1743 = vmatpush1.msra.mxu0 %v497
    %1744 = vmatprep.subr.mxu0 0.0
    %1745 = vmatpush1.msra.mxu0 %v498
    %1746 = vmatprep.subr.mxu0 0.0
    %1747 = vmatpush1.msra.mxu0 %v499
    %1748 = vmatprep.subr.mxu0 0.0
    %1749 = vmatpush1.msra.mxu0 %v500
    %1750 = vmatprep.subr.mxu0 0.0
    %1751 = vmatpush1.msra.mxu0 %v501
    %1752 = vmatprep.subr.mxu0 0.0
    %1753 = vmatpush1.msra.mxu0 %v502
    %1754 = vmatprep.subr.mxu0 0.0
    %1755 = vmatpush1.msra.mxu0 %v503
    %1756 = vmatprep.subr.mxu0 0.0
    %1757 = vmatpush1.msra.mxu0 %v504
    %1758 = vmatprep.subr.mxu0 0.0
    %1759 = vmatpush1.msra.mxu0 %v505
    %1760 = vmatprep.subr.mxu0 0.0
    %1761 = vmatpush1.msra.mxu0 %v506
    %1762 = vmatprep.subr.mxu0 0.0
    %1763 = vmatpush1.msra.mxu0 %v507
    %1764 = vmatprep.subr.mxu0 0.0
    %1765 = vmatpush1.msra.mxu0 %v508
    %1766 = vmatprep.subr.mxu0 0.0
    %1767 = vmatpush1.msra.mxu0 %v509
    %1768 = vmatprep.subr.mxu0 0.0
    %1769 = vmatpush1.msra.mxu0 %v510
    %1770 = vmatprep.mubr.f32.mxu0 %v692
    %1771 = vmatmul.mubr.f32.gmra.mrb[0].mxu0 %v684
    %v1772 = vpop.f32.mrb[0].mxu0
    %v1773 = vadd.f32 %v1703, %v1772
    %v1774 = vpop.f32.mrb[0].mxu0
    %1775 = vdwg.mxu0
    %1776 = vmatprep.subr.mxu0 0.0
    %1777 = vmatpush1.msra.mxu0 %v511
    %1778 = vmatprep.subr.mxu0 0.0
    %1779 = vmatpush1.msra.mxu0 %v512
    %1780 = vmatprep.subr.mxu0 0.0
    %1781 = vmatpush1.msra.mxu0 %v513
    %1782 = vmatprep.subr.mxu0 0.0
    %1783 = vmatpush1.msra.mxu0 %v514
    %1784 = vmatprep.subr.mxu0 0.0
    %1785 = vmatpush1.msra.mxu0 %v515
    %1786 = vmatprep.subr.mxu0 0.0
    %1787 = vmatpush1.msra.mxu0 %v516
    %1788 = vmatprep.subr.mxu0 0.0
    %1789 = vmatpush1.msra.mxu0 %v517
    %1790 = vmatprep.subr.mxu0 0.0
    %1791 = vmatpush1.msra.mxu0 %v518
    %1792 = vmatprep.subr.mxu0 0.0
    %1793 = vmatpush1.msra.mxu0 %v519
    %1794 = vmatprep.subr.mxu0 0.0
    %1795 = vmatpush1.msra.mxu0 %v520
    %1796 = vmatprep.subr.mxu0 0.0
    %1797 = vmatpush1.msra.mxu0 %v521
    %1798 = vmatprep.subr.mxu0 0.0
    %1799 = vmatpush1.msra.mxu0 %v522
    %1800 = vmatprep.subr.mxu0 0.0
    %1801 = vmatpush1.msra.mxu0 %v523
    %1802 = vmatprep.subr.mxu0 0.0
    %1803 = vmatpush1.msra.mxu0 %v524
    %1804 = vmatprep.subr.mxu0 0.0
    %1805 = vmatpush1.msra.mxu0 %v525
    %1806 = vmatprep.subr.mxu0 0.0
    %1807 = vmatpush1.msra.mxu0 %v526
    %1808 = vmatprep.subr.mxu0 0.0
    %1809 = vmatpush1.msra.mxu0 %v527
    %1810 = vmatprep.subr.mxu0 0.0
    %1811 = vmatpush1.msra.mxu0 %v528
    %1812 = vmatprep.subr.mxu0 0.0
    %1813 = vmatpush1.msra.mxu0 %v529
    %1814 = vmatprep.subr.mxu0 0.0
    %1815 = vmatpush1.msra.mxu0 %v530
    %1816 = vmatprep.subr.mxu0 0.0
    %1817 = vmatpush1.msra.mxu0 %v531
    %1818 = vmatprep.subr.mxu0 0.0
    %1819 = vmatpush1.msra.mxu0 %v532
    %1820 = vmatprep.subr.mxu0 0.0
    %1821 = vmatpush1.msra.mxu0 %v533
    %1822 = vmatprep.subr.mxu0 0.0
    %1823 = vmatpush1.msra.mxu0 %v534
    %1824 = vmatprep.subr.mxu0 0.0
    %1825 = vmatpush1.msra.mxu0 %v535
    %1826 = vmatprep.subr.mxu0 0.0
    %1827 = vmatpush1.msra.mxu0 %v536
    %1828 = vmatprep.subr.mxu0 0.0
    %1829 = vmatpush1.msra.mxu0 %v537
    %1830 = vmatprep.subr.mxu0 0.0
    %1831 = vmatpush1.msra.mxu0 %v538
    %1832 = vmatprep.subr.mxu0 0.0
    %1833 = vmatpush1.msra.mxu0 %v539
    %1834 = vmatprep.subr.mxu0 0.0
    %1835 = vmatpush1.msra.mxu0 %v540
    %1836 = vmatprep.subr.mxu0 0.0
    %1837 = vmatpush1.msra.mxu0 %v541
    %1838 = vmatprep.subr.mxu0 0.0
    %1839 = vmatpush1.msra.mxu0 %v542
    %1840 = vmatprep.mubr.f32.mxu0 %v693
    %1841 = vmatmul.mubr.f32.gmra.mrb[0].mxu0 %v691
    %v1842 = vpop.f32.mrb[0].mxu0
    %v1843 = vadd.f32 %v1773, %v1842
    %v1844 = vpop.f32.mrb[0].mxu0
    %1845 = vdwg.mxu0
    %1846 = vst [vmem:[#allocation2] sm:$0x3] %v1843
    %v1847 = vld [vmem:[%s3] sm:$0xff]
    %v1848 = vld [vmem:[%s3 + $0x8] sm:$0xff]
    %v1849 = vld [vmem:[%s3 + $0x10] sm:$0xff]
    %v1850 = vld [vmem:[%s3 + $0x18] sm:$0xff]
    %v1851 = vld [vmem:[%s3 + $0x20] sm:$0xff]
    %v1852 = vld [vmem:[%s3 + $0x28] sm:$0xff]
    %v1853 = vld [vmem:[%s3 + $0x30] sm:$0xff]
    %v1854 = vld [vmem:[%s3 + $0x38] sm:$0xff]
    %v1855 = vld [vmem:[%s3 + $0x40] sm:$0xff]
    %v1856 = vld [vmem:[%s3 + $0x48] sm:$0xff]
    %v1857 = vld [vmem:[%s3 + $0x50] sm:$0xff]
    %v1858 = vld [vmem:[%s3 + $0x58] sm:$0xff]
    %v1859 = vld [vmem:[%s3 + $0x60] sm:$0xff]
    %v1860 = vld [vmem:[%s3 + $0x68] sm:$0xff]
    %v1861 = vld [vmem:[%s3 + $0x70] sm:$0xff]
    %v1862 = vld [vmem:[%s3 + $0x78] sm:$0xff]
    %v1863 = vld [vmem:[%s3 + $0x80] sm:$0xff]
    %v1864 = vld [vmem:[%s3 + $0x88] sm:$0xff]
    %v1865 = vld [vmem:[%s3 + $0x90] sm:$0xff]
    %v1866 = vld [vmem:[%s3 + $0x98] sm:$0xff]
    %v1867 = vld [vmem:[%s3 + $0xa0] sm:$0xff]
    %v1868 = vld [vmem:[%s3 + $0xa8] sm:$0xff]
    %v1869 = vld [vmem:[%s3 + $0xb0] sm:$0xff]
    %v1870 = vld [vmem:[%s3 + $0xb8] sm:$0xff]
    %v1871 = vld [vmem:[%s3 + $0xc0] sm:$0xff]
    %v1872 = vld [vmem:[%s3 + $0xc8] sm:$0xff]
    %v1873 = vld [vmem:[%s3 + $0xd0] sm:$0xff]
    %v1874 = vld [vmem:[%s3 + $0xd8] sm:$0xff]
    %v1875 = vld [vmem:[%s3 + $0xe0] sm:$0xff]
    %v1876 = vld [vmem:[%s3 + $0xe8] sm:$0xff]
    %v1877 = vld [vmem:[%s3 + $0xf0] sm:$0xff]
    %v1878 = vld [vmem:[%s3 + $0xf8] sm:$0xff]
    %v1879 = vld [vmem:[%s3 + $0x100] sm:$0xff]
    %v1880 = vld [vmem:[%s3 + $0x108] sm:$0xff]
    %v1881 = vld [vmem:[%s3 + $0x110] sm:$0xff]
    %v1882 = vld [vmem:[%s3 + $0x118] sm:$0xff]
    %v1883 = vld [vmem:[%s3 + $0x120] sm:$0xff]
    %v1884 = vld [vmem:[%s3 + $0x128] sm:$0xff]
    %v1885 = vld [vmem:[%s3 + $0x130] sm:$0xff]
    %v1886 = vld [vmem:[%s3 + $0x138] sm:$0xff]
    %v1887 = vld [vmem:[%s3 + $0x140] sm:$0xff]
    %v1888 = vld [vmem:[%s3 + $0x148] sm:$0xff]
    %v1889 = vld [vmem:[%s3 + $0x150] sm:$0xff]
    %v1890 = vld [vmem:[%s3 + $0x158] sm:$0xff]
    %v1891 = vld [vmem:[%s3 + $0x160] sm:$0xff]
    %v1892 = vld [vmem:[%s3 + $0x168] sm:$0xff]
    %v1893 = vld [vmem:[%s3 + $0x170] sm:$0xff]
    %v1894 = vld [vmem:[%s3 + $0x178] sm:$0xff]
    %v1895 = vld [vmem:[%s3 + $0x180] sm:$0xff]
    %v1896 = vld [vmem:[%s3 + $0x188] sm:$0xff]
    %v1897 = vld [vmem:[%s3 + $0x190] sm:$0xff]
    %v1898 = vld [vmem:[%s3 + $0x198] sm:$0xff]
    %v1899 = vld [vmem:[%s3 + $0x1a0] sm:$0xff]
    %v1900 = vld [vmem:[%s3 + $0x1a8] sm:$0xff]
    %v1901 = vld [vmem:[%s3 + $0x1b0] sm:$0xff]
    %v1902 = vld [vmem:[%s3 + $0x1b8] sm:$0xff]
    %v1903 = vld [vmem:[%s3 + $0x1c0] sm:$0xff]
    %v1904 = vld [vmem:[%s3 + $0x1c8] sm:$0xff]
    %v1905 = vld [vmem:[%s3 + $0x1d0] sm:$0xff]
    %v1906 = vld [vmem:[%s3 + $0x1d8] sm:$0xff]
    %v1907 = vld [vmem:[%s3 + $0x1e0] sm:$0xff]
    %v1908 = vld [vmem:[%s3 + $0x1e8] sm:$0xff]
    %v1909 = vld [vmem:[%s3 + $0x1f0] sm:$0xff]
    %v1910 = vld [vmem:[%s3 + $0x1f8] sm:$0xff]
    %v1911 = vld [vmem:[%s3 + $0x200] sm:$0xff]
    %v1912 = vld [vmem:[%s3 + $0x208] sm:$0xff]
    %v1913 = vld [vmem:[%s3 + $0x210] sm:$0xff]
    %v1914 = vld [vmem:[%s3 + $0x218] sm:$0xff]
    %v1915 = vld [vmem:[%s3 + $0x220] sm:$0xff]
    %v1916 = vld [vmem:[%s3 + $0x228] sm:$0xff]
    %v1917 = vld [vmem:[%s3 + $0x230] sm:$0xff]
    %v1918 = vld [vmem:[%s3 + $0x238] sm:$0xff]
    %v1919 = vld [vmem:[%s3 + $0x240] sm:$0xff]
    %v1920 = vld [vmem:[%s3 + $0x248] sm:$0xff]
    %v1921 = vld [vmem:[%s3 + $0x250] sm:$0xff]
    %v1922 = vld [vmem:[%s3 + $0x258] sm:$0xff]
    %v1923 = vld [vmem:[%s3 + $0x260] sm:$0xff]
    %v1924 = vld [vmem:[%s3 + $0x268] sm:$0xff]
    %v1925 = vld [vmem:[%s3 + $0x270] sm:$0xff]
    %v1926 = vld [vmem:[%s3 + $0x278] sm:$0xff]
    %v1927 = vld [vmem:[%s3 + $0x280] sm:$0xff]
    %v1928 = vld [vmem:[%s3 + $0x288] sm:$0xff]
    %v1929 = vld [vmem:[%s3 + $0x290] sm:$0xff]
    %v1930 = vld [vmem:[%s3 + $0x298] sm:$0xff]
    %v1931 = vld [vmem:[%s3 + $0x2a0] sm:$0xff]
    %v1932 = vld [vmem:[%s3 + $0x2a8] sm:$0xff]
    %v1933 = vld [vmem:[%s3 + $0x2b0] sm:$0xff]
    %v1934 = vld [vmem:[%s3 + $0x2b8] sm:$0xff]
    %v1935 = vld [vmem:[%s3 + $0x2c0] sm:$0xff]
    %v1936 = vld [vmem:[%s3 + $0x2c8] sm:$0xff]
    %v1937 = vld [vmem:[%s3 + $0x2d0] sm:$0xff]
    %v1938 = vld [vmem:[%s3 + $0x2d8] sm:$0xff]
    %v1939 = vld [vmem:[%s3 + $0x2e0] sm:$0xff]
    %v1940 = vld [vmem:[%s3 + $0x2e8] sm:$0xff]
    %v1941 = vld [vmem:[%s3 + $0x2f0] sm:$0xff]
    %v1942 = vld [vmem:[%s3 + $0x2f8] sm:$0xff]
    %v1943 = vld [vmem:[%s3 + $0x300] sm:$0xff]
    %v1944 = vld [vmem:[%s3 + $0x308] sm:$0xff]
    %v1945 = vld [vmem:[%s3 + $0x310] sm:$0xff]
    %v1946 = vld [vmem:[%s3 + $0x318] sm:$0xff]
    %v1947 = vld [vmem:[%s3 + $0x320] sm:$0xff]
    %v1948 = vld [vmem:[%s3 + $0x328] sm:$0xff]
    %v1949 = vld [vmem:[%s3 + $0x330] sm:$0xff]
    %v1950 = vld [vmem:[%s3 + $0x338] sm:$0xff]
    %v1951 = vld [vmem:[%s3 + $0x340] sm:$0xff]
    %v1952 = vld [vmem:[%s3 + $0x348] sm:$0xff]
    %v1953 = vld [vmem:[%s3 + $0x350] sm:$0xff]
    %v1954 = vld [vmem:[%s3 + $0x358] sm:$0xff]
    %v1955 = vld [vmem:[%s3 + $0x360] sm:$0xff]
    %v1956 = vld [vmem:[%s3 + $0x368] sm:$0xff]
    %v1957 = vld [vmem:[%s3 + $0x370] sm:$0xff]
    %v1958 = vld [vmem:[%s3 + $0x378] sm:$0xff]
    %v1959 = vld [vmem:[%s3 + $0x380] sm:$0xff]
    %v1960 = vld [vmem:[%s3 + $0x388] sm:$0xff]
    %v1961 = vld [vmem:[%s3 + $0x390] sm:$0xff]
    %v1962 = vld [vmem:[%s3 + $0x398] sm:$0xff]
    %v1963 = vld [vmem:[%s3 + $0x3a0] sm:$0xff]
    %v1964 = vld [vmem:[%s3 + $0x3a8] sm:$0xff]
    %v1965 = vld [vmem:[%s3 + $0x3b0] sm:$0xff]
    %v1966 = vld [vmem:[%s3 + $0x3b8] sm:$0xff]
    %v1967 = vld [vmem:[%s3 + $0x3c0] sm:$0xff]
    %v1968 = vld [vmem:[%s3 + $0x3c8] sm:$0xff]
    %v1969 = vld [vmem:[%s3 + $0x3d0] sm:$0xff]
    %v1970 = vld [vmem:[%s3 + $0x3d8] sm:$0xff]
    %v1971 = vld [vmem:[%s3 + $0x3e0] sm:$0xff]
    %v1972 = vld [vmem:[%s3 + $0x3e8] sm:$0xff]
    %v1973 = vld [vmem:[%s3 + $0x3f0] sm:$0xff]
    %v1974 = vld [vmem:[%s3 + $0x3f8] sm:$0xff]
    %v1975 = vld [vmem:[%s3 + $0x400] sm:$0xff]
    %v1976 = vld [vmem:[%s3 + $0x408] sm:$0xff]
    %v1977 = vld [vmem:[%s3 + $0x410] sm:$0xff]
    %v1978 = vld [vmem:[%s3 + $0x418] sm:$0xff]
    %v1979 = vld [vmem:[%s3 + $0x420] sm:$0xff]
    %v1980 = vld [vmem:[%s3 + $0x428] sm:$0xff]
    %v1981 = vld [vmem:[%s3 + $0x430] sm:$0xff]
    %v1982 = vld [vmem:[%s3 + $0x438] sm:$0xff]
    %v1983 = vld [vmem:[%s3 + $0x440] sm:$0xff]
    %v1984 = vld [vmem:[%s3 + $0x448] sm:$0xff]
    %v1985 = vld [vmem:[%s3 + $0x450] sm:$0xff]
    %v1986 = vld [vmem:[%s3 + $0x458] sm:$0xff]
    %v1987 = vld [vmem:[%s3 + $0x460] sm:$0xff]
    %v1988 = vld [vmem:[%s3 + $0x468] sm:$0xff]
    %v1989 = vld [vmem:[%s3 + $0x470] sm:$0xff]
    %v1990 = vld [vmem:[%s3 + $0x478] sm:$0xff]
    %v1991 = vld [vmem:[%s3 + $0x480] sm:$0xff]
    %v1992 = vld [vmem:[%s3 + $0x488] sm:$0xff]
    %v1993 = vld [vmem:[%s3 + $0x490] sm:$0xff]
    %v1994 = vld [vmem:[%s3 + $0x498] sm:$0xff]
    %v1995 = vld [vmem:[%s3 + $0x4a0] sm:$0xff]
    %v1996 = vld [vmem:[%s3 + $0x4a8] sm:$0xff]
    %v1997 = vld [vmem:[%s3 + $0x4b0] sm:$0xff]
    %v1998 = vld [vmem:[%s3 + $0x4b8] sm:$0xff]
    %v1999 = vld [vmem:[%s3 + $0x4c0] sm:$0xff]
    %v2000 = vld [vmem:[%s3 + $0x4c8] sm:$0xff]
    %v2001 = vld [vmem:[%s3 + $0x4d0] sm:$0xff]
    %v2002 = vld [vmem:[%s3 + $0x4d8] sm:$0xff]
    %v2003 = vld [vmem:[%s3 + $0x4e0] sm:$0xff]
    %v2004 = vld [vmem:[%s3 + $0x4e8] sm:$0xff]
    %v2005 = vld [vmem:[%s3 + $0x4f0] sm:$0xff]
    %v2006 = vld [vmem:[%s3 + $0x4f8] sm:$0xff]
    %v2007 = vld [vmem:[%s3 + $0x500] sm:$0xff]
    %v2008 = vld [vmem:[%s3 + $0x508] sm:$0xff]
    %v2009 = vld [vmem:[%s3 + $0x510] sm:$0xff]
    %v2010 = vld [vmem:[%s3 + $0x518] sm:$0xff]
    %v2011 = vld [vmem:[%s3 + $0x520] sm:$0xff]
    %v2012 = vld [vmem:[%s3 + $0x528] sm:$0xff]
    %v2013 = vld [vmem:[%s3 + $0x530] sm:$0xff]
    %v2014 = vld [vmem:[%s3 + $0x538] sm:$0xff]
    %v2015 = vld [vmem:[%s3 + $0x540] sm:$0xff]
    %v2016 = vld [vmem:[%s3 + $0x548] sm:$0xff]
    %v2017 = vld [vmem:[%s3 + $0x550] sm:$0xff]
    %v2018 = vld [vmem:[%s3 + $0x558] sm:$0xff]
    %v2019 = vld [vmem:[%s3 + $0x560] sm:$0xff]
    %v2020 = vld [vmem:[%s3 + $0x568] sm:$0xff]
    %v2021 = vld [vmem:[%s3 + $0x570] sm:$0xff]
    %v2022 = vld [vmem:[%s3 + $0x578] sm:$0xff]
    %v2023 = vld [vmem:[%s3 + $0x580] sm:$0xff]
    %v2024 = vld [vmem:[%s3 + $0x588] sm:$0xff]
    %v2025 = vld [vmem:[%s3 + $0x590] sm:$0xff]
    %v2026 = vld [vmem:[%s3 + $0x598] sm:$0xff]
    %v2027 = vld [vmem:[%s3 + $0x5a0] sm:$0xff]
    %v2028 = vld [vmem:[%s3 + $0x5a8] sm:$0xff]
    %v2029 = vld [vmem:[%s3 + $0x5b0] sm:$0xff]
    %v2030 = vld [vmem:[%s3 + $0x5b8] sm:$0xff]
    %v2031 = vld [vmem:[%s3 + $0x5c0] sm:$0xff]
    %v2032 = vld [vmem:[%s3 + $0x5c8] sm:$0xff]
    %v2033 = vld [vmem:[%s3 + $0x5d0] sm:$0xff]
    %v2034 = vld [vmem:[%s3 + $0x5d8] sm:$0xff]
    %v2035 = vld [vmem:[%s3 + $0x5e0] sm:$0xff]
    %v2036 = vld [vmem:[%s3 + $0x5e8] sm:$0xff]
    %v2037 = vld [vmem:[%s3 + $0x5f0] sm:$0xff]
    %v2038 = vld [vmem:[%s3 + $0x5f8] sm:$0xff]
    %v2039 = vld [vmem:[%s3 + $0x600] sm:$0xff]
    %v2040 = vld [vmem:[%s3 + $0x608] sm:$0xff]
    %v2041 = vld [vmem:[%s3 + $0x610] sm:$0xff]
    %v2042 = vld [vmem:[%s3 + $0x618] sm:$0xff]
    %v2043 = vld [vmem:[%s3 + $0x620] sm:$0xff]
    %v2044 = vld [vmem:[%s3 + $0x628] sm:$0xff]
    %v2045 = vld [vmem:[%s3 + $0x630] sm:$0xff]
    %v2046 = vld [vmem:[%s3 + $0x638] sm:$0xff]
    %v2047 = vld [vmem:[%s3 + $0x640] sm:$0xff]
    %v2048 = vld [vmem:[%s3 + $0x648] sm:$0xff]
    %v2049 = vld [vmem:[%s3 + $0x650] sm:$0xff]
    %v2050 = vld [vmem:[%s3 + $0x658] sm:$0xff]
    %v2051 = vld [vmem:[%s3 + $0x660] sm:$0xff]
    %v2052 = vld [vmem:[%s3 + $0x668] sm:$0xff]
    %v2053 = vld [vmem:[%s3 + $0x670] sm:$0xff]
    %v2054 = vld [vmem:[%s3 + $0x678] sm:$0xff]
    %v2055 = vld [vmem:[%s3 + $0x680] sm:$0xff]
    %v2056 = vld [vmem:[%s3 + $0x688] sm:$0xff]
    %v2057 = vld [vmem:[%s3 + $0x690] sm:$0xff]
    %v2058 = vld [vmem:[%s3 + $0x698] sm:$0xff]
    %v2059 = vld [vmem:[%s3 + $0x6a0] sm:$0xff]
    %v2060 = vld [vmem:[%s3 + $0x6a8] sm:$0xff]
    %v2061 = vld [vmem:[%s3 + $0x6b0] sm:$0xff]
    %v2062 = vld [vmem:[%s3 + $0x6b8] sm:$0xff]
    %v2063 = vld [vmem:[%s3 + $0x6c0] sm:$0xff]
    %v2064 = vld [vmem:[%s3 + $0x6c8] sm:$0xff]
    %v2065 = vld [vmem:[%s3 + $0x6d0] sm:$0xff]
    %v2066 = vld [vmem:[%s3 + $0x6d8] sm:$0xff]
    %v2067 = vld [vmem:[%s3 + $0x6e0] sm:$0xff]
    %v2068 = vld [vmem:[%s3 + $0x6e8] sm:$0xff]
    %v2069 = vld [vmem:[%s3 + $0x6f0] sm:$0xff]
    %v2070 = vld [vmem:[%s3 + $0x6f8] sm:$0xff]
    %v2071 = vld [vmem:[%s3 + $0x700] sm:$0xff]
    %v2072 = vld [vmem:[%s3 + $0x708] sm:$0xff]
    %v2073 = vld [vmem:[%s3 + $0x710] sm:$0xff]
    %v2074 = vld [vmem:[%s3 + $0x718] sm:$0xff]
    %v2075 = vld [vmem:[%s3 + $0x720] sm:$0xff]
    %v2076 = vld [vmem:[%s3 + $0x728] sm:$0xff]
    %v2077 = vld [vmem:[%s3 + $0x730] sm:$0xff]
    %v2078 = vld [vmem:[%s3 + $0x738] sm:$0xff]
    %v2079 = vld [vmem:[%s3 + $0x740] sm:$0xff]
    %v2080 = vld [vmem:[%s3 + $0x748] sm:$0xff]
    %v2081 = vld [vmem:[%s3 + $0x750] sm:$0xff]
    %v2082 = vld [vmem:[%s3 + $0x758] sm:$0xff]
    %v2083 = vld [vmem:[%s3 + $0x760] sm:$0xff]
    %v2084 = vld [vmem:[%s3 + $0x768] sm:$0xff]
    %v2085 = vld [vmem:[%s3 + $0x770] sm:$0xff]
    %v2086 = vld [vmem:[%s3 + $0x778] sm:$0xff]
    %v2087 = vld [vmem:[%s3 + $0x780] sm:$0xff]
    %v2088 = vld [vmem:[%s3 + $0x788] sm:$0xff]
    %v2089 = vld [vmem:[%s3 + $0x790] sm:$0xff]
    %v2090 = vld [vmem:[%s3 + $0x798] sm:$0xff]
    %v2091 = vld [vmem:[%s3 + $0x7a0] sm:$0xff]
    %v2092 = vld [vmem:[%s3 + $0x7a8] sm:$0xff]
    %v2093 = vld [vmem:[%s3 + $0x7b0] sm:$0xff]
    %v2094 = vld [vmem:[%s3 + $0x7b8] sm:$0xff]
    %v2095 = vld [vmem:[%s3 + $0x7c0] sm:$0xff]
    %v2096 = vld [vmem:[%s3 + $0x7c8] sm:$0xff]
    %v2097 = vld [vmem:[%s3 + $0x7d0] sm:$0xff]
    %v2098 = vld [vmem:[%s3 + $0x7d8] sm:$0xff]
    %v2099 = vld [vmem:[%s3 + $0x7e0] sm:$0xff]
    %v2100 = vld [vmem:[%s3 + $0x7e8] sm:$0xff]
    %v2101 = vld [vmem:[%s3 + $0x7f0] sm:$0xff]
    %v2102 = vld [vmem:[%s3 + $0x7f8] sm:$0xff]
    %v2103 = vld [vmem:[%s3 + $0x800] sm:$0xff]
    %v2104 = vld [vmem:[%s3 + $0x808] sm:$0xff]
    %v2105 = vld [vmem:[%s3 + $0x810] sm:$0xff]
    %v2106 = vld [vmem:[%s3 + $0x818] sm:$0xff]
    %v2107 = vld [vmem:[%s3 + $0x820] sm:$0xff]
    %v2108 = vld [vmem:[%s3 + $0x828] sm:$0xff]
    %v2109 = vld [vmem:[%s3 + $0x830] sm:$0xff]
    %v2110 = vld [vmem:[%s3 + $0x838] sm:$0xff]
    %v2111 = vld [vmem:[%s3 + $0x840] sm:$0xff]
    %v2112 = vld [vmem:[%s3 + $0x848] sm:$0xff]
    %v2113 = vld [vmem:[%s3 + $0x850] sm:$0xff]
    %v2114 = vld [vmem:[%s3 + $0x858] sm:$0xff]
    %v2115 = vld [vmem:[%s3 + $0x860] sm:$0xff]
    %v2116 = vld [vmem:[%s3 + $0x868] sm:$0xff]
    %v2117 = vld [vmem:[%s3 + $0x870] sm:$0xff]
    %v2118 = vld [vmem:[%s3 + $0x878] sm:$0xff]
    %v2119 = vld [vmem:[%s3 + $0x880] sm:$0xff]
    %v2120 = vld [vmem:[%s3 + $0x888] sm:$0xff]
    %v2121 = vld [vmem:[%s3 + $0x890] sm:$0xff]
    %v2122 = vld [vmem:[%s3 + $0x898] sm:$0xff]
    %v2123 = vld [vmem:[%s3 + $0x8a0] sm:$0xff]
    %v2124 = vld [vmem:[%s3 + $0x8a8] sm:$0xff]
    %v2125 = vld [vmem:[%s3 + $0x8b0] sm:$0xff]
    %v2126 = vld [vmem:[%s3 + $0x8b8] sm:$0xff]
    %v2127 = vld [vmem:[%s3 + $0x8c0] sm:$0xff]
    %v2128 = vld [vmem:[%s3 + $0x8c8] sm:$0xff]
    %v2129 = vld [vmem:[%s3 + $0x8d0] sm:$0xff]
    %v2130 = vld [vmem:[%s3 + $0x8d8] sm:$0xff]
    %v2131 = vld [vmem:[%s3 + $0x8e0] sm:$0xff]
    %v2132 = vld [vmem:[%s3 + $0x8e8] sm:$0xff]
    %v2133 = vld [vmem:[%s3 + $0x8f0] sm:$0xff]
    %v2134 = vld [vmem:[%s3 + $0x8f8] sm:$0xff]
    %v2135 = vld [vmem:[%s3 + $0x900] sm:$0xff]
    %v2136 = vld [vmem:[%s3 + $0x908] sm:$0xff]
    %v2137 = vld [vmem:[%s3 + $0x910] sm:$0xff]
    %v2138 = vld [vmem:[%s3 + $0x918] sm:$0xff]
    %v2139 = vld [vmem:[%s3 + $0x920] sm:$0xff]
    %v2140 = vld [vmem:[%s3 + $0x928] sm:$0xff]
    %v2141 = vld [vmem:[%s3 + $0x930] sm:$0xff]
    %v2142 = vld [vmem:[%s3 + $0x938] sm:$0xff]
    %v2143 = vld [vmem:[%s3 + $0x940] sm:$0xff]
    %v2144 = vld [vmem:[%s3 + $0x948] sm:$0xff]
    %v2145 = vld [vmem:[%s3 + $0x950] sm:$0xff]
    %v2146 = vld [vmem:[%s3 + $0x958] sm:$0xff]
    %v2147 = vld [vmem:[%s3 + $0x960] sm:$0xff]
    %v2148 = vld [vmem:[%s3 + $0x968] sm:$0xff]
    %v2149 = vld [vmem:[%s3 + $0x970] sm:$0xff]
    %v2150 = vld [vmem:[%s3 + $0x978] sm:$0xff]
    %v2151 = vld [vmem:[%s3 + $0x980] sm:$0xff]
    %v2152 = vld [vmem:[%s3 + $0x988] sm:$0xff]
    %v2153 = vld [vmem:[%s3 + $0x990] sm:$0xff]
    %v2154 = vld [vmem:[%s3 + $0x998] sm:$0xff]
    %v2155 = vld [vmem:[%s3 + $0x9a0] sm:$0xff]
    %v2156 = vld [vmem:[%s3 + $0x9a8] sm:$0xff]
    %v2157 = vld [vmem:[%s3 + $0x9b0] sm:$0xff]
    %v2158 = vld [vmem:[%s3 + $0x9b8] sm:$0xff]
    %v2159 = vld [vmem:[%s3 + $0x9c0] sm:$0xff]
    %v2160 = vld [vmem:[%s3 + $0x9c8] sm:$0xff]
    %v2161 = vld [vmem:[%s3 + $0x9d0] sm:$0xff]
    %v2162 = vld [vmem:[%s3 + $0x9d8] sm:$0xff]
    %v2163 = vld [vmem:[%s3 + $0x9e0] sm:$0xff]
    %v2164 = vld [vmem:[%s3 + $0x9e8] sm:$0xff]
    %v2165 = vld [vmem:[%s3 + $0x9f0] sm:$0xff]
    %v2166 = vld [vmem:[%s3 + $0x9f8] sm:$0xff]
    %v2167 = vld [vmem:[%s3 + $0xa00] sm:$0xff]
    %v2168 = vld [vmem:[%s3 + $0xa08] sm:$0xff]
    %v2169 = vld [vmem:[%s3 + $0xa10] sm:$0xff]
    %v2170 = vld [vmem:[%s3 + $0xa18] sm:$0xff]
    %v2171 = vld [vmem:[%s3 + $0xa20] sm:$0xff]
    %v2172 = vld [vmem:[%s3 + $0xa28] sm:$0xff]
    %v2173 = vld [vmem:[%s3 + $0xa30] sm:$0xff]
    %v2174 = vld [vmem:[%s3 + $0xa38] sm:$0xff]
    %v2175 = vld [vmem:[%s3 + $0xa40] sm:$0xff]
    %v2176 = vld [vmem:[%s3 + $0xa48] sm:$0xff]
    %v2177 = vld [vmem:[%s3 + $0xa50] sm:$0xff]
    %v2178 = vld [vmem:[%s3 + $0xa58] sm:$0xff]
    %v2179 = vld [vmem:[%s3 + $0xa60] sm:$0xff]
    %v2180 = vld [vmem:[%s3 + $0xa68] sm:$0xff]
    %v2181 = vld [vmem:[%s3 + $0xa70] sm:$0xff]
    %v2182 = vld [vmem:[%s3 + $0xa78] sm:$0xff]
    %v2183 = vld [vmem:[%s3 + $0xa80] sm:$0xff]
    %v2184 = vld [vmem:[%s3 + $0xa88] sm:$0xff]
    %v2185 = vld [vmem:[%s3 + $0xa90] sm:$0xff]
    %v2186 = vld [vmem:[%s3 + $0xa98] sm:$0xff]
    %v2187 = vld [vmem:[%s3 + $0xaa0] sm:$0xff]
    %v2188 = vld [vmem:[%s3 + $0xaa8] sm:$0xff]
    %v2189 = vld [vmem:[%s3 + $0xab0] sm:$0xff]
    %v2190 = vld [vmem:[%s3 + $0xab8] sm:$0xff]
    %v2191 = vld [vmem:[%s3 + $0xac0] sm:$0xff]
    %v2192 = vld [vmem:[%s3 + $0xac8] sm:$0xff]
    %v2193 = vld [vmem:[%s3 + $0xad0] sm:$0xff]
    %v2194 = vld [vmem:[%s3 + $0xad8] sm:$0xff]
    %v2195 = vld [vmem:[%s3 + $0xae0] sm:$0xff]
    %v2196 = vld [vmem:[%s3 + $0xae8] sm:$0xff]
    %v2197 = vld [vmem:[%s3 + $0xaf0] sm:$0xff]
    %v2198 = vld [vmem:[%s3 + $0xaf8] sm:$0xff]
    %v2199 = vld [vmem:[%s3 + $0xb00] sm:$0xff]
    %v2200 = vld [vmem:[%s3 + $0xb08] sm:$0xff]
    %v2201 = vld [vmem:[%s3 + $0xb10] sm:$0xff]
    %v2202 = vld [vmem:[%s3 + $0xb18] sm:$0xff]
    %v2203 = vld [vmem:[%s3 + $0xb20] sm:$0xff]
    %v2204 = vld [vmem:[%s3 + $0xb28] sm:$0xff]
    %v2205 = vld [vmem:[%s3 + $0xb30] sm:$0xff]
    %v2206 = vld [vmem:[%s3 + $0xb38] sm:$0xff]
    %v2207 = vld [vmem:[%s3 + $0xb40] sm:$0xff]
    %v2208 = vld [vmem:[%s3 + $0xb48] sm:$0xff]
    %v2209 = vld [vmem:[%s3 + $0xb50] sm:$0xff]
    %v2210 = vld [vmem:[%s3 + $0xb58] sm:$0xff]
    %v2211 = vld [vmem:[%s3 + $0xb60] sm:$0xff]
    %v2212 = vld [vmem:[%s3 + $0xb68] sm:$0xff]
    %v2213 = vld [vmem:[%s3 + $0xb70] sm:$0xff]
    %v2214 = vld [vmem:[%s3 + $0xb78] sm:$0xff]
    %v2215 = vld [vmem:[%s3 + $0xb80] sm:$0xff]
    %v2216 = vld [vmem:[%s3 + $0xb88] sm:$0xff]
    %v2217 = vld [vmem:[%s3 + $0xb90] sm:$0xff]
    %v2218 = vld [vmem:[%s3 + $0xb98] sm:$0xff]
    %v2219 = vld [vmem:[%s3 + $0xba0] sm:$0xff]
    %v2220 = vld [vmem:[%s3 + $0xba8] sm:$0xff]
    %v2221 = vld [vmem:[%s3 + $0xbb0] sm:$0xff]
    %v2222 = vld [vmem:[%s3 + $0xbb8] sm:$0xff]
    %v2223 = vld [vmem:[%s3 + $0xbc0] sm:$0xff]
    %v2224 = vld [vmem:[%s3 + $0xbc8] sm:$0xff]
    %v2225 = vld [vmem:[%s3 + $0xbd0] sm:$0xff]
    %v2226 = vld [vmem:[%s3 + $0xbd8] sm:$0xff]
    %v2227 = vld [vmem:[%s3 + $0xbe0] sm:$0xff]
    %v2228 = vld [vmem:[%s3 + $0xbe8] sm:$0xff]
    %v2229 = vld [vmem:[%s3 + $0xbf0] sm:$0xff]
    %v2230 = vld [vmem:[%s3 + $0xbf8] sm:$0xff]
    %v2231 = vld [vmem:[%s3 + $0xc00] sm:$0xff]
    %v2232 = vld [vmem:[%s3 + $0xc08] sm:$0xff]
    %v2233 = vld [vmem:[%s3 + $0xc10] sm:$0xff]
    %v2234 = vld [vmem:[%s3 + $0xc18] sm:$0xff]
    %v2235 = vld [vmem:[%s3 + $0xc20] sm:$0xff]
    %v2236 = vld [vmem:[%s3 + $0xc28] sm:$0xff]
    %v2237 = vld [vmem:[%s3 + $0xc30] sm:$0xff]
    %v2238 = vld [vmem:[%s3 + $0xc38] sm:$0xff]
    %v2239 = vld [vmem:[%s3 + $0xc40] sm:$0xff]
    %v2240 = vld [vmem:[%s3 + $0xc48] sm:$0xff]
    %v2241 = vld [vmem:[%s3 + $0xc50] sm:$0xff]
    %v2242 = vld [vmem:[%s3 + $0xc58] sm:$0xff]
    %v2243 = vld [vmem:[%s3 + $0xc60] sm:$0xff]
    %v2244 = vld [vmem:[%s3 + $0xc68] sm:$0xff]
    %v2245 = vld [vmem:[%s3 + $0xc70] sm:$0xff]
    %v2246 = vld [vmem:[%s3 + $0xc78] sm:$0xff]
    %v2247 = vld [vmem:[%s3 + $0xc80] sm:$0xff]
    %v2248 = vld [vmem:[%s3 + $0xc88] sm:$0xff]
    %v2249 = vld [vmem:[%s3 + $0xc90] sm:$0xff]
    %v2250 = vld [vmem:[%s3 + $0xc98] sm:$0xff]
    %v2251 = vld [vmem:[%s3 + $0xca0] sm:$0xff]
    %v2252 = vld [vmem:[%s3 + $0xca8] sm:$0xff]
    %v2253 = vld [vmem:[%s3 + $0xcb0] sm:$0xff]
    %v2254 = vld [vmem:[%s3 + $0xcb8] sm:$0xff]
    %v2255 = vld [vmem:[%s3 + $0xcc0] sm:$0xff]
    %v2256 = vld [vmem:[%s3 + $0xcc8] sm:$0xff]
    %v2257 = vld [vmem:[%s3 + $0xcd0] sm:$0xff]
    %v2258 = vld [vmem:[%s3 + $0xcd8] sm:$0xff]
    %v2259 = vld [vmem:[%s3 + $0xce0] sm:$0xff]
    %v2260 = vld [vmem:[%s3 + $0xce8] sm:$0xff]
    %v2261 = vld [vmem:[%s3 + $0xcf0] sm:$0xff]
    %v2262 = vld [vmem:[%s3 + $0xcf8] sm:$0xff]
    %v2263 = vld [vmem:[%s3 + $0xd00] sm:$0xff]
    %v2264 = vld [vmem:[%s3 + $0xd08] sm:$0xff]
    %v2265 = vld [vmem:[%s3 + $0xd10] sm:$0xff]
    %v2266 = vld [vmem:[%s3 + $0xd18] sm:$0xff]
    %v2267 = vld [vmem:[%s3 + $0xd20] sm:$0xff]
    %v2268 = vld [vmem:[%s3 + $0xd28] sm:$0xff]
    %v2269 = vld [vmem:[%s3 + $0xd30] sm:$0xff]
    %v2270 = vld [vmem:[%s3 + $0xd38] sm:$0xff]
    %v2271 = vld [vmem:[%s3 + $0xd40] sm:$0xff]
    %v2272 = vld [vmem:[%s3 + $0xd48] sm:$0xff]
    %v2273 = vld [vmem:[%s3 + $0xd50] sm:$0xff]
    %v2274 = vld [vmem:[%s3 + $0xd58] sm:$0xff]
    %v2275 = vld [vmem:[%s3 + $0xd60] sm:$0xff]
    %v2276 = vld [vmem:[%s3 + $0xd68] sm:$0xff]
    %v2277 = vld [vmem:[%s3 + $0xd70] sm:$0xff]
    %v2278 = vld [vmem:[%s3 + $0xd78] sm:$0xff]
    %v2279 = vld [vmem:[%s3 + $0xd80] sm:$0xff]
    %v2280 = vld [vmem:[%s3 + $0xd88] sm:$0xff]
    %v2281 = vld [vmem:[%s3 + $0xd90] sm:$0xff]
    %v2282 = vld [vmem:[%s3 + $0xd98] sm:$0xff]
    %v2283 = vld [vmem:[%s3 + $0xda0] sm:$0xff]
    %v2284 = vld [vmem:[%s3 + $0xda8] sm:$0xff]
    %v2285 = vld [vmem:[%s3 + $0xdb0] sm:$0xff]
    %v2286 = vld [vmem:[%s3 + $0xdb8] sm:$0xff]
    %v2287 = vld [vmem:[%s3 + $0xdc0] sm:$0xff]
    %v2288 = vld [vmem:[%s3 + $0xdc8] sm:$0xff]
    %v2289 = vld [vmem:[%s3 + $0xdd0] sm:$0xff]
    %v2290 = vld [vmem:[%s3 + $0xdd8] sm:$0xff]
    %v2291 = vld [vmem:[%s3 + $0xde0] sm:$0xff]
    %v2292 = vld [vmem:[%s3 + $0xde8] sm:$0xff]
    %v2293 = vld [vmem:[%s3 + $0xdf0] sm:$0xff]
    %v2294 = vld [vmem:[%s3 + $0xdf8] sm:$0xff]
    %v2295 = vld [vmem:[%s3 + $0xe00] sm:$0xff]
    %v2296 = vld [vmem:[%s3 + $0xe08] sm:$0xff]
    %v2297 = vld [vmem:[%s3 + $0xe10] sm:$0xff]
    %v2298 = vld [vmem:[%s3 + $0xe18] sm:$0xff]
    %v2299 = vld [vmem:[%s3 + $0xe20] sm:$0xff]
    %v2300 = vld [vmem:[%s3 + $0xe28] sm:$0xff]
    %v2301 = vld [vmem:[%s3 + $0xe30] sm:$0xff]
    %v2302 = vld [vmem:[%s3 + $0xe38] sm:$0xff]
    %v2303 = vld [vmem:[%s3 + $0xe40] sm:$0xff]
    %v2304 = vld [vmem:[%s3 + $0xe48] sm:$0xff]
    %v2305 = vld [vmem:[%s3 + $0xe50] sm:$0xff]
    %v2306 = vld [vmem:[%s3 + $0xe58] sm:$0xff]
    %v2307 = vld [vmem:[%s3 + $0xe60] sm:$0xff]
    %v2308 = vld [vmem:[%s3 + $0xe68] sm:$0xff]
    %v2309 = vld [vmem:[%s3 + $0xe70] sm:$0xff]
    %v2310 = vld [vmem:[%s3 + $0xe78] sm:$0xff]
    %v2311 = vld [vmem:[%s3 + $0xe80] sm:$0xff]
    %v2312 = vld [vmem:[%s3 + $0xe88] sm:$0xff]
    %v2313 = vld [vmem:[%s3 + $0xe90] sm:$0xff]
    %v2314 = vld [vmem:[%s3 + $0xe98] sm:$0xff]
    %v2315 = vld [vmem:[%s3 + $0xea0] sm:$0xff]
    %v2316 = vld [vmem:[%s3 + $0xea8] sm:$0xff]
    %v2317 = vld [vmem:[%s3 + $0xeb0] sm:$0xff]
    %v2318 = vld [vmem:[%s3 + $0xeb8] sm:$0xff]
    %v2319 = vld [vmem:[%s3 + $0xec0] sm:$0xff]
    %v2320 = vld [vmem:[%s3 + $0xec8] sm:$0xff]
    %v2321 = vld [vmem:[%s3 + $0xed0] sm:$0xff]
    %v2322 = vld [vmem:[%s3 + $0xed8] sm:$0xff]
    %v2323 = vld [vmem:[%s3 + $0xee0] sm:$0xff]
    %v2324 = vld [vmem:[%s3 + $0xee8] sm:$0xff]
    %v2325 = vld [vmem:[%s3 + $0xef0] sm:$0xff]
    %v2326 = vld [vmem:[%s3 + $0xef8] sm:$0xff]
    %v2327 = vld [vmem:[%s3 + $0xf00] sm:$0xff]
    %v2328 = vld [vmem:[%s3 + $0xf08] sm:$0xff]
    %v2329 = vld [vmem:[%s3 + $0xf10] sm:$0xff]
    %v2330 = vld [vmem:[%s3 + $0xf18] sm:$0xff]
    %v2331 = vld [vmem:[%s3 + $0xf20] sm:$0xff]
    %v2332 = vld [vmem:[%s3 + $0xf28] sm:$0xff]
    %v2333 = vld [vmem:[%s3 + $0xf30] sm:$0xff]
    %v2334 = vld [vmem:[%s3 + $0xf38] sm:$0xff]
    %v2335 = vld [vmem:[%s3 + $0xf40] sm:$0xff]
    %v2336 = vld [vmem:[%s3 + $0xf48] sm:$0xff]
    %v2337 = vld [vmem:[%s3 + $0xf50] sm:$0xff]
    %v2338 = vld [vmem:[%s3 + $0xf58] sm:$0xff]
    %v2339 = vld [vmem:[%s3 + $0xf60] sm:$0xff]
    %v2340 = vld [vmem:[%s3 + $0xf68] sm:$0xff]
    %v2341 = vld [vmem:[%s3 + $0xf70] sm:$0xff]
    %v2342 = vld [vmem:[%s3 + $0xf78] sm:$0xff]
    %v2343 = vld [vmem:[%s3 + $0xf80] sm:$0xff]
    %v2344 = vld [vmem:[%s3 + $0xf88] sm:$0xff]
    %v2345 = vld [vmem:[%s3 + $0xf90] sm:$0xff]
    %v2346 = vld [vmem:[%s3 + $0xf98] sm:$0xff]
    %v2347 = vld [vmem:[%s3 + $0xfa0] sm:$0xff]
    %v2348 = vld [vmem:[%s3 + $0xfa8] sm:$0xff]
    %v2349 = vld [vmem:[%s3 + $0xfb0] sm:$0xff]
    %v2350 = vld [vmem:[%s3 + $0xfb8] sm:$0xff]
    %v2351 = vld [vmem:[%s3 + $0xfc0] sm:$0xff]
    %v2352 = vld [vmem:[%s3 + $0xfc8] sm:$0xff]
    %v2353 = vld [vmem:[%s3 + $0xfd0] sm:$0xff]
    %v2354 = vld [vmem:[%s3 + $0xfd8] sm:$0xff]
    %v2355 = vld [vmem:[%s3 + $0xfe0] sm:$0xff]
    %v2356 = vld [vmem:[%s3 + $0xfe8] sm:$0xff]
    %v2357 = vld [vmem:[%s3 + $0xff0] sm:$0xff]
    %v2358 = vld [vmem:[%s3 + $0xff8] sm:$0xff]
    %v2359 = vld [vmem:[%s4] sm:$0xff]
    %v2360 = vld [vmem:[%s4 + $0x8] sm:$0xff]
    %v2361 = vld [vmem:[%s4 + $0x10] sm:$0xff]
    %v2362 = vld [vmem:[%s4 + $0x18] sm:$0xff]
    %v2367 = vlaneseq
    %v2368 = vshrl.u32 %v2367, 7
    %v2369 = vsub.s32 0, %v2368
    %v2370 = vrot.slane %v2359, %v2369
    %v2371 = vlaneseq
    %v2372 = vshrl.u32 %v2371, 7
    %v2373 = vsub.s32 1, %v2372
    %v2374 = vrot.slane %v2359, %v2373
    %v2375 = vlaneseq
    %v2376 = vshrl.u32 %v2375, 7
    %v2377 = vsub.s32 2, %v2376
    %v2378 = vrot.slane %v2359, %v2377
    %v2379 = vlaneseq
    %v2380 = vshrl.u32 %v2379, 7
    %v2381 = vsub.s32 3, %v2380
    %v2382 = vrot.slane %v2359, %v2381
    %v2383 = vlaneseq
    %v2384 = vshrl.u32 %v2383, 7
    %v2385 = vsub.s32 4, %v2384
    %v2386 = vrot.slane %v2359, %v2385
    %v2387 = vlaneseq
    %v2388 = vshrl.u32 %v2387, 7
    %v2389 = vsub.s32 5, %v2388
    %v2390 = vrot.slane %v2359, %v2389
    %v2391 = vlaneseq
    %v2392 = vshrl.u32 %v2391, 7
    %v2393 = vsub.s32 6, %v2392
    %v2394 = vrot.slane %v2359, %v2393
    %v2395 = vlaneseq
    %v2396 = vshrl.u32 %v2395, 7
    %v2397 = vsub.s32 7, %v2396
    %v2398 = vrot.slane %v2359, %v2397
    %v2399 = vlaneseq
    %v2400 = vshrl.u32 %v2399, 7
    %v2401 = vsub.s32 0, %v2400
    %v2402 = vrot.slane %v2360, %v2401
    %v2403 = vlaneseq
    %v2404 = vshrl.u32 %v2403, 7
    %v2405 = vsub.s32 1, %v2404
    %v2406 = vrot.slane %v2360, %v2405
    %v2407 = vlaneseq
    %v2408 = vshrl.u32 %v2407, 7
    %v2409 = vsub.s32 2, %v2408
    %v2410 = vrot.slane %v2360, %v2409
    %v2411 = vlaneseq
    %v2412 = vshrl.u32 %v2411, 7
    %v2413 = vsub.s32 3, %v2412
    %v2414 = vrot.slane %v2360, %v2413
    %v2415 = vlaneseq
    %v2416 = vshrl.u32 %v2415, 7
    %v2417 = vsub.s32 4, %v2416
    %v2418 = vrot.slane %v2360, %v2417
    %v2419 = vlaneseq
    %v2420 = vshrl.u32 %v2419, 7
    %v2421 = vsub.s32 5, %v2420
    %v2422 = vrot.slane %v2360, %v2421
    %v2423 = vlaneseq
    %v2424 = vshrl.u32 %v2423, 7
    %v2425 = vsub.s32 6, %v2424
    %v2426 = vrot.slane %v2360, %v2425
    %v2427 = vlaneseq
    %v2428 = vshrl.u32 %v2427, 7
    %v2429 = vsub.s32 7, %v2428
    %v2430 = vrot.slane %v2360, %v2429
    %v2431 = vlaneseq
    %v2432 = vshrl.u32 %v2431, 7
    %v2433 = vsub.s32 0, %v2432
    %v2434 = vrot.slane %v2361, %v2433
    %v2435 = vlaneseq
    %v2436 = vshrl.u32 %v2435, 7
    %v2437 = vsub.s32 1, %v2436
    %v2438 = vrot.slane %v2361, %v2437
    %v2439 = vlaneseq
    %v2440 = vshrl.u32 %v2439, 7
    %v2441 = vsub.s32 2, %v2440
    %v2442 = vrot.slane %v2361, %v2441
    %v2443 = vlaneseq
    %v2444 = vshrl.u32 %v2443, 7
    %v2445 = vsub.s32 3, %v2444
    %v2446 = vrot.slane %v2361, %v2445
    %v2447 = vlaneseq
    %v2448 = vshrl.u32 %v2447, 7
    %v2449 = vsub.s32 4, %v2448
    %v2450 = vrot.slane %v2361, %v2449
    %v2451 = vlaneseq
    %v2452 = vshrl.u32 %v2451, 7
    %v2453 = vsub.s32 5, %v2452
    %v2454 = vrot.slane %v2361, %v2453
    %v2455 = vlaneseq
    %v2456 = vshrl.u32 %v2455, 7
    %v2457 = vsub.s32 6, %v2456
    %v2458 = vrot.slane %v2361, %v2457
    %v2459 = vlaneseq
    %v2460 = vshrl.u32 %v2459, 7
    %v2461 = vsub.s32 7, %v2460
    %v2462 = vrot.slane %v2361, %v2461
    %v2463 = vlaneseq
    %v2464 = vshrl.u32 %v2463, 7
    %v2465 = vsub.s32 0, %v2464
    %v2466 = vrot.slane %v2362, %v2465
    %v2467 = vlaneseq
    %v2468 = vshrl.u32 %v2467, 7
    %v2469 = vsub.s32 1, %v2468
    %v2470 = vrot.slane %v2362, %v2469
    %v2471 = vlaneseq
    %v2472 = vshrl.u32 %v2471, 7
    %v2473 = vsub.s32 2, %v2472
    %v2474 = vrot.slane %v2362, %v2473
    %v2475 = vlaneseq
    %v2476 = vshrl.u32 %v2475, 7
    %v2477 = vsub.s32 3, %v2476
    %v2478 = vrot.slane %v2362, %v2477
    %v2479 = vlaneseq
    %v2480 = vshrl.u32 %v2479, 7
    %v2481 = vsub.s32 4, %v2480
    %v2482 = vrot.slane %v2362, %v2481
    %v2483 = vlaneseq
    %v2484 = vshrl.u32 %v2483, 7
    %v2485 = vsub.s32 5, %v2484
    %v2486 = vrot.slane %v2362, %v2485
    %v2487 = vlaneseq
    %v2488 = vshrl.u32 %v2487, 7
    %v2489 = vsub.s32 6, %v2488
    %v2490 = vrot.slane %v2362, %v2489
    %v2491 = vlaneseq
    %v2492 = vshrl.u32 %v2491, 7
    %v2493 = vsub.s32 7, %v2492
    %v2494 = vrot.slane %v2362, %v2493
    %2527 = vmatprep.subr.mxu0 %v1848
    %2528 = vmatpush1.msra.mxu0 %v1847
    %2529 = vmatprep.subr.mxu0 %v1880
    %2530 = vmatpush1.msra.mxu0 %v1879
    %2531 = vmatprep.subr.mxu0 %v1912
    %2532 = vmatpush1.msra.mxu0 %v1911
    %2533 = vmatprep.subr.mxu0 %v1944
    %2534 = vmatpush1.msra.mxu0 %v1943
    %2535 = vmatprep.subr.mxu0 %v1976
    %2536 = vmatpush1.msra.mxu0 %v1975
    %2537 = vmatprep.subr.mxu0 %v2008
    %2538 = vmatpush1.msra.mxu0 %v2007
    %2539 = vmatprep.subr.mxu0 %v2040
    %2540 = vmatpush1.msra.mxu0 %v2039
    %2541 = vmatprep.subr.mxu0 %v2072
    %2542 = vmatpush1.msra.mxu0 %v2071
    %2543 = vmatprep.subr.mxu0 %v2104
    %2544 = vmatpush1.msra.mxu0 %v2103
    %2545 = vmatprep.subr.mxu0 %v2136
    %2546 = vmatpush1.msra.mxu0 %v2135
    %2547 = vmatprep.subr.mxu0 %v2168
    %2548 = vmatpush1.msra.mxu0 %v2167
    %2549 = vmatprep.subr.mxu0 %v2200
    %2550 = vmatpush1.msra.mxu0 %v2199
    %2551 = vmatprep.subr.mxu0 %v2232
    %2552 = vmatpush1.msra.mxu0 %v2231
    %2553 = vmatprep.subr.mxu0 %v2264
    %2554 = vmatpush1.msra.mxu0 %v2263
    %2555 = vmatprep.subr.mxu0 %v2296
    %2556 = vmatpush1.msra.mxu0 %v2295
    %2557 = vmatprep.subr.mxu0 %v2328
    %2558 = vmatpush1.msra.mxu0 %v2327
    %2559 = vmatprep.subr.mxu0 0.0
    %2560 = vmatpush1.msra.mxu0 0.0
    %2561 = vmatprep.subr.mxu0 0.0
    %2562 = vmatpush1.msra.mxu0 0.0
    %2563 = vmatprep.subr.mxu0 0.0
    %2564 = vmatpush1.msra.mxu0 0.0
    %2565 = vmatprep.subr.mxu0 0.0
    %2566 = vmatpush1.msra.mxu0 0.0
    %2567 = vmatprep.subr.mxu0 0.0
    %2568 = vmatpush1.msra.mxu0 0.0
    %2569 = vmatprep.subr.mxu0 0.0
    %2570 = vmatpush1.msra.mxu0 0.0
    %2571 = vmatprep.subr.mxu0 0.0
    %2572 = vmatpush1.msra.mxu0 0.0
    %2573 = vmatprep.subr.mxu0 0.0
    %2574 = vmatpush1.msra.mxu0 0.0
    %2575 = vmatprep.subr.mxu0 0.0
    %2576 = vmatpush1.msra.mxu0 0.0
    %2577 = vmatprep.subr.mxu0 0.0
    %2578 = vmatpush1.msra.mxu0 0.0
    %2579 = vmatprep.subr.mxu0 0.0
    %2580 = vmatpush1.msra.mxu0 0.0
    %2581 = vmatprep.subr.mxu0 0.0
    %2582 = vmatpush1.msra.mxu0 0.0
    %2583 = vmatprep.subr.mxu0 0.0
    %2584 = vmatpush1.msra.mxu0 0.0
    %2585 = vmatprep.subr.mxu0 0.0
    %2586 = vmatpush1.msra.mxu0 0.0
    %2587 = vmatprep.subr.mxu0 0.0
    %2588 = vmatpush1.msra.mxu0 0.0
    %2589 = vmatprep.subr.mxu0 0.0
    %2590 = vmatpush1.msra.mxu0 0.0
    %2591 = vmatprep.mubr.f32.mxu0 0.0
    %2592 = vmatmul.mubr.f32.gmra.mrb[0].mxu0 %v1843
    %v2593 = vpop.f32.mrb[0].mxu0
    %v2594 = vadd.f32 %v2370, %v2593
    %v2595 = vpop.f32.mrb[0].mxu0
    %v2596 = vadd.f32 %v2374, %v2595
    %2597 = vdwg.mxu0
    %2598 = vmatprep.subr.mxu0 %v1850
    %2599 = vmatpush1.msra.mxu0 %v1849
    %2600 = vmatprep.subr.mxu0 %v1882
    %2601 = vmatpush1.msra.mxu0 %v1881
    %2602 = vmatprep.subr.mxu0 %v1914
    %2603 = vmatpush1.msra.mxu0 %v1913
    %2604 = vmatprep.subr.mxu0 %v1946
    %2605 = vmatpush1.msra.mxu0 %v1945
    %2606 = vmatprep.subr.mxu0 %v1978
    %2607 = vmatpush1.msra.mxu0 %v1977
    %2608 = vmatprep.subr.mxu0 %v2010
    %2609 = vmatpush1.msra.mxu0 %v2009
    %2610 = vmatprep.subr.mxu0 %v2042
    %2611 = vmatpush1.msra.mxu0 %v2041
    %2612 = vmatprep.subr.mxu0 %v2074
    %2613 = vmatpush1.msra.mxu0 %v2073
    %2614 = vmatprep.subr.mxu0 %v2106
    %2615 = vmatpush1.msra.mxu0 %v2105
    %2616 = vmatprep.subr.mxu0 %v2138
    %2617 = vmatpush1.msra.mxu0 %v2137
    %2618 = vmatprep.subr.mxu0 %v2170
    %2619 = vmatpush1.msra.mxu0 %v2169
    %2620 = vmatprep.subr.mxu0 %v2202
    %2621 = vmatpush1.msra.mxu0 %v2201
    %2622 = vmatprep.subr.mxu0 %v2234
    %2623 = vmatpush1.msra.mxu0 %v2233
    %2624 = vmatprep.subr.mxu0 %v2266
    %2625 = vmatpush1.msra.mxu0 %v2265
    %2626 = vmatprep.subr.mxu0 %v2298
    %2627 = vmatpush1.msra.mxu0 %v2297
    %2628 = vmatprep.subr.mxu0 %v2330
    %2629 = vmatpush1.msra.mxu0 %v2329
    %2630 = vmatprep.subr.mxu0 0.0
    %2631 = vmatpush1.msra.mxu0 0.0
    %2632 = vmatprep.subr.mxu0 0.0
    %2633 = vmatpush1.msra.mxu0 0.0
    %2634 = vmatprep.subr.mxu0 0.0
    %2635 = vmatpush1.msra.mxu0 0.0
    %2636 = vmatprep.subr.mxu0 0.0
    %2637 = vmatpush1.msra.mxu0 0.0
    %2638 = vmatprep.subr.mxu0 0.0
    %2639 = vmatpush1.msra.mxu0 0.0
    %2640 = vmatprep.subr.mxu0 0.0
    %2641 = vmatpush1.msra.mxu0 0.0
    %2642 = vmatprep.subr.mxu0 0.0
    %2643 = vmatpush1.msra.mxu0 0.0
    %2644 = vmatprep.subr.mxu0 0.0
    %2645 = vmatpush1.msra.mxu0 0.0
    %2646 = vmatprep.subr.mxu0 0.0
    %2647 = vmatpush1.msra.mxu0 0.0
    %2648 = vmatprep.subr.mxu0 0.0
    %2649 = vmatpush1.msra.mxu0 0.0
    %2650 = vmatprep.subr.mxu0 0.0
    %2651 = vmatpush1.msra.mxu0 0.0
    %2652 = vmatprep.subr.mxu0 0.0
    %2653 = vmatpush1.msra.mxu0 0.0
    %2654 = vmatprep.subr.mxu0 0.0
    %2655 = vmatpush1.msra.mxu0 0.0
    %2656 = vmatprep.subr.mxu0 0.0
    %2657 = vmatpush1.msra.mxu0 0.0
    %2658 = vmatprep.subr.mxu0 0.0
    %2659 = vmatpush1.msra.mxu0 0.0
    %2660 = vmatprep.subr.mxu0 0.0
    %2661 = vmatpush1.msra.mxu0 0.0
    %2662 = vmatprep.mubr.f32.mxu0 0.0
    %2663 = vmatmul.mubr.f32.gmra.mrb[0].mxu0 %v1843
    %v2664 = vpop.f32.mrb[0].mxu0
    %v2665 = vadd.f32 %v2378, %v2664
    %v2666 = vpop.f32.mrb[0].mxu0
    %v2667 = vadd.f32 %v2382, %v2666
    %2668 = vdwg.mxu0
    %2669 = vmatprep.subr.mxu0 %v1852
    %2670 = vmatpush1.msra.mxu0 %v1851
    %2671 = vmatprep.subr.mxu0 %v1884
    %2672 = vmatpush1.msra.mxu0 %v1883
    %2673 = vmatprep.subr.mxu0 %v1916
    %2674 = vmatpush1.msra.mxu0 %v1915
    %2675 = vmatprep.subr.mxu0 %v1948
    %2676 = vmatpush1.msra.mxu0 %v1947
    %2677 = vmatprep.subr.mxu0 %v1980
    %2678 = vmatpush1.msra.mxu0 %v1979
    %2679 = vmatprep.subr.mxu0 %v2012
    %2680 = vmatpush1.msra.mxu0 %v2011
    %2681 = vmatprep.subr.mxu0 %v2044
    %2682 = vmatpush1.msra.mxu0 %v2043
    %2683 = vmatprep.subr.mxu0 %v2076
    %2684 = vmatpush1.msra.mxu0 %v2075
    %2685 = vmatprep.subr.mxu0 %v2108
    %2686 = vmatpush1.msra.mxu0 %v2107
    %2687 = vmatprep.subr.mxu0 %v2140
    %2688 = vmatpush1.msra.mxu0 %v2139
    %2689 = vmatprep.subr.mxu0 %v2172
    %2690 = vmatpush1.msra.mxu0 %v2171
    %2691 = vmatprep.subr.mxu0 %v2204
    %2692 = vmatpush1.msra.mxu0 %v2203
    %2693 = vmatprep.subr.mxu0 %v2236
    %2694 = vmatpush1.msra.mxu0 %v2235
    %2695 = vmatprep.subr.mxu0 %v2268
    %2696 = vmatpush1.msra.mxu0 %v2267
    %2697 = vmatprep.subr.mxu0 %v2300
    %2698 = vmatpush1.msra.mxu0 %v2299
    %2699 = vmatprep.subr.mxu0 %v2332
    %2700 = vmatpush1.msra.mxu0 %v2331
    %2701 = vmatprep.subr.mxu0 0.0
    %2702 = vmatpush1.msra.mxu0 0.0
    %2703 = vmatprep.subr.mxu0 0.0
    %2704 = vmatpush1.msra.mxu0 0.0
    %2705 = vmatprep.subr.mxu0 0.0
    %2706 = vmatpush1.msra.mxu0 0.0
    %2707 = vmatprep.subr.mxu0 0.0
    %2708 = vmatpush1.msra.mxu0 0.0
    %2709 = vmatprep.subr.mxu0 0.0
    %2710 = vmatpush1.msra.mxu0 0.0
    %2711 = vmatprep.subr.mxu0 0.0
    %2712 = vmatpush1.msra.mxu0 0.0
    %2713 = vmatprep.subr.mxu0 0.0
    %2714 = vmatpush1.msra.mxu0 0.0
    %2715 = vmatprep.subr.mxu0 0.0
    %2716 = vmatpush1.msra.mxu0 0.0
    %2717 = vmatprep.subr.mxu0 0.0
    %2718 = vmatpush1.msra.mxu0 0.0
    %2719 = vmatprep.subr.mxu0 0.0
    %2720 = vmatpush1.msra.mxu0 0.0
    %2721 = vmatprep.subr.mxu0 0.0
    %2722 = vmatpush1.msra.mxu0 0.0
    %2723 = vmatprep.subr.mxu0 0.0
    %2724 = vmatpush1.msra.mxu0 0.0
    %2725 = vmatprep.subr.mxu0 0.0
    %2726 = vmatpush1.msra.mxu0 0.0
    %2727 = vmatprep.subr.mxu0 0.0
    %2728 = vmatpush1.msra.mxu0 0.0
    %2729 = vmatprep.subr.mxu0 0.0
    %2730 = vmatpush1.msra.mxu0 0.0
    %2731 = vmatprep.subr.mxu0 0.0
    %2732 = vmatpush1.msra.mxu0 0.0
    %2733 = vmatprep.mubr.f32.mxu0 0.0
    %2734 = vmatmul.mubr.f32.gmra.mrb[0].mxu0 %v1843
    %v2735 = vpop.f32.mrb[0].mxu0
    %v2736 = vadd.f32 %v2386, %v2735
    %v2737 = vpop.f32.mrb[0].mxu0
    %v2738 = vadd.f32 %v2390, %v2737
    %2739 = vdwg.mxu0
    %2740 = vmatprep.subr.mxu0 %v1854
    %2741 = vmatpush1.msra.mxu0 %v1853
    %2742 = vmatprep.subr.mxu0 %v1886
    %2743 = vmatpush1.msra.mxu0 %v1885
    %2744 = vmatprep.subr.mxu0 %v1918
    %2745 = vmatpush1.msra.mxu0 %v1917
    %2746 = vmatprep.subr.mxu0 %v1950
    %2747 = vmatpush1.msra.mxu0 %v1949
    %2748 = vmatprep.subr.mxu0 %v1982
    %2749 = vmatpush1.msra.mxu0 %v1981
    %2750 = vmatprep.subr.mxu0 %v2014
    %2751 = vmatpush1.msra.mxu0 %v2013
    %2752 = vmatprep.subr.mxu0 %v2046
    %2753 = vmatpush1.msra.mxu0 %v2045
    %2754 = vmatprep.subr.mxu0 %v2078
    %2755 = vmatpush1.msra.mxu0 %v2077
    %2756 = vmatprep.subr.mxu0 %v2110
    %2757 = vmatpush1.msra.mxu0 %v2109
    %2758 = vmatprep.subr.mxu0 %v2142
    %2759 = vmatpush1.msra.mxu0 %v2141
    %2760 = vmatprep.subr.mxu0 %v2174
    %2761 = vmatpush1.msra.mxu0 %v2173
    %2762 = vmatprep.subr.mxu0 %v2206
    %2763 = vmatpush1.msra.mxu0 %v2205
    %2764 = vmatprep.subr.mxu0 %v2238
    %2765 = vmatpush1.msra.mxu0 %v2237
    %2766 = vmatprep.subr.mxu0 %v2270
    %2767 = vmatpush1.msra.mxu0 %v2269
    %2768 = vmatprep.subr.mxu0 %v2302
    %2769 = vmatpush1.msra.mxu0 %v2301
    %2770 = vmatprep.subr.mxu0 %v2334
    %2771 = vmatpush1.msra.mxu0 %v2333
    %2772 = vmatprep.subr.mxu0 0.0
    %2773 = vmatpush1.msra.mxu0 0.0
    %2774 = vmatprep.subr.mxu0 0.0
    %2775 = vmatpush1.msra.mxu0 0.0
    %2776 = vmatprep.subr.mxu0 0.0
    %2777 = vmatpush1.msra.mxu0 0.0
    %2778 = vmatprep.subr.mxu0 0.0
    %2779 = vmatpush1.msra.mxu0 0.0
    %2780 = vmatprep.subr.mxu0 0.0
    %2781 = vmatpush1.msra.mxu0 0.0
    %2782 = vmatprep.subr.mxu0 0.0
    %2783 = vmatpush1.msra.mxu0 0.0
    %2784 = vmatprep.subr.mxu0 0.0
    %2785 = vmatpush1.msra.mxu0 0.0
    %2786 = vmatprep.subr.mxu0 0.0
    %2787 = vmatpush1.msra.mxu0 0.0
    %2788 = vmatprep.subr.mxu0 0.0
    %2789 = vmatpush1.msra.mxu0 0.0
    %2790 = vmatprep.subr.mxu0 0.0
    %2791 = vmatpush1.msra.mxu0 0.0
    %2792 = vmatprep.subr.mxu0 0.0
    %2793 = vmatpush1.msra.mxu0 0.0
    %2794 = vmatprep.subr.mxu0 0.0
    %2795 = vmatpush1.msra.mxu0 0.0
    %2796 = vmatprep.subr.mxu0 0.0
    %2797 = vmatpush1.msra.mxu0 0.0
    %2798 = vmatprep.subr.mxu0 0.0
    %2799 = vmatpush1.msra.mxu0 0.0
    %2800 = vmatprep.subr.mxu0 0.0
    %2801 = vmatpush1.msra.mxu0 0.0
    %2802 = vmatprep.subr.mxu0 0.0
    %2803 = vmatpush1.msra.mxu0 0.0
    %2804 = vmatprep.mubr.f32.mxu0 0.0
    %2805 = vmatmul.mubr.f32.gmra.mrb[0].mxu0 %v1843
    %v2806 = vpop.f32.mrb[0].mxu0
    %v2807 = vadd.f32 %v2394, %v2806
    %v2808 = vpop.f32.mrb[0].mxu0
    %v2809 = vadd.f32 %v2398, %v2808
    %2810 = vdwg.mxu0
    %2811 = vmatprep.subr.mxu0 %v1856
    %2812 = vmatpush1.msra.mxu0 %v1855
    %2813 = vmatprep.subr.mxu0 %v1888
    %2814 = vmatpush1.msra.mxu0 %v1887
    %2815 = vmatprep.subr.mxu0 %v1920
    %2816 = vmatpush1.msra.mxu0 %v1919
    %2817 = vmatprep.subr.mxu0 %v1952
    %2818 = vmatpush1.msra.mxu0 %v1951
    %2819 = vmatprep.subr.mxu0 %v1984
    %2820 = vmatpush1.msra.mxu0 %v1983
    %2821 = vmatprep.subr.mxu0 %v2016
    %2822 = vmatpush1.msra.mxu0 %v2015
    %2823 = vmatprep.subr.mxu0 %v2048
    %2824 = vmatpush1.msra.mxu0 %v2047
    %2825 = vmatprep.subr.mxu0 %v2080
    %2826 = vmatpush1.msra.mxu0 %v2079
    %2827 = vmatprep.subr.mxu0 %v2112
    %2828 = vmatpush1.msra.mxu0 %v2111
    %2829 = vmatprep.subr.mxu0 %v2144
    %2830 = vmatpush1.msra.mxu0 %v2143
    %2831 = vmatprep.subr.mxu0 %v2176
    %2832 = vmatpush1.msra.mxu0 %v2175
    %2833 = vmatprep.subr.mxu0 %v2208
    %2834 = vmatpush1.msra.mxu0 %v2207
    %2835 = vmatprep.subr.mxu0 %v2240
    %2836 = vmatpush1.msra.mxu0 %v2239
    %2837 = vmatprep.subr.mxu0 %v2272
    %2838 = vmatpush1.msra.mxu0 %v2271
    %2839 = vmatprep.subr.mxu0 %v2304
    %2840 = vmatpush1.msra.mxu0 %v2303
    %2841 = vmatprep.subr.mxu0 %v2336
    %2842 = vmatpush1.msra.mxu0 %v2335
    %2843 = vmatprep.subr.mxu0 0.0
    %2844 = vmatpush1.msra.mxu0 0.0
    %2845 = vmatprep.subr.mxu0 0.0
    %2846 = vmatpush1.msra.mxu0 0.0
    %2847 = vmatprep.subr.mxu0 0.0
    %2848 = vmatpush1.msra.mxu0 0.0
    %2849 = vmatprep.subr.mxu0 0.0
    %2850 = vmatpush1.msra.mxu0 0.0
    %2851 = vmatprep.subr.mxu0 0.0
    %2852 = vmatpush1.msra.mxu0 0.0
    %2853 = vmatprep.subr.mxu0 0.0
    %2854 = vmatpush1.msra.mxu0 0.0
    %2855 = vmatprep.subr.mxu0 0.0
    %2856 = vmatpush1.msra.mxu0 0.0
    %2857 = vmatprep.subr.mxu0 0.0
    %2858 = vmatpush1.msra.mxu0 0.0
    %2859 = vmatprep.subr.mxu0 0.0
    %2860 = vmatpush1.msra.mxu0 0.0
    %2861 = vmatprep.subr.mxu0 0.0
    %2862 = vmatpush1.msra.mxu0 0.0
    %2863 = vmatprep.subr.mxu0 0.0
    %2864 = vmatpush1.msra.mxu0 0.0
    %2865 = vmatprep.subr.mxu0 0.0
    %2866 = vmatpush1.msra.mxu0 0.0
    %2867 = vmatprep.subr.mxu0 0.0
    %2868 = vmatpush1.msra.mxu0 0.0
    %2869 = vmatprep.subr.mxu0 0.0
    %2870 = vmatpush1.msra.mxu0 0.0
    %2871 = vmatprep.subr.mxu0 0.0
    %2872 = vmatpush1.msra.mxu0 0.0
    %2873 = vmatprep.subr.mxu0 0.0
    %2874 = vmatpush1.msra.mxu0 0.0
    %2875 = vmatprep.mubr.f32.mxu0 0.0
    %2876 = vmatmul.mubr.f32.gmra.mrb[0].mxu0 %v1843
    %v2877 = vpop.f32.mrb[0].mxu0
    %v2878 = vadd.f32 %v2402, %v2877
    %v2879 = vpop.f32.mrb[0].mxu0
    %v2880 = vadd.f32 %v2406, %v2879
    %2881 = vdwg.mxu0
    %2882 = vmatprep.subr.mxu0 %v1858
    %2883 = vmatpush1.msra.mxu0 %v1857
    %2884 = vmatprep.subr.mxu0 %v1890
    %2885 = vmatpush1.msra.mxu0 %v1889
    %2886 = vmatprep.subr.mxu0 %v1922
    %2887 = vmatpush1.msra.mxu0 %v1921
    %2888 = vmatprep.subr.mxu0 %v1954
    %2889 = vmatpush1.msra.mxu0 %v1953
    %2890 = vmatprep.subr.mxu0 %v1986
    %2891 = vmatpush1.msra.mxu0 %v1985
    %2892 = vmatprep.subr.mxu0 %v2018
    %2893 = vmatpush1.msra.mxu0 %v2017
    %2894 = vmatprep.subr.mxu0 %v2050
    %2895 = vmatpush1.msra.mxu0 %v2049
    %2896 = vmatprep.subr.mxu0 %v2082
    %2897 = vmatpush1.msra.mxu0 %v2081
    %2898 = vmatprep.subr.mxu0 %v2114
    %2899 = vmatpush1.msra.mxu0 %v2113
    %2900 = vmatprep.subr.mxu0 %v2146
    %2901 = vmatpush1.msra.mxu0 %v2145
    %2902 = vmatprep.subr.mxu0 %v2178
    %2903 = vmatpush1.msra.mxu0 %v2177
    %2904 = vmatprep.subr.mxu0 %v2210
    %2905 = vmatpush1.msra.mxu0 %v2209
    %2906 = vmatprep.subr.mxu0 %v2242
    %2907 = vmatpush1.msra.mxu0 %v2241
    %2908 = vmatprep.subr.mxu0 %v2274
    %2909 = vmatpush1.msra.mxu0 %v2273
    %2910 = vmatprep.subr.mxu0 %v2306
    %2911 = vmatpush1.msra.mxu0 %v2305
    %2912 = vmatprep.subr.mxu0 %v2338
    %2913 = vmatpush1.msra.mxu0 %v2337
    %2914 = vmatprep.subr.mxu0 0.0
    %2915 = vmatpush1.msra.mxu0 0.0
    %2916 = vmatprep.subr.mxu0 0.0
    %2917 = vmatpush1.msra.mxu0 0.0
    %2918 = vmatprep.subr.mxu0 0.0
    %2919 = vmatpush1.msra.mxu0 0.0
    %2920 = vmatprep.subr.mxu0 0.0
    %2921 = vmatpush1.msra.mxu0 0.0
    %2922 = vmatprep.subr.mxu0 0.0
    %2923 = vmatpush1.msra.mxu0 0.0
    %2924 = vmatprep.subr.mxu0 0.0
    %2925 = vmatpush1.msra.mxu0 0.0
    %2926 = vmatprep.subr.mxu0 0.0
    %2927 = vmatpush1.msra.mxu0 0.0
    %2928 = vmatprep.subr.mxu0 0.0
    %2929 = vmatpush1.msra.mxu0 0.0
    %2930 = vmatprep.subr.mxu0 0.0
    %2931 = vmatpush1.msra.mxu0 0.0
    %2932 = vmatprep.subr.mxu0 0.0
    %2933 = vmatpush1.msra.mxu0 0.0
    %2934 = vmatprep.subr.mxu0 0.0
    %2935 = vmatpush1.msra.mxu0 0.0
    %2936 = vmatprep.subr.mxu0 0.0
    %2937 = vmatpush1.msra.mxu0 0.0
    %2938 = vmatprep.subr.mxu0 0.0
    %2939 = vmatpush1.msra.mxu0 0.0
    %2940 = vmatprep.subr.mxu0 0.0
    %2941 = vmatpush1.msra.mxu0 0.0
    %2942 = vmatprep.subr.mxu0 0.0
    %2943 = vmatpush1.msra.mxu0 0.0
    %2944 = vmatprep.subr.mxu0 0.0
    %2945 = vmatpush1.msra.mxu0 0.0
    %2946 = vmatprep.mubr.f32.mxu0 0.0
    %2947 = vmatmul.mubr.f32.gmra.mrb[0].mxu0 %v1843
    %v2948 = vpop.f32.mrb[0].mxu0
    %v2949 = vadd.f32 %v2410, %v2948
    %v2950 = vpop.f32.mrb[0].mxu0
    %v2951 = vadd.f32 %v2414, %v2950
    %2952 = vdwg.mxu0
    %2953 = vmatprep.subr.mxu0 %v1860
    %2954 = vmatpush1.msra.mxu0 %v1859
    %2955 = vmatprep.subr.mxu0 %v1892
    %2956 = vmatpush1.msra.mxu0 %v1891
    %2957 = vmatprep.subr.mxu0 %v1924
    %2958 = vmatpush1.msra.mxu0 %v1923
    %2959 = vmatprep.subr.mxu0 %v1956
    %2960 = vmatpush1.msra.mxu0 %v1955
    %2961 = vmatprep.subr.mxu0 %v1988
    %2962 = vmatpush1.msra.mxu0 %v1987
    %2963 = vmatprep.subr.mxu0 %v2020
    %2964 = vmatpush1.msra.mxu0 %v2019
    %2965 = vmatprep.subr.mxu0 %v2052
    %2966 = vmatpush1.msra.mxu0 %v2051
    %2967 = vmatprep.subr.mxu0 %v2084
    %2968 = vmatpush1.msra.mxu0 %v2083
    %2969 = vmatprep.subr.mxu0 %v2116
    %2970 = vmatpush1.msra.mxu0 %v2115
    %2971 = vmatprep.subr.mxu0 %v2148
    %2972 = vmatpush1.msra.mxu0 %v2147
    %2973 = vmatprep.subr.mxu0 %v2180
    %2974 = vmatpush1.msra.mxu0 %v2179
    %2975 = vmatprep.subr.mxu0 %v2212
    %2976 = vmatpush1.msra.mxu0 %v2211
    %2977 = vmatprep.subr.mxu0 %v2244
    %2978 = vmatpush1.msra.mxu0 %v2243
    %2979 = vmatprep.subr.mxu0 %v2276
    %2980 = vmatpush1.msra.mxu0 %v2275
    %2981 = vmatprep.subr.mxu0 %v2308
    %2982 = vmatpush1.msra.mxu0 %v2307
    %2983 = vmatprep.subr.mxu0 %v2340
    %2984 = vmatpush1.msra.mxu0 %v2339
    %2985 = vmatprep.subr.mxu0 0.0
    %2986 = vmatpush1.msra.mxu0 0.0
    %2987 = vmatprep.subr.mxu0 0.0
    %2988 = vmatpush1.msra.mxu0 0.0
    %2989 = vmatprep.subr.mxu0 0.0
    %2990 = vmatpush1.msra.mxu0 0.0
    %2991 = vmatprep.subr.mxu0 0.0
    %2992 = vmatpush1.msra.mxu0 0.0
    %2993 = vmatprep.subr.mxu0 0.0
    %2994 = vmatpush1.msra.mxu0 0.0
    %2995 = vmatprep.subr.mxu0 0.0
    %2996 = vmatpush1.msra.mxu0 0.0
    %2997 = vmatprep.subr.mxu0 0.0
    %2998 = vmatpush1.msra.mxu0 0.0
    %2999 = vmatprep.subr.mxu0 0.0
    %3000 = vmatpush1.msra.mxu0 0.0
    %3001 = vmatprep.subr.mxu0 0.0
    %3002 = vmatpush1.msra.mxu0 0.0
    %3003 = vmatprep.subr.mxu0 0.0
    %3004 = vmatpush1.msra.mxu0 0.0
    %3005 = vmatprep.subr.mxu0 0.0
    %3006 = vmatpush1.msra.mxu0 0.0
    %3007 = vmatprep.subr.mxu0 0.0
    %3008 = vmatpush1.msra.mxu0 0.0
    %3009 = vmatprep.subr.mxu0 0.0
    %3010 = vmatpush1.msra.mxu0 0.0
    %3011 = vmatprep.subr.mxu0 0.0
    %3012 = vmatpush1.msra.mxu0 0.0
    %3013 = vmatprep.subr.mxu0 0.0
    %3014 = vmatpush1.msra.mxu0 0.0
    %3015 = vmatprep.subr.mxu0 0.0
    %3016 = vmatpush1.msra.mxu0 0.0
    %3017 = vmatprep.mubr.f32.mxu0 0.0
    %3018 = vmatmul.mubr.f32.gmra.mrb[0].mxu0 %v1843
    %v3019 = vpop.f32.mrb[0].mxu0
    %v3020 = vadd.f32 %v2418, %v3019
    %v3021 = vpop.f32.mrb[0].mxu0
    %v3022 = vadd.f32 %v2422, %v3021
    %3023 = vdwg.mxu0
    %3024 = vmatprep.subr.mxu0 %v1862
    %3025 = vmatpush1.msra.mxu0 %v1861
    %3026 = vmatprep.subr.mxu0 %v1894
    %3027 = vmatpush1.msra.mxu0 %v1893
    %3028 = vmatprep.subr.mxu0 %v1926
    %3029 = vmatpush1.msra.mxu0 %v1925
    %3030 = vmatprep.subr.mxu0 %v1958
    %3031 = vmatpush1.msra.mxu0 %v1957
    %3032 = vmatprep.subr.mxu0 %v1990
    %3033 = vmatpush1.msra.mxu0 %v1989
    %3034 = vmatprep.subr.mxu0 %v2022
    %3035 = vmatpush1.msra.mxu0 %v2021
    %3036 = vmatprep.subr.mxu0 %v2054
    %3037 = vmatpush1.msra.mxu0 %v2053
    %3038 = vmatprep.subr.mxu0 %v2086
    %3039 = vmatpush1.msra.mxu0 %v2085
    %3040 = vmatprep.subr.mxu0 %v2118
    %3041 = vmatpush1.msra.mxu0 %v2117
    %3042 = vmatprep.subr.mxu0 %v2150
    %3043 = vmatpush1.msra.mxu0 %v2149
    %3044 = vmatprep.subr.mxu0 %v2182
    %3045 = vmatpush1.msra.mxu0 %v2181
    %3046 = vmatprep.subr.mxu0 %v2214
    %3047 = vmatpush1.msra.mxu0 %v2213
    %3048 = vmatprep.subr.mxu0 %v2246
    %3049 = vmatpush1.msra.mxu0 %v2245
    %3050 = vmatprep.subr.mxu0 %v2278
    %3051 = vmatpush1.msra.mxu0 %v2277
    %3052 = vmatprep.subr.mxu0 %v2310
    %3053 = vmatpush1.msra.mxu0 %v2309
    %3054 = vmatprep.subr.mxu0 %v2342
    %3055 = vmatpush1.msra.mxu0 %v2341
    %3056 = vmatprep.subr.mxu0 0.0
    %3057 = vmatpush1.msra.mxu0 0.0
    %3058 = vmatprep.subr.mxu0 0.0
    %3059 = vmatpush1.msra.mxu0 0.0
    %3060 = vmatprep.subr.mxu0 0.0
    %3061 = vmatpush1.msra.mxu0 0.0
    %3062 = vmatprep.subr.mxu0 0.0
    %3063 = vmatpush1.msra.mxu0 0.0
    %3064 = vmatprep.subr.mxu0 0.0
    %3065 = vmatpush1.msra.mxu0 0.0
    %3066 = vmatprep.subr.mxu0 0.0
    %3067 = vmatpush1.msra.mxu0 0.0
    %3068 = vmatprep.subr.mxu0 0.0
    %3069 = vmatpush1.msra.mxu0 0.0
    %3070 = vmatprep.subr.mxu0 0.0
    %3071 = vmatpush1.msra.mxu0 0.0
    %3072 = vmatprep.subr.mxu0 0.0
    %3073 = vmatpush1.msra.mxu0 0.0
    %3074 = vmatprep.subr.mxu0 0.0
    %3075 = vmatpush1.msra.mxu0 0.0
    %3076 = vmatprep.subr.mxu0 0.0
    %3077 = vmatpush1.msra.mxu0 0.0
    %3078 = vmatprep.subr.mxu0 0.0
    %3079 = vmatpush1.msra.mxu0 0.0
    %3080 = vmatprep.subr.mxu0 0.0
    %3081 = vmatpush1.msra.mxu0 0.0
    %3082 = vmatprep.subr.mxu0 0.0
    %3083 = vmatpush1.msra.mxu0 0.0
    %3084 = vmatprep.subr.mxu0 0.0
    %3085 = vmatpush1.msra.mxu0 0.0
    %3086 = vmatprep.subr.mxu0 0.0
    %3087 = vmatpush1.msra.mxu0 0.0
    %3088 = vmatprep.mubr.f32.mxu0 0.0
    %3089 = vmatmul.mubr.f32.gmra.mrb[0].mxu0 %v1843
    %v3090 = vpop.f32.mrb[0].mxu0
    %v3091 = vadd.f32 %v2426, %v3090
    %v3092 = vpop.f32.mrb[0].mxu0
    %v3093 = vadd.f32 %v2430, %v3092
    %3094 = vdwg.mxu0
    %3095 = vmatprep.subr.mxu0 %v1864
    %3096 = vmatpush1.msra.mxu0 %v1863
    %3097 = vmatprep.subr.mxu0 %v1896
    %3098 = vmatpush1.msra.mxu0 %v1895
    %3099 = vmatprep.subr.mxu0 %v1928
    %3100 = vmatpush1.msra.mxu0 %v1927
    %3101 = vmatprep.subr.mxu0 %v1960
    %3102 = vmatpush1.msra.mxu0 %v1959
    %3103 = vmatprep.subr.mxu0 %v1992
    %3104 = vmatpush1.msra.mxu0 %v1991
    %3105 = vmatprep.subr.mxu0 %v2024
    %3106 = vmatpush1.msra.mxu0 %v2023
    %3107 = vmatprep.subr.mxu0 %v2056
    %3108 = vmatpush1.msra.mxu0 %v2055
    %3109 = vmatprep.subr.mxu0 %v2088
    %3110 = vmatpush1.msra.mxu0 %v2087
    %3111 = vmatprep.subr.mxu0 %v2120
    %3112 = vmatpush1.msra.mxu0 %v2119
    %3113 = vmatprep.subr.mxu0 %v2152
    %3114 = vmatpush1.msra.mxu0 %v2151
    %3115 = vmatprep.subr.mxu0 %v2184
    %3116 = vmatpush1.msra.mxu0 %v2183
    %3117 = vmatprep.subr.mxu0 %v2216
    %3118 = vmatpush1.msra.mxu0 %v2215
    %3119 = vmatprep.subr.mxu0 %v2248
    %3120 = vmatpush1.msra.mxu0 %v2247
    %3121 = vmatprep.subr.mxu0 %v2280
    %3122 = vmatpush1.msra.mxu0 %v2279
    %3123 = vmatprep.subr.mxu0 %v2312
    %3124 = vmatpush1.msra.mxu0 %v2311
    %3125 = vmatprep.subr.mxu0 %v2344
    %3126 = vmatpush1.msra.mxu0 %v2343
    %3127 = vmatprep.subr.mxu0 0.0
    %3128 = vmatpush1.msra.mxu0 0.0
    %3129 = vmatprep.subr.mxu0 0.0
    %3130 = vmatpush1.msra.mxu0 0.0
    %3131 = vmatprep.subr.mxu0 0.0
    %3132 = vmatpush1.msra.mxu0 0.0
    %3133 = vmatprep.subr.mxu0 0.0
    %3134 = vmatpush1.msra.mxu0 0.0
    %3135 = vmatprep.subr.mxu0 0.0
    %3136 = vmatpush1.msra.mxu0 0.0
    %3137 = vmatprep.subr.mxu0 0.0
    %3138 = vmatpush1.msra.mxu0 0.0
    %3139 = vmatprep.subr.mxu0 0.0
    %3140 = vmatpush1.msra.mxu0 0.0
    %3141 = vmatprep.subr.mxu0 0.0
    %3142 = vmatpush1.msra.mxu0 0.0
    %3143 = vmatprep.subr.mxu0 0.0
    %3144 = vmatpush1.msra.mxu0 0.0
    %3145 = vmatprep.subr.mxu0 0.0
    %3146 = vmatpush1.msra.mxu0 0.0
    %3147 = vmatprep.subr.mxu0 0.0
    %3148 = vmatpush1.msra.mxu0 0.0
    %3149 = vmatprep.subr.mxu0 0.0
    %3150 = vmatpush1.msra.mxu0 0.0
    %3151 = vmatprep.subr.mxu0 0.0
    %3152 = vmatpush1.msra.mxu0 0.0
    %3153 = vmatprep.subr.mxu0 0.0
    %3154 = vmatpush1.msra.mxu0 0.0
    %3155 = vmatprep.subr.mxu0 0.0
    %3156 = vmatpush1.msra.mxu0 0.0
    %3157 = vmatprep.subr.mxu0 0.0
    %3158 = vmatpush1.msra.mxu0 0.0
    %3159 = vmatprep.mubr.f32.mxu0 0.0
    %3160 = vmatmul.mubr.f32.gmra.mrb[0].mxu0 %v1843
    %v3161 = vpop.f32.mrb[0].mxu0
    %v3162 = vadd.f32 %v2434, %v3161
    %v3163 = vpop.f32.mrb[0].mxu0
    %v3164 = vadd.f32 %v2438, %v3163
    %3165 = vdwg.mxu0
    %3166 = vmatprep.subr.mxu0 %v1866
    %3167 = vmatpush1.msra.mxu0 %v1865
    %3168 = vmatprep.subr.mxu0 %v1898
    %3169 = vmatpush1.msra.mxu0 %v1897
    %3170 = vmatprep.subr.mxu0 %v1930
    %3171 = vmatpush1.msra.mxu0 %v1929
    %3172 = vmatprep.subr.mxu0 %v1962
    %3173 = vmatpush1.msra.mxu0 %v1961
    %3174 = vmatprep.subr.mxu0 %v1994
    %3175 = vmatpush1.msra.mxu0 %v1993
    %3176 = vmatprep.subr.mxu0 %v2026
    %3177 = vmatpush1.msra.mxu0 %v2025
    %3178 = vmatprep.subr.mxu0 %v2058
    %3179 = vmatpush1.msra.mxu0 %v2057
    %3180 = vmatprep.subr.mxu0 %v2090
    %3181 = vmatpush1.msra.mxu0 %v2089
    %3182 = vmatprep.subr.mxu0 %v2122
    %3183 = vmatpush1.msra.mxu0 %v2121
    %3184 = vmatprep.subr.mxu0 %v2154
    %3185 = vmatpush1.msra.mxu0 %v2153
    %3186 = vmatprep.subr.mxu0 %v2186
    %3187 = vmatpush1.msra.mxu0 %v2185
    %3188 = vmatprep.subr.mxu0 %v2218
    %3189 = vmatpush1.msra.mxu0 %v2217
    %3190 = vmatprep.subr.mxu0 %v2250
    %3191 = vmatpush1.msra.mxu0 %v2249
    %3192 = vmatprep.subr.mxu0 %v2282
    %3193 = vmatpush1.msra.mxu0 %v2281
    %3194 = vmatprep.subr.mxu0 %v2314
    %3195 = vmatpush1.msra.mxu0 %v2313
    %3196 = vmatprep.subr.mxu0 %v2346
    %3197 = vmatpush1.msra.mxu0 %v2345
    %3198 = vmatprep.subr.mxu0 0.0
    %3199 = vmatpush1.msra.mxu0 0.0
    %3200 = vmatprep.subr.mxu0 0.0
    %3201 = vmatpush1.msra.mxu0 0.0
    %3202 = vmatprep.subr.mxu0 0.0
    %3203 = vmatpush1.msra.mxu0 0.0
    %3204 = vmatprep.subr.mxu0 0.0
    %3205 = vmatpush1.msra.mxu0 0.0
    %3206 = vmatprep.subr.mxu0 0.0
    %3207 = vmatpush1.msra.mxu0 0.0
    %3208 = vmatprep.subr.mxu0 0.0
    %3209 = vmatpush1.msra.mxu0 0.0
    %3210 = vmatprep.subr.mxu0 0.0
    %3211 = vmatpush1.msra.mxu0 0.0
    %3212 = vmatprep.subr.mxu0 0.0
    %3213 = vmatpush1.msra.mxu0 0.0
    %3214 = vmatprep.subr.mxu0 0.0
    %3215 = vmatpush1.msra.mxu0 0.0
    %3216 = vmatprep.subr.mxu0 0.0
    %3217 = vmatpush1.msra.mxu0 0.0
    %3218 = vmatprep.subr.mxu0 0.0
    %3219 = vmatpush1.msra.mxu0 0.0
    %3220 = vmatprep.subr.mxu0 0.0
    %3221 = vmatpush1.msra.mxu0 0.0
    %3222 = vmatprep.subr.mxu0 0.0
    %3223 = vmatpush1.msra.mxu0 0.0
    %3224 = vmatprep.subr.mxu0 0.0
    %3225 = vmatpush1.msra.mxu0 0.0
    %3226 = vmatprep.subr.mxu0 0.0
    %3227 = vmatpush1.msra.mxu0 0.0
    %3228 = vmatprep.subr.mxu0 0.0
    %3229 = vmatpush1.msra.mxu0 0.0
    %3230 = vmatprep.mubr.f32.mxu0 0.0
    %3231 = vmatmul.mubr.f32.gmra.mrb[0].mxu0 %v1843
    %v3232 = vpop.f32.mrb[0].mxu0
    %v3233 = vadd.f32 %v2442, %v3232
    %v3234 = vpop.f32.mrb[0].mxu0
    %v3235 = vadd.f32 %v2446, %v3234
    %3236 = vdwg.mxu0
    %3237 = vmatprep.subr.mxu0 %v1868
    %3238 = vmatpush1.msra.mxu0 %v1867
    %3239 = vmatprep.subr.mxu0 %v1900
    %3240 = vmatpush1.msra.mxu0 %v1899
    %3241 = vmatprep.subr.mxu0 %v1932
    %3242 = vmatpush1.msra.mxu0 %v1931
    %3243 = vmatprep.subr.mxu0 %v1964
    %3244 = vmatpush1.msra.mxu0 %v1963
    %3245 = vmatprep.subr.mxu0 %v1996
    %3246 = vmatpush1.msra.mxu0 %v1995
    %3247 = vmatprep.subr.mxu0 %v2028
    %3248 = vmatpush1.msra.mxu0 %v2027
    %3249 = vmatprep.subr.mxu0 %v2060
    %3250 = vmatpush1.msra.mxu0 %v2059
    %3251 = vmatprep.subr.mxu0 %v2092
    %3252 = vmatpush1.msra.mxu0 %v2091
    %3253 = vmatprep.subr.mxu0 %v2124
    %3254 = vmatpush1.msra.mxu0 %v2123
    %3255 = vmatprep.subr.mxu0 %v2156
    %3256 = vmatpush1.msra.mxu0 %v2155
    %3257 = vmatprep.subr.mxu0 %v2188
    %3258 = vmatpush1.msra.mxu0 %v2187
    %3259 = vmatprep.subr.mxu0 %v2220
    %3260 = vmatpush1.msra.mxu0 %v2219
    %3261 = vmatprep.subr.mxu0 %v2252
    %3262 = vmatpush1.msra.mxu0 %v2251
    %3263 = vmatprep.subr.mxu0 %v2284
    %3264 = vmatpush1.msra.mxu0 %v2283
    %3265 = vmatprep.subr.mxu0 %v2316
    %3266 = vmatpush1.msra.mxu0 %v2315
    %3267 = vmatprep.subr.mxu0 %v2348
    %3268 = vmatpush1.msra.mxu0 %v2347
    %3269 = vmatprep.subr.mxu0 0.0
    %3270 = vmatpush1.msra.mxu0 0.0
    %3271 = vmatprep.subr.mxu0 0.0
    %3272 = vmatpush1.msra.mxu0 0.0
    %3273 = vmatprep.subr.mxu0 0.0
    %3274 = vmatpush1.msra.mxu0 0.0
    %3275 = vmatprep.subr.mxu0 0.0
    %3276 = vmatpush1.msra.mxu0 0.0
    %3277 = vmatprep.subr.mxu0 0.0
    %3278 = vmatpush1.msra.mxu0 0.0
    %3279 = vmatprep.subr.mxu0 0.0
    %3280 = vmatpush1.msra.mxu0 0.0
    %3281 = vmatprep.subr.mxu0 0.0
    %3282 = vmatpush1.msra.mxu0 0.0
    %3283 = vmatprep.subr.mxu0 0.0
    %3284 = vmatpush1.msra.mxu0 0.0
    %3285 = vmatprep.subr.mxu0 0.0
    %3286 = vmatpush1.msra.mxu0 0.0
    %3287 = vmatprep.subr.mxu0 0.0
    %3288 = vmatpush1.msra.mxu0 0.0
    %3289 = vmatprep.subr.mxu0 0.0
    %3290 = vmatpush1.msra.mxu0 0.0
    %3291 = vmatprep.subr.mxu0 0.0
    %3292 = vmatpush1.msra.mxu0 0.0
    %3293 = vmatprep.subr.mxu0 0.0
    %3294 = vmatpush1.msra.mxu0 0.0
    %3295 = vmatprep.subr.mxu0 0.0
    %3296 = vmatpush1.msra.mxu0 0.0
    %3297 = vmatprep.subr.mxu0 0.0
    %3298 = vmatpush1.msra.mxu0 0.0
    %3299 = vmatprep.subr.mxu0 0.0
    %3300 = vmatpush1.msra.mxu0 0.0
    %3301 = vmatprep.mubr.f32.mxu0 0.0
    %3302 = vmatmul.mubr.f32.gmra.mrb[0].mxu0 %v1843
    %v3303 = vpop.f32.mrb[0].mxu0
    %v3304 = vadd.f32 %v2450, %v3303
    %v3305 = vpop.f32.mrb[0].mxu0
    %v3306 = vadd.f32 %v2454, %v3305
    %3307 = vdwg.mxu0
    %3308 = vmatprep.subr.mxu0 %v1870
    %3309 = vmatpush1.msra.mxu0 %v1869
    %3310 = vmatprep.subr.mxu0 %v1902
    %3311 = vmatpush1.msra.mxu0 %v1901
    %3312 = vmatprep.subr.mxu0 %v1934
    %3313 = vmatpush1.msra.mxu0 %v1933
    %3314 = vmatprep.subr.mxu0 %v1966
    %3315 = vmatpush1.msra.mxu0 %v1965
    %3316 = vmatprep.subr.mxu0 %v1998
    %3317 = vmatpush1.msra.mxu0 %v1997
    %3318 = vmatprep.subr.mxu0 %v2030
    %3319 = vmatpush1.msra.mxu0 %v2029
    %3320 = vmatprep.subr.mxu0 %v2062
    %3321 = vmatpush1.msra.mxu0 %v2061
    %3322 = vmatprep.subr.mxu0 %v2094
    %3323 = vmatpush1.msra.mxu0 %v2093
    %3324 = vmatprep.subr.mxu0 %v2126
    %3325 = vmatpush1.msra.mxu0 %v2125
    %3326 = vmatprep.subr.mxu0 %v2158
    %3327 = vmatpush1.msra.mxu0 %v2157
    %3328 = vmatprep.subr.mxu0 %v2190
    %3329 = vmatpush1.msra.mxu0 %v2189
    %3330 = vmatprep.subr.mxu0 %v2222
    %3331 = vmatpush1.msra.mxu0 %v2221
    %3332 = vmatprep.subr.mxu0 %v2254
    %3333 = vmatpush1.msra.mxu0 %v2253
    %3334 = vmatprep.subr.mxu0 %v2286
    %3335 = vmatpush1.msra.mxu0 %v2285
    %3336 = vmatprep.subr.mxu0 %v2318
    %3337 = vmatpush1.msra.mxu0 %v2317
    %3338 = vmatprep.subr.mxu0 %v2350
    %3339 = vmatpush1.msra.mxu0 %v2349
    %3340 = vmatprep.subr.mxu0 0.0
    %3341 = vmatpush1.msra.mxu0 0.0
    %3342 = vmatprep.subr.mxu0 0.0
    %3343 = vmatpush1.msra.mxu0 0.0
    %3344 = vmatprep.subr.mxu0 0.0
    %3345 = vmatpush1.msra.mxu0 0.0
    %3346 = vmatprep.subr.mxu0 0.0
    %3347 = vmatpush1.msra.mxu0 0.0
    %3348 = vmatprep.subr.mxu0 0.0
    %3349 = vmatpush1.msra.mxu0 0.0
    %3350 = vmatprep.subr.mxu0 0.0
    %3351 = vmatpush1.msra.mxu0 0.0
    %3352 = vmatprep.subr.mxu0 0.0
    %3353 = vmatpush1.msra.mxu0 0.0
    %3354 = vmatprep.subr.mxu0 0.0
    %3355 = vmatpush1.msra.mxu0 0.0
    %3356 = vmatprep.subr.mxu0 0.0
    %3357 = vmatpush1.msra.mxu0 0.0
    %3358 = vmatprep.subr.mxu0 0.0
    %3359 = vmatpush1.msra.mxu0 0.0
    %3360 = vmatprep.subr.mxu0 0.0
    %3361 = vmatpush1.msra.mxu0 0.0
    %3362 = vmatprep.subr.mxu0 0.0
    %3363 = vmatpush1.msra.mxu0 0.0
    %3364 = vmatprep.subr.mxu0 0.0
    %3365 = vmatpush1.msra.mxu0 0.0
    %3366 = vmatprep.subr.mxu0 0.0
    %3367 = vmatpush1.msra.mxu0 0.0
    %3368 = vmatprep.subr.mxu0 0.0
    %3369 = vmatpush1.msra.mxu0 0.0
    %3370 = vmatprep.subr.mxu0 0.0
    %3371 = vmatpush1.msra.mxu0 0.0
    %3372 = vmatprep.mubr.f32.mxu0 0.0
    %3373 = vmatmul.mubr.f32.gmra.mrb[0].mxu0 %v1843
    %v3374 = vpop.f32.mrb[0].mxu0
    %v3375 = vadd.f32 %v2458, %v3374
    %v3376 = vpop.f32.mrb[0].mxu0
    %v3377 = vadd.f32 %v2462, %v3376
    %3378 = vdwg.mxu0
    %3379 = vmatprep.subr.mxu0 %v1872
    %3380 = vmatpush1.msra.mxu0 %v1871
    %3381 = vmatprep.subr.mxu0 %v1904
    %3382 = vmatpush1.msra.mxu0 %v1903
    %3383 = vmatprep.subr.mxu0 %v1936
    %3384 = vmatpush1.msra.mxu0 %v1935
    %3385 = vmatprep.subr.mxu0 %v1968
    %3386 = vmatpush1.msra.mxu0 %v1967
    %3387 = vmatprep.subr.mxu0 %v2000
    %3388 = vmatpush1.msra.mxu0 %v1999
    %3389 = vmatprep.subr.mxu0 %v2032
    %3390 = vmatpush1.msra.mxu0 %v2031
    %3391 = vmatprep.subr.mxu0 %v2064
    %3392 = vmatpush1.msra.mxu0 %v2063
    %3393 = vmatprep.subr.mxu0 %v2096
    %3394 = vmatpush1.msra.mxu0 %v2095
    %3395 = vmatprep.subr.mxu0 %v2128
    %3396 = vmatpush1.msra.mxu0 %v2127
    %3397 = vmatprep.subr.mxu0 %v2160
    %3398 = vmatpush1.msra.mxu0 %v2159
    %3399 = vmatprep.subr.mxu0 %v2192
    %3400 = vmatpush1.msra.mxu0 %v2191
    %3401 = vmatprep.subr.mxu0 %v2224
    %3402 = vmatpush1.msra.mxu0 %v2223
    %3403 = vmatprep.subr.mxu0 %v2256
    %3404 = vmatpush1.msra.mxu0 %v2255
    %3405 = vmatprep.subr.mxu0 %v2288
    %3406 = vmatpush1.msra.mxu0 %v2287
    %3407 = vmatprep.subr.mxu0 %v2320
    %3408 = vmatpush1.msra.mxu0 %v2319
    %3409 = vmatprep.subr.mxu0 %v2352
    %3410 = vmatpush1.msra.mxu0 %v2351
    %3411 = vmatprep.subr.mxu0 0.0
    %3412 = vmatpush1.msra.mxu0 0.0
    %3413 = vmatprep.subr.mxu0 0.0
    %3414 = vmatpush1.msra.mxu0 0.0
    %3415 = vmatprep.subr.mxu0 0.0
    %3416 = vmatpush1.msra.mxu0 0.0
    %3417 = vmatprep.subr.mxu0 0.0
    %3418 = vmatpush1.msra.mxu0 0.0
    %3419 = vmatprep.subr.mxu0 0.0
    %3420 = vmatpush1.msra.mxu0 0.0
    %3421 = vmatprep.subr.mxu0 0.0
    %3422 = vmatpush1.msra.mxu0 0.0
    %3423 = vmatprep.subr.mxu0 0.0
    %3424 = vmatpush1.msra.mxu0 0.0
    %3425 = vmatprep.subr.mxu0 0.0
    %3426 = vmatpush1.msra.mxu0 0.0
    %3427 = vmatprep.subr.mxu0 0.0
    %3428 = vmatpush1.msra.mxu0 0.0
    %3429 = vmatprep.subr.mxu0 0.0
    %3430 = vmatpush1.msra.mxu0 0.0
    %3431 = vmatprep.subr.mxu0 0.0
    %3432 = vmatpush1.msra.mxu0 0.0
    %3433 = vmatprep.subr.mxu0 0.0
    %3434 = vmatpush1.msra.mxu0 0.0
    %3435 = vmatprep.subr.mxu0 0.0
    %3436 = vmatpush1.msra.mxu0 0.0
    %3437 = vmatprep.subr.mxu0 0.0
    %3438 = vmatpush1.msra.mxu0 0.0
    %3439 = vmatprep.subr.mxu0 0.0
    %3440 = vmatpush1.msra.mxu0 0.0
    %3441 = vmatprep.subr.mxu0 0.0
    %3442 = vmatpush1.msra.mxu0 0.0
    %3443 = vmatprep.mubr.f32.mxu0 0.0
    %3444 = vmatmul.mubr.f32.gmra.mrb[0].mxu0 %v1843
    %v3445 = vpop.f32.mrb[0].mxu0
    %v3446 = vadd.f32 %v2466, %v3445
    %v3447 = vpop.f32.mrb[0].mxu0
    %v3448 = vadd.f32 %v2470, %v3447
    %3449 = vdwg.mxu0
    %3450 = vmatprep.subr.mxu0 %v1874
    %3451 = vmatpush1.msra.mxu0 %v1873
    %3452 = vmatprep.subr.mxu0 %v1906
    %3453 = vmatpush1.msra.mxu0 %v1905
    %3454 = vmatprep.subr.mxu0 %v1938
    %3455 = vmatpush1.msra.mxu0 %v1937
    %3456 = vmatprep.subr.mxu0 %v1970
    %3457 = vmatpush1.msra.mxu0 %v1969
    %3458 = vmatprep.subr.mxu0 %v2002
    %3459 = vmatpush1.msra.mxu0 %v2001
    %3460 = vmatprep.subr.mxu0 %v2034
    %3461 = vmatpush1.msra.mxu0 %v2033
    %3462 = vmatprep.subr.mxu0 %v2066
    %3463 = vmatpush1.msra.mxu0 %v2065
    %3464 = vmatprep.subr.mxu0 %v2098
    %3465 = vmatpush1.msra.mxu0 %v2097
    %3466 = vmatprep.subr.mxu0 %v2130
    %3467 = vmatpush1.msra.mxu0 %v2129
    %3468 = vmatprep.subr.mxu0 %v2162
    %3469 = vmatpush1.msra.mxu0 %v2161
    %3470 = vmatprep.subr.mxu0 %v2194
    %3471 = vmatpush1.msra.mxu0 %v2193
    %3472 = vmatprep.subr.mxu0 %v2226
    %3473 = vmatpush1.msra.mxu0 %v2225
    %3474 = vmatprep.subr.mxu0 %v2258
    %3475 = vmatpush1.msra.mxu0 %v2257
    %3476 = vmatprep.subr.mxu0 %v2290
    %3477 = vmatpush1.msra.mxu0 %v2289
    %3478 = vmatprep.subr.mxu0 %v2322
    %3479 = vmatpush1.msra.mxu0 %v2321
    %3480 = vmatprep.subr.mxu0 %v2354
    %3481 = vmatpush1.msra.mxu0 %v2353
    %3482 = vmatprep.subr.mxu0 0.0
    %3483 = vmatpush1.msra.mxu0 0.0
    %3484 = vmatprep.subr.mxu0 0.0
    %3485 = vmatpush1.msra.mxu0 0.0
    %3486 = vmatprep.subr.mxu0 0.0
    %3487 = vmatpush1.msra.mxu0 0.0
    %3488 = vmatprep.subr.mxu0 0.0
    %3489 = vmatpush1.msra.mxu0 0.0
    %3490 = vmatprep.subr.mxu0 0.0
    %3491 = vmatpush1.msra.mxu0 0.0
    %3492 = vmatprep.subr.mxu0 0.0
    %3493 = vmatpush1.msra.mxu0 0.0
    %3494 = vmatprep.subr.mxu0 0.0
    %3495 = vmatpush1.msra.mxu0 0.0
    %3496 = vmatprep.subr.mxu0 0.0
    %3497 = vmatpush1.msra.mxu0 0.0
    %3498 = vmatprep.subr.mxu0 0.0
    %3499 = vmatpush1.msra.mxu0 0.0
    %3500 = vmatprep.subr.mxu0 0.0
    %3501 = vmatpush1.msra.mxu0 0.0
    %3502 = vmatprep.subr.mxu0 0.0
    %3503 = vmatpush1.msra.mxu0 0.0
    %3504 = vmatprep.subr.mxu0 0.0
    %3505 = vmatpush1.msra.mxu0 0.0
    %3506 = vmatprep.subr.mxu0 0.0
    %3507 = vmatpush1.msra.mxu0 0.0
    %3508 = vmatprep.subr.mxu0 0.0
    %3509 = vmatpush1.msra.mxu0 0.0
    %3510 = vmatprep.subr.mxu0 0.0
    %3511 = vmatpush1.msra.mxu0 0.0
    %3512 = vmatprep.subr.mxu0 0.0
    %3513 = vmatpush1.msra.mxu0 0.0
    %3514 = vmatprep.mubr.f32.mxu0 0.0
    %3515 = vmatmul.mubr.f32.gmra.mrb[0].mxu0 %v1843
    %v3516 = vpop.f32.mrb[0].mxu0
    %v3517 = vadd.f32 %v2474, %v3516
    %v3518 = vpop.f32.mrb[0].mxu0
    %v3519 = vadd.f32 %v2478, %v3518
    %3520 = vdwg.mxu0
    %3521 = vmatprep.subr.mxu0 %v1876
    %3522 = vmatpush1.msra.mxu0 %v1875
    %3523 = vmatprep.subr.mxu0 %v1908
    %3524 = vmatpush1.msra.mxu0 %v1907
    %3525 = vmatprep.subr.mxu0 %v1940
    %3526 = vmatpush1.msra.mxu0 %v1939
    %3527 = vmatprep.subr.mxu0 %v1972
    %3528 = vmatpush1.msra.mxu0 %v1971
    %3529 = vmatprep.subr.mxu0 %v2004
    %3530 = vmatpush1.msra.mxu0 %v2003
    %3531 = vmatprep.subr.mxu0 %v2036
    %3532 = vmatpush1.msra.mxu0 %v2035
    %3533 = vmatprep.subr.mxu0 %v2068
    %3534 = vmatpush1.msra.mxu0 %v2067
    %3535 = vmatprep.subr.mxu0 %v2100
    %3536 = vmatpush1.msra.mxu0 %v2099
    %3537 = vmatprep.subr.mxu0 %v2132
    %3538 = vmatpush1.msra.mxu0 %v2131
    %3539 = vmatprep.subr.mxu0 %v2164
    %3540 = vmatpush1.msra.mxu0 %v2163
    %3541 = vmatprep.subr.mxu0 %v2196
    %3542 = vmatpush1.msra.mxu0 %v2195
    %3543 = vmatprep.subr.mxu0 %v2228
    %3544 = vmatpush1.msra.mxu0 %v2227
    %3545 = vmatprep.subr.mxu0 %v2260
    %3546 = vmatpush1.msra.mxu0 %v2259
    %3547 = vmatprep.subr.mxu0 %v2292
    %3548 = vmatpush1.msra.mxu0 %v2291
    %3549 = vmatprep.subr.mxu0 %v2324
    %3550 = vmatpush1.msra.mxu0 %v2323
    %3551 = vmatprep.subr.mxu0 %v2356
    %3552 = vmatpush1.msra.mxu0 %v2355
    %3553 = vmatprep.subr.mxu0 0.0
    %3554 = vmatpush1.msra.mxu0 0.0
    %3555 = vmatprep.subr.mxu0 0.0
    %3556 = vmatpush1.msra.mxu0 0.0
    %3557 = vmatprep.subr.mxu0 0.0
    %3558 = vmatpush1.msra.mxu0 0.0
    %3559 = vmatprep.subr.mxu0 0.0
    %3560 = vmatpush1.msra.mxu0 0.0
    %3561 = vmatprep.subr.mxu0 0.0
    %3562 = vmatpush1.msra.mxu0 0.0
    %3563 = vmatprep.subr.mxu0 0.0
    %3564 = vmatpush1.msra.mxu0 0.0
    %3565 = vmatprep.subr.mxu0 0.0
    %3566 = vmatpush1.msra.mxu0 0.0
    %3567 = vmatprep.subr.mxu0 0.0
    %3568 = vmatpush1.msra.mxu0 0.0
    %3569 = vmatprep.subr.mxu0 0.0
    %3570 = vmatpush1.msra.mxu0 0.0
    %3571 = vmatprep.subr.mxu0 0.0
    %3572 = vmatpush1.msra.mxu0 0.0
    %3573 = vmatprep.subr.mxu0 0.0
    %3574 = vmatpush1.msra.mxu0 0.0
    %3575 = vmatprep.subr.mxu0 0.0
    %3576 = vmatpush1.msra.mxu0 0.0
    %3577 = vmatprep.subr.mxu0 0.0
    %3578 = vmatpush1.msra.mxu0 0.0
    %3579 = vmatprep.subr.mxu0 0.0
    %3580 = vmatpush1.msra.mxu0 0.0
    %3581 = vmatprep.subr.mxu0 0.0
    %3582 = vmatpush1.msra.mxu0 0.0
    %3583 = vmatprep.subr.mxu0 0.0
    %3584 = vmatpush1.msra.mxu0 0.0
    %3585 = vmatprep.mubr.f32.mxu0 0.0
    %3586 = vmatmul.mubr.f32.gmra.mrb[0].mxu0 %v1843
    %v3587 = vpop.f32.mrb[0].mxu0
    %v3588 = vadd.f32 %v2482, %v3587
    %v3589 = vpop.f32.mrb[0].mxu0
    %v3590 = vadd.f32 %v2486, %v3589
    %3591 = vdwg.mxu0
    %3592 = vmatprep.subr.mxu0 %v1878
    %3593 = vmatpush1.msra.mxu0 %v1877
    %3594 = vmatprep.subr.mxu0 %v1910
    %3595 = vmatpush1.msra.mxu0 %v1909
    %3596 = vmatprep.subr.mxu0 %v1942
    %3597 = vmatpush1.msra.mxu0 %v1941
    %3598 = vmatprep.subr.mxu0 %v1974
    %3599 = vmatpush1.msra.mxu0 %v1973
    %3600 = vmatprep.subr.mxu0 %v2006
    %3601 = vmatpush1.msra.mxu0 %v2005
    %3602 = vmatprep.subr.mxu0 %v2038
    %3603 = vmatpush1.msra.mxu0 %v2037
    %3604 = vmatprep.subr.mxu0 %v2070
    %3605 = vmatpush1.msra.mxu0 %v2069
    %3606 = vmatprep.subr.mxu0 %v2102
    %3607 = vmatpush1.msra.mxu0 %v2101
    %3608 = vmatprep.subr.mxu0 %v2134
    %3609 = vmatpush1.msra.mxu0 %v2133
    %3610 = vmatprep.subr.mxu0 %v2166
    %3611 = vmatpush1.msra.mxu0 %v2165
    %3612 = vmatprep.subr.mxu0 %v2198
    %3613 = vmatpush1.msra.mxu0 %v2197
    %3614 = vmatprep.subr.mxu0 %v2230
    %3615 = vmatpush1.msra.mxu0 %v2229
    %3616 = vmatprep.subr.mxu0 %v2262
    %3617 = vmatpush1.msra.mxu0 %v2261
    %3618 = vmatprep.subr.mxu0 %v2294
    %3619 = vmatpush1.msra.mxu0 %v2293
    %3620 = vmatprep.subr.mxu0 %v2326
    %3621 = vmatpush1.msra.mxu0 %v2325
    %3622 = vmatprep.subr.mxu0 %v2358
    %3623 = vmatpush1.msra.mxu0 %v2357
    %3624 = vmatprep.subr.mxu0 0.0
    %3625 = vmatpush1.msra.mxu0 0.0
    %3626 = vmatprep.subr.mxu0 0.0
    %3627 = vmatpush1.msra.mxu0 0.0
    %3628 = vmatprep.subr.mxu0 0.0
    %3629 = vmatpush1.msra.mxu0 0.0
    %3630 = vmatprep.subr.mxu0 0.0
    %3631 = vmatpush1.msra.mxu0 0.0
    %3632 = vmatprep.subr.mxu0 0.0
    %3633 = vmatpush1.msra.mxu0 0.0
    %3634 = vmatprep.subr.mxu0 0.0
    %3635 = vmatpush1.msra.mxu0 0.0
    %3636 = vmatprep.subr.mxu0 0.0
    %3637 = vmatpush1.msra.mxu0 0.0
    %3638 = vmatprep.subr.mxu0 0.0
    %3639 = vmatpush1.msra.mxu0 0.0
    %3640 = vmatprep.subr.mxu0 0.0
    %3641 = vmatpush1.msra.mxu0 0.0
    %3642 = vmatprep.subr.mxu0 0.0
    %3643 = vmatpush1.msra.mxu0 0.0
    %3644 = vmatprep.subr.mxu0 0.0
    %3645 = vmatpush1.msra.mxu0 0.0
    %3646 = vmatprep.subr.mxu0 0.0
    %3647 = vmatpush1.msra.mxu0 0.0
    %3648 = vmatprep.subr.mxu0 0.0
    %3649 = vmatpush1.msra.mxu0 0.0
    %3650 = vmatprep.subr.mxu0 0.0
    %3651 = vmatpush1.msra.mxu0 0.0
    %3652 = vmatprep.subr.mxu0 0.0
    %3653 = vmatpush1.msra.mxu0 0.0
    %3654 = vmatprep.subr.mxu0 0.0
    %3655 = vmatpush1.msra.mxu0 0.0
    %3656 = vmatprep.mubr.f32.mxu0 0.0
    %3657 = vmatmul.mubr.f32.gmra.mrb[0].mxu0 %v1843
    %v3658 = vpop.f32.mrb[0].mxu0
    %v3659 = vadd.f32 %v2490, %v3658
    %v3660 = vpop.f32.mrb[0].mxu0
    %v3661 = vadd.f32 %v2494, %v3660
    %3662 = vdwg.mxu0
    %v3695 = vcombine.low %v2594, %v2596
    %v3696 = vcombine.low %v2665, %v2667
    %v3698 = vunpack.c.l.s4 1983009808
    %v3699 = vunpack.c.0.s8 %v3698
    %v3700 = vlaneseq
    %v3701 = vshrl.u32 %v3700, 7
    %v3702 = vsub.s32 %v3699, %v3701
    %v3703 = vrot.slane %v3695, %v3702
    %v3705 = vunpack.c.l.s4 1983009808
    %v3706 = vunpack.c.0.s8 %v3705
    %v3707 = vlaneseq
    %v3708 = vshrl.u32 %v3707, 7
    %v3709 = vsub.s32 %v3706, %v3708
    %v3710 = vrot.slane %v3696, %v3709
    %v3711 = vcombine.low %v3703, %v3710
    %v3712 = vcombine.low %v2736, %v2738
    %v3713 = vcombine.low %v2807, %v2809
    %v3715 = vunpack.c.l.s4 1983009808
    %v3716 = vunpack.c.0.s8 %v3715
    %v3717 = vlaneseq
    %v3718 = vshrl.u32 %v3717, 7
    %v3719 = vsub.s32 %v3716, %v3718
    %v3720 = vrot.slane %v3712, %v3719
    %v3722 = vunpack.c.l.s4 1983009808
    %v3723 = vunpack.c.0.s8 %v3722
    %v3724 = vlaneseq
    %v3725 = vshrl.u32 %v3724, 7
    %v3726 = vsub.s32 %v3723, %v3725
    %v3727 = vrot.slane %v3713, %v3726
    %v3728 = vcombine.low %v3720, %v3727
    %v3729 = vcombine.low %v2878, %v2880
    %v3730 = vcombine.low %v2949, %v2951
    %v3732 = vunpack.c.l.s4 1983009808
    %v3733 = vunpack.c.0.s8 %v3732
    %v3734 = vlaneseq
    %v3735 = vshrl.u32 %v3734, 7
    %v3736 = vsub.s32 %v3733, %v3735
    %v3737 = vrot.slane %v3729, %v3736
    %v3739 = vunpack.c.l.s4 1983009808
    %v3740 = vunpack.c.0.s8 %v3739
    %v3741 = vlaneseq
    %v3742 = vshrl.u32 %v3741, 7
    %v3743 = vsub.s32 %v3740, %v3742
    %v3744 = vrot.slane %v3730, %v3743
    %v3745 = vcombine.low %v3737, %v3744
    %v3746 = vcombine.low %v3020, %v3022
    %v3747 = vcombine.low %v3091, %v3093
    %v3749 = vunpack.c.l.s4 1983009808
    %v3750 = vunpack.c.0.s8 %v3749
    %v3751 = vlaneseq
    %v3752 = vshrl.u32 %v3751, 7
    %v3753 = vsub.s32 %v3750, %v3752
    %v3754 = vrot.slane %v3746, %v3753
    %v3756 = vunpack.c.l.s4 1983009808
    %v3757 = vunpack.c.0.s8 %v3756
    %v3758 = vlaneseq
    %v3759 = vshrl.u32 %v3758, 7
    %v3760 = vsub.s32 %v3757, %v3759
    %v3761 = vrot.slane %v3747, %v3760
    %v3762 = vcombine.low %v3754, %v3761
    %v3763 = vcombine.low %v3162, %v3164
    %v3764 = vcombine.low %v3233, %v3235
    %v3766 = vunpack.c.l.s4 1983009808
    %v3767 = vunpack.c.0.s8 %v3766
    %v3768 = vlaneseq
    %v3769 = vshrl.u32 %v3768, 7
    %v3770 = vsub.s32 %v3767, %v3769
    %v3771 = vrot.slane %v3763, %v3770
    %v3773 = vunpack.c.l.s4 1983009808
    %v3774 = vunpack.c.0.s8 %v3773
    %v3775 = vlaneseq
    %v3776 = vshrl.u32 %v3775, 7
    %v3777 = vsub.s32 %v3774, %v3776
    %v3778 = vrot.slane %v3764, %v3777
    %v3779 = vcombine.low %v3771, %v3778
    %v3780 = vcombine.low %v3304, %v3306
    %v3781 = vcombine.low %v3375, %v3377
    %v3783 = vunpack.c.l.s4 1983009808
    %v3784 = vunpack.c.0.s8 %v3783
    %v3785 = vlaneseq
    %v3786 = vshrl.u32 %v3785, 7
    %v3787 = vsub.s32 %v3784, %v3786
    %v3788 = vrot.slane %v3780, %v3787
    %v3790 = vunpack.c.l.s4 1983009808
    %v3791 = vunpack.c.0.s8 %v3790
    %v3792 = vlaneseq
    %v3793 = vshrl.u32 %v3792, 7
    %v3794 = vsub.s32 %v3791, %v3793
    %v3795 = vrot.slane %v3781, %v3794
    %v3796 = vcombine.low %v3788, %v3795
    %v3797 = vcombine.low %v3446, %v3448
    %v3798 = vcombine.low %v3517, %v3519
    %v3800 = vunpack.c.l.s4 1983009808
    %v3801 = vunpack.c.0.s8 %v3800
    %v3802 = vlaneseq
    %v3803 = vshrl.u32 %v3802, 7
    %v3804 = vsub.s32 %v3801, %v3803
    %v3805 = vrot.slane %v3797, %v3804
    %v3807 = vunpack.c.l.s4 1983009808
    %v3808 = vunpack.c.0.s8 %v3807
    %v3809 = vlaneseq
    %v3810 = vshrl.u32 %v3809, 7
    %v3811 = vsub.s32 %v3808, %v3810
    %v3812 = vrot.slane %v3798, %v3811
    %v3813 = vcombine.low %v3805, %v3812
    %v3814 = vcombine.low %v3588, %v3590
    %v3815 = vcombine.low %v3659, %v3661
    %v3817 = vunpack.c.l.s4 1983009808
    %v3818 = vunpack.c.0.s8 %v3817
    %v3819 = vlaneseq
    %v3820 = vshrl.u32 %v3819, 7
    %v3821 = vsub.s32 %v3818, %v3820
    %v3822 = vrot.slane %v3814, %v3821
    %v3824 = vunpack.c.l.s4 1983009808
    %v3825 = vunpack.c.0.s8 %v3824
    %v3826 = vlaneseq
    %v3827 = vshrl.u32 %v3826, 7
    %v3828 = vsub.s32 %v3825, %v3827
    %v3829 = vrot.slane %v3815, %v3828
    %v3830 = vcombine.low %v3822, %v3829
    %3839 = vst [vmem:[%s6] sm:$0xff] %v3711
    %3840 = vst [vmem:[%s6 + $0x8] sm:$0xff] %v3728
    %3841 = vst [vmem:[%s6 + $0x10] sm:$0xff] %v3745
    %3842 = vst [vmem:[%s6 + $0x18] sm:$0xff] %v3762
    %3843 = vst [vmem:[%s6 + $0x20] sm:$0xff] %v3779
    %3844 = vst [vmem:[%s6 + $0x28] sm:$0xff] %v3796
    %3845 = vst [vmem:[%s6 + $0x30] sm:$0xff] %v3813
    %3846 = vst [vmem:[%s6 + $0x38] sm:$0xff] %v3830
    // Predicated region
    $region22: #{_lambda_.10} parent=1 // pred_check
      _
    $region23: #{_lambda_.10} parent=1 // pred_check_branch
      %3848 = sbr.rel (0) target = $region25
    $region24: #{_lambda_.10} parent=1 // pred_region
      %s3850 = ssub.s32 32, 32
      %3851 = vsyncadd [#allocation3], %s3850
      %s3853 = sshll.u32 [#allocation2], 4
      %s3854 = int_to_ptr.vmem [resolvable:$true] %s3853
      %3856 = dma.vmem_to_hbm [thread:$0]  %s3854, 32, %s5, [#allocation3]
    $region25: #{_lambda_.10} parent=1 // pred_fallthru
      _
    // Predicated region
    $region26: #{_lambda_.10} parent=1 // pred_check
      _
    $region27: #{_lambda_.10} parent=1 // pred_check_branch
      %3858 = sbr.rel (0) target = $region29
    $region28: #{_lambda_.10} parent=1 // pred_region
      _
    $region29: #{_lambda_.10} parent=1 // pred_fallthru
      _
    // Predicated region
    $region30: #{_lambda_.10} parent=1 // pred_check
      _
    $region31: #{_lambda_.10} parent=1 // pred_check_branch
      %3860 = sbr.rel (0) target = $region33
    $region32: #{_lambda_.10} parent=1 // pred_region
      %3861 = dma.done [#allocation3], 32
    $region33: #{_lambda_.10} parent=1 // pred_fallthru
      _
    // Predicated region
    $region34: #{_lambda_.10} parent=1 // pred_check
      _
    $region35: #{_lambda_.10} parent=1 // pred_check_branch
      %3863 = sbr.rel (0) target = $region37
    $region36: #{_lambda_.10} parent=1 // pred_region
      _
    $region37: #{_lambda_.10} parent=1 // pred_fallthru
      _
    %3864 = vsyncpa [#allocation3], 1

// kernel: _lambda_.11
$region0: #{_lambda_.11}
  #allocation0 [shape = 'u32[]', space=smem, size = 0x4, offset = 0x4, fixed_abs, tag = 'smem constant byte address 0x4 - core index']
  #allocation1 [shape = 'u32[144,128]{1,0:T(1,128)}', space=vmem, size = 0x12000, scoped, tag = 'internal scratch']
  %s0 = inlined_call_operand.vmem [shape: f32[4,32,1024], index: 0, kind: input, shape index: {}]
  %s1 = inlined_call_operand.vmem [shape: f32[4,1024,128], index: 1, kind: input, shape index: {}]
  %s2 = inlined_call_operand.vmem [shape: f32[1,128], index: 2, kind: input, shape index: {}]
  %s3 = inlined_call_operand.vmem [shape: f32[4,32,128], index: 3, kind: output, shape index: {}]
  %s4 = sld [smem:[#allocation0]]
  $region45: #{_lambda_.11} parent=0
    _
  %s6 = ssub.s32 1, %s4
  %s7 = scalar_select 0, %s6, %s4
  loop: start=0, step=1, limit=6
  $region2: #{_lambda_.11} parent=0 // loop_pre_header
    _
  $region3: #{_lambda_.11} parent=0 // loop_header
    %s9 = sphi 0, %s13
    %p10 = scmp.ge.s32.totalorder %s9, 6
    %s16 = sphi 0, %s28
    %s17 = sphi 0, %s24
    %s18 = sphi 0, %s16
    %s19 = sphi 0, %s17
    %s20 = sphi 0, %s18
    %s21 = sphi 0, %s19
    %s33 = sphi 0, %s35
    %s36 = sphi 0, %s33
    %s37 = sphi 0, %s36
    %s53 = sphi 0, %s37
    %s59 = sphi 0, %s61
    %s62 = sphi 0, %s59
    %s63 = sphi 0, %s62
    %s79 = sphi 0, %s63
    %s83 = sphi 0, %s83
    %s85 = sphi 0, %s83
    %s86 = sphi 0, %s85
    %s100 = sphi 0, %s86
    %s108 = sphi 0, %s110
    %s111 = sphi 0, %s108
    %s112 = sphi 0, %s111
    %s128 = sphi 0, %s112
  $region4: #{_lambda_.11} parent=0 // loop_header_branch
    %12 = sbr.rel (%p10) target = $region8
  $region5: #{_lambda_.11} parent=0 // loop_body
    %s14 = ssub.s32 %s9, 1
    %s15 = ssub.s32 %s9, 2
    %s22 = sadd.s32 1, %s17
    %p23 = scmp.ge.s32.totalorder %s22, 1
    %s24 = scalar_select %p23, 0, %s22
    %s25 = sadd.s32 1, %s16
    %s26 = scalar_select %p23, %s25, %s16
    %p27 = scmp.ge.s32.totalorder %s26, 4
    %s28 = scalar_select %p27, 0, %s26
    %s29 = ssub.s32 %s16, %s28
    %s30 = ssub.s32 %s17, %s24
    %s31 = sor.u32 %s29, %s30
    %p32 = scmp.eq.s32.totalorder %s31, 0
    %s34 = sadd.s32 %s33, 1
    %s35 = scalar_select %p32, %s33, %s34
    %p38 = pneg %p32
    %p39 = scmp.eq.s32.totalorder %s9, 3
    %p40 = por %p38, %p39
    %p41 = scmp.ne.s32.totalorder %s33, %s36
    %p42 = scmp.eq.s32.totalorder %s9, 0
    %p43 = por %p41, %p42
    %p44 = scmp.ne.s32.totalorder %s33, %s36
    %p45 = scmp.eq.s32.totalorder %s14, 3
    %p46 = por %p44, %p45
    %p47 = scmp.ne.s32.totalorder %s36, %s37
    %p48 = scmp.eq.s32.totalorder %s14, 0
    %p49 = por %p47, %p48
    %p50 = scmp.ne.s32.totalorder %s36, %s37
    %p51 = scmp.eq.s32.totalorder %s15, 3
    %p52 = por %p50, %p51
    %p54 = scmp.ne.s32.totalorder %s37, %s53
    %p55 = scmp.eq.s32.totalorder %s15, 0
    %p56 = por %p54, %p55
    %s57 = ssub.s32 %s16, %s28
    %p58 = scmp.eq.s32.totalorder %s57, 0
    %s60 = sadd.s32 %s59, 1
    %s61 = scalar_select %p58, %s59, %s60
    %p64 = pneg %p58
    %p65 = scmp.eq.s32.totalorder %s9, 3
    %p66 = por %p64, %p65
    %p67 = scmp.ne.s32.totalorder %s59, %s62
    %p68 = scmp.eq.s32.totalorder %s9, 0
    %p69 = por %p67, %p68
    %p70 = scmp.ne.s32.totalorder %s59, %s62
    %p71 = scmp.eq.s32.totalorder %s14, 3
    %p72 = por %p70, %p71
    %p73 = scmp.ne.s32.totalorder %s62, %s63
    %p74 = scmp.eq.s32.totalorder %s14, 0
    %p75 = por %p73, %p74
    %p76 = scmp.ne.s32.totalorder %s62, %s63
    %p77 = scmp.eq.s32.totalorder %s15, 3
    %p78 = por %p76, %p77
    %p80 = scmp.ne.s32.totalorder %s63, %s79
    %p81 = scmp.eq.s32.totalorder %s15, 0
    %p82 = por %p80, %p81
    %s84 = sadd.s32 %s83, 1
    %p87 = scmp.eq.s32.totalorder %s9, 3
    %p88 = scmp.ne.s32.totalorder %s83, %s85
    %p89 = scmp.eq.s32.totalorder %s9, 0
    %p90 = por %p88, %p89
    %p91 = scmp.ne.s32.totalorder %s83, %s85
    %p92 = scmp.eq.s32.totalorder %s14, 3
    %p93 = por %p91, %p92
    %p94 = scmp.ne.s32.totalorder %s85, %s86
    %p95 = scmp.eq.s32.totalorder %s14, 0
    %p96 = por %p94, %p95
    %p97 = scmp.ne.s32.totalorder %s85, %s86
    %p98 = scmp.eq.s32.totalorder %s15, 3
    %p99 = por %p97, %p98
    %p101 = scmp.ne.s32.totalorder %s86, %s100
    %p102 = scmp.eq.s32.totalorder %s15, 0
    %p103 = por %p101, %p102
    %s104 = ssub.s32 %s16, %s28
    %s105 = ssub.s32 %s17, %s24
    %s106 = sor.u32 %s104, %s105
    %p107 = scmp.eq.s32.totalorder %s106, 0
    %s109 = sadd.s32 %s108, 1
    %s110 = scalar_select %p107, %s108, %s109
    %p113 = pneg %p107
    %p114 = scmp.eq.s32.totalorder %s9, 3
    %p115 = por %p113, %p114
    %p116 = scmp.ne.s32.totalorder %s108, %s111
    %p117 = scmp.eq.s32.totalorder %s9, 0
    %p118 = por %p116, %p117
    %p119 = scmp.ne.s32.totalorder %s108, %s111
    %p120 = scmp.eq.s32.totalorder %s14, 3
    %p121 = por %p119, %p120
    %p122 = scmp.ne.s32.totalorder %s111, %s112
    %p123 = scmp.eq.s32.totalorder %s14, 0
    %p124 = por %p122, %p123
    %p125 = scmp.ne.s32.totalorder %s111, %s112
    %p126 = scmp.eq.s32.totalorder %s15, 3
    %p127 = por %p125, %p126
    %p129 = scmp.ne.s32.totalorder %s112, %s128
    %p130 = scmp.eq.s32.totalorder %s15, 0
    %p131 = por %p129, %p130
    %p132 = scmp.le.s32.totalorder 1, %s9
    %p133 = scmp.lt.s32.totalorder %s9, 5
    %p134 = pnand %p132, %p133
    %p135 = pneg %p134
    // Predicated region
    $region9: #{_lambda_.11} parent=5 // pred_check
      _
    $region10: #{_lambda_.11} parent=5 // pred_check_branch
      %137 = sbr.rel (%p134) target = $region12
    $region11: #{_lambda_.11} parent=5 // pred_region
      %s138 = ssub.s32 %s9, 1
      // Predicated region
      $region13: #{_lambda_.11} parent=11 // pred_check
        %p139 = pneg %p96
      $region14: #{_lambda_.11} parent=11 // pred_check_branch
        %141 = sbr.rel (%p139) target = $region16
      $region15: #{_lambda_.11} parent=11 // pred_region
        _
      $region16: #{_lambda_.11} parent=11 // pred_fallthru
        _
    $region12: #{_lambda_.11} parent=5 // pred_fallthru
      _
    %p142 = scmp.lt.s32.totalorder %s9, 4
    // Predicated region
    $region17: #{_lambda_.11} parent=5 // pred_check
      %p143 = pneg %p142
    $region18: #{_lambda_.11} parent=5 // pred_check_branch
      %145 = sbr.rel (%p143) target = $region20
    $region19: #{_lambda_.11} parent=5 // pred_region
      // Predicated region
      $region21: #{_lambda_.11} parent=19 // pred_check
        %p146 = pneg %p43
      $region22: #{_lambda_.11} parent=19 // pred_check_branch
        %148 = sbr.rel (%p146) target = $region24
      $region23: #{_lambda_.11} parent=19 // pred_region
        %s149 = smul.u32 4, %s17
        %p150 = scmp.lt.s32.totalorder %s16, 3
        %s151 = scalar_select %p150, %s16, 3
        %p152 = scmp.lt.s32.totalorder %s149, 3
        %s153 = scalar_select %p152, %s149, 3
        %s154 = smul.addr %s153, 8
        %s155 = smul.addr %s151, 32
        %s156 = sadd.s32 %s154, %s155
        %s157 = smul.addr %s156, 8
        %s158 = scalar_lea.vmem %s0, %s157
        %s159 = smul.u32 4, %s17
      $region24: #{_lambda_.11} parent=19 // pred_fallthru
        _
      // Predicated region
      $region25: #{_lambda_.11} parent=19 // pred_check
        %p160 = pneg %p69
      $region26: #{_lambda_.11} parent=19 // pred_check_branch
        %162 = sbr.rel (%p160) target = $region28
      $region27: #{_lambda_.11} parent=19 // pred_region
        %p163 = scmp.lt.s32.totalorder %s16, 3
        %s164 = scalar_select %p163, %s16, 3
        %s165 = smul.addr %s164, 128
        %s166 = smul.addr %s165, 8
        %s167 = scalar_lea.vmem %s1, %s166
      $region28: #{_lambda_.11} parent=19 // pred_fallthru
        _
    $region20: #{_lambda_.11} parent=5 // pred_fallthru
      _
    %p168 = scmp.le.s32.totalorder 1, %s9
    %p169 = scmp.lt.s32.totalorder %s9, 5
    %p170 = pnand %p168, %p169
    %p171 = pneg %p170
    // Predicated region
    $region29: #{_lambda_.11} parent=5 // pred_check
      _
    $region30: #{_lambda_.11} parent=5 // pred_check_branch
      %173 = sbr.rel (%p170) target = $region32
    $region31: #{_lambda_.11} parent=5 // pred_region
      %s174 = ssub.s32 %s9, 1
      %s175 = smul.u32 4, %s19
      %p176 = scmp.lt.s32.totalorder %s18, 3
      %s177 = scalar_select %p176, %s18, 3
      %p178 = scmp.lt.s32.totalorder %s175, 3
      %s179 = scalar_select %p178, %s175, 3
      %s180 = smul.addr %s179, 8
      %s181 = smul.addr %s177, 32
      %s182 = sadd.s32 %s180, %s181
      %s183 = smul.addr %s182, 8
      %s184 = scalar_lea.vmem %s0, %s183
      %p185 = pneg %p49
      %p186 = pneg %p46
      %p187 = scmp.lt.s32.totalorder %s18, 3
      %s188 = scalar_select %p187, %s18, 3
      %s189 = smul.addr %s188, 128
      %s190 = smul.addr %s189, 8
      %s191 = scalar_lea.vmem %s1, %s190
      %p192 = pneg %p75
      %p193 = pneg %p72
      %p194 = pneg %p96
      %p195 = pneg %p93
      %p196 = pneg %p124
      %p197 = pneg %p121
      %s198 = smul.u32 4, %s19
      %p199 = scmp.lt.s32.totalorder %s18, 3
      %s200 = scalar_select %p199, %s18, 3
      %p201 = scmp.lt.s32.totalorder %s198, 3
      %s202 = scalar_select %p201, %s198, 3
      %s203 = smul.addr %s200, 4
      %s204 = sadd.s32 %s202, %s203
      %s205 = smul.addr %s204, 8
      %s206 = scalar_lea.vmem %s3, %s205
      %s207 = smul.u32 4, %s19
      %p208 = scmp.lt.s32.totalorder %s18, 3
      %s209 = scalar_select %p208, %s18, 3
      %p210 = scmp.lt.s32.totalorder %s207, 3
      %s211 = scalar_select %p210, %s207, 3
      %s212 = smul.addr %s211, 8
      %s213 = smul.addr %s209, 32
      %s214 = sadd.s32 %s212, %s213
      %s215 = smul.addr %s214, 8
      %s216 = scalar_lea.vmem %s0, %s215
      %s217 = smul.u32 4, %s19
      %p218 = scmp.lt.s32.totalorder %s18, 3
      %s219 = scalar_select %p218, %s18, 3
      %s220 = smul.addr %s219, 128
      %s221 = smul.addr %s220, 8
      %s222 = scalar_lea.vmem %s1, %s221
      %s223 = smul.u32 4, %s19
      %p224 = scmp.lt.s32.totalorder %s18, 3
      %s225 = scalar_select %p224, %s18, 3
      %p226 = scmp.lt.s32.totalorder %s223, 3
      %s227 = scalar_select %p226, %s223, 3
      %s228 = smul.addr %s225, 4
      %s229 = sadd.s32 %s227, %s228
      %s230 = smul.addr %s229, 8
      %s231 = scalar_lea.vmem %s3, %s230
      %s232 = smul.u32 4, %s19
      %v233 = vld [vmem:[%s216] sm:$0xff]
      %v234 = vld [vmem:[%s216 + $0x8] sm:$0xff]
      %v235 = vld [vmem:[%s216 + $0x10] sm:$0xff]
      %v236 = vld [vmem:[%s216 + $0x18] sm:$0xff]
      %v237 = vld [vmem:[%s216 + $0x20] sm:$0xff]
      %v238 = vld [vmem:[%s216 + $0x28] sm:$0xff]
      %v239 = vld [vmem:[%s216 + $0x30] sm:$0xff]
      %v240 = vld [vmem:[%s216 + $0x38] sm:$0xff]
      %v241 = vld [vmem:[%s216 + $0x40] sm:$0xff]
      %v242 = vld [vmem:[%s216 + $0x48] sm:$0xff]
      %v243 = vld [vmem:[%s216 + $0x50] sm:$0xff]
      %v244 = vld [vmem:[%s216 + $0x58] sm:$0xff]
      %v245 = vld [vmem:[%s216 + $0x60] sm:$0xff]
      %v246 = vld [vmem:[%s216 + $0x68] sm:$0xff]
      %v247 = vld [vmem:[%s216 + $0x70] sm:$0xff]
      %v248 = vld [vmem:[%s216 + $0x78] sm:$0xff]
      %v249 = vld [vmem:[%s216 + $0x80] sm:$0xff]
      %v250 = vld [vmem:[%s216 + $0x88] sm:$0xff]
      %v251 = vld [vmem:[%s216 + $0x90] sm:$0xff]
      %v252 = vld [vmem:[%s216 + $0x98] sm:$0xff]
      %v253 = vld [vmem:[%s216 + $0xa0] sm:$0xff]
      %v254 = vld [vmem:[%s216 + $0xa8] sm:$0xff]
      %v255 = vld [vmem:[%s216 + $0xb0] sm:$0xff]
      %v256 = vld [vmem:[%s216 + $0xb8] sm:$0xff]
      %v257 = vld [vmem:[%s216 + $0xc0] sm:$0xff]
      %v258 = vld [vmem:[%s216 + $0xc8] sm:$0xff]
      %v259 = vld [vmem:[%s216 + $0xd0] sm:$0xff]
      %v260 = vld [vmem:[%s216 + $0xd8] sm:$0xff]
      %v261 = vld [vmem:[%s216 + $0xe0] sm:$0xff]
      %v262 = vld [vmem:[%s216 + $0xe8] sm:$0xff]
      %v263 = vld [vmem:[%s216 + $0xf0] sm:$0xff]
      %v264 = vld [vmem:[%s216 + $0xf8] sm:$0xff]
      %v265 = vld [vmem:[%s222] sm:$0xff]
      %v266 = vld [vmem:[%s222 + $0x8] sm:$0xff]
      %v267 = vld [vmem:[%s222 + $0x10] sm:$0xff]
      %v268 = vld [vmem:[%s222 + $0x18] sm:$0xff]
      %v269 = vld [vmem:[%s222 + $0x20] sm:$0xff]
      %v270 = vld [vmem:[%s222 + $0x28] sm:$0xff]
      %v271 = vld [vmem:[%s222 + $0x30] sm:$0xff]
      %v272 = vld [vmem:[%s222 + $0x38] sm:$0xff]
      %v273 = vld [vmem:[%s222 + $0x40] sm:$0xff]
      %v274 = vld [vmem:[%s222 + $0x48] sm:$0xff]
      %v275 = vld [vmem:[%s222 + $0x50] sm:$0xff]
      %v276 = vld [vmem:[%s222 + $0x58] sm:$0xff]
      %v277 = vld [vmem:[%s222 + $0x60] sm:$0xff]
      %v278 = vld [vmem:[%s222 + $0x68] sm:$0xff]
      %v279 = vld [vmem:[%s222 + $0x70] sm:$0xff]
      %v280 = vld [vmem:[%s222 + $0x78] sm:$0xff]
      %v281 = vld [vmem:[%s222 + $0x80] sm:$0xff]
      %v282 = vld [vmem:[%s222 + $0x88] sm:$0xff]
      %v283 = vld [vmem:[%s222 + $0x90] sm:$0xff]
      %v284 = vld [vmem:[%s222 + $0x98] sm:$0xff]
      %v285 = vld [vmem:[%s222 + $0xa0] sm:$0xff]
      %v286 = vld [vmem:[%s222 + $0xa8] sm:$0xff]
      %v287 = vld [vmem:[%s222 + $0xb0] sm:$0xff]
      %v288 = vld [vmem:[%s222 + $0xb8] sm:$0xff]
      %v289 = vld [vmem:[%s222 + $0xc0] sm:$0xff]
      %v290 = vld [vmem:[%s222 + $0xc8] sm:$0xff]
      %v291 = vld [vmem:[%s222 + $0xd0] sm:$0xff]
      %v292 = vld [vmem:[%s222 + $0xd8] sm:$0xff]
      %v293 = vld [vmem:[%s222 + $0xe0] sm:$0xff]
      %v294 = vld [vmem:[%s222 + $0xe8] sm:$0xff]
      %v295 = vld [vmem:[%s222 + $0xf0] sm:$0xff]
      %v296 = vld [vmem:[%s222 + $0xf8] sm:$0xff]
      %v297 = vld [vmem:[%s222 + $0x100] sm:$0xff]
      %v298 = vld [vmem:[%s222 + $0x108] sm:$0xff]
      %v299 = vld [vmem:[%s222 + $0x110] sm:$0xff]
      %v300 = vld [vmem:[%s222 + $0x118] sm:$0xff]
      %v301 = vld [vmem:[%s222 + $0x120] sm:$0xff]
      %v302 = vld [vmem:[%s222 + $0x128] sm:$0xff]
      %v303 = vld [vmem:[%s222 + $0x130] sm:$0xff]
      %v304 = vld [vmem:[%s222 + $0x138] sm:$0xff]
      %v305 = vld [vmem:[%s222 + $0x140] sm:$0xff]
      %v306 = vld [vmem:[%s222 + $0x148] sm:$0xff]
      %v307 = vld [vmem:[%s222 + $0x150] sm:$0xff]
      %v308 = vld [vmem:[%s222 + $0x158] sm:$0xff]
      %v309 = vld [vmem:[%s222 + $0x160] sm:$0xff]
      %v310 = vld [vmem:[%s222 + $0x168] sm:$0xff]
      %v311 = vld [vmem:[%s222 + $0x170] sm:$0xff]
      %v312 = vld [vmem:[%s222 + $0x178] sm:$0xff]
      %v313 = vld [vmem:[%s222 + $0x180] sm:$0xff]
      %v314 = vld [vmem:[%s222 + $0x188] sm:$0xff]
      %v315 = vld [vmem:[%s222 + $0x190] sm:$0xff]
      %v316 = vld [vmem:[%s222 + $0x198] sm:$0xff]
      %v317 = vld [vmem:[%s222 + $0x1a0] sm:$0xff]
      %v318 = vld [vmem:[%s222 + $0x1a8] sm:$0xff]
      %v319 = vld [vmem:[%s222 + $0x1b0] sm:$0xff]
      %v320 = vld [vmem:[%s222 + $0x1b8] sm:$0xff]
      %v321 = vld [vmem:[%s222 + $0x1c0] sm:$0xff]
      %v322 = vld [vmem:[%s222 + $0x1c8] sm:$0xff]
      %v323 = vld [vmem:[%s222 + $0x1d0] sm:$0xff]
      %v324 = vld [vmem:[%s222 + $0x1d8] sm:$0xff]
      %v325 = vld [vmem:[%s222 + $0x1e0] sm:$0xff]
      %v326 = vld [vmem:[%s222 + $0x1e8] sm:$0xff]
      %v327 = vld [vmem:[%s222 + $0x1f0] sm:$0xff]
      %v328 = vld [vmem:[%s222 + $0x1f8] sm:$0xff]
      %v329 = vld [vmem:[%s222 + $0x200] sm:$0xff]
      %v330 = vld [vmem:[%s222 + $0x208] sm:$0xff]
      %v331 = vld [vmem:[%s222 + $0x210] sm:$0xff]
      %v332 = vld [vmem:[%s222 + $0x218] sm:$0xff]
      %v333 = vld [vmem:[%s222 + $0x220] sm:$0xff]
      %v334 = vld [vmem:[%s222 + $0x228] sm:$0xff]
      %v335 = vld [vmem:[%s222 + $0x230] sm:$0xff]
      %v336 = vld [vmem:[%s222 + $0x238] sm:$0xff]
      %v337 = vld [vmem:[%s222 + $0x240] sm:$0xff]
      %v338 = vld [vmem:[%s222 + $0x248] sm:$0xff]
      %v339 = vld [vmem:[%s222 + $0x250] sm:$0xff]
      %v340 = vld [vmem:[%s222 + $0x258] sm:$0xff]
      %v341 = vld [vmem:[%s222 + $0x260] sm:$0xff]
      %v342 = vld [vmem:[%s222 + $0x268] sm:$0xff]
      %v343 = vld [vmem:[%s222 + $0x270] sm:$0xff]
      %v344 = vld [vmem:[%s222 + $0x278] sm:$0xff]
      %v345 = vld [vmem:[%s222 + $0x280] sm:$0xff]
      %v346 = vld [vmem:[%s222 + $0x288] sm:$0xff]
      %v347 = vld [vmem:[%s222 + $0x290] sm:$0xff]
      %v348 = vld [vmem:[%s222 + $0x298] sm:$0xff]
      %v349 = vld [vmem:[%s222 + $0x2a0] sm:$0xff]
      %v350 = vld [vmem:[%s222 + $0x2a8] sm:$0xff]
      %v351 = vld [vmem:[%s222 + $0x2b0] sm:$0xff]
      %v352 = vld [vmem:[%s222 + $0x2b8] sm:$0xff]
      %v353 = vld [vmem:[%s222 + $0x2c0] sm:$0xff]
      %v354 = vld [vmem:[%s222 + $0x2c8] sm:$0xff]
      %v355 = vld [vmem:[%s222 + $0x2d0] sm:$0xff]
      %v356 = vld [vmem:[%s222 + $0x2d8] sm:$0xff]
      %v357 = vld [vmem:[%s222 + $0x2e0] sm:$0xff]
      %v358 = vld [vmem:[%s222 + $0x2e8] sm:$0xff]
      %v359 = vld [vmem:[%s222 + $0x2f0] sm:$0xff]
      %v360 = vld [vmem:[%s222 + $0x2f8] sm:$0xff]
      %v361 = vld [vmem:[%s222 + $0x300] sm:$0xff]
      %v362 = vld [vmem:[%s222 + $0x308] sm:$0xff]
      %v363 = vld [vmem:[%s222 + $0x310] sm:$0xff]
      %v364 = vld [vmem:[%s222 + $0x318] sm:$0xff]
      %v365 = vld [vmem:[%s222 + $0x320] sm:$0xff]
      %v366 = vld [vmem:[%s222 + $0x328] sm:$0xff]
      %v367 = vld [vmem:[%s222 + $0x330] sm:$0xff]
      %v368 = vld [vmem:[%s222 + $0x338] sm:$0xff]
      %v369 = vld [vmem:[%s222 + $0x340] sm:$0xff]
      %v370 = vld [vmem:[%s222 + $0x348] sm:$0xff]
      %v371 = vld [vmem:[%s222 + $0x350] sm:$0xff]
      %v372 = vld [vmem:[%s222 + $0x358] sm:$0xff]
      %v373 = vld [vmem:[%s222 + $0x360] sm:$0xff]
      %v374 = vld [vmem:[%s222 + $0x368] sm:$0xff]
      %v375 = vld [vmem:[%s222 + $0x370] sm:$0xff]
      %v376 = vld [vmem:[%s222 + $0x378] sm:$0xff]
      %v377 = vld [vmem:[%s222 + $0x380] sm:$0xff]
      %v378 = vld [vmem:[%s222 + $0x388] sm:$0xff]
      %v379 = vld [vmem:[%s222 + $0x390] sm:$0xff]
      %v380 = vld [vmem:[%s222 + $0x398] sm:$0xff]
      %v381 = vld [vmem:[%s222 + $0x3a0] sm:$0xff]
      %v382 = vld [vmem:[%s222 + $0x3a8] sm:$0xff]
      %v383 = vld [vmem:[%s222 + $0x3b0] sm:$0xff]
      %v384 = vld [vmem:[%s222 + $0x3b8] sm:$0xff]
      %v385 = vld [vmem:[%s222 + $0x3c0] sm:$0xff]
      %v386 = vld [vmem:[%s222 + $0x3c8] sm:$0xff]
      %v387 = vld [vmem:[%s222 + $0x3d0] sm:$0xff]
      %v388 = vld [vmem:[%s222 + $0x3d8] sm:$0xff]
      %v389 = vld [vmem:[%s222 + $0x3e0] sm:$0xff]
      %v390 = vld [vmem:[%s222 + $0x3e8] sm:$0xff]
      %v391 = vld [vmem:[%s222 + $0x3f0] sm:$0xff]
      %v392 = vld [vmem:[%s222 + $0x3f8] sm:$0xff]
      %v393 = vld [vmem:[%s2] sm:$0x1]
      %v395 = vlaneseq
      %v396 = vshrl.u32 %v395, 7
      %v397 = vsub.s32 0, %v396
      %v398 = vrot.slane %v393, %v397
      %400 = vmatprep.subr.mxu0 0.0
      %401 = vmatpush1.msra.mxu0 %v265
      %402 = vmatprep.subr.mxu0 0.0
      %403 = vmatpush1.msra.mxu0 %v266
      %404 = vmatprep.subr.mxu0 0.0
      %405 = vmatpush1.msra.mxu0 %v267
      %406 = vmatprep.subr.mxu0 0.0
      %407 = vmatpush1.msra.mxu0 %v268
      %408 = vmatprep.subr.mxu0 0.0
      %409 = vmatpush1.msra.mxu0 %v269
      %410 = vmatprep.subr.mxu0 0.0
      %411 = vmatpush1.msra.mxu0 %v270
      %412 = vmatprep.subr.mxu0 0.0
      %413 = vmatpush1.msra.mxu0 %v271
      %414 = vmatprep.subr.mxu0 0.0
      %415 = vmatpush1.msra.mxu0 %v272
      %416 = vmatprep.subr.mxu0 0.0
      %417 = vmatpush1.msra.mxu0 %v273
      %418 = vmatprep.subr.mxu0 0.0
      %419 = vmatpush1.msra.mxu0 %v274
      %420 = vmatprep.subr.mxu0 0.0
      %421 = vmatpush1.msra.mxu0 %v275
      %422 = vmatprep.subr.mxu0 0.0
      %423 = vmatpush1.msra.mxu0 %v276
      %424 = vmatprep.subr.mxu0 0.0
      %425 = vmatpush1.msra.mxu0 %v277
      %426 = vmatprep.subr.mxu0 0.0
      %427 = vmatpush1.msra.mxu0 %v278
      %428 = vmatprep.subr.mxu0 0.0
      %429 = vmatpush1.msra.mxu0 %v279
      %430 = vmatprep.subr.mxu0 0.0
      %431 = vmatpush1.msra.mxu0 %v280
      %432 = vmatprep.subr.mxu0 0.0
      %433 = vmatpush1.msra.mxu0 %v281
      %434 = vmatprep.subr.mxu0 0.0
      %435 = vmatpush1.msra.mxu0 %v282
      %436 = vmatprep.subr.mxu0 0.0
      %437 = vmatpush1.msra.mxu0 %v283
      %438 = vmatprep.subr.mxu0 0.0
      %439 = vmatpush1.msra.mxu0 %v284
      %440 = vmatprep.subr.mxu0 0.0
      %441 = vmatpush1.msra.mxu0 %v285
      %442 = vmatprep.subr.mxu0 0.0
      %443 = vmatpush1.msra.mxu0 %v286
      %444 = vmatprep.subr.mxu0 0.0
      %445 = vmatpush1.msra.mxu0 %v287
      %446 = vmatprep.subr.mxu0 0.0
      %447 = vmatpush1.msra.mxu0 %v288
      %448 = vmatprep.subr.mxu0 0.0
      %449 = vmatpush1.msra.mxu0 %v289
      %450 = vmatprep.subr.mxu0 0.0
      %451 = vmatpush1.msra.mxu0 %v290
      %452 = vmatprep.subr.mxu0 0.0
      %453 = vmatpush1.msra.mxu0 %v291
      %454 = vmatprep.subr.mxu0 0.0
      %455 = vmatpush1.msra.mxu0 %v292
      %456 = vmatprep.subr.mxu0 0.0
      %457 = vmatpush1.msra.mxu0 %v293
      %458 = vmatprep.subr.mxu0 0.0
      %459 = vmatpush1.msra.mxu0 %v294
      %460 = vmatprep.subr.mxu0 0.0
      %461 = vmatpush1.msra.mxu0 %v295
      %462 = vmatprep.subr.mxu0 0.0
      %463 = vmatpush1.msra.mxu0 %v296
      %464 = vmatprep.mubr.f32.mxu0 %v234
      %465 = vmatmul.mubr.f32.gmra.mrb[0].mxu0 %v233
      %v466 = vpop.f32.mrb[0].mxu0
      %v467 = vadd.f32 %v398, %v466
      %v468 = vpop.f32.mrb[0].mxu0
      %469 = vmatprep.mubr.f32.mxu0 %v242
      %470 = vmatmul.mubr.f32.gmra.mrb[0].mxu0 %v241
      %v471 = vpop.f32.mrb[0].mxu0
      %v472 = vadd.f32 %v398, %v471
      %v473 = vpop.f32.mrb[0].mxu0
      %474 = vmatprep.mubr.f32.mxu0 %v250
      %475 = vmatmul.mubr.f32.gmra.mrb[0].mxu0 %v249
      %v476 = vpop.f32.mrb[0].mxu0
      %v477 = vadd.f32 %v398, %v476
      %v478 = vpop.f32.mrb[0].mxu0
      %479 = vmatprep.mubr.f32.mxu0 %v258
      %480 = vmatmul.mubr.f32.gmra.mrb[0].mxu0 %v257
      %v481 = vpop.f32.mrb[0].mxu0
      %v482 = vadd.f32 %v398, %v481
      %v483 = vpop.f32.mrb[0].mxu0
      %484 = vdwg.mxu0
      %485 = vmatprep.subr.mxu0 0.0
      %486 = vmatpush1.msra.mxu0 %v297
      %487 = vmatprep.subr.mxu0 0.0
      %488 = vmatpush1.msra.mxu0 %v298
      %489 = vmatprep.subr.mxu0 0.0
      %490 = vmatpush1.msra.mxu0 %v299
      %491 = vmatprep.subr.mxu0 0.0
      %492 = vmatpush1.msra.mxu0 %v300
      %493 = vmatprep.subr.mxu0 0.0
      %494 = vmatpush1.msra.mxu0 %v301
      %495 = vmatprep.subr.mxu0 0.0
      %496 = vmatpush1.msra.mxu0 %v302
      %497 = vmatprep.subr.mxu0 0.0
      %498 = vmatpush1.msra.mxu0 %v303
      %499 = vmatprep.subr.mxu0 0.0
      %500 = vmatpush1.msra.mxu0 %v304
      %501 = vmatprep.subr.mxu0 0.0
      %502 = vmatpush1.msra.mxu0 %v305
      %503 = vmatprep.subr.mxu0 0.0
      %504 = vmatpush1.msra.mxu0 %v306
      %505 = vmatprep.subr.mxu0 0.0
      %506 = vmatpush1.msra.mxu0 %v307
      %507 = vmatprep.subr.mxu0 0.0
      %508 = vmatpush1.msra.mxu0 %v308
      %509 = vmatprep.subr.mxu0 0.0
      %510 = vmatpush1.msra.mxu0 %v309
      %511 = vmatprep.subr.mxu0 0.0
      %512 = vmatpush1.msra.mxu0 %v310
      %513 = vmatprep.subr.mxu0 0.0
      %514 = vmatpush1.msra.mxu0 %v311
      %515 = vmatprep.subr.mxu0 0.0
      %516 = vmatpush1.msra.mxu0 %v312
      %517 = vmatprep.subr.mxu0 0.0
      %518 = vmatpush1.msra.mxu0 %v313
      %519 = vmatprep.subr.mxu0 0.0
      %520 = vmatpush1.msra.mxu0 %v314
      %521 = vmatprep.subr.mxu0 0.0
      %522 = vmatpush1.msra.mxu0 %v315
      %523 = vmatprep.subr.mxu0 0.0
      %524 = vmatpush1.msra.mxu0 %v316
      %525 = vmatprep.subr.mxu0 0.0
      %526 = vmatpush1.msra.mxu0 %v317
      %527 = vmatprep.subr.mxu0 0.0
      %528 = vmatpush1.msra.mxu0 %v318
      %529 = vmatprep.subr.mxu0 0.0
      %530 = vmatpush1.msra.mxu0 %v319
      %531 = vmatprep.subr.mxu0 0.0
      %532 = vmatpush1.msra.mxu0 %v320
      %533 = vmatprep.subr.mxu0 0.0
      %534 = vmatpush1.msra.mxu0 %v321
      %535 = vmatprep.subr.mxu0 0.0
      %536 = vmatpush1.msra.mxu0 %v322
      %537 = vmatprep.subr.mxu0 0.0
      %538 = vmatpush1.msra.mxu0 %v323
      %539 = vmatprep.subr.mxu0 0.0
      %540 = vmatpush1.msra.mxu0 %v324
      %541 = vmatprep.subr.mxu0 0.0
      %542 = vmatpush1.msra.mxu0 %v325
      %543 = vmatprep.subr.mxu0 0.0
      %544 = vmatpush1.msra.mxu0 %v326
      %545 = vmatprep.subr.mxu0 0.0
      %546 = vmatpush1.msra.mxu0 %v327
      %547 = vmatprep.subr.mxu0 0.0
      %548 = vmatpush1.msra.mxu0 %v328
      %549 = vmatprep.mubr.f32.mxu0 %v236
      %550 = vmatmul.mubr.f32.gmra.mrb[0].mxu0 %v235
      %v551 = vpop.f32.mrb[0].mxu0
      %v552 = vadd.f32 %v467, %v551
      %v553 = vpop.f32.mrb[0].mxu0
      %554 = vmatprep.mubr.f32.mxu0 %v244
      %555 = vmatmul.mubr.f32.gmra.mrb[0].mxu0 %v243
      %v556 = vpop.f32.mrb[0].mxu0
      %v557 = vadd.f32 %v472, %v556
      %v558 = vpop.f32.mrb[0].mxu0
      %559 = vmatprep.mubr.f32.mxu0 %v252
      %560 = vmatmul.mubr.f32.gmra.mrb[0].mxu0 %v251
      %v561 = vpop.f32.mrb[0].mxu0
      %v562 = vadd.f32 %v477, %v561
      %v563 = vpop.f32.mrb[0].mxu0
      %564 = vmatprep.mubr.f32.mxu0 %v260
      %565 = vmatmul.mubr.f32.gmra.mrb[0].mxu0 %v259
      %v566 = vpop.f32.mrb[0].mxu0
      %v567 = vadd.f32 %v482, %v566
      %v568 = vpop.f32.mrb[0].mxu0
      %569 = vdwg.mxu0
      %570 = vmatprep.subr.mxu0 0.0
      %571 = vmatpush1.msra.mxu0 %v329
      %572 = vmatprep.subr.mxu0 0.0
      %573 = vmatpush1.msra.mxu0 %v330
      %574 = vmatprep.subr.mxu0 0.0
      %575 = vmatpush1.msra.mxu0 %v331
      %576 = vmatprep.subr.mxu0 0.0
      %577 = vmatpush1.msra.mxu0 %v332
      %578 = vmatprep.subr.mxu0 0.0
      %579 = vmatpush1.msra.mxu0 %v333
      %580 = vmatprep.subr.mxu0 0.0
      %581 = vmatpush1.msra.mxu0 %v334
      %582 = vmatprep.subr.mxu0 0.0
      %583 = vmatpush1.msra.mxu0 %v335
      %584 = vmatprep.subr.mxu0 0.0
      %585 = vmatpush1.msra.mxu0 %v336
      %586 = vmatprep.subr.mxu0 0.0
      %587 = vmatpush1.msra.mxu0 %v337
      %588 = vmatprep.subr.mxu0 0.0
      %589 = vmatpush1.msra.mxu0 %v338
      %590 = vmatprep.subr.mxu0 0.0
      %591 = vmatpush1.msra.mxu0 %v339
      %592 = vmatprep.subr.mxu0 0.0
      %593 = vmatpush1.msra.mxu0 %v340
      %594 = vmatprep.subr.mxu0 0.0
      %595 = vmatpush1.msra.mxu0 %v341
      %596 = vmatprep.subr.mxu0 0.0
      %597 = vmatpush1.msra.mxu0 %v342
      %598 = vmatprep.subr.mxu0 0.0
      %599 = vmatpush1.msra.mxu0 %v343
      %600 = vmatprep.subr.mxu0 0.0
      %601 = vmatpush1.msra.mxu0 %v344
      %602 = vmatprep.subr.mxu0 0.0
      %603 = vmatpush1.msra.mxu0 %v345
      %604 = vmatprep.subr.mxu0 0.0
      %605 = vmatpush1.msra.mxu0 %v346
      %606 = vmatprep.subr.mxu0 0.0
      %607 = vmatpush1.msra.mxu0 %v347
      %608 = vmatprep.subr.mxu0 0.0
      %609 = vmatpush1.msra.mxu0 %v348
      %610 = vmatprep.subr.mxu0 0.0
      %611 = vmatpush1.msra.mxu0 %v349
      %612 = vmatprep.subr.mxu0 0.0
      %613 = vmatpush1.msra.mxu0 %v350
      %614 = vmatprep.subr.mxu0 0.0
      %615 = vmatpush1.msra.mxu0 %v351
      %616 = vmatprep.subr.mxu0 0.0
      %617 = vmatpush1.msra.mxu0 %v352
      %618 = vmatprep.subr.mxu0 0.0
      %619 = vmatpush1.msra.mxu0 %v353
      %620 = vmatprep.subr.mxu0 0.0
      %621 = vmatpush1.msra.mxu0 %v354
      %622 = vmatprep.subr.mxu0 0.0
      %623 = vmatpush1.msra.mxu0 %v355
      %624 = vmatprep.subr.mxu0 0.0
      %625 = vmatpush1.msra.mxu0 %v356
      %626 = vmatprep.subr.mxu0 0.0
      %627 = vmatpush1.msra.mxu0 %v357
      %628 = vmatprep.subr.mxu0 0.0
      %629 = vmatpush1.msra.mxu0 %v358
      %630 = vmatprep.subr.mxu0 0.0
      %631 = vmatpush1.msra.mxu0 %v359
      %632 = vmatprep.subr.mxu0 0.0
      %633 = vmatpush1.msra.mxu0 %v360
      %634 = vmatprep.mubr.f32.mxu0 %v238
      %635 = vmatmul.mubr.f32.gmra.mrb[0].mxu0 %v237
      %v636 = vpop.f32.mrb[0].mxu0
      %v637 = vadd.f32 %v552, %v636
      %v638 = vpop.f32.mrb[0].mxu0
      %639 = vmatprep.mubr.f32.mxu0 %v246
      %640 = vmatmul.mubr.f32.gmra.mrb[0].mxu0 %v245
      %v641 = vpop.f32.mrb[0].mxu0
      %v642 = vadd.f32 %v557, %v641
      %v643 = vpop.f32.mrb[0].mxu0
      %644 = vmatprep.mubr.f32.mxu0 %v254
      %645 = vmatmul.mubr.f32.gmra.mrb[0].mxu0 %v253
      %v646 = vpop.f32.mrb[0].mxu0
      %v647 = vadd.f32 %v562, %v646
      %v648 = vpop.f32.mrb[0].mxu0
      %649 = vmatprep.mubr.f32.mxu0 %v262
      %650 = vmatmul.mubr.f32.gmra.mrb[0].mxu0 %v261
      %v651 = vpop.f32.mrb[0].mxu0
      %v652 = vadd.f32 %v567, %v651
      %v653 = vpop.f32.mrb[0].mxu0
      %654 = vdwg.mxu0
      %655 = vmatprep.subr.mxu0 0.0
      %656 = vmatpush1.msra.mxu0 %v361
      %657 = vmatprep.subr.mxu0 0.0
      %658 = vmatpush1.msra.mxu0 %v362
      %659 = vmatprep.subr.mxu0 0.0
      %660 = vmatpush1.msra.mxu0 %v363
      %661 = vmatprep.subr.mxu0 0.0
      %662 = vmatpush1.msra.mxu0 %v364
      %663 = vmatprep.subr.mxu0 0.0
      %664 = vmatpush1.msra.mxu0 %v365
      %665 = vmatprep.subr.mxu0 0.0
      %666 = vmatpush1.msra.mxu0 %v366
      %667 = vmatprep.subr.mxu0 0.0
      %668 = vmatpush1.msra.mxu0 %v367
      %669 = vmatprep.subr.mxu0 0.0
      %670 = vmatpush1.msra.mxu0 %v368
      %671 = vmatprep.subr.mxu0 0.0
      %672 = vmatpush1.msra.mxu0 %v369
      %673 = vmatprep.subr.mxu0 0.0
      %674 = vmatpush1.msra.mxu0 %v370
      %675 = vmatprep.subr.mxu0 0.0
      %676 = vmatpush1.msra.mxu0 %v371
      %677 = vmatprep.subr.mxu0 0.0
      %678 = vmatpush1.msra.mxu0 %v372
      %679 = vmatprep.subr.mxu0 0.0
      %680 = vmatpush1.msra.mxu0 %v373
      %681 = vmatprep.subr.mxu0 0.0
      %682 = vmatpush1.msra.mxu0 %v374
      %683 = vmatprep.subr.mxu0 0.0
      %684 = vmatpush1.msra.mxu0 %v375
      %685 = vmatprep.subr.mxu0 0.0
      %686 = vmatpush1.msra.mxu0 %v376
      %687 = vmatprep.subr.mxu0 0.0
      %688 = vmatpush1.msra.mxu0 %v377
      %689 = vmatprep.subr.mxu0 0.0
      %690 = vmatpush1.msra.mxu0 %v378
      %691 = vmatprep.subr.mxu0 0.0
      %692 = vmatpush1.msra.mxu0 %v379
      %693 = vmatprep.subr.mxu0 0.0
      %694 = vmatpush1.msra.mxu0 %v380
      %695 = vmatprep.subr.mxu0 0.0
      %696 = vmatpush1.msra.mxu0 %v381
      %697 = vmatprep.subr.mxu0 0.0
      %698 = vmatpush1.msra.mxu0 %v382
      %699 = vmatprep.subr.mxu0 0.0
      %700 = vmatpush1.msra.mxu0 %v383
      %701 = vmatprep.subr.mxu0 0.0
      %702 = vmatpush1.msra.mxu0 %v384
      %703 = vmatprep.subr.mxu0 0.0
      %704 = vmatpush1.msra.mxu0 %v385
      %705 = vmatprep.subr.mxu0 0.0
      %706 = vmatpush1.msra.mxu0 %v386
      %707 = vmatprep.subr.mxu0 0.0
      %708 = vmatpush1.msra.mxu0 %v387
      %709 = vmatprep.subr.mxu0 0.0
      %710 = vmatpush1.msra.mxu0 %v388
      %711 = vmatprep.subr.mxu0 0.0
      %712 = vmatpush1.msra.mxu0 %v389
      %713 = vmatprep.subr.mxu0 0.0
      %714 = vmatpush1.msra.mxu0 %v390
      %715 = vmatprep.subr.mxu0 0.0
      %716 = vmatpush1.msra.mxu0 %v391
      %717 = vmatprep.subr.mxu0 0.0
      %718 = vmatpush1.msra.mxu0 %v392
      %719 = vmatprep.mubr.f32.mxu0 %v240
      %720 = vmatmul.mubr.f32.gmra.mrb[0].mxu0 %v239
      %v721 = vpop.f32.mrb[0].mxu0
      %v722 = vadd.f32 %v637, %v721
      %v723 = vpop.f32.mrb[0].mxu0
      %724 = vmatprep.mubr.f32.mxu0 %v248
      %725 = vmatmul.mubr.f32.gmra.mrb[0].mxu0 %v247
      %v726 = vpop.f32.mrb[0].mxu0
      %v727 = vadd.f32 %v642, %v726
      %v728 = vpop.f32.mrb[0].mxu0
      %729 = vmatprep.mubr.f32.mxu0 %v256
      %730 = vmatmul.mubr.f32.gmra.mrb[0].mxu0 %v255
      %v731 = vpop.f32.mrb[0].mxu0
      %v732 = vadd.f32 %v647, %v731
      %v733 = vpop.f32.mrb[0].mxu0
      %734 = vmatprep.mubr.f32.mxu0 %v264
      %735 = vmatmul.mubr.f32.gmra.mrb[0].mxu0 %v263
      %v736 = vpop.f32.mrb[0].mxu0
      %v737 = vadd.f32 %v652, %v736
      %v738 = vpop.f32.mrb[0].mxu0
      %739 = vdwg.mxu0
      %v740 = vmax.f32 %v722, 0.0
      %v741 = vmax.f32 %v727, 0.0
      %v742 = vmax.f32 %v732, 0.0
      %v743 = vmax.f32 %v737, 0.0
      %744 = vst [vmem:[%s231] sm:$0xff] %v740
      %745 = vst [vmem:[%s231 + $0x8] sm:$0xff] %v741
      %746 = vst [vmem:[%s231 + $0x10] sm:$0xff] %v742
      %747 = vst [vmem:[%s231 + $0x18] sm:$0xff] %v743
      %s748 = smul.u32 4, %s19
      %p749 = scmp.lt.s32.totalorder %s18, 3
      %s750 = scalar_select %p749, %s18, 3
      %p751 = scmp.lt.s32.totalorder %s748, 3
      %s752 = scalar_select %p751, %s748, 3
      %s753 = smul.addr %s750, 4
      %s754 = sadd.s32 %s752, %s753
      %s755 = smul.addr %s754, 8
      %s756 = scalar_lea.vmem %s3, %s755
      // Predicated region
      $region33: #{_lambda_.11} parent=31 // pred_check
        %p757 = pneg %p121
      $region34: #{_lambda_.11} parent=31 // pred_check_branch
        %759 = sbr.rel (%p757) target = $region36
      $region35: #{_lambda_.11} parent=31 // pred_region
        %s760 = smul.u32 4, %s19
      $region36: #{_lambda_.11} parent=31 // pred_fallthru
        _
    $region32: #{_lambda_.11} parent=5 // pred_fallthru
      _
    %p761 = scmp.le.s32.totalorder 2, %s9
    // Predicated region
    $region37: #{_lambda_.11} parent=5 // pred_check
      %p762 = pneg %p761
    $region38: #{_lambda_.11} parent=5 // pred_check_branch
      %764 = sbr.rel (%p762) target = $region40
    $region39: #{_lambda_.11} parent=5 // pred_region
      %s765 = ssub.s32 %s9, 2
      // Predicated region
      $region41: #{_lambda_.11} parent=39 // pred_check
        %p766 = pneg %p127
      $region42: #{_lambda_.11} parent=39 // pred_check_branch
        %768 = sbr.rel (%p766) target = $region44
      $region43: #{_lambda_.11} parent=39 // pred_region
        %s769 = smul.u32 4, %s21
        %p770 = scmp.lt.s32.totalorder %s20, 3
        %s771 = scalar_select %p770, %s20, 3
        %p772 = scmp.lt.s32.totalorder %s769, 3
        %s773 = scalar_select %p772, %s769, 3
        %s774 = smul.addr %s771, 4
        %s775 = sadd.s32 %s773, %s774
        %s776 = smul.addr %s775, 8
        %s777 = scalar_lea.vmem %s3, %s776
      $region44: #{_lambda_.11} parent=39 // pred_fallthru
        _
    $region40: #{_lambda_.11} parent=5 // pred_fallthru
      _
  $region6: #{_lambda_.11} parent=0 // loop_footer
    %s13 = sadd.s32 1, %s9
  $region7: #{_lambda_.11} parent=0 // loop_footer_branch
    %8 = sbr.rel target = $region3
  $region8: #{_lambda_.11} parent=0 // loop_exit
    _

// kernel: _lambda_.12
$region0: #{_lambda_.12}
  #allocation0 [shape = 'u32[]', space=smem, size = 0x4, offset = 0x4, fixed_abs, tag = 'smem constant byte address 0x4 - core index']
  #allocation1 [shape = 'u32[144,128]{1,0:T(1,128)}', space=vmem, size = 0x12000, scoped, tag = 'internal scratch']
  %s0 = inlined_call_operand.vmem [shape: f32[4,128,512], index: 0, kind: input, shape index: {}]
  %s1 = inlined_call_operand.vmem [shape: f32[4,512,128], index: 1, kind: input, shape index: {}]
  %s2 = inlined_call_operand.vmem [shape: f32[1,128], index: 2, kind: input, shape index: {}]
  %s3 = inlined_call_operand.vmem [shape: f32[4,128,128], index: 3, kind: output, shape index: {}]
  %s4 = sld [smem:[#allocation0]]
  $region45: #{_lambda_.12} parent=0
    _
  %s6 = ssub.s32 1, %s4
  %s7 = scalar_select 0, %s6, %s4
  loop: start=0, step=1, limit=6
  $region2: #{_lambda_.12} parent=0 // loop_pre_header
    _
  $region3: #{_lambda_.12} parent=0 // loop_header
    %s9 = sphi 0, %s13
    %p10 = scmp.ge.s32.totalorder %s9, 6
    %s16 = sphi 0, %s28
    %s17 = sphi 0, %s24
    %s18 = sphi 0, %s16
    %s19 = sphi 0, %s17
    %s20 = sphi 0, %s18
    %s21 = sphi 0, %s19
    %s33 = sphi 0, %s35
    %s36 = sphi 0, %s33
    %s37 = sphi 0, %s36
    %s53 = sphi 0, %s37
    %s59 = sphi 0, %s61
    %s62 = sphi 0, %s59
    %s63 = sphi 0, %s62
    %s79 = sphi 0, %s63
    %s83 = sphi 0, %s83
    %s85 = sphi 0, %s83
    %s86 = sphi 0, %s85
    %s100 = sphi 0, %s86
    %s108 = sphi 0, %s110
    %s111 = sphi 0, %s108
    %s112 = sphi 0, %s111
    %s128 = sphi 0, %s112
  $region4: #{_lambda_.12} parent=0 // loop_header_branch
    %12 = sbr.rel (%p10) target = $region8
  $region5: #{_lambda_.12} parent=0 // loop_body
    %s14 = ssub.s32 %s9, 1
    %s15 = ssub.s32 %s9, 2
    %s22 = sadd.s32 1, %s17
    %p23 = scmp.ge.s32.totalorder %s22, 1
    %s24 = scalar_select %p23, 0, %s22
    %s25 = sadd.s32 1, %s16
    %s26 = scalar_select %p23, %s25, %s16
    %p27 = scmp.ge.s32.totalorder %s26, 4
    %s28 = scalar_select %p27, 0, %s26
    %s29 = ssub.s32 %s16, %s28
    %s30 = ssub.s32 %s17, %s24
    %s31 = sor.u32 %s29, %s30
    %p32 = scmp.eq.s32.totalorder %s31, 0
    %s34 = sadd.s32 %s33, 1
    %s35 = scalar_select %p32, %s33, %s34
    %p38 = pneg %p32
    %p39 = scmp.eq.s32.totalorder %s9, 3
    %p40 = por %p38, %p39
    %p41 = scmp.ne.s32.totalorder %s33, %s36
    %p42 = scmp.eq.s32.totalorder %s9, 0
    %p43 = por %p41, %p42
    %p44 = scmp.ne.s32.totalorder %s33, %s36
    %p45 = scmp.eq.s32.totalorder %s14, 3
    %p46 = por %p44, %p45
    %p47 = scmp.ne.s32.totalorder %s36, %s37
    %p48 = scmp.eq.s32.totalorder %s14, 0
    %p49 = por %p47, %p48
    %p50 = scmp.ne.s32.totalorder %s36, %s37
    %p51 = scmp.eq.s32.totalorder %s15, 3
    %p52 = por %p50, %p51
    %p54 = scmp.ne.s32.totalorder %s37, %s53
    %p55 = scmp.eq.s32.totalorder %s15, 0
    %p56 = por %p54, %p55
    %s57 = ssub.s32 %s16, %s28
    %p58 = scmp.eq.s32.totalorder %s57, 0
    %s60 = sadd.s32 %s59, 1
    %s61 = scalar_select %p58, %s59, %s60
    %p64 = pneg %p58
    %p65 = scmp.eq.s32.totalorder %s9, 3
    %p66 = por %p64, %p65
    %p67 = scmp.ne.s32.totalorder %s59, %s62
    %p68 = scmp.eq.s32.totalorder %s9, 0
    %p69 = por %p67, %p68
    %p70 = scmp.ne.s32.totalorder %s59, %s62
    %p71 = scmp.eq.s32.totalorder %s14, 3
    %p72 = por %p70, %p71
    %p73 = scmp.ne.s32.totalorder %s62, %s63
    %p74 = scmp.eq.s32.totalorder %s14, 0
    %p75 = por %p73, %p74
    %p76 = scmp.ne.s32.totalorder %s62, %s63
    %p77 = scmp.eq.s32.totalorder %s15, 3
    %p78 = por %p76, %p77
    %p80 = scmp.ne.s32.totalorder %s63, %s79
    %p81 = scmp.eq.s32.totalorder %s15, 0
    %p82 = por %p80, %p81
    %s84 = sadd.s32 %s83, 1
    %p87 = scmp.eq.s32.totalorder %s9, 3
    %p88 = scmp.ne.s32.totalorder %s83, %s85
    %p89 = scmp.eq.s32.totalorder %s9, 0
    %p90 = por %p88, %p89
    %p91 = scmp.ne.s32.totalorder %s83, %s85
    %p92 = scmp.eq.s32.totalorder %s14, 3
    %p93 = por %p91, %p92
    %p94 = scmp.ne.s32.totalorder %s85, %s86
    %p95 = scmp.eq.s32.totalorder %s14, 0
    %p96 = por %p94, %p95
    %p97 = scmp.ne.s32.totalorder %s85, %s86
    %p98 = scmp.eq.s32.totalorder %s15, 3
    %p99 = por %p97, %p98
    %p101 = scmp.ne.s32.totalorder %s86, %s100
    %p102 = scmp.eq.s32.totalorder %s15, 0
    %p103 = por %p101, %p102
    %s104 = ssub.s32 %s16, %s28
    %s105 = ssub.s32 %s17, %s24
    %s106 = sor.u32 %s104, %s105
    %p107 = scmp.eq.s32.totalorder %s106, 0
    %s109 = sadd.s32 %s108, 1
    %s110 = scalar_select %p107, %s108, %s109
    %p113 = pneg %p107
    %p114 = scmp.eq.s32.totalorder %s9, 3
    %p115 = por %p113, %p114
    %p116 = scmp.ne.s32.totalorder %s108, %s111
    %p117 = scmp.eq.s32.totalorder %s9, 0
    %p118 = por %p116, %p117
    %p119 = scmp.ne.s32.totalorder %s108, %s111
    %p120 = scmp.eq.s32.totalorder %s14, 3
    %p121 = por %p119, %p120
    %p122 = scmp.ne.s32.totalorder %s111, %s112
    %p123 = scmp.eq.s32.totalorder %s14, 0
    %p124 = por %p122, %p123
    %p125 = scmp.ne.s32.totalorder %s111, %s112
    %p126 = scmp.eq.s32.totalorder %s15, 3
    %p127 = por %p125, %p126
    %p129 = scmp.ne.s32.totalorder %s112, %s128
    %p130 = scmp.eq.s32.totalorder %s15, 0
    %p131 = por %p129, %p130
    %p132 = scmp.le.s32.totalorder 1, %s9
    %p133 = scmp.lt.s32.totalorder %s9, 5
    %p134 = pnand %p132, %p133
    %p135 = pneg %p134
    // Predicated region
    $region9: #{_lambda_.12} parent=5 // pred_check
      _
    $region10: #{_lambda_.12} parent=5 // pred_check_branch
      %137 = sbr.rel (%p134) target = $region12
    $region11: #{_lambda_.12} parent=5 // pred_region
      %s138 = ssub.s32 %s9, 1
      // Predicated region
      $region13: #{_lambda_.12} parent=11 // pred_check
        %p139 = pneg %p96
      $region14: #{_lambda_.12} parent=11 // pred_check_branch
        %141 = sbr.rel (%p139) target = $region16
      $region15: #{_lambda_.12} parent=11 // pred_region
        _
      $region16: #{_lambda_.12} parent=11 // pred_fallthru
        _
    $region12: #{_lambda_.12} parent=5 // pred_fallthru
      _
    %p142 = scmp.lt.s32.totalorder %s9, 4
    // Predicated region
    $region17: #{_lambda_.12} parent=5 // pred_check
      %p143 = pneg %p142
    $region18: #{_lambda_.12} parent=5 // pred_check_branch
      %145 = sbr.rel (%p143) target = $region20
    $region19: #{_lambda_.12} parent=5 // pred_region
      // Predicated region
      $region21: #{_lambda_.12} parent=19 // pred_check
        %p146 = pneg %p43
      $region22: #{_lambda_.12} parent=19 // pred_check_branch
        %148 = sbr.rel (%p146) target = $region24
      $region23: #{_lambda_.12} parent=19 // pred_region
        %s149 = smul.u32 16, %s17
        %p150 = scmp.lt.s32.totalorder %s16, 3
        %s151 = scalar_select %p150, %s16, 3
        %p152 = scmp.lt.s32.totalorder %s149, 15
        %s153 = scalar_select %p152, %s149, 15
        %s154 = smul.addr %s153, 4
        %s155 = smul.addr %s151, 64
        %s156 = sadd.s32 %s154, %s155
        %s157 = smul.addr %s156, 8
        %s158 = scalar_lea.vmem %s0, %s157
        %s159 = smul.u32 16, %s17
      $region24: #{_lambda_.12} parent=19 // pred_fallthru
        _
      // Predicated region
      $region25: #{_lambda_.12} parent=19 // pred_check
        %p160 = pneg %p69
      $region26: #{_lambda_.12} parent=19 // pred_check_branch
        %162 = sbr.rel (%p160) target = $region28
      $region27: #{_lambda_.12} parent=19 // pred_region
        %p163 = scmp.lt.s32.totalorder %s16, 3
        %s164 = scalar_select %p163, %s16, 3
        %s165 = smul.addr %s164, 64
        %s166 = smul.addr %s165, 8
        %s167 = scalar_lea.vmem %s1, %s166
      $region28: #{_lambda_.12} parent=19 // pred_fallthru
        _
    $region20: #{_lambda_.12} parent=5 // pred_fallthru
      _
    %p168 = scmp.le.s32.totalorder 1, %s9
    %p169 = scmp.lt.s32.totalorder %s9, 5
    %p170 = pnand %p168, %p169
    %p171 = pneg %p170
    // Predicated region
    $region29: #{_lambda_.12} parent=5 // pred_check
      _
    $region30: #{_lambda_.12} parent=5 // pred_check_branch
      %173 = sbr.rel (%p170) target = $region32
    $region31: #{_lambda_.12} parent=5 // pred_region
      %s174 = ssub.s32 %s9, 1
      %s175 = smul.u32 16, %s19
      %p176 = scmp.lt.s32.totalorder %s18, 3
      %s177 = scalar_select %p176, %s18, 3
      %p178 = scmp.lt.s32.totalorder %s175, 15
      %s179 = scalar_select %p178, %s175, 15
      %s180 = smul.addr %s179, 4
      %s181 = smul.addr %s177, 64
      %s182 = sadd.s32 %s180, %s181
      %s183 = smul.addr %s182, 8
      %s184 = scalar_lea.vmem %s0, %s183
      %p185 = pneg %p49
      %p186 = pneg %p46
      %p187 = scmp.lt.s32.totalorder %s18, 3
      %s188 = scalar_select %p187, %s18, 3
      %s189 = smul.addr %s188, 64
      %s190 = smul.addr %s189, 8
      %s191 = scalar_lea.vmem %s1, %s190
      %p192 = pneg %p75
      %p193 = pneg %p72
      %p194 = pneg %p96
      %p195 = pneg %p93
      %p196 = pneg %p124
      %p197 = pneg %p121
      %s198 = smul.u32 16, %s19
      %p199 = scmp.lt.s32.totalorder %s18, 3
      %s200 = scalar_select %p199, %s18, 3
      %p201 = scmp.lt.s32.totalorder %s198, 15
      %s202 = scalar_select %p201, %s198, 15
      %s203 = smul.addr %s200, 16
      %s204 = sadd.s32 %s202, %s203
      %s205 = smul.addr %s204, 8
      %s206 = scalar_lea.vmem %s3, %s205
      %s207 = smul.u32 16, %s19
      %p208 = scmp.lt.s32.totalorder %s18, 3
      %s209 = scalar_select %p208, %s18, 3
      %p210 = scmp.lt.s32.totalorder %s207, 15
      %s211 = scalar_select %p210, %s207, 15
      %s212 = smul.addr %s211, 4
      %s213 = smul.addr %s209, 64
      %s214 = sadd.s32 %s212, %s213
      %s215 = smul.addr %s214, 8
      %s216 = scalar_lea.vmem %s0, %s215
      %s217 = smul.u32 16, %s19
      %p218 = scmp.lt.s32.totalorder %s18, 3
      %s219 = scalar_select %p218, %s18, 3
      %s220 = smul.addr %s219, 64
      %s221 = smul.addr %s220, 8
      %s222 = scalar_lea.vmem %s1, %s221
      %s223 = smul.u32 16, %s19
      %p224 = scmp.lt.s32.totalorder %s18, 3
      %s225 = scalar_select %p224, %s18, 3
      %p226 = scmp.lt.s32.totalorder %s223, 15
      %s227 = scalar_select %p226, %s223, 15
      %s228 = smul.addr %s225, 16
      %s229 = sadd.s32 %s227, %s228
      %s230 = smul.addr %s229, 8
      %s231 = scalar_lea.vmem %s3, %s230
      %s232 = smul.u32 16, %s19
      %v233 = vld [vmem:[%s216] sm:$0xff]
      %v234 = vld [vmem:[%s216 + $0x8] sm:$0xff]
      %v235 = vld [vmem:[%s216 + $0x10] sm:$0xff]
      %v236 = vld [vmem:[%s216 + $0x18] sm:$0xff]
      %v237 = vld [vmem:[%s216 + $0x20] sm:$0xff]
      %v238 = vld [vmem:[%s216 + $0x28] sm:$0xff]
      %v239 = vld [vmem:[%s216 + $0x30] sm:$0xff]
      %v240 = vld [vmem:[%s216 + $0x38] sm:$0xff]
      %v241 = vld [vmem:[%s216 + $0x40] sm:$0xff]
      %v242 = vld [vmem:[%s216 + $0x48] sm:$0xff]
      %v243 = vld [vmem:[%s216 + $0x50] sm:$0xff]
      %v244 = vld [vmem:[%s216 + $0x58] sm:$0xff]
      %v245 = vld [vmem:[%s216 + $0x60] sm:$0xff]
      %v246 = vld [vmem:[%s216 + $0x68] sm:$0xff]
      %v247 = vld [vmem:[%s216 + $0x70] sm:$0xff]
      %v248 = vld [vmem:[%s216 + $0x78] sm:$0xff]
      %v249 = vld [vmem:[%s216 + $0x80] sm:$0xff]
      %v250 = vld [vmem:[%s216 + $0x88] sm:$0xff]
      %v251 = vld [vmem:[%s216 + $0x90] sm:$0xff]
      %v252 = vld [vmem:[%s216 + $0x98] sm:$0xff]
      %v253 = vld [vmem:[%s216 + $0xa0] sm:$0xff]
      %v254 = vld [vmem:[%s216 + $0xa8] sm:$0xff]
      %v255 = vld [vmem:[%s216 + $0xb0] sm:$0xff]
      %v256 = vld [vmem:[%s216 + $0xb8] sm:$0xff]
      %v257 = vld [vmem:[%s216 + $0xc0] sm:$0xff]
      %v258 = vld [vmem:[%s216 + $0xc8] sm:$0xff]
      %v259 = vld [vmem:[%s216 + $0xd0] sm:$0xff]
      %v260 = vld [vmem:[%s216 + $0xd8] sm:$0xff]
      %v261 = vld [vmem:[%s216 + $0xe0] sm:$0xff]
      %v262 = vld [vmem:[%s216 + $0xe8] sm:$0xff]
      %v263 = vld [vmem:[%s216 + $0xf0] sm:$0xff]
      %v264 = vld [vmem:[%s216 + $0xf8] sm:$0xff]
      %v265 = vld [vmem:[%s216 + $0x100] sm:$0xff]
      %v266 = vld [vmem:[%s216 + $0x108] sm:$0xff]
      %v267 = vld [vmem:[%s216 + $0x110] sm:$0xff]
      %v268 = vld [vmem:[%s216 + $0x118] sm:$0xff]
      %v269 = vld [vmem:[%s216 + $0x120] sm:$0xff]
      %v270 = vld [vmem:[%s216 + $0x128] sm:$0xff]
      %v271 = vld [vmem:[%s216 + $0x130] sm:$0xff]
      %v272 = vld [vmem:[%s216 + $0x138] sm:$0xff]
      %v273 = vld [vmem:[%s216 + $0x140] sm:$0xff]
      %v274 = vld [vmem:[%s216 + $0x148] sm:$0xff]
      %v275 = vld [vmem:[%s216 + $0x150] sm:$0xff]
      %v276 = vld [vmem:[%s216 + $0x158] sm:$0xff]
      %v277 = vld [vmem:[%s216 + $0x160] sm:$0xff]
      %v278 = vld [vmem:[%s216 + $0x168] sm:$0xff]
      %v279 = vld [vmem:[%s216 + $0x170] sm:$0xff]
      %v280 = vld [vmem:[%s216 + $0x178] sm:$0xff]
      %v281 = vld [vmem:[%s216 + $0x180] sm:$0xff]
      %v282 = vld [vmem:[%s216 + $0x188] sm:$0xff]
      %v283 = vld [vmem:[%s216 + $0x190] sm:$0xff]
      %v284 = vld [vmem:[%s216 + $0x198] sm:$0xff]
      %v285 = vld [vmem:[%s216 + $0x1a0] sm:$0xff]
      %v286 = vld [vmem:[%s216 + $0x1a8] sm:$0xff]
      %v287 = vld [vmem:[%s216 + $0x1b0] sm:$0xff]
      %v288 = vld [vmem:[%s216 + $0x1b8] sm:$0xff]
      %v289 = vld [vmem:[%s216 + $0x1c0] sm:$0xff]
      %v290 = vld [vmem:[%s216 + $0x1c8] sm:$0xff]
      %v291 = vld [vmem:[%s216 + $0x1d0] sm:$0xff]
      %v292 = vld [vmem:[%s216 + $0x1d8] sm:$0xff]
      %v293 = vld [vmem:[%s216 + $0x1e0] sm:$0xff]
      %v294 = vld [vmem:[%s216 + $0x1e8] sm:$0xff]
      %v295 = vld [vmem:[%s216 + $0x1f0] sm:$0xff]
      %v296 = vld [vmem:[%s216 + $0x1f8] sm:$0xff]
      %v297 = vld [vmem:[%s222] sm:$0xff]
      %v298 = vld [vmem:[%s222 + $0x8] sm:$0xff]
      %v299 = vld [vmem:[%s222 + $0x10] sm:$0xff]
      %v300 = vld [vmem:[%s222 + $0x18] sm:$0xff]
      %v301 = vld [vmem:[%s222 + $0x20] sm:$0xff]
      %v302 = vld [vmem:[%s222 + $0x28] sm:$0xff]
      %v303 = vld [vmem:[%s222 + $0x30] sm:$0xff]
      %v304 = vld [vmem:[%s222 + $0x38] sm:$0xff]
      %v305 = vld [vmem:[%s222 + $0x40] sm:$0xff]
      %v306 = vld [vmem:[%s222 + $0x48] sm:$0xff]
      %v307 = vld [vmem:[%s222 + $0x50] sm:$0xff]
      %v308 = vld [vmem:[%s222 + $0x58] sm:$0xff]
      %v309 = vld [vmem:[%s222 + $0x60] sm:$0xff]
      %v310 = vld [vmem:[%s222 + $0x68] sm:$0xff]
      %v311 = vld [vmem:[%s222 + $0x70] sm:$0xff]
      %v312 = vld [vmem:[%s222 + $0x78] sm:$0xff]
      %v313 = vld [vmem:[%s222 + $0x80] sm:$0xff]
      %v314 = vld [vmem:[%s222 + $0x88] sm:$0xff]
      %v315 = vld [vmem:[%s222 + $0x90] sm:$0xff]
      %v316 = vld [vmem:[%s222 + $0x98] sm:$0xff]
      %v317 = vld [vmem:[%s222 + $0xa0] sm:$0xff]
      %v318 = vld [vmem:[%s222 + $0xa8] sm:$0xff]
      %v319 = vld [vmem:[%s222 + $0xb0] sm:$0xff]
      %v320 = vld [vmem:[%s222 + $0xb8] sm:$0xff]
      %v321 = vld [vmem:[%s222 + $0xc0] sm:$0xff]
      %v322 = vld [vmem:[%s222 + $0xc8] sm:$0xff]
      %v323 = vld [vmem:[%s222 + $0xd0] sm:$0xff]
      %v324 = vld [vmem:[%s222 + $0xd8] sm:$0xff]
      %v325 = vld [vmem:[%s222 + $0xe0] sm:$0xff]
      %v326 = vld [vmem:[%s222 + $0xe8] sm:$0xff]
      %v327 = vld [vmem:[%s222 + $0xf0] sm:$0xff]
      %v328 = vld [vmem:[%s222 + $0xf8] sm:$0xff]
      %v329 = vld [vmem:[%s222 + $0x100] sm:$0xff]
      %v330 = vld [vmem:[%s222 + $0x108] sm:$0xff]
      %v331 = vld [vmem:[%s222 + $0x110] sm:$0xff]
      %v332 = vld [vmem:[%s222 + $0x118] sm:$0xff]
      %v333 = vld [vmem:[%s222 + $0x120] sm:$0xff]
      %v334 = vld [vmem:[%s222 + $0x128] sm:$0xff]
      %v335 = vld [vmem:[%s222 + $0x130] sm:$0xff]
      %v336 = vld [vmem:[%s222 + $0x138] sm:$0xff]
      %v337 = vld [vmem:[%s222 + $0x140] sm:$0xff]
      %v338 = vld [vmem:[%s222 + $0x148] sm:$0xff]
      %v339 = vld [vmem:[%s222 + $0x150] sm:$0xff]
      %v340 = vld [vmem:[%s222 + $0x158] sm:$0xff]
      %v341 = vld [vmem:[%s222 + $0x160] sm:$0xff]
      %v342 = vld [vmem:[%s222 + $0x168] sm:$0xff]
      %v343 = vld [vmem:[%s222 + $0x170] sm:$0xff]
      %v344 = vld [vmem:[%s222 + $0x178] sm:$0xff]
      %v345 = vld [vmem:[%s222 + $0x180] sm:$0xff]
      %v346 = vld [vmem:[%s222 + $0x188] sm:$0xff]
      %v347 = vld [vmem:[%s222 + $0x190] sm:$0xff]
      %v348 = vld [vmem:[%s222 + $0x198] sm:$0xff]
      %v349 = vld [vmem:[%s222 + $0x1a0] sm:$0xff]
      %v350 = vld [vmem:[%s222 + $0x1a8] sm:$0xff]
      %v351 = vld [vmem:[%s222 + $0x1b0] sm:$0xff]
      %v352 = vld [vmem:[%s222 + $0x1b8] sm:$0xff]
      %v353 = vld [vmem:[%s222 + $0x1c0] sm:$0xff]
      %v354 = vld [vmem:[%s222 + $0x1c8] sm:$0xff]
      %v355 = vld [vmem:[%s222 + $0x1d0] sm:$0xff]
      %v356 = vld [vmem:[%s222 + $0x1d8] sm:$0xff]
      %v357 = vld [vmem:[%s222 + $0x1e0] sm:$0xff]
      %v358 = vld [vmem:[%s222 + $0x1e8] sm:$0xff]
      %v359 = vld [vmem:[%s222 + $0x1f0] sm:$0xff]
      %v360 = vld [vmem:[%s222 + $0x1f8] sm:$0xff]
      %v361 = vld [vmem:[%s2] sm:$0x1]
      %v363 = vlaneseq
      %v364 = vshrl.u32 %v363, 7
      %v365 = vsub.s32 0, %v364
      %v366 = vrot.slane %v361, %v365
      %368 = vmatprep.subr.mxu0 0.0
      %369 = vmatpush1.msra.mxu0 %v297
      %370 = vmatprep.subr.mxu0 0.0
      %371 = vmatpush1.msra.mxu0 %v298
      %372 = vmatprep.subr.mxu0 0.0
      %373 = vmatpush1.msra.mxu0 %v299
      %374 = vmatprep.subr.mxu0 0.0
      %375 = vmatpush1.msra.mxu0 %v300
      %376 = vmatprep.subr.mxu0 0.0
      %377 = vmatpush1.msra.mxu0 %v301
      %378 = vmatprep.subr.mxu0 0.0
      %379 = vmatpush1.msra.mxu0 %v302
      %380 = vmatprep.subr.mxu0 0.0
      %381 = vmatpush1.msra.mxu0 %v303
      %382 = vmatprep.subr.mxu0 0.0
      %383 = vmatpush1.msra.mxu0 %v304
      %384 = vmatprep.subr.mxu0 0.0
      %385 = vmatpush1.msra.mxu0 %v305
      %386 = vmatprep.subr.mxu0 0.0
      %387 = vmatpush1.msra.mxu0 %v306
      %388 = vmatprep.subr.mxu0 0.0
      %389 = vmatpush1.msra.mxu0 %v307
      %390 = vmatprep.subr.mxu0 0.0
      %391 = vmatpush1.msra.mxu0 %v308
      %392 = vmatprep.subr.mxu0 0.0
      %393 = vmatpush1.msra.mxu0 %v309
      %394 = vmatprep.subr.mxu0 0.0
      %395 = vmatpush1.msra.mxu0 %v310
      %396 = vmatprep.subr.mxu0 0.0
      %397 = vmatpush1.msra.mxu0 %v311
      %398 = vmatprep.subr.mxu0 0.0
      %399 = vmatpush1.msra.mxu0 %v312
      %400 = vmatprep.subr.mxu0 0.0
      %401 = vmatpush1.msra.mxu0 %v313
      %402 = vmatprep.subr.mxu0 0.0
      %403 = vmatpush1.msra.mxu0 %v314
      %404 = vmatprep.subr.mxu0 0.0
      %405 = vmatpush1.msra.mxu0 %v315
      %406 = vmatprep.subr.mxu0 0.0
      %407 = vmatpush1.msra.mxu0 %v316
      %408 = vmatprep.subr.mxu0 0.0
      %409 = vmatpush1.msra.mxu0 %v317
      %410 = vmatprep.subr.mxu0 0.0
      %411 = vmatpush1.msra.mxu0 %v318
      %412 = vmatprep.subr.mxu0 0.0
      %413 = vmatpush1.msra.mxu0 %v319
      %414 = vmatprep.subr.mxu0 0.0
      %415 = vmatpush1.msra.mxu0 %v320
      %416 = vmatprep.subr.mxu0 0.0
      %417 = vmatpush1.msra.mxu0 %v321
      %418 = vmatprep.subr.mxu0 0.0
      %419 = vmatpush1.msra.mxu0 %v322
      %420 = vmatprep.subr.mxu0 0.0
      %421 = vmatpush1.msra.mxu0 %v323
      %422 = vmatprep.subr.mxu0 0.0
      %423 = vmatpush1.msra.mxu0 %v324
      %424 = vmatprep.subr.mxu0 0.0
      %425 = vmatpush1.msra.mxu0 %v325
      %426 = vmatprep.subr.mxu0 0.0
      %427 = vmatpush1.msra.mxu0 %v326
      %428 = vmatprep.subr.mxu0 0.0
      %429 = vmatpush1.msra.mxu0 %v327
      %430 = vmatprep.subr.mxu0 0.0
      %431 = vmatpush1.msra.mxu0 %v328
      %432 = vmatprep.mubr.f32.mxu0 %v234
      %433 = vmatmul.mubr.f32.gmra.mrb[0].mxu0 %v233
      %v434 = vpop.f32.mrb[0].mxu0
      %v435 = vadd.f32 %v366, %v434
      %v436 = vpop.f32.mrb[0].mxu0
      %437 = vmatprep.mubr.f32.mxu0 %v238
      %438 = vmatmul.mubr.f32.gmra.mrb[0].mxu0 %v237
      %v439 = vpop.f32.mrb[0].mxu0
      %v440 = vadd.f32 %v366, %v439
      %v441 = vpop.f32.mrb[0].mxu0
      %442 = vmatprep.mubr.f32.mxu0 %v242
      %443 = vmatmul.mubr.f32.gmra.mrb[0].mxu0 %v241
      %v444 = vpop.f32.mrb[0].mxu0
      %v445 = vadd.f32 %v366, %v444
      %v446 = vpop.f32.mrb[0].mxu0
      %447 = vmatprep.mubr.f32.mxu0 %v246
      %448 = vmatmul.mubr.f32.gmra.mrb[0].mxu0 %v245
      %v449 = vpop.f32.mrb[0].mxu0
      %v450 = vadd.f32 %v366, %v449
      %v451 = vpop.f32.mrb[0].mxu0
      %452 = vmatprep.mubr.f32.mxu0 %v250
      %453 = vmatmul.mubr.f32.gmra.mrb[0].mxu0 %v249
      %v454 = vpop.f32.mrb[0].mxu0
      %v455 = vadd.f32 %v366, %v454
      %v456 = vpop.f32.mrb[0].mxu0
      %457 = vmatprep.mubr.f32.mxu0 %v254
      %458 = vmatmul.mubr.f32.gmra.mrb[0].mxu0 %v253
      %v459 = vpop.f32.mrb[0].mxu0
      %v460 = vadd.f32 %v366, %v459
      %v461 = vpop.f32.mrb[0].mxu0
      %462 = vmatprep.mubr.f32.mxu0 %v258
      %463 = vmatmul.mubr.f32.gmra.mrb[0].mxu0 %v257
      %v464 = vpop.f32.mrb[0].mxu0
      %v465 = vadd.f32 %v366, %v464
      %v466 = vpop.f32.mrb[0].mxu0
      %467 = vmatprep.mubr.f32.mxu0 %v262
      %468 = vmatmul.mubr.f32.gmra.mrb[0].mxu0 %v261
      %v469 = vpop.f32.mrb[0].mxu0
      %v470 = vadd.f32 %v366, %v469
      %v471 = vpop.f32.mrb[0].mxu0
      %472 = vmatprep.mubr.f32.mxu0 %v266
      %473 = vmatmul.mubr.f32.gmra.mrb[0].mxu0 %v265
      %v474 = vpop.f32.mrb[0].mxu0
      %v475 = vadd.f32 %v366, %v474
      %v476 = vpop.f32.mrb[0].mxu0
      %477 = vmatprep.mubr.f32.mxu0 %v270
      %478 = vmatmul.mubr.f32.gmra.mrb[0].mxu0 %v269
      %v479 = vpop.f32.mrb[0].mxu0
      %v480 = vadd.f32 %v366, %v479
      %v481 = vpop.f32.mrb[0].mxu0
      %482 = vmatprep.mubr.f32.mxu0 %v274
      %483 = vmatmul.mubr.f32.gmra.mrb[0].mxu0 %v273
      %v484 = vpop.f32.mrb[0].mxu0
      %v485 = vadd.f32 %v366, %v484
      %v486 = vpop.f32.mrb[0].mxu0
      %487 = vmatprep.mubr.f32.mxu0 %v278
      %488 = vmatmul.mubr.f32.gmra.mrb[0].mxu0 %v277
      %v489 = vpop.f32.mrb[0].mxu0
      %v490 = vadd.f32 %v366, %v489
      %v491 = vpop.f32.mrb[0].mxu0
      %492 = vmatprep.mubr.f32.mxu0 %v282
      %493 = vmatmul.mubr.f32.gmra.mrb[0].mxu0 %v281
      %v494 = vpop.f32.mrb[0].mxu0
      %v495 = vadd.f32 %v366, %v494
      %v496 = vpop.f32.mrb[0].mxu0
      %497 = vmatprep.mubr.f32.mxu0 %v286
      %498 = vmatmul.mubr.f32.gmra.mrb[0].mxu0 %v285
      %v499 = vpop.f32.mrb[0].mxu0
      %v500 = vadd.f32 %v366, %v499
      %v501 = vpop.f32.mrb[0].mxu0
      %502 = vmatprep.mubr.f32.mxu0 %v290
      %503 = vmatmul.mubr.f32.gmra.mrb[0].mxu0 %v289
      %v504 = vpop.f32.mrb[0].mxu0
      %v505 = vadd.f32 %v366, %v504
      %v506 = vpop.f32.mrb[0].mxu0
      %507 = vmatprep.mubr.f32.mxu0 %v294
      %508 = vmatmul.mubr.f32.gmra.mrb[0].mxu0 %v293
      %v509 = vpop.f32.mrb[0].mxu0
      %v510 = vadd.f32 %v366, %v509
      %v511 = vpop.f32.mrb[0].mxu0
      %512 = vdwg.mxu0
      %513 = vmatprep.subr.mxu0 0.0
      %514 = vmatpush1.msra.mxu0 %v329
      %515 = vmatprep.subr.mxu0 0.0
      %516 = vmatpush1.msra.mxu0 %v330
      %517 = vmatprep.subr.mxu0 0.0
      %518 = vmatpush1.msra.mxu0 %v331
      %519 = vmatprep.subr.mxu0 0.0
      %520 = vmatpush1.msra.mxu0 %v332
      %521 = vmatprep.subr.mxu0 0.0
      %522 = vmatpush1.msra.mxu0 %v333
      %523 = vmatprep.subr.mxu0 0.0
      %524 = vmatpush1.msra.mxu0 %v334
      %525 = vmatprep.subr.mxu0 0.0
      %526 = vmatpush1.msra.mxu0 %v335
      %527 = vmatprep.subr.mxu0 0.0
      %528 = vmatpush1.msra.mxu0 %v336
      %529 = vmatprep.subr.mxu0 0.0
      %530 = vmatpush1.msra.mxu0 %v337
      %531 = vmatprep.subr.mxu0 0.0
      %532 = vmatpush1.msra.mxu0 %v338
      %533 = vmatprep.subr.mxu0 0.0
      %534 = vmatpush1.msra.mxu0 %v339
      %535 = vmatprep.subr.mxu0 0.0
      %536 = vmatpush1.msra.mxu0 %v340
      %537 = vmatprep.subr.mxu0 0.0
      %538 = vmatpush1.msra.mxu0 %v341
      %539 = vmatprep.subr.mxu0 0.0
      %540 = vmatpush1.msra.mxu0 %v342
      %541 = vmatprep.subr.mxu0 0.0
      %542 = vmatpush1.msra.mxu0 %v343
      %543 = vmatprep.subr.mxu0 0.0
      %544 = vmatpush1.msra.mxu0 %v344
      %545 = vmatprep.subr.mxu0 0.0
      %546 = vmatpush1.msra.mxu0 %v345
      %547 = vmatprep.subr.mxu0 0.0
      %548 = vmatpush1.msra.mxu0 %v346
      %549 = vmatprep.subr.mxu0 0.0
      %550 = vmatpush1.msra.mxu0 %v347
      %551 = vmatprep.subr.mxu0 0.0
      %552 = vmatpush1.msra.mxu0 %v348
      %553 = vmatprep.subr.mxu0 0.0
      %554 = vmatpush1.msra.mxu0 %v349
      %555 = vmatprep.subr.mxu0 0.0
      %556 = vmatpush1.msra.mxu0 %v350
      %557 = vmatprep.subr.mxu0 0.0
      %558 = vmatpush1.msra.mxu0 %v351
      %559 = vmatprep.subr.mxu0 0.0
      %560 = vmatpush1.msra.mxu0 %v352
      %561 = vmatprep.subr.mxu0 0.0
      %562 = vmatpush1.msra.mxu0 %v353
      %563 = vmatprep.subr.mxu0 0.0
      %564 = vmatpush1.msra.mxu0 %v354
      %565 = vmatprep.subr.mxu0 0.0
      %566 = vmatpush1.msra.mxu0 %v355
      %567 = vmatprep.subr.mxu0 0.0
      %568 = vmatpush1.msra.mxu0 %v356
      %569 = vmatprep.subr.mxu0 0.0
      %570 = vmatpush1.msra.mxu0 %v357
      %571 = vmatprep.subr.mxu0 0.0
      %572 = vmatpush1.msra.mxu0 %v358
      %573 = vmatprep.subr.mxu0 0.0
      %574 = vmatpush1.msra.mxu0 %v359
      %575 = vmatprep.subr.mxu0 0.0
      %576 = vmatpush1.msra.mxu0 %v360
      %577 = vmatprep.mubr.f32.mxu0 %v236
      %578 = vmatmul.mubr.f32.gmra.mrb[0].mxu0 %v235
      %v579 = vpop.f32.mrb[0].mxu0
      %v580 = vadd.f32 %v435, %v579
      %v581 = vpop.f32.mrb[0].mxu0
      %582 = vmatprep.mubr.f32.mxu0 %v240
      %583 = vmatmul.mubr.f32.gmra.mrb[0].mxu0 %v239
      %v584 = vpop.f32.mrb[0].mxu0
      %v585 = vadd.f32 %v440, %v584
      %v586 = vpop.f32.mrb[0].mxu0
      %587 = vmatprep.mubr.f32.mxu0 %v244
      %588 = vmatmul.mubr.f32.gmra.mrb[0].mxu0 %v243
      %v589 = vpop.f32.mrb[0].mxu0
      %v590 = vadd.f32 %v445, %v589
      %v591 = vpop.f32.mrb[0].mxu0
      %592 = vmatprep.mubr.f32.mxu0 %v248
      %593 = vmatmul.mubr.f32.gmra.mrb[0].mxu0 %v247
      %v594 = vpop.f32.mrb[0].mxu0
      %v595 = vadd.f32 %v450, %v594
      %v596 = vpop.f32.mrb[0].mxu0
      %597 = vmatprep.mubr.f32.mxu0 %v252
      %598 = vmatmul.mubr.f32.gmra.mrb[0].mxu0 %v251
      %v599 = vpop.f32.mrb[0].mxu0
      %v600 = vadd.f32 %v455, %v599
      %v601 = vpop.f32.mrb[0].mxu0
      %602 = vmatprep.mubr.f32.mxu0 %v256
      %603 = vmatmul.mubr.f32.gmra.mrb[0].mxu0 %v255
      %v604 = vpop.f32.mrb[0].mxu0
      %v605 = vadd.f32 %v460, %v604
      %v606 = vpop.f32.mrb[0].mxu0
      %607 = vmatprep.mubr.f32.mxu0 %v260
      %608 = vmatmul.mubr.f32.gmra.mrb[0].mxu0 %v259
      %v609 = vpop.f32.mrb[0].mxu0
      %v610 = vadd.f32 %v465, %v609
      %v611 = vpop.f32.mrb[0].mxu0
      %612 = vmatprep.mubr.f32.mxu0 %v264
      %613 = vmatmul.mubr.f32.gmra.mrb[0].mxu0 %v263
      %v614 = vpop.f32.mrb[0].mxu0
      %v615 = vadd.f32 %v470, %v614
      %v616 = vpop.f32.mrb[0].mxu0
      %617 = vmatprep.mubr.f32.mxu0 %v268
      %618 = vmatmul.mubr.f32.gmra.mrb[0].mxu0 %v267
      %v619 = vpop.f32.mrb[0].mxu0
      %v620 = vadd.f32 %v475, %v619
      %v621 = vpop.f32.mrb[0].mxu0
      %622 = vmatprep.mubr.f32.mxu0 %v272
      %623 = vmatmul.mubr.f32.gmra.mrb[0].mxu0 %v271
      %v624 = vpop.f32.mrb[0].mxu0
      %v625 = vadd.f32 %v480, %v624
      %v626 = vpop.f32.mrb[0].mxu0
      %627 = vmatprep.mubr.f32.mxu0 %v276
      %628 = vmatmul.mubr.f32.gmra.mrb[0].mxu0 %v275
      %v629 = vpop.f32.mrb[0].mxu0
      %v630 = vadd.f32 %v485, %v629
      %v631 = vpop.f32.mrb[0].mxu0
      %632 = vmatprep.mubr.f32.mxu0 %v280
      %633 = vmatmul.mubr.f32.gmra.mrb[0].mxu0 %v279
      %v634 = vpop.f32.mrb[0].mxu0
      %v635 = vadd.f32 %v490, %v634
      %v636 = vpop.f32.mrb[0].mxu0
      %637 = vmatprep.mubr.f32.mxu0 %v284
      %638 = vmatmul.mubr.f32.gmra.mrb[0].mxu0 %v283
      %v639 = vpop.f32.mrb[0].mxu0
      %v640 = vadd.f32 %v495, %v639
      %v641 = vpop.f32.mrb[0].mxu0
      %642 = vmatprep.mubr.f32.mxu0 %v288
      %643 = vmatmul.mubr.f32.gmra.mrb[0].mxu0 %v287
      %v644 = vpop.f32.mrb[0].mxu0
      %v645 = vadd.f32 %v500, %v644
      %v646 = vpop.f32.mrb[0].mxu0
      %647 = vmatprep.mubr.f32.mxu0 %v292
      %648 = vmatmul.mubr.f32.gmra.mrb[0].mxu0 %v291
      %v649 = vpop.f32.mrb[0].mxu0
      %v650 = vadd.f32 %v505, %v649
      %v651 = vpop.f32.mrb[0].mxu0
      %652 = vmatprep.mubr.f32.mxu0 %v296
      %653 = vmatmul.mubr.f32.gmra.mrb[0].mxu0 %v295
      %v654 = vpop.f32.mrb[0].mxu0
      %v655 = vadd.f32 %v510, %v654
      %v656 = vpop.f32.mrb[0].mxu0
      %657 = vdwg.mxu0
      %v658 = vmax.f32 %v580, 0.0
      %v659 = vmax.f32 %v585, 0.0
      %v660 = vmax.f32 %v590, 0.0
      %v661 = vmax.f32 %v595, 0.0
      %v662 = vmax.f32 %v600, 0.0
      %v663 = vmax.f32 %v605, 0.0
      %v664 = vmax.f32 %v610, 0.0
      %v665 = vmax.f32 %v615, 0.0
      %v666 = vmax.f32 %v620, 0.0
      %v667 = vmax.f32 %v625, 0.0
      %v668 = vmax.f32 %v630, 0.0
      %v669 = vmax.f32 %v635, 0.0
      %v670 = vmax.f32 %v640, 0.0
      %v671 = vmax.f32 %v645, 0.0
      %v672 = vmax.f32 %v650, 0.0
      %v673 = vmax.f32 %v655, 0.0
      %674 = vst [vmem:[%s231] sm:$0xff] %v658
      %675 = vst [vmem:[%s231 + $0x8] sm:$0xff] %v659
      %676 = vst [vmem:[%s231 + $0x10] sm:$0xff] %v660
      %677 = vst [vmem:[%s231 + $0x18] sm:$0xff] %v661
      %678 = vst [vmem:[%s231 + $0x20] sm:$0xff] %v662
      %679 = vst [vmem:[%s231 + $0x28] sm:$0xff] %v663
      %680 = vst [vmem:[%s231 + $0x30] sm:$0xff] %v664
      %681 = vst [vmem:[%s231 + $0x38] sm:$0xff] %v665
      %682 = vst [vmem:[%s231 + $0x40] sm:$0xff] %v666
      %683 = vst [vmem:[%s231 + $0x48] sm:$0xff] %v667
      %684 = vst [vmem:[%s231 + $0x50] sm:$0xff] %v668
      %685 = vst [vmem:[%s231 + $0x58] sm:$0xff] %v669
      %686 = vst [vmem:[%s231 + $0x60] sm:$0xff] %v670
      %687 = vst [vmem:[%s231 + $0x68] sm:$0xff] %v671
      %688 = vst [vmem:[%s231 + $0x70] sm:$0xff] %v672
      %689 = vst [vmem:[%s231 + $0x78] sm:$0xff] %v673
      %s690 = smul.u32 16, %s19
      %p691 = scmp.lt.s32.totalorder %s18, 3
      %s692 = scalar_select %p691, %s18, 3
      %p693 = scmp.lt.s32.totalorder %s690, 15
      %s694 = scalar_select %p693, %s690, 15
      %s695 = smul.addr %s692, 16
      %s696 = sadd.s32 %s694, %s695
      %s697 = smul.addr %s696, 8
      %s698 = scalar_lea.vmem %s3, %s697
      // Predicated region
      $region33: #{_lambda_.12} parent=31 // pred_check
        %p699 = pneg %p121
      $region34: #{_lambda_.12} parent=31 // pred_check_branch
        %701 = sbr.rel (%p699) target = $region36
      $region35: #{_lambda_.12} parent=31 // pred_region
        %s702 = smul.u32 16, %s19
      $region36: #{_lambda_.12} parent=31 // pred_fallthru
        _
    $region32: #{_lambda_.12} parent=5 // pred_fallthru
      _
    %p703 = scmp.le.s32.totalorder 2, %s9
    // Predicated region
    $region37: #{_lambda_.12} parent=5 // pred_check
      %p704 = pneg %p703
    $region38: #{_lambda_.12} parent=5 // pred_check_branch
      %706 = sbr.rel (%p704) target = $region40
    $region39: #{_lambda_.12} parent=5 // pred_region
      %s707 = ssub.s32 %s9, 2
      // Predicated region
      $region41: #{_lambda_.12} parent=39 // pred_check
        %p708 = pneg %p127
      $region42: #{_lambda_.12} parent=39 // pred_check_branch
        %710 = sbr.rel (%p708) target = $region44
      $region43: #{_lambda_.12} parent=39 // pred_region
        %s711 = smul.u32 16, %s21
        %p712 = scmp.lt.s32.totalorder %s20, 3
        %s713 = scalar_select %p712, %s20, 3
        %p714 = scmp.lt.s32.totalorder %s711, 15
        %s715 = scalar_select %p714, %s711, 15
        %s716 = smul.addr %s713, 16
        %s717 = sadd.s32 %s715, %s716
        %s718 = smul.addr %s717, 8
        %s719 = scalar_lea.vmem %s3, %s718
      $region44: #{_lambda_.12} parent=39 // pred_fallthru
        _
    $region40: #{_lambda_.12} parent=5 // pred_fallthru
      _
  $region6: #{_lambda_.12} parent=0 // loop_footer
    %s13 = sadd.s32 1, %s9
  $region7: #{_lambda_.12} parent=0 // loop_footer_branch
    %8 = sbr.rel target = $region3
  $region8: #{_lambda_.12} parent=0 // loop_exit
    _

// kernel: _lambda_.13
$region0: #{_lambda_.13}
  #allocation0 [shape = 'u32[]', space=smem, size = 0x4, offset = 0x4, fixed_abs, tag = 'smem constant byte address 0x4 - core index']
  #allocation1 [shape = 'u32[144,128]{1,0:T(1,128)}', space=vmem, size = 0x12000, scoped, tag = 'internal scratch']
  %s0 = inlined_call_operand.vmem [shape: f32[4,512,256], index: 0, kind: input, shape index: {}]
  %s1 = inlined_call_operand.vmem [shape: f32[4,256,128], index: 1, kind: input, shape index: {}]
  %s2 = inlined_call_operand.vmem [shape: f32[1,128], index: 2, kind: input, shape index: {}]
  %s3 = inlined_call_operand.vmem [shape: f32[4,512,128], index: 3, kind: output, shape index: {}]
  %s4 = sld [smem:[#allocation0]]
  $region45: #{_lambda_.13} parent=0
    _
  %s6 = ssub.s32 1, %s4
  %s7 = scalar_select 0, %s6, %s4
  loop: start=0, step=1, limit=6
  $region2: #{_lambda_.13} parent=0 // loop_pre_header
    _
  $region3: #{_lambda_.13} parent=0 // loop_header
    %s9 = sphi 0, %s13
    %p10 = scmp.ge.s32.totalorder %s9, 6
    %s16 = sphi 0, %s28
    %s17 = sphi 0, %s24
    %s18 = sphi 0, %s16
    %s19 = sphi 0, %s17
    %s20 = sphi 0, %s18
    %s21 = sphi 0, %s19
    %s33 = sphi 0, %s35
    %s36 = sphi 0, %s33
    %s37 = sphi 0, %s36
    %s53 = sphi 0, %s37
    %s59 = sphi 0, %s61
    %s62 = sphi 0, %s59
    %s63 = sphi 0, %s62
    %s79 = sphi 0, %s63
    %s83 = sphi 0, %s83
    %s85 = sphi 0, %s83
    %s86 = sphi 0, %s85
    %s100 = sphi 0, %s86
    %s108 = sphi 0, %s110
    %s111 = sphi 0, %s108
    %s112 = sphi 0, %s111
    %s128 = sphi 0, %s112
  $region4: #{_lambda_.13} parent=0 // loop_header_branch
    %12 = sbr.rel (%p10) target = $region8
  $region5: #{_lambda_.13} parent=0 // loop_body
    %s14 = ssub.s32 %s9, 1
    %s15 = ssub.s32 %s9, 2
    %s22 = sadd.s32 1, %s17
    %p23 = scmp.ge.s32.totalorder %s22, 1
    %s24 = scalar_select %p23, 0, %s22
    %s25 = sadd.s32 1, %s16
    %s26 = scalar_select %p23, %s25, %s16
    %p27 = scmp.ge.s32.totalorder %s26, 4
    %s28 = scalar_select %p27, 0, %s26
    %s29 = ssub.s32 %s16, %s28
    %s30 = ssub.s32 %s17, %s24
    %s31 = sor.u32 %s29, %s30
    %p32 = scmp.eq.s32.totalorder %s31, 0
    %s34 = sadd.s32 %s33, 1
    %s35 = scalar_select %p32, %s33, %s34
    %p38 = pneg %p32
    %p39 = scmp.eq.s32.totalorder %s9, 3
    %p40 = por %p38, %p39
    %p41 = scmp.ne.s32.totalorder %s33, %s36
    %p42 = scmp.eq.s32.totalorder %s9, 0
    %p43 = por %p41, %p42
    %p44 = scmp.ne.s32.totalorder %s33, %s36
    %p45 = scmp.eq.s32.totalorder %s14, 3
    %p46 = por %p44, %p45
    %p47 = scmp.ne.s32.totalorder %s36, %s37
    %p48 = scmp.eq.s32.totalorder %s14, 0
    %p49 = por %p47, %p48
    %p50 = scmp.ne.s32.totalorder %s36, %s37
    %p51 = scmp.eq.s32.totalorder %s15, 3
    %p52 = por %p50, %p51
    %p54 = scmp.ne.s32.totalorder %s37, %s53
    %p55 = scmp.eq.s32.totalorder %s15, 0
    %p56 = por %p54, %p55
    %s57 = ssub.s32 %s16, %s28
    %p58 = scmp.eq.s32.totalorder %s57, 0
    %s60 = sadd.s32 %s59, 1
    %s61 = scalar_select %p58, %s59, %s60
    %p64 = pneg %p58
    %p65 = scmp.eq.s32.totalorder %s9, 3
    %p66 = por %p64, %p65
    %p67 = scmp.ne.s32.totalorder %s59, %s62
    %p68 = scmp.eq.s32.totalorder %s9, 0
    %p69 = por %p67, %p68
    %p70 = scmp.ne.s32.totalorder %s59, %s62
    %p71 = scmp.eq.s32.totalorder %s14, 3
    %p72 = por %p70, %p71
    %p73 = scmp.ne.s32.totalorder %s62, %s63
    %p74 = scmp.eq.s32.totalorder %s14, 0
    %p75 = por %p73, %p74
    %p76 = scmp.ne.s32.totalorder %s62, %s63
    %p77 = scmp.eq.s32.totalorder %s15, 3
    %p78 = por %p76, %p77
    %p80 = scmp.ne.s32.totalorder %s63, %s79
    %p81 = scmp.eq.s32.totalorder %s15, 0
    %p82 = por %p80, %p81
    %s84 = sadd.s32 %s83, 1
    %p87 = scmp.eq.s32.totalorder %s9, 3
    %p88 = scmp.ne.s32.totalorder %s83, %s85
    %p89 = scmp.eq.s32.totalorder %s9, 0
    %p90 = por %p88, %p89
    %p91 = scmp.ne.s32.totalorder %s83, %s85
    %p92 = scmp.eq.s32.totalorder %s14, 3
    %p93 = por %p91, %p92
    %p94 = scmp.ne.s32.totalorder %s85, %s86
    %p95 = scmp.eq.s32.totalorder %s14, 0
    %p96 = por %p94, %p95
    %p97 = scmp.ne.s32.totalorder %s85, %s86
    %p98 = scmp.eq.s32.totalorder %s15, 3
    %p99 = por %p97, %p98
    %p101 = scmp.ne.s32.totalorder %s86, %s100
    %p102 = scmp.eq.s32.totalorder %s15, 0
    %p103 = por %p101, %p102
    %s104 = ssub.s32 %s16, %s28
    %s105 = ssub.s32 %s17, %s24
    %s106 = sor.u32 %s104, %s105
    %p107 = scmp.eq.s32.totalorder %s106, 0
    %s109 = sadd.s32 %s108, 1
    %s110 = scalar_select %p107, %s108, %s109
    %p113 = pneg %p107
    %p114 = scmp.eq.s32.totalorder %s9, 3
    %p115 = por %p113, %p114
    %p116 = scmp.ne.s32.totalorder %s108, %s111
    %p117 = scmp.eq.s32.totalorder %s9, 0
    %p118 = por %p116, %p117
    %p119 = scmp.ne.s32.totalorder %s108, %s111
    %p120 = scmp.eq.s32.totalorder %s14, 3
    %p121 = por %p119, %p120
    %p122 = scmp.ne.s32.totalorder %s111, %s112
    %p123 = scmp.eq.s32.totalorder %s14, 0
    %p124 = por %p122, %p123
    %p125 = scmp.ne.s32.totalorder %s111, %s112
    %p126 = scmp.eq.s32.totalorder %s15, 3
    %p127 = por %p125, %p126
    %p129 = scmp.ne.s32.totalorder %s112, %s128
    %p130 = scmp.eq.s32.totalorder %s15, 0
    %p131 = por %p129, %p130
    %p132 = scmp.le.s32.totalorder 1, %s9
    %p133 = scmp.lt.s32.totalorder %s9, 5
    %p134 = pnand %p132, %p133
    %p135 = pneg %p134
    // Predicated region
    $region9: #{_lambda_.13} parent=5 // pred_check
      _
    $region10: #{_lambda_.13} parent=5 // pred_check_branch
      %137 = sbr.rel (%p134) target = $region12
    $region11: #{_lambda_.13} parent=5 // pred_region
      %s138 = ssub.s32 %s9, 1
      // Predicated region
      $region13: #{_lambda_.13} parent=11 // pred_check
        %p139 = pneg %p96
      $region14: #{_lambda_.13} parent=11 // pred_check_branch
        %141 = sbr.rel (%p139) target = $region16
      $region15: #{_lambda_.13} parent=11 // pred_region
        _
      $region16: #{_lambda_.13} parent=11 // pred_fallthru
        _
    $region12: #{_lambda_.13} parent=5 // pred_fallthru
      _
    %p142 = scmp.lt.s32.totalorder %s9, 4
    // Predicated region
    $region17: #{_lambda_.13} parent=5 // pred_check
      %p143 = pneg %p142
    $region18: #{_lambda_.13} parent=5 // pred_check_branch
      %145 = sbr.rel (%p143) target = $region20
    $region19: #{_lambda_.13} parent=5 // pred_region
      // Predicated region
      $region21: #{_lambda_.13} parent=19 // pred_check
        %p146 = pneg %p43
      $region22: #{_lambda_.13} parent=19 // pred_check_branch
        %148 = sbr.rel (%p146) target = $region24
      $region23: #{_lambda_.13} parent=19 // pred_region
        %s149 = smul.u32 64, %s17
        %p150 = scmp.lt.s32.totalorder %s16, 3
        %s151 = scalar_select %p150, %s16, 3
        %p152 = scmp.lt.s32.totalorder %s149, 63
        %s153 = scalar_select %p152, %s149, 63
        %s154 = smul.addr %s153, 2
        %s155 = smul.addr %s151, 128
        %s156 = sadd.s32 %s154, %s155
        %s157 = smul.addr %s156, 8
        %s158 = scalar_lea.vmem %s0, %s157
        %s159 = smul.u32 64, %s17
      $region24: #{_lambda_.13} parent=19 // pred_fallthru
        _
      // Predicated region
      $region25: #{_lambda_.13} parent=19 // pred_check
        %p160 = pneg %p69
      $region26: #{_lambda_.13} parent=19 // pred_check_branch
        %162 = sbr.rel (%p160) target = $region28
      $region27: #{_lambda_.13} parent=19 // pred_region
        %p163 = scmp.lt.s32.totalorder %s16, 3
        %s164 = scalar_select %p163, %s16, 3
        %s165 = smul.addr %s164, 32
        %s166 = smul.addr %s165, 8
        %s167 = scalar_lea.vmem %s1, %s166
      $region28: #{_lambda_.13} parent=19 // pred_fallthru
        _
    $region20: #{_lambda_.13} parent=5 // pred_fallthru
      _
    %p168 = scmp.le.s32.totalorder 1, %s9
    %p169 = scmp.lt.s32.totalorder %s9, 5
    %p170 = pnand %p168, %p169
    %p171 = pneg %p170
    // Predicated region
    $region29: #{_lambda_.13} parent=5 // pred_check
      _
    $region30: #{_lambda_.13} parent=5 // pred_check_branch
      %173 = sbr.rel (%p170) target = $region32
    $region31: #{_lambda_.13} parent=5 // pred_region
      %s174 = ssub.s32 %s9, 1
      %s175 = smul.u32 64, %s19
      %p176 = scmp.lt.s32.totalorder %s18, 3
      %s177 = scalar_select %p176, %s18, 3
      %p178 = scmp.lt.s32.totalorder %s175, 63
      %s179 = scalar_select %p178, %s175, 63
      %s180 = smul.addr %s179, 2
      %s181 = smul.addr %s177, 128
      %s182 = sadd.s32 %s180, %s181
      %s183 = smul.addr %s182, 8
      %s184 = scalar_lea.vmem %s0, %s183
      %p185 = pneg %p49
      %p186 = pneg %p46
      %p187 = scmp.lt.s32.totalorder %s18, 3
      %s188 = scalar_select %p187, %s18, 3
      %s189 = smul.addr %s188, 32
      %s190 = smul.addr %s189, 8
      %s191 = scalar_lea.vmem %s1, %s190
      %p192 = pneg %p75
      %p193 = pneg %p72
      %p194 = pneg %p96
      %p195 = pneg %p93
      %p196 = pneg %p124
      %p197 = pneg %p121
      %s198 = smul.u32 64, %s19
      %p199 = scmp.lt.s32.totalorder %s18, 3
      %s200 = scalar_select %p199, %s18, 3
      %p201 = scmp.lt.s32.totalorder %s198, 63
      %s202 = scalar_select %p201, %s198, 63
      %s203 = smul.addr %s200, 64
      %s204 = sadd.s32 %s202, %s203
      %s205 = smul.addr %s204, 8
      %s206 = scalar_lea.vmem %s3, %s205
      %s207 = smul.u32 64, %s19
      %p208 = scmp.lt.s32.totalorder %s18, 3
      %s209 = scalar_select %p208, %s18, 3
      %p210 = scmp.lt.s32.totalorder %s207, 63
      %s211 = scalar_select %p210, %s207, 63
      %s212 = smul.addr %s211, 2
      %s213 = smul.addr %s209, 128
      %s214 = sadd.s32 %s212, %s213
      %s215 = smul.addr %s214, 8
      %s216 = scalar_lea.vmem %s0, %s215
      %s217 = smul.u32 64, %s19
      %p218 = scmp.lt.s32.totalorder %s18, 3
      %s219 = scalar_select %p218, %s18, 3
      %s220 = smul.addr %s219, 32
      %s221 = smul.addr %s220, 8
      %s222 = scalar_lea.vmem %s1, %s221
      %s223 = smul.u32 64, %s19
      %p224 = scmp.lt.s32.totalorder %s18, 3
      %s225 = scalar_select %p224, %s18, 3
      %p226 = scmp.lt.s32.totalorder %s223, 63
      %s227 = scalar_select %p226, %s223, 63
      %s228 = smul.addr %s225, 64
      %s229 = sadd.s32 %s227, %s228
      %s230 = smul.addr %s229, 8
      %s231 = scalar_lea.vmem %s3, %s230
      %s232 = smul.u32 64, %s19
      %v233 = vld [vmem:[%s216] sm:$0xff]
      %v234 = vld [vmem:[%s216 + $0x8] sm:$0xff]
      %v235 = vld [vmem:[%s216 + $0x10] sm:$0xff]
      %v236 = vld [vmem:[%s216 + $0x18] sm:$0xff]
      %v237 = vld [vmem:[%s216 + $0x20] sm:$0xff]
      %v238 = vld [vmem:[%s216 + $0x28] sm:$0xff]
      %v239 = vld [vmem:[%s216 + $0x30] sm:$0xff]
      %v240 = vld [vmem:[%s216 + $0x38] sm:$0xff]
      %v241 = vld [vmem:[%s216 + $0x40] sm:$0xff]
      %v242 = vld [vmem:[%s216 + $0x48] sm:$0xff]
      %v243 = vld [vmem:[%s216 + $0x50] sm:$0xff]
      %v244 = vld [vmem:[%s216 + $0x58] sm:$0xff]
      %v245 = vld [vmem:[%s216 + $0x60] sm:$0xff]
      %v246 = vld [vmem:[%s216 + $0x68] sm:$0xff]
      %v247 = vld [vmem:[%s216 + $0x70] sm:$0xff]
      %v248 = vld [vmem:[%s216 + $0x78] sm:$0xff]
      %v249 = vld [vmem:[%s216 + $0x80] sm:$0xff]
      %v250 = vld [vmem:[%s216 + $0x88] sm:$0xff]
      %v251 = vld [vmem:[%s216 + $0x90] sm:$0xff]
      %v252 = vld [vmem:[%s216 + $0x98] sm:$0xff]
      %v253 = vld [vmem:[%s216 + $0xa0] sm:$0xff]
      %v254 = vld [vmem:[%s216 + $0xa8] sm:$0xff]
      %v255 = vld [vmem:[%s216 + $0xb0] sm:$0xff]
      %v256 = vld [vmem:[%s216 + $0xb8] sm:$0xff]
      %v257 = vld [vmem:[%s216 + $0xc0] sm:$0xff]
      %v258 = vld [vmem:[%s216 + $0xc8] sm:$0xff]
      %v259 = vld [vmem:[%s216 + $0xd0] sm:$0xff]
      %v260 = vld [vmem:[%s216 + $0xd8] sm:$0xff]
      %v261 = vld [vmem:[%s216 + $0xe0] sm:$0xff]
      %v262 = vld [vmem:[%s216 + $0xe8] sm:$0xff]
      %v263 = vld [vmem:[%s216 + $0xf0] sm:$0xff]
      %v264 = vld [vmem:[%s216 + $0xf8] sm:$0xff]
      %v265 = vld [vmem:[%s216 + $0x100] sm:$0xff]
      %v266 = vld [vmem:[%s216 + $0x108] sm:$0xff]
      %v267 = vld [vmem:[%s216 + $0x110] sm:$0xff]
      %v268 = vld [vmem:[%s216 + $0x118] sm:$0xff]
      %v269 = vld [vmem:[%s216 + $0x120] sm:$0xff]
      %v270 = vld [vmem:[%s216 + $0x128] sm:$0xff]
      %v271 = vld [vmem:[%s216 + $0x130] sm:$0xff]
      %v272 = vld [vmem:[%s216 + $0x138] sm:$0xff]
      %v273 = vld [vmem:[%s216 + $0x140] sm:$0xff]
      %v274 = vld [vmem:[%s216 + $0x148] sm:$0xff]
      %v275 = vld [vmem:[%s216 + $0x150] sm:$0xff]
      %v276 = vld [vmem:[%s216 + $0x158] sm:$0xff]
      %v277 = vld [vmem:[%s216 + $0x160] sm:$0xff]
      %v278 = vld [vmem:[%s216 + $0x168] sm:$0xff]
      %v279 = vld [vmem:[%s216 + $0x170] sm:$0xff]
      %v280 = vld [vmem:[%s216 + $0x178] sm:$0xff]
      %v281 = vld [vmem:[%s216 + $0x180] sm:$0xff]
      %v282 = vld [vmem:[%s216 + $0x188] sm:$0xff]
      %v283 = vld [vmem:[%s216 + $0x190] sm:$0xff]
      %v284 = vld [vmem:[%s216 + $0x198] sm:$0xff]
      %v285 = vld [vmem:[%s216 + $0x1a0] sm:$0xff]
      %v286 = vld [vmem:[%s216 + $0x1a8] sm:$0xff]
      %v287 = vld [vmem:[%s216 + $0x1b0] sm:$0xff]
      %v288 = vld [vmem:[%s216 + $0x1b8] sm:$0xff]
      %v289 = vld [vmem:[%s216 + $0x1c0] sm:$0xff]
      %v290 = vld [vmem:[%s216 + $0x1c8] sm:$0xff]
      %v291 = vld [vmem:[%s216 + $0x1d0] sm:$0xff]
      %v292 = vld [vmem:[%s216 + $0x1d8] sm:$0xff]
      %v293 = vld [vmem:[%s216 + $0x1e0] sm:$0xff]
      %v294 = vld [vmem:[%s216 + $0x1e8] sm:$0xff]
      %v295 = vld [vmem:[%s216 + $0x1f0] sm:$0xff]
      %v296 = vld [vmem:[%s216 + $0x1f8] sm:$0xff]
      %v297 = vld [vmem:[%s216 + $0x200] sm:$0xff]
      %v298 = vld [vmem:[%s216 + $0x208] sm:$0xff]
      %v299 = vld [vmem:[%s216 + $0x210] sm:$0xff]
      %v300 = vld [vmem:[%s216 + $0x218] sm:$0xff]
      %v301 = vld [vmem:[%s216 + $0x220] sm:$0xff]
      %v302 = vld [vmem:[%s216 + $0x228] sm:$0xff]
      %v303 = vld [vmem:[%s216 + $0x230] sm:$0xff]
      %v304 = vld [vmem:[%s216 + $0x238] sm:$0xff]
      %v305 = vld [vmem:[%s216 + $0x240] sm:$0xff]
      %v306 = vld [vmem:[%s216 + $0x248] sm:$0xff]
      %v307 = vld [vmem:[%s216 + $0x250] sm:$0xff]
      %v308 = vld [vmem:[%s216 + $0x258] sm:$0xff]
      %v309 = vld [vmem:[%s216 + $0x260] sm:$0xff]
      %v310 = vld [vmem:[%s216 + $0x268] sm:$0xff]
      %v311 = vld [vmem:[%s216 + $0x270] sm:$0xff]
      %v312 = vld [vmem:[%s216 + $0x278] sm:$0xff]
      %v313 = vld [vmem:[%s216 + $0x280] sm:$0xff]
      %v314 = vld [vmem:[%s216 + $0x288] sm:$0xff]
      %v315 = vld [vmem:[%s216 + $0x290] sm:$0xff]
      %v316 = vld [vmem:[%s216 + $0x298] sm:$0xff]
      %v317 = vld [vmem:[%s216 + $0x2a0] sm:$0xff]
      %v318 = vld [vmem:[%s216 + $0x2a8] sm:$0xff]
      %v319 = vld [vmem:[%s216 + $0x2b0] sm:$0xff]
      %v320 = vld [vmem:[%s216 + $0x2b8] sm:$0xff]
      %v321 = vld [vmem:[%s216 + $0x2c0] sm:$0xff]
      %v322 = vld [vmem:[%s216 + $0x2c8] sm:$0xff]
      %v323 = vld [vmem:[%s216 + $0x2d0] sm:$0xff]
      %v324 = vld [vmem:[%s216 + $0x2d8] sm:$0xff]
      %v325 = vld [vmem:[%s216 + $0x2e0] sm:$0xff]
      %v326 = vld [vmem:[%s216 + $0x2e8] sm:$0xff]
      %v327 = vld [vmem:[%s216 + $0x2f0] sm:$0xff]
      %v328 = vld [vmem:[%s216 + $0x2f8] sm:$0xff]
      %v329 = vld [vmem:[%s216 + $0x300] sm:$0xff]
      %v330 = vld [vmem:[%s216 + $0x308] sm:$0xff]
      %v331 = vld [vmem:[%s216 + $0x310] sm:$0xff]
      %v332 = vld [vmem:[%s216 + $0x318] sm:$0xff]
      %v333 = vld [vmem:[%s216 + $0x320] sm:$0xff]
      %v334 = vld [vmem:[%s216 + $0x328] sm:$0xff]
      %v335 = vld [vmem:[%s216 + $0x330] sm:$0xff]
      %v336 = vld [vmem:[%s216 + $0x338] sm:$0xff]
      %v337 = vld [vmem:[%s216 + $0x340] sm:$0xff]
      %v338 = vld [vmem:[%s216 + $0x348] sm:$0xff]
      %v339 = vld [vmem:[%s216 + $0x350] sm:$0xff]
      %v340 = vld [vmem:[%s216 + $0x358] sm:$0xff]
      %v341 = vld [vmem:[%s216 + $0x360] sm:$0xff]
      %v342 = vld [vmem:[%s216 + $0x368] sm:$0xff]
      %v343 = vld [vmem:[%s216 + $0x370] sm:$0xff]
      %v344 = vld [vmem:[%s216 + $0x378] sm:$0xff]
      %v345 = vld [vmem:[%s216 + $0x380] sm:$0xff]
      %v346 = vld [vmem:[%s216 + $0x388] sm:$0xff]
      %v347 = vld [vmem:[%s216 + $0x390] sm:$0xff]
      %v348 = vld [vmem:[%s216 + $0x398] sm:$0xff]
      %v349 = vld [vmem:[%s216 + $0x3a0] sm:$0xff]
      %v350 = vld [vmem:[%s216 + $0x3a8] sm:$0xff]
      %v351 = vld [vmem:[%s216 + $0x3b0] sm:$0xff]
      %v352 = vld [vmem:[%s216 + $0x3b8] sm:$0xff]
      %v353 = vld [vmem:[%s216 + $0x3c0] sm:$0xff]
      %v354 = vld [vmem:[%s216 + $0x3c8] sm:$0xff]
      %v355 = vld [vmem:[%s216 + $0x3d0] sm:$0xff]
      %v356 = vld [vmem:[%s216 + $0x3d8] sm:$0xff]
      %v357 = vld [vmem:[%s216 + $0x3e0] sm:$0xff]
      %v358 = vld [vmem:[%s216 + $0x3e8] sm:$0xff]
      %v359 = vld [vmem:[%s216 + $0x3f0] sm:$0xff]
      %v360 = vld [vmem:[%s216 + $0x3f8] sm:$0xff]
      %v361 = vld [vmem:[%s222] sm:$0xff]
      %v362 = vld [vmem:[%s222 + $0x8] sm:$0xff]
      %v363 = vld [vmem:[%s222 + $0x10] sm:$0xff]
      %v364 = vld [vmem:[%s222 + $0x18] sm:$0xff]
      %v365 = vld [vmem:[%s222 + $0x20] sm:$0xff]
      %v366 = vld [vmem:[%s222 + $0x28] sm:$0xff]
      %v367 = vld [vmem:[%s222 + $0x30] sm:$0xff]
      %v368 = vld [vmem:[%s222 + $0x38] sm:$0xff]
      %v369 = vld [vmem:[%s222 + $0x40] sm:$0xff]
      %v370 = vld [vmem:[%s222 + $0x48] sm:$0xff]
      %v371 = vld [vmem:[%s222 + $0x50] sm:$0xff]
      %v372 = vld [vmem:[%s222 + $0x58] sm:$0xff]
      %v373 = vld [vmem:[%s222 + $0x60] sm:$0xff]
      %v374 = vld [vmem:[%s222 + $0x68] sm:$0xff]
      %v375 = vld [vmem:[%s222 + $0x70] sm:$0xff]
      %v376 = vld [vmem:[%s222 + $0x78] sm:$0xff]
      %v377 = vld [vmem:[%s222 + $0x80] sm:$0xff]
      %v378 = vld [vmem:[%s222 + $0x88] sm:$0xff]
      %v379 = vld [vmem:[%s222 + $0x90] sm:$0xff]
      %v380 = vld [vmem:[%s222 + $0x98] sm:$0xff]
      %v381 = vld [vmem:[%s222 + $0xa0] sm:$0xff]
      %v382 = vld [vmem:[%s222 + $0xa8] sm:$0xff]
      %v383 = vld [vmem:[%s222 + $0xb0] sm:$0xff]
      %v384 = vld [vmem:[%s222 + $0xb8] sm:$0xff]
      %v385 = vld [vmem:[%s222 + $0xc0] sm:$0xff]
      %v386 = vld [vmem:[%s222 + $0xc8] sm:$0xff]
      %v387 = vld [vmem:[%s222 + $0xd0] sm:$0xff]
      %v388 = vld [vmem:[%s222 + $0xd8] sm:$0xff]
      %v389 = vld [vmem:[%s222 + $0xe0] sm:$0xff]
      %v390 = vld [vmem:[%s222 + $0xe8] sm:$0xff]
      %v391 = vld [vmem:[%s222 + $0xf0] sm:$0xff]
      %v392 = vld [vmem:[%s222 + $0xf8] sm:$0xff]
      %v393 = vld [vmem:[%s2] sm:$0x1]
      %v395 = vlaneseq
      %v396 = vshrl.u32 %v395, 7
      %v397 = vsub.s32 0, %v396
      %v398 = vrot.slane %v393, %v397
      %400 = vmatprep.subr.mxu0 0.0
      %401 = vmatpush1.msra.mxu0 %v361
      %402 = vmatprep.subr.mxu0 0.0
      %403 = vmatpush1.msra.mxu0 %v362
      %404 = vmatprep.subr.mxu0 0.0
      %405 = vmatpush1.msra.mxu0 %v363
      %406 = vmatprep.subr.mxu0 0.0
      %407 = vmatpush1.msra.mxu0 %v364
      %408 = vmatprep.subr.mxu0 0.0
      %409 = vmatpush1.msra.mxu0 %v365
      %410 = vmatprep.subr.mxu0 0.0
      %411 = vmatpush1.msra.mxu0 %v366
      %412 = vmatprep.subr.mxu0 0.0
      %413 = vmatpush1.msra.mxu0 %v367
      %414 = vmatprep.subr.mxu0 0.0
      %415 = vmatpush1.msra.mxu0 %v368
      %416 = vmatprep.subr.mxu0 0.0
      %417 = vmatpush1.msra.mxu0 %v369
      %418 = vmatprep.subr.mxu0 0.0
      %419 = vmatpush1.msra.mxu0 %v370
      %420 = vmatprep.subr.mxu0 0.0
      %421 = vmatpush1.msra.mxu0 %v371
      %422 = vmatprep.subr.mxu0 0.0
      %423 = vmatpush1.msra.mxu0 %v372
      %424 = vmatprep.subr.mxu0 0.0
      %425 = vmatpush1.msra.mxu0 %v373
      %426 = vmatprep.subr.mxu0 0.0
      %427 = vmatpush1.msra.mxu0 %v374
      %428 = vmatprep.subr.mxu0 0.0
      %429 = vmatpush1.msra.mxu0 %v375
      %430 = vmatprep.subr.mxu0 0.0
      %431 = vmatpush1.msra.mxu0 %v376
      %432 = vmatprep.subr.mxu0 0.0
      %433 = vmatpush1.msra.mxu0 %v377
      %434 = vmatprep.subr.mxu0 0.0
      %435 = vmatpush1.msra.mxu0 %v378
      %436 = vmatprep.subr.mxu0 0.0
      %437 = vmatpush1.msra.mxu0 %v379
      %438 = vmatprep.subr.mxu0 0.0
      %439 = vmatpush1.msra.mxu0 %v380
      %440 = vmatprep.subr.mxu0 0.0
      %441 = vmatpush1.msra.mxu0 %v381
      %442 = vmatprep.subr.mxu0 0.0
      %443 = vmatpush1.msra.mxu0 %v382
      %444 = vmatprep.subr.mxu0 0.0
      %445 = vmatpush1.msra.mxu0 %v383
      %446 = vmatprep.subr.mxu0 0.0
      %447 = vmatpush1.msra.mxu0 %v384
      %448 = vmatprep.subr.mxu0 0.0
      %449 = vmatpush1.msra.mxu0 %v385
      %450 = vmatprep.subr.mxu0 0.0
      %451 = vmatpush1.msra.mxu0 %v386
      %452 = vmatprep.subr.mxu0 0.0
      %453 = vmatpush1.msra.mxu0 %v387
      %454 = vmatprep.subr.mxu0 0.0
      %455 = vmatpush1.msra.mxu0 %v388
      %456 = vmatprep.subr.mxu0 0.0
      %457 = vmatpush1.msra.mxu0 %v389
      %458 = vmatprep.subr.mxu0 0.0
      %459 = vmatpush1.msra.mxu0 %v390
      %460 = vmatprep.subr.mxu0 0.0
      %461 = vmatpush1.msra.mxu0 %v391
      %462 = vmatprep.subr.mxu0 0.0
      %463 = vmatpush1.msra.mxu0 %v392
      %464 = vmatprep.mubr.f32.mxu0 %v234
      %465 = vmatmul.mubr.f32.gmra.mrb[0].mxu0 %v233
      %v466 = vpop.f32.mrb[0].mxu0
      %v467 = vadd.f32 %v398, %v466
      %v468 = vpop.f32.mrb[0].mxu0
      %469 = vmatprep.mubr.f32.mxu0 %v236
      %470 = vmatmul.mubr.f32.gmra.mrb[0].mxu0 %v235
      %v471 = vpop.f32.mrb[0].mxu0
      %v472 = vadd.f32 %v398, %v471
      %v473 = vpop.f32.mrb[0].mxu0
      %474 = vmatprep.mubr.f32.mxu0 %v238
      %475 = vmatmul.mubr.f32.gmra.mrb[0].mxu0 %v237
      %v476 = vpop.f32.mrb[0].mxu0
      %v477 = vadd.f32 %v398, %v476
      %v478 = vpop.f32.mrb[0].mxu0
      %479 = vmatprep.mubr.f32.mxu0 %v240
      %480 = vmatmul.mubr.f32.gmra.mrb[0].mxu0 %v239
      %v481 = vpop.f32.mrb[0].mxu0
      %v482 = vadd.f32 %v398, %v481
      %v483 = vpop.f32.mrb[0].mxu0
      %484 = vmatprep.mubr.f32.mxu0 %v242
      %485 = vmatmul.mubr.f32.gmra.mrb[0].mxu0 %v241
      %v486 = vpop.f32.mrb[0].mxu0
      %v487 = vadd.f32 %v398, %v486
      %v488 = vpop.f32.mrb[0].mxu0
      %489 = vmatprep.mubr.f32.mxu0 %v244
      %490 = vmatmul.mubr.f32.gmra.mrb[0].mxu0 %v243
      %v491 = vpop.f32.mrb[0].mxu0
      %v492 = vadd.f32 %v398, %v491
      %v493 = vpop.f32.mrb[0].mxu0
      %494 = vmatprep.mubr.f32.mxu0 %v246
      %495 = vmatmul.mubr.f32.gmra.mrb[0].mxu0 %v245
      %v496 = vpop.f32.mrb[0].mxu0
      %v497 = vadd.f32 %v398, %v496
      %v498 = vpop.f32.mrb[0].mxu0
      %499 = vmatprep.mubr.f32.mxu0 %v248
      %500 = vmatmul.mubr.f32.gmra.mrb[0].mxu0 %v247
      %v501 = vpop.f32.mrb[0].mxu0
      %v502 = vadd.f32 %v398, %v501
      %v503 = vpop.f32.mrb[0].mxu0
      %504 = vmatprep.mubr.f32.mxu0 %v250
      %505 = vmatmul.mubr.f32.gmra.mrb[0].mxu0 %v249
      %v506 = vpop.f32.mrb[0].mxu0
      %v507 = vadd.f32 %v398, %v506
      %v508 = vpop.f32.mrb[0].mxu0
      %509 = vmatprep.mubr.f32.mxu0 %v252
      %510 = vmatmul.mubr.f32.gmra.mrb[0].mxu0 %v251
      %v511 = vpop.f32.mrb[0].mxu0
      %v512 = vadd.f32 %v398, %v511
      %v513 = vpop.f32.mrb[0].mxu0
      %514 = vmatprep.mubr.f32.mxu0 %v254
      %515 = vmatmul.mubr.f32.gmra.mrb[0].mxu0 %v253
      %v516 = vpop.f32.mrb[0].mxu0
      %v517 = vadd.f32 %v398, %v516
      %v518 = vpop.f32.mrb[0].mxu0
      %519 = vmatprep.mubr.f32.mxu0 %v256
      %520 = vmatmul.mubr.f32.gmra.mrb[0].mxu0 %v255
      %v521 = vpop.f32.mrb[0].mxu0
      %v522 = vadd.f32 %v398, %v521
      %v523 = vpop.f32.mrb[0].mxu0
      %524 = vmatprep.mubr.f32.mxu0 %v258
      %525 = vmatmul.mubr.f32.gmra.mrb[0].mxu0 %v257
      %v526 = vpop.f32.mrb[0].mxu0
      %v527 = vadd.f32 %v398, %v526
      %v528 = vpop.f32.mrb[0].mxu0
      %529 = vmatprep.mubr.f32.mxu0 %v260
      %530 = vmatmul.mubr.f32.gmra.mrb[0].mxu0 %v259
      %v531 = vpop.f32.mrb[0].mxu0
      %v532 = vadd.f32 %v398, %v531
      %v533 = vpop.f32.mrb[0].mxu0
      %534 = vmatprep.mubr.f32.mxu0 %v262
      %535 = vmatmul.mubr.f32.gmra.mrb[0].mxu0 %v261
      %v536 = vpop.f32.mrb[0].mxu0
      %v537 = vadd.f32 %v398, %v536
      %v538 = vpop.f32.mrb[0].mxu0
      %539 = vmatprep.mubr.f32.mxu0 %v264
      %540 = vmatmul.mubr.f32.gmra.mrb[0].mxu0 %v263
      %v541 = vpop.f32.mrb[0].mxu0
      %v542 = vadd.f32 %v398, %v541
      %v543 = vpop.f32.mrb[0].mxu0
      %544 = vmatprep.mubr.f32.mxu0 %v266
      %545 = vmatmul.mubr.f32.gmra.mrb[0].mxu0 %v265
      %v546 = vpop.f32.mrb[0].mxu0
      %v547 = vadd.f32 %v398, %v546
      %v548 = vpop.f32.mrb[0].mxu0
      %549 = vmatprep.mubr.f32.mxu0 %v268
      %550 = vmatmul.mubr.f32.gmra.mrb[0].mxu0 %v267
      %v551 = vpop.f32.mrb[0].mxu0
      %v552 = vadd.f32 %v398, %v551
      %v553 = vpop.f32.mrb[0].mxu0
      %554 = vmatprep.mubr.f32.mxu0 %v270
      %555 = vmatmul.mubr.f32.gmra.mrb[0].mxu0 %v269
      %v556 = vpop.f32.mrb[0].mxu0
      %v557 = vadd.f32 %v398, %v556
      %v558 = vpop.f32.mrb[0].mxu0
      %559 = vmatprep.mubr.f32.mxu0 %v272
      %560 = vmatmul.mubr.f32.gmra.mrb[0].mxu0 %v271
      %v561 = vpop.f32.mrb[0].mxu0
      %v562 = vadd.f32 %v398, %v561
      %v563 = vpop.f32.mrb[0].mxu0
      %564 = vmatprep.mubr.f32.mxu0 %v274
      %565 = vmatmul.mubr.f32.gmra.mrb[0].mxu0 %v273
      %v566 = vpop.f32.mrb[0].mxu0
      %v567 = vadd.f32 %v398, %v566
      %v568 = vpop.f32.mrb[0].mxu0
      %569 = vmatprep.mubr.f32.mxu0 %v276
      %570 = vmatmul.mubr.f32.gmra.mrb[0].mxu0 %v275
      %v571 = vpop.f32.mrb[0].mxu0
      %v572 = vadd.f32 %v398, %v571
      %v573 = vpop.f32.mrb[0].mxu0
      %574 = vmatprep.mubr.f32.mxu0 %v278
      %575 = vmatmul.mubr.f32.gmra.mrb[0].mxu0 %v277
      %v576 = vpop.f32.mrb[0].mxu0
      %v577 = vadd.f32 %v398, %v576
      %v578 = vpop.f32.mrb[0].mxu0
      %579 = vmatprep.mubr.f32.mxu0 %v280
      %580 = vmatmul.mubr.f32.gmra.mrb[0].mxu0 %v279
      %v581 = vpop.f32.mrb[0].mxu0
      %v582 = vadd.f32 %v398, %v581
      %v583 = vpop.f32.mrb[0].mxu0
      %584 = vmatprep.mubr.f32.mxu0 %v282
      %585 = vmatmul.mubr.f32.gmra.mrb[0].mxu0 %v281
      %v586 = vpop.f32.mrb[0].mxu0
      %v587 = vadd.f32 %v398, %v586
      %v588 = vpop.f32.mrb[0].mxu0
      %589 = vmatprep.mubr.f32.mxu0 %v284
      %590 = vmatmul.mubr.f32.gmra.mrb[0].mxu0 %v283
      %v591 = vpop.f32.mrb[0].mxu0
      %v592 = vadd.f32 %v398, %v591
      %v593 = vpop.f32.mrb[0].mxu0
      %594 = vmatprep.mubr.f32.mxu0 %v286
      %595 = vmatmul.mubr.f32.gmra.mrb[0].mxu0 %v285
      %v596 = vpop.f32.mrb[0].mxu0
      %v597 = vadd.f32 %v398, %v596
      %v598 = vpop.f32.mrb[0].mxu0
      %599 = vmatprep.mubr.f32.mxu0 %v288
      %600 = vmatmul.mubr.f32.gmra.mrb[0].mxu0 %v287
      %v601 = vpop.f32.mrb[0].mxu0
      %v602 = vadd.f32 %v398, %v601
      %v603 = vpop.f32.mrb[0].mxu0
      %604 = vmatprep.mubr.f32.mxu0 %v290
      %605 = vmatmul.mubr.f32.gmra.mrb[0].mxu0 %v289
      %v606 = vpop.f32.mrb[0].mxu0
      %v607 = vadd.f32 %v398, %v606
      %v608 = vpop.f32.mrb[0].mxu0
      %609 = vmatprep.mubr.f32.mxu0 %v292
      %610 = vmatmul.mubr.f32.gmra.mrb[0].mxu0 %v291
      %v611 = vpop.f32.mrb[0].mxu0
      %v612 = vadd.f32 %v398, %v611
      %v613 = vpop.f32.mrb[0].mxu0
      %614 = vmatprep.mubr.f32.mxu0 %v294
      %615 = vmatmul.mubr.f32.gmra.mrb[0].mxu0 %v293
      %v616 = vpop.f32.mrb[0].mxu0
      %v617 = vadd.f32 %v398, %v616
      %v618 = vpop.f32.mrb[0].mxu0
      %619 = vmatprep.mubr.f32.mxu0 %v296
      %620 = vmatmul.mubr.f32.gmra.mrb[0].mxu0 %v295
      %v621 = vpop.f32.mrb[0].mxu0
      %v622 = vadd.f32 %v398, %v621
      %v623 = vpop.f32.mrb[0].mxu0
      %624 = vmatprep.mubr.f32.mxu0 %v298
      %625 = vmatmul.mubr.f32.gmra.mrb[0].mxu0 %v297
      %v626 = vpop.f32.mrb[0].mxu0
      %v627 = vadd.f32 %v398, %v626
      %v628 = vpop.f32.mrb[0].mxu0
      %629 = vmatprep.mubr.f32.mxu0 %v300
      %630 = vmatmul.mubr.f32.gmra.mrb[0].mxu0 %v299
      %v631 = vpop.f32.mrb[0].mxu0
      %v632 = vadd.f32 %v398, %v631
      %v633 = vpop.f32.mrb[0].mxu0
      %634 = vmatprep.mubr.f32.mxu0 %v302
      %635 = vmatmul.mubr.f32.gmra.mrb[0].mxu0 %v301
      %v636 = vpop.f32.mrb[0].mxu0
      %v637 = vadd.f32 %v398, %v636
      %v638 = vpop.f32.mrb[0].mxu0
      %639 = vmatprep.mubr.f32.mxu0 %v304
      %640 = vmatmul.mubr.f32.gmra.mrb[0].mxu0 %v303
      %v641 = vpop.f32.mrb[0].mxu0
      %v642 = vadd.f32 %v398, %v641
      %v643 = vpop.f32.mrb[0].mxu0
      %644 = vmatprep.mubr.f32.mxu0 %v306
      %645 = vmatmul.mubr.f32.gmra.mrb[0].mxu0 %v305
      %v646 = vpop.f32.mrb[0].mxu0
      %v647 = vadd.f32 %v398, %v646
      %v648 = vpop.f32.mrb[0].mxu0
      %649 = vmatprep.mubr.f32.mxu0 %v308
      %650 = vmatmul.mubr.f32.gmra.mrb[0].mxu0 %v307
      %v651 = vpop.f32.mrb[0].mxu0
      %v652 = vadd.f32 %v398, %v651
      %v653 = vpop.f32.mrb[0].mxu0
      %654 = vmatprep.mubr.f32.mxu0 %v310
      %655 = vmatmul.mubr.f32.gmra.mrb[0].mxu0 %v309
      %v656 = vpop.f32.mrb[0].mxu0
      %v657 = vadd.f32 %v398, %v656
      %v658 = vpop.f32.mrb[0].mxu0
      %659 = vmatprep.mubr.f32.mxu0 %v312
      %660 = vmatmul.mubr.f32.gmra.mrb[0].mxu0 %v311
      %v661 = vpop.f32.mrb[0].mxu0
      %v662 = vadd.f32 %v398, %v661
      %v663 = vpop.f32.mrb[0].mxu0
      %664 = vmatprep.mubr.f32.mxu0 %v314
      %665 = vmatmul.mubr.f32.gmra.mrb[0].mxu0 %v313
      %v666 = vpop.f32.mrb[0].mxu0
      %v667 = vadd.f32 %v398, %v666
      %v668 = vpop.f32.mrb[0].mxu0
      %669 = vmatprep.mubr.f32.mxu0 %v316
      %670 = vmatmul.mubr.f32.gmra.mrb[0].mxu0 %v315
      %v671 = vpop.f32.mrb[0].mxu0
      %v672 = vadd.f32 %v398, %v671
      %v673 = vpop.f32.mrb[0].mxu0
      %674 = vmatprep.mubr.f32.mxu0 %v318
      %675 = vmatmul.mubr.f32.gmra.mrb[0].mxu0 %v317
      %v676 = vpop.f32.mrb[0].mxu0
      %v677 = vadd.f32 %v398, %v676
      %v678 = vpop.f32.mrb[0].mxu0
      %679 = vmatprep.mubr.f32.mxu0 %v320
      %680 = vmatmul.mubr.f32.gmra.mrb[0].mxu0 %v319
      %v681 = vpop.f32.mrb[0].mxu0
      %v682 = vadd.f32 %v398, %v681
      %v683 = vpop.f32.mrb[0].mxu0
      %684 = vmatprep.mubr.f32.mxu0 %v322
      %685 = vmatmul.mubr.f32.gmra.mrb[0].mxu0 %v321
      %v686 = vpop.f32.mrb[0].mxu0
      %v687 = vadd.f32 %v398, %v686
      %v688 = vpop.f32.mrb[0].mxu0
      %689 = vmatprep.mubr.f32.mxu0 %v324
      %690 = vmatmul.mubr.f32.gmra.mrb[0].mxu0 %v323
      %v691 = vpop.f32.mrb[0].mxu0
      %v692 = vadd.f32 %v398, %v691
      %v693 = vpop.f32.mrb[0].mxu0
      %694 = vmatprep.mubr.f32.mxu0 %v326
      %695 = vmatmul.mubr.f32.gmra.mrb[0].mxu0 %v325
      %v696 = vpop.f32.mrb[0].mxu0
      %v697 = vadd.f32 %v398, %v696
      %v698 = vpop.f32.mrb[0].mxu0
      %699 = vmatprep.mubr.f32.mxu0 %v328
      %700 = vmatmul.mubr.f32.gmra.mrb[0].mxu0 %v327
      %v701 = vpop.f32.mrb[0].mxu0
      %v702 = vadd.f32 %v398, %v701
      %v703 = vpop.f32.mrb[0].mxu0
      %704 = vmatprep.mubr.f32.mxu0 %v330
      %705 = vmatmul.mubr.f32.gmra.mrb[0].mxu0 %v329
      %v706 = vpop.f32.mrb[0].mxu0
      %v707 = vadd.f32 %v398, %v706
      %v708 = vpop.f32.mrb[0].mxu0
      %709 = vmatprep.mubr.f32.mxu0 %v332
      %710 = vmatmul.mubr.f32.gmra.mrb[0].mxu0 %v331
      %v711 = vpop.f32.mrb[0].mxu0
      %v712 = vadd.f32 %v398, %v711
      %v713 = vpop.f32.mrb[0].mxu0
      %714 = vmatprep.mubr.f32.mxu0 %v334
      %715 = vmatmul.mubr.f32.gmra.mrb[0].mxu0 %v333
      %v716 = vpop.f32.mrb[0].mxu0
      %v717 = vadd.f32 %v398, %v716
      %v718 = vpop.f32.mrb[0].mxu0
      %719 = vmatprep.mubr.f32.mxu0 %v336
      %720 = vmatmul.mubr.f32.gmra.mrb[0].mxu0 %v335
      %v721 = vpop.f32.mrb[0].mxu0
      %v722 = vadd.f32 %v398, %v721
      %v723 = vpop.f32.mrb[0].mxu0
      %724 = vmatprep.mubr.f32.mxu0 %v338
      %725 = vmatmul.mubr.f32.gmra.mrb[0].mxu0 %v337
      %v726 = vpop.f32.mrb[0].mxu0
      %v727 = vadd.f32 %v398, %v726
      %v728 = vpop.f32.mrb[0].mxu0
      %729 = vmatprep.mubr.f32.mxu0 %v340
      %730 = vmatmul.mubr.f32.gmra.mrb[0].mxu0 %v339
      %v731 = vpop.f32.mrb[0].mxu0
      %v732 = vadd.f32 %v398, %v731
      %v733 = vpop.f32.mrb[0].mxu0
      %734 = vmatprep.mubr.f32.mxu0 %v342
      %735 = vmatmul.mubr.f32.gmra.mrb[0].mxu0 %v341
      %v736 = vpop.f32.mrb[0].mxu0
      %v737 = vadd.f32 %v398, %v736
      %v738 = vpop.f32.mrb[0].mxu0
      %739 = vmatprep.mubr.f32.mxu0 %v344
      %740 = vmatmul.mubr.f32.gmra.mrb[0].mxu0 %v343
      %v741 = vpop.f32.mrb[0].mxu0
      %v742 = vadd.f32 %v398, %v741
      %v743 = vpop.f32.mrb[0].mxu0
      %744 = vmatprep.mubr.f32.mxu0 %v346
      %745 = vmatmul.mubr.f32.gmra.mrb[0].mxu0 %v345
      %v746 = vpop.f32.mrb[0].mxu0
      %v747 = vadd.f32 %v398, %v746
      %v748 = vpop.f32.mrb[0].mxu0
      %749 = vmatprep.mubr.f32.mxu0 %v348
      %750 = vmatmul.mubr.f32.gmra.mrb[0].mxu0 %v347
      %v751 = vpop.f32.mrb[0].mxu0
      %v752 = vadd.f32 %v398, %v751
      %v753 = vpop.f32.mrb[0].mxu0
      %754 = vmatprep.mubr.f32.mxu0 %v350
      %755 = vmatmul.mubr.f32.gmra.mrb[0].mxu0 %v349
      %v756 = vpop.f32.mrb[0].mxu0
      %v757 = vadd.f32 %v398, %v756
      %v758 = vpop.f32.mrb[0].mxu0
      %759 = vmatprep.mubr.f32.mxu0 %v352
      %760 = vmatmul.mubr.f32.gmra.mrb[0].mxu0 %v351
      %v761 = vpop.f32.mrb[0].mxu0
      %v762 = vadd.f32 %v398, %v761
      %v763 = vpop.f32.mrb[0].mxu0
      %764 = vmatprep.mubr.f32.mxu0 %v354
      %765 = vmatmul.mubr.f32.gmra.mrb[0].mxu0 %v353
      %v766 = vpop.f32.mrb[0].mxu0
      %v767 = vadd.f32 %v398, %v766
      %v768 = vpop.f32.mrb[0].mxu0
      %769 = vmatprep.mubr.f32.mxu0 %v356
      %770 = vmatmul.mubr.f32.gmra.mrb[0].mxu0 %v355
      %v771 = vpop.f32.mrb[0].mxu0
      %v772 = vadd.f32 %v398, %v771
      %v773 = vpop.f32.mrb[0].mxu0
      %774 = vmatprep.mubr.f32.mxu0 %v358
      %775 = vmatmul.mubr.f32.gmra.mrb[0].mxu0 %v357
      %v776 = vpop.f32.mrb[0].mxu0
      %v777 = vadd.f32 %v398, %v776
      %v778 = vpop.f32.mrb[0].mxu0
      %779 = vmatprep.mubr.f32.mxu0 %v360
      %780 = vmatmul.mubr.f32.gmra.mrb[0].mxu0 %v359
      %v781 = vpop.f32.mrb[0].mxu0
      %v782 = vadd.f32 %v398, %v781
      %v783 = vpop.f32.mrb[0].mxu0
      %784 = vdwg.mxu0
      %v785 = vtanh.pop %v467
      %v786 = vtanh.pop %v472
      %v787 = vtanh.pop %v477
      %v788 = vtanh.pop %v482
      %v789 = vtanh.pop %v487
      %v790 = vtanh.pop %v492
      %v791 = vtanh.pop %v497
      %v792 = vtanh.pop %v502
      %v793 = vtanh.pop %v507
      %v794 = vtanh.pop %v512
      %v795 = vtanh.pop %v517
      %v796 = vtanh.pop %v522
      %v797 = vtanh.pop %v527
      %v798 = vtanh.pop %v532
      %v799 = vtanh.pop %v537
      %v800 = vtanh.pop %v542
      %v801 = vtanh.pop %v547
      %v802 = vtanh.pop %v552
      %v803 = vtanh.pop %v557
      %v804 = vtanh.pop %v562
      %v805 = vtanh.pop %v567
      %v806 = vtanh.pop %v572
      %v807 = vtanh.pop %v577
      %v808 = vtanh.pop %v582
      %v809 = vtanh.pop %v587
      %v810 = vtanh.pop %v592
      %v811 = vtanh.pop %v597
      %v812 = vtanh.pop %v602
      %v813 = vtanh.pop %v607
      %v814 = vtanh.pop %v612
      %v815 = vtanh.pop %v617
      %v816 = vtanh.pop %v622
      %v817 = vtanh.pop %v627
      %v818 = vtanh.pop %v632
      %v819 = vtanh.pop %v637
      %v820 = vtanh.pop %v642
      %v821 = vtanh.pop %v647
      %v822 = vtanh.pop %v652
      %v823 = vtanh.pop %v657
      %v824 = vtanh.pop %v662
      %v825 = vtanh.pop %v667
      %v826 = vtanh.pop %v672
      %v827 = vtanh.pop %v677
      %v828 = vtanh.pop %v682
      %v829 = vtanh.pop %v687
      %v830 = vtanh.pop %v692
      %v831 = vtanh.pop %v697
      %v832 = vtanh.pop %v702
      %v833 = vtanh.pop %v707
      %v834 = vtanh.pop %v712
      %v835 = vtanh.pop %v717
      %v836 = vtanh.pop %v722
      %v837 = vtanh.pop %v727
      %v838 = vtanh.pop %v732
      %v839 = vtanh.pop %v737
      %v840 = vtanh.pop %v742
      %v841 = vtanh.pop %v747
      %v842 = vtanh.pop %v752
      %v843 = vtanh.pop %v757
      %v844 = vtanh.pop %v762
      %v845 = vtanh.pop %v767
      %v846 = vtanh.pop %v772
      %v847 = vtanh.pop %v777
      %v848 = vtanh.pop %v782
      %849 = vst [vmem:[%s231] sm:$0xff] %v785
      %850 = vst [vmem:[%s231 + $0x8] sm:$0xff] %v786
      %851 = vst [vmem:[%s231 + $0x10] sm:$0xff] %v787
      %852 = vst [vmem:[%s231 + $0x18] sm:$0xff] %v788
      %853 = vst [vmem:[%s231 + $0x20] sm:$0xff] %v789
      %854 = vst [vmem:[%s231 + $0x28] sm:$0xff] %v790
      %855 = vst [vmem:[%s231 + $0x30] sm:$0xff] %v791
      %856 = vst [vmem:[%s231 + $0x38] sm:$0xff] %v792
      %857 = vst [vmem:[%s231 + $0x40] sm:$0xff] %v793
      %858 = vst [vmem:[%s231 + $0x48] sm:$0xff] %v794
      %859 = vst [vmem:[%s231 + $0x50] sm:$0xff] %v795
      %860 = vst [vmem:[%s231 + $0x58] sm:$0xff] %v796
      %861 = vst [vmem:[%s231 + $0x60] sm:$0xff] %v797
      %862 = vst [vmem:[%s231 + $0x68] sm:$0xff] %v798
      %863 = vst [vmem:[%s231 + $0x70] sm:$0xff] %v799
      %864 = vst [vmem:[%s231 + $0x78] sm:$0xff] %v800
      %865 = vst [vmem:[%s231 + $0x80] sm:$0xff] %v801
      %866 = vst [vmem:[%s231 + $0x88] sm:$0xff] %v802
      %867 = vst [vmem:[%s231 + $0x90] sm:$0xff] %v803
      %868 = vst [vmem:[%s231 + $0x98] sm:$0xff] %v804
      %869 = vst [vmem:[%s231 + $0xa0] sm:$0xff] %v805
      %870 = vst [vmem:[%s231 + $0xa8] sm:$0xff] %v806
      %871 = vst [vmem:[%s231 + $0xb0] sm:$0xff] %v807
      %872 = vst [vmem:[%s231 + $0xb8] sm:$0xff] %v808
      %873 = vst [vmem:[%s231 + $0xc0] sm:$0xff] %v809
      %874 = vst [vmem:[%s231 + $0xc8] sm:$0xff] %v810
      %875 = vst [vmem:[%s231 + $0xd0] sm:$0xff] %v811
      %876 = vst [vmem:[%s231 + $0xd8] sm:$0xff] %v812
      %877 = vst [vmem:[%s231 + $0xe0] sm:$0xff] %v813
      %878 = vst [vmem:[%s231 + $0xe8] sm:$0xff] %v814
      %879 = vst [vmem:[%s231 + $0xf0] sm:$0xff] %v815
      %880 = vst [vmem:[%s231 + $0xf8] sm:$0xff] %v816
      %881 = vst [vmem:[%s231 + $0x100] sm:$0xff] %v817
      %882 = vst [vmem:[%s231 + $0x108] sm:$0xff] %v818
      %883 = vst [vmem:[%s231 + $0x110] sm:$0xff] %v819
      %884 = vst [vmem:[%s231 + $0x118] sm:$0xff] %v820
      %885 = vst [vmem:[%s231 + $0x120] sm:$0xff] %v821
      %886 = vst [vmem:[%s231 + $0x128] sm:$0xff] %v822
      %887 = vst [vmem:[%s231 + $0x130] sm:$0xff] %v823
      %888 = vst [vmem:[%s231 + $0x138] sm:$0xff] %v824
      %889 = vst [vmem:[%s231 + $0x140] sm:$0xff] %v825
      %890 = vst [vmem:[%s231 + $0x148] sm:$0xff] %v826
      %891 = vst [vmem:[%s231 + $0x150] sm:$0xff] %v827
      %892 = vst [vmem:[%s231 + $0x158] sm:$0xff] %v828
      %893 = vst [vmem:[%s231 + $0x160] sm:$0xff] %v829
      %894 = vst [vmem:[%s231 + $0x168] sm:$0xff] %v830
      %895 = vst [vmem:[%s231 + $0x170] sm:$0xff] %v831
      %896 = vst [vmem:[%s231 + $0x178] sm:$0xff] %v832
      %897 = vst [vmem:[%s231 + $0x180] sm:$0xff] %v833
      %898 = vst [vmem:[%s231 + $0x188] sm:$0xff] %v834
      %899 = vst [vmem:[%s231 + $0x190] sm:$0xff] %v835
      %900 = vst [vmem:[%s231 + $0x198] sm:$0xff] %v836
      %901 = vst [vmem:[%s231 + $0x1a0] sm:$0xff] %v837
      %902 = vst [vmem:[%s231 + $0x1a8] sm:$0xff] %v838
      %903 = vst [vmem:[%s231 + $0x1b0] sm:$0xff] %v839
      %904 = vst [vmem:[%s231 + $0x1b8] sm:$0xff] %v840
      %905 = vst [vmem:[%s231 + $0x1c0] sm:$0xff] %v841
      %906 = vst [vmem:[%s231 + $0x1c8] sm:$0xff] %v842
      %907 = vst [vmem:[%s231 + $0x1d0] sm:$0xff] %v843
      %908 = vst [vmem:[%s231 + $0x1d8] sm:$0xff] %v844
      %909 = vst [vmem:[%s231 + $0x1e0] sm:$0xff] %v845
      %910 = vst [vmem:[%s231 + $0x1e8] sm:$0xff] %v846
      %911 = vst [vmem:[%s231 + $0x1f0] sm:$0xff] %v847
      %912 = vst [vmem:[%s231 + $0x1f8] sm:$0xff] %v848
      %s913 = smul.u32 64, %s19
      %p914 = scmp.lt.s32.totalorder %s18, 3
      %s915 = scalar_select %p914, %s18, 3
      %p916 = scmp.lt.s32.totalorder %s913, 63
      %s917 = scalar_select %p916, %s913, 63
      %s918 = smul.addr %s915, 64
      %s919 = sadd.s32 %s917, %s918
      %s920 = smul.addr %s919, 8
      %s921 = scalar_lea.vmem %s3, %s920
      // Predicated region
      $region33: #{_lambda_.13} parent=31 // pred_check
        %p922 = pneg %p121
      $region34: #{_lambda_.13} parent=31 // pred_check_branch
        %924 = sbr.rel (%p922) target = $region36
      $region35: #{_lambda_.13} parent=31 // pred_region
        %s925 = smul.u32 64, %s19
      $region36: #{_lambda_.13} parent=31 // pred_fallthru
        _
    $region32: #{_lambda_.13} parent=5 // pred_fallthru
      _
    %p926 = scmp.le.s32.totalorder 2, %s9
    // Predicated region
    $region37: #{_lambda_.13} parent=5 // pred_check
      %p927 = pneg %p926
    $region38: #{_lambda_.13} parent=5 // pred_check_branch
      %929 = sbr.rel (%p927) target = $region40
    $region39: #{_lambda_.13} parent=5 // pred_region
      %s930 = ssub.s32 %s9, 2
      // Predicated region
      $region41: #{_lambda_.13} parent=39 // pred_check
        %p931 = pneg %p127
      $region42: #{_lambda_.13} parent=39 // pred_check_branch
        %933 = sbr.rel (%p931) target = $region44
      $region43: #{_lambda_.13} parent=39 // pred_region
        %s934 = smul.u32 64, %s21
        %p935 = scmp.lt.s32.totalorder %s20, 3
        %s936 = scalar_select %p935, %s20, 3
        %p937 = scmp.lt.s32.totalorder %s934, 63
        %s938 = scalar_select %p937, %s934, 63
        %s939 = smul.addr %s936, 64
        %s940 = sadd.s32 %s938, %s939
        %s941 = smul.addr %s940, 8
        %s942 = scalar_lea.vmem %s3, %s941
      $region44: #{_lambda_.13} parent=39 // pred_fallthru
        _
    $region40: #{_lambda_.13} parent=5 // pred_fallthru
      _
  $region6: #{_lambda_.13} parent=0 // loop_footer
    %s13 = sadd.s32 1, %s9
  $region7: #{_lambda_.13} parent=0 // loop_footer_branch
    %8 = sbr.rel target = $region3
  $region8: #{_lambda_.13} parent=0 // loop_exit
    _

</llo_original>
